<compile_context>
chip_gen: v5e
topology: v5e:2x2
jax: 0.10.0
libtpu: 0.0.40
codegen_flags: <defaults>
</compile_context>

<pallas_src>
import functools
import numpy as np
import jax
import jax.numpy as jnp
from jax.experimental import pallas as pl
from jax.experimental.pallas import tpu as pltpu

# ---- model hyper-parameters (small, consistent with the module) -------------
SEQ_LEN   = 8
IN_SIZE   = 8      # lstm_input_size (== HID so the shared lstm_cell_cat_size works)
HID       = 8      # lstm_hidden_size (== encoder lstm_output_size)
OUT_SIZE  = 4      # lstm_output_size (decoder)
NUM_QUBIT = 4      # lstm_num_qubit
NUM_LAYER = 2      # lstm_cell_num_layers
INTERNAL  = 8      # lstm_internal_size (== HID so the elementwise gating in
                   # VQLSTM._forward broadcasts exactly as in the source)
DUP       = 1      # duplicate_time_of_input
CAT       = DUP * IN_SIZE + HID          # lstm_cell_cat_size
QP        = NUM_LAYER * NUM_QUBIT * 3    # flattened q_params_k size per cell
GATES     = 4 * INTERNAL                 # fused gate width == weight-slab width

assert INTERNAL == HID, "VQLSTM gating `c * r1 + r2 * r3` requires internal==hidden"
assert IN_SIZE == HID, "shared lstm_cell_cat_size requires input==hidden"

# 8-row-aligned block offsets inside the single packed weight slab (width = 32)
_WBLOCKS = ["e_xa", "e_xb", "e_ha", "e_hb", "e_gb",
            "e_5a", "e_5b", "e_b5",
            "d_ha", "d_hb", "d_gb",
            "d_ta", "d_tb", "d_bt"]
_ROW = {name: 8 * i for i, name in enumerate(_WBLOCKS)}
_SLAB_ROWS = 8 * len(_WBLOCKS)           # 112


def _atan(x):
    # float32 arctan (Cephes-style) built only from ops Mosaic lowers natively.
    # Single selected division instead of evaluating both where-branches.
    sgn = jnp.where(x < 0.0, -1.0, 1.0)
    a = jnp.abs(x)
    big = a > 2.414213562373095          # tan(3*pi/8)
    mid = a > 0.4142135623730951         # tan(pi/8)
    num = jnp.where(big, -1.0, jnp.where(mid, a - 1.0, a))
    den = jnp.where(big, jnp.maximum(a, 1e-30), jnp.where(mid, a + 1.0, 1.0))
    xr = num / den                       # exact f32 divide (tolerance safety)
    y = jnp.where(big, np.pi / 2, jnp.where(mid, np.pi / 4, 0.0))
    z = xr * xr
    p = ((8.05374449538e-2 * z - 1.38776856032e-1) * z
         + 1.99777106478e-1) * z - 3.33329491539e-1
    return sgn * (y + xr + xr * z * p)


def _sigmoid(x):
    return 1.0 / (1.0 + jnp.exp(-x))


def _gate(gates, c):
    # fused gate column order [g1, g2, g4, 2*g3]: one sigmoid over all 32 lanes,
    # the tanh gate recovered exactly as 2*sigmoid(2z) - 1 (no per-step tanh chain).
    I = INTERNAL
    s = _sigmoid(gates)
    r1 = s[:, 0:I]
    r2 = s[:, I:2 * I]
    r4 = s[:, 2 * I:3 * I]
    r3 = 2.0 * s[:, 3 * I:4 * I] - 1.0
    c_t = c * r1 + r2 * r3
    g = r4 * jnp.tanh(c_t)
    return c_t, g


def _ae_vqlstm_kernel(d_ref, w_ref, out_ref, xg_ref):
    f32 = jnp.float32
    dot = functools.partial(jnp.dot, preferred_element_type=f32)
    H = HID
    seq_len = out_ref.shape[1]
    x_rows = xg_ref.shape[0]             # seq_len rounded up to a sublane tile

    def wmat(name, cols=GATES):          # (8, cols) weight block, static row slice
        r = _ROW[name]
        return w_ref[r:r + 8, 0:cols]

    def wbias(name, cols=GATES):         # (1, cols) bias row, static row slice
        r = _ROW[name]
        return w_ref[r:r + 1, 0:cols]

    # ---- folded weights: one packed slab -> static, 8-aligned slices ---------
    e_xa, e_xb = wmat("e_xa"), wmat("e_xb")          # encoder gate rows for atan(x)/atan(x^2)
    e_ha, e_hb = wmat("e_ha"), wmat("e_hb")          # encoder gate rows for atan(h)/atan(h^2)
    e_gb = wbias("e_gb")                             # encoder gate bias (q_params folded)
    e_5a, e_5b = wmat("e_5a", H), wmat("e_5b", H)    # encoder cell_5 halves
    e_b5 = wbias("e_b5", H)
    d_ha, d_hb = wmat("d_ha"), wmat("d_hb")          # decoder gate live rows (x rows dropped)
    d_gb = wbias("d_gb")
    d_ta, d_tb = wmat("d_ta", H + 1), wmat("d_tb", H + 1)  # tail = [cell_5 | cell_6 @ Linear]
    d_bt = wbias("d_bt", H + 1)

    x_all = d_ref[0:x_rows, :]                       # (x_rows, IN); rows >= seq_len are zero
    h = d_ref[x_rows:x_rows + 1, :]                  # (1, HID) initial hidden
    c = d_ref[x_rows + 8:x_rows + 9, :]              # (1, HID) initial cell

    # ---- hoisted x-only encoder gate work: one M=seq_len matmul pair ---------
    # (removes half the atan lanes and half the gate-dot K from the serial chain)
    xg_ref[...] = (dot(_atan(x_all), e_xa)
                   + dot(_atan(x_all * x_all), e_xb) + e_gb)

    # ---------------- encoder VQLSTM (return_all=False; only latent h,c used) -
    for t in range(seq_len):                         # fully unrolled, static trip count
        fa = _atan(h)
        fb = _atan(h * h)
        gates = dot(fa, e_ha) + dot(fb, e_hb) + xg_ref[t:t + 1, :]
        c, g = _gate(gates, c)
        h = dot(_atan(g), e_5a) + dot(_atan(g * g), e_5b) + e_b5
        # encoder cell_6 / classical_nn_linear output is discarded by the AE

    # ---------------- decoder VQLSTM (return_all=True) over zero inputs -------
    # decoder_input == 0 and atan(0) == 0 -> only the h-derived rows survive.
    outs = []
    for t in range(seq_len):
        fa = _atan(h)
        fb = _atan(h * h)
        gates = dot(fa, d_ha) + dot(fb, d_hb) + d_gb
        c, g = _gate(gates, c)
        tail = dot(_atan(g), d_ta) + dot(_atan(g * g), d_tb) + d_bt   # (1, HID+1) = [h_t | out]
        h = tail[:, 0:H]
        outs.append(tail[:, H:H + 1])                # folded cell_6 + Linear head

    out_ref[...] = jnp.concatenate(outs, axis=1)     # single lane-dense store


def init_params(key):
    ks = jax.random.split(key, 14)

    def n(k, shape, scale):
        return (scale * jax.random.normal(k, shape)).astype(jnp.float32)

    p = {}
    # q_params_1..6 (each (L, Q, 3)*0.01), stored flattened per cell
    p["enc_q"] = n(ks[0], (6, QP), 0.01)
    p["dec_q"] = n(ks[1], (6, QP), 0.01)
    # surrogate VQC weights (deterministic synthetic)
    p["enc_w14"] = n(ks[2], (4, 2 * CAT, INTERNAL), 1.0 / np.sqrt(2 * CAT))
    p["enc_u14"] = n(ks[3], (4, QP, INTERNAL), 1.0 / np.sqrt(QP))
    p["enc_w5"] = n(ks[4], (2 * INTERNAL, HID), 1.0 / np.sqrt(2 * INTERNAL))
    p["enc_u5"] = n(ks[5], (QP, HID), 1.0 / np.sqrt(QP))
    p["dec_w14"] = n(ks[6], (4, 2 * CAT, INTERNAL), 1.0 / np.sqrt(2 * CAT))
    p["dec_u14"] = n(ks[7], (4, QP, INTERNAL), 1.0 / np.sqrt(QP))
    p["dec_w5"] = n(ks[8], (2 * INTERNAL, HID), 1.0 / np.sqrt(2 * INTERNAL))
    p["dec_u5"] = n(ks[9], (QP, HID), 1.0 / np.sqrt(QP))
    p["dec_w6"] = n(ks[10], (2 * INTERNAL, OUT_SIZE), 1.0 / np.sqrt(2 * INTERNAL))
    p["dec_u6"] = n(ks[11], (QP, OUT_SIZE), 1.0 / np.sqrt(QP))
    # decoder classical_nn_linear: Linear(lstm_output_size, 1)
    p["lin_w"] = n(ks[12], (OUT_SIZE, 1), 1.0 / np.sqrt(OUT_SIZE))
    p["lin_b"] = n(ks[13], (1, 1), 1.0 / np.sqrt(OUT_SIZE))
    return p


def _pack_weights(params):
    """Constant folding OUTSIDE the serial kernel, packed into ONE (112, 32) slab:
       - 4 gate weights stacked as [g1,g2,g4,g3] with the tanh gate (g3) pre-scaled
         by 2 so the kernel uses a single sigmoid and r3 = 2*s - 1,
       - weight rows split by angle feature (atan(v) vs atan(v^2)) so the kernel
         never lane-concats features (two independent dots instead),
       - input duplication and q_params bias contributions folded,
       - decoder x rows dropped (decoder input == 0); cell_6 + classical Linear
         folded into cell_5 giving one [h_t | out] tail matrix,
       - everything zero-padded to 8-row x 32-col blocks -> one DMA, tile-aligned."""
    f32 = jnp.float32
    I, H, C, IN = INTERNAL, HID, CAT, IN_SIZE
    order = (0, 1, 3, 2)                 # [g1, g2, g4, g3] (sigmoids contiguous)
    scale = (1.0, 1.0, 1.0, 2.0)         # tanh(z) == 2*sigmoid(2z) - 1

    def gate_blocks(w14, u14, q):
        W = jnp.concatenate([s * w14[k] for k, s in zip(order, scale)], axis=1)     # (2C, 4I)
        b = jnp.concatenate([s * (q[k][None, :] @ u14[k])
                             for k, s in zip(order, scale)], axis=1)                # (1, 4I)
        xa = sum(W[d * IN:(d + 1) * IN] for d in range(DUP))            # atan(x) rows (dup folded)
        ha = W[DUP * IN:C]                                              # atan(h) rows
        xb = sum(W[C + d * IN:C + (d + 1) * IN] for d in range(DUP))    # atan(x^2) rows
        hb = W[C + DUP * IN:2 * C]                                      # atan(h^2) rows
        return xa, xb, ha, hb, b

    e_xa, e_xb, e_ha, e_hb, e_gb = gate_blocks(params["enc_w14"],
                                               params["enc_u14"], params["enc_q"])
    _, _, d_ha, d_hb, d_gb = gate_blocks(params["dec_w14"],
                                         params["dec_u14"], params["dec_q"])

    e_5a, e_5b = params["enc_w5"][0:I], params["enc_w5"][I:2 * I]
    e_b5 = params["enc_q"][4][None, :] @ params["enc_u5"]

    w6lin = params["dec_w6"] @ params["lin_w"]                          # fold Linear into cell_6
    dtw = jnp.concatenate([params["dec_w5"], w6lin], axis=1)            # (2I, HID+1)
    d_bt = jnp.concatenate(
        [params["dec_q"][4][None, :] @ params["dec_u5"],
         params["dec_q"][5][None, :] @ params["dec_u6"] @ params["lin_w"] + params["lin_b"]],
        axis=1)                                                         # (1, HID+1)
    d_ta, d_tb = dtw[0:I], dtw[I:2 * I]

    blocks = {"e_xa": e_xa, "e_xb": e_xb, "e_ha": e_ha, "e_hb": e_hb, "e_gb": e_gb,
              "e_5a": e_5a, "e_5b": e_5b, "e_b5": e_b5,
              "d_ha": d_ha, "d_hb": d_hb, "d_gb": d_gb,
              "d_ta": d_ta, "d_tb": d_tb, "d_bt": d_bt}

    def pad_block(a):
        a = a.astype(f32)
        return jnp.pad(a, ((0, 8 - a.shape[0]), (0, GATES - a.shape[1])))

    slab = jnp.concatenate([pad_block(blocks[name]) for name in _WBLOCKS], axis=0)
    assert slab.shape == (_SLAB_ROWS, GATES)
    return slab


def _pack_data(input_seq, h_0, c_0, x_rows):
    # one (x_rows + 16, IN_SIZE) slab: [x ; pad ; h0 row ; pad ; c0 row ; pad]
    slab = jnp.zeros((x_rows + 16, IN_SIZE), jnp.float32)
    slab = slab.at[0:input_seq.shape[0]].set(input_seq.astype(jnp.float32))
    slab = slab.at[x_rows].set(h_0.astype(jnp.float32).reshape(HID))
    slab = slab.at[x_rows + 8].set(c_0.astype(jnp.float32).reshape(HID))
    return slab


@functools.partial(jax.jit, static_argnames=("return_all",))
def autoencoded_vqlstm_forward(input_seq, h_0, c_0, params, return_all=False):
    seq_len = input_seq.shape[0]
    x_rows = ((seq_len + 7) // 8) * 8
    data_slab = _pack_data(input_seq, h_0, c_0, x_rows)
    weight_slab = _pack_weights(params)

    vmem = pl.BlockSpec(memory_space=pltpu.MemorySpace.VMEM)
    recon_row = pl.pallas_call(
        _ae_vqlstm_kernel,
        out_shape=jax.ShapeDtypeStruct((1, seq_len), jnp.float32),
        in_specs=[vmem, vmem],
        out_specs=vmem,
        scratch_shapes=[pltpu.VMEM((x_rows, GATES), jnp.float32)],   # hoisted x-gate rows
    )(data_slab, weight_slab)
    recon = recon_row.reshape(seq_len, 1)
    return recon if return_all else recon[-1]


def _reference_forward(input_seq, h_0, c_0, params, return_all=False):
    # plain-JAX mirror of the module (jnp.arctan, unfused per-gate weights, real tanh);
    # used only for correctness checking of the folding + kernel.
    def angles(v):
        return jnp.concatenate([jnp.arctan(v), jnp.arctan(v * v)])

    def sig(v):
        return 1.0 / (1.0 + jnp.exp(-v))

    eb = [params["enc_q"][k] @ params["enc_u14"][k] for k in range(4)]
    eb5 = params["enc_q"][4] @ params["enc_u5"]
    db = [params["dec_q"][k] @ params["dec_u14"][k] for k in range(4)]
    db5 = params["dec_q"][4] @ params["dec_u5"]
    db6 = params["dec_q"][5] @ params["dec_u6"]

    def step(x, h, c, w14, b14, w5, b5):
        cat = jnp.concatenate([x] * DUP + [h])
        feat = angles(cat)
        r1 = sig(feat @ w14[0] + b14[0])
        r2 = sig(feat @ w14[1] + b14[1])
        r3 = jnp.tanh(feat @ w14[2] + b14[2])
        r4 = sig(feat @ w14[3] + b14[3])
        c_t = c * r1 + r2 * r3
        g = r4 * jnp.tanh(c_t)
        feat2 = angles(g)
        h_t = feat2 @ w5 + b5
        return h_t, c_t, feat2

    h, c = h_0, c_0
    for t in range(input_seq.shape[0]):
        h, c, _ = step(input_seq[t], h, c, params["enc_w14"], eb,
                       params["enc_w5"], eb5)
    outs = []
    for t in range(input_seq.shape[0]):
        h, c, feat2 = step(jnp.zeros((HID,), jnp.float32), h, c,
                           params["dec_w14"], db, params["dec_w5"], db5)
        c6 = feat2 @ params["dec_w6"] + db6
        outs.append(c6 @ params["lin_w"] + params["lin_b"][0])
    recon = jnp.stack(outs)          # (seq_len, 1)
    return recon if return_all else recon[-1]


if __name__ == "__main__":
    key = jax.random.PRNGKey(0)
    k_in, k_h, k_c, k_p = jax.random.split(key, 4)
    input_seq = jax.random.normal(k_in, (SEQ_LEN, IN_SIZE), jnp.float32)
    h_0 = jax.random.normal(k_h, (HID,), jnp.float32)
    c_0 = jax.random.normal(k_c, (HID,), jnp.float32)
    params = init_params(k_p)

    recon = autoencoded_vqlstm_forward(input_seq, h_0, c_0, params, return_all=True)
    recon = jax.block_until_ready(recon)

    ref = _reference_forward(input_seq, h_0, c_0, params, return_all=True)
    assert recon.shape == (SEQ_LEN, 1)
    assert np.all(np.isfinite(np.asarray(recon)))
    np.testing.assert_allclose(np.asarray(recon), np.asarray(ref),
                               rtol=1e-3, atol=1e-3)

    # default module behaviour (return_all=False) -> reconstruction[-1]
    last = jax.block_until_ready(
        autoencoded_vqlstm_forward(input_seq, h_0, c_0, params, return_all=False))
    assert last.shape == (1,)

    print("KERNEL_OK")
</pallas_src>

<mosaic_0001>
module attributes {stable_mosaic.version = 11 : i64} {
  func.func @_ae_vqlstm_kernel(%arg0: memref<24x8xf32, #tpu.memory_space<vmem>>, %arg1: memref<112x32xf32, #tpu.memory_space<vmem>>, %arg2: memref<1x8xf32, #tpu.memory_space<vmem>>, %arg3: memref<8x32xf32, #tpu.memory_space<vmem>>) attributes {dimension_semantics = [], scalar_prefetch = 0 : i64, scratch_operands = 1 : i64, tpu.core_type = #tpu.core_type<tc>} {
    %c0 = arith.constant 0 : index
    %c0_0 = arith.constant 0 : index
    %0 = vector.load %arg1[%c0, %c0_0] : memref<112x32xf32, #tpu.memory_space<vmem>>, vector<8x32xf32>
    %c8 = arith.constant 8 : index
    %c0_1 = arith.constant 0 : index
    %1 = vector.load %arg1[%c8, %c0_1] : memref<112x32xf32, #tpu.memory_space<vmem>>, vector<8x32xf32>
    %c16 = arith.constant 16 : index
    %c0_2 = arith.constant 0 : index
    %2 = vector.load %arg1[%c16, %c0_2] : memref<112x32xf32, #tpu.memory_space<vmem>>, vector<8x32xf32>
    %c24 = arith.constant 24 : index
    %c0_3 = arith.constant 0 : index
    %3 = vector.load %arg1[%c24, %c0_3] : memref<112x32xf32, #tpu.memory_space<vmem>>, vector<8x32xf32>
    %c32 = arith.constant 32 : index
    %c0_4 = arith.constant 0 : index
    %4 = vector.load %arg1[%c32, %c0_4] : memref<112x32xf32, #tpu.memory_space<vmem>>, vector<1x32xf32>
    %c40 = arith.constant 40 : index
    %c0_5 = arith.constant 0 : index
    %5 = vector.load %arg1[%c40, %c0_5] : memref<112x32xf32, #tpu.memory_space<vmem>>, vector<8x8xf32>
    %c48 = arith.constant 48 : index
    %c0_6 = arith.constant 0 : index
    %6 = vector.load %arg1[%c48, %c0_6] : memref<112x32xf32, #tpu.memory_space<vmem>>, vector<8x8xf32>
    %c56 = arith.constant 56 : index
    %c0_7 = arith.constant 0 : index
    %7 = vector.load %arg1[%c56, %c0_7] : memref<112x32xf32, #tpu.memory_space<vmem>>, vector<1x8xf32>
    %c64 = arith.constant 64 : index
    %c0_8 = arith.constant 0 : index
    %8 = vector.load %arg1[%c64, %c0_8] : memref<112x32xf32, #tpu.memory_space<vmem>>, vector<8x32xf32>
    %c72 = arith.constant 72 : index
    %c0_9 = arith.constant 0 : index
    %9 = vector.load %arg1[%c72, %c0_9] : memref<112x32xf32, #tpu.memory_space<vmem>>, vector<8x32xf32>
    %c80 = arith.constant 80 : index
    %c0_10 = arith.constant 0 : index
    %10 = vector.load %arg1[%c80, %c0_10] : memref<112x32xf32, #tpu.memory_space<vmem>>, vector<1x32xf32>
    %c88 = arith.constant 88 : index
    %c0_11 = arith.constant 0 : index
    %11 = vector.load %arg1[%c88, %c0_11] : memref<112x32xf32, #tpu.memory_space<vmem>>, vector<8x9xf32>
    %c96 = arith.constant 96 : index
    %c0_12 = arith.constant 0 : index
    %12 = vector.load %arg1[%c96, %c0_12] : memref<112x32xf32, #tpu.memory_space<vmem>>, vector<8x9xf32>
    %c104 = arith.constant 104 : index
    %c0_13 = arith.constant 0 : index
    %13 = vector.load %arg1[%c104, %c0_13] : memref<112x32xf32, #tpu.memory_space<vmem>>, vector<1x9xf32>
    %c0_14 = arith.constant 0 : index
    %c0_15 = arith.constant 0 : index
    %14 = vector.load %arg0[%c0_14, %c0_15] : memref<24x8xf32, #tpu.memory_space<vmem>>, vector<8x8xf32>
    %c8_16 = arith.constant 8 : index
    %c0_17 = arith.constant 0 : index
    %15 = vector.load %arg0[%c8_16, %c0_17] : memref<24x8xf32, #tpu.memory_space<vmem>>, vector<1x8xf32>
    %c16_18 = arith.constant 16 : index
    %c0_19 = arith.constant 0 : index
    %16 = vector.load %arg0[%c16_18, %c0_19] : memref<24x8xf32, #tpu.memory_space<vmem>>, vector<1x8xf32>
    %cst = arith.constant 0.000000e+00 : f32
    %17 = vector.broadcast %cst : f32 to vector<8x8xf32>
    %18 = arith.cmpf olt, %14, %17 : vector<8x8xf32>
    %cst_20 = arith.constant -1.000000e+00 : f32
    %cst_21 = arith.constant 1.000000e+00 : f32
    %19 = vector.broadcast %cst_20 : f32 to vector<8x8xf32>
    %20 = vector.broadcast %cst_21 : f32 to vector<8x8xf32>
    %21 = arith.select %18, %19, %20 : vector<8x8xi1>, vector<8x8xf32>
    %22 = math.absf %14 : vector<8x8xf32>
    %cst_22 = arith.constant 2.41421366 : f32
    %23 = vector.broadcast %cst_22 : f32 to vector<8x8xf32>
    %24 = arith.cmpf ogt, %22, %23 : vector<8x8xf32>
    %cst_23 = arith.constant 0.414213568 : f32
    %25 = vector.broadcast %cst_23 : f32 to vector<8x8xf32>
    %26 = arith.cmpf ogt, %22, %25 : vector<8x8xf32>
    %cst_24 = arith.constant 1.000000e+00 : f32
    %27 = vector.broadcast %cst_24 : f32 to vector<8x8xf32>
    %28 = arith.subf %22, %27 : vector<8x8xf32>
    %29 = arith.select %26, %28, %22 : vector<8x8xi1>, vector<8x8xf32>
    %cst_25 = arith.constant -1.000000e+00 : f32
    %30 = vector.broadcast %cst_25 : f32 to vector<8x8xf32>
    %31 = arith.select %24, %30, %29 : vector<8x8xi1>, vector<8x8xf32>
    %cst_26 = arith.constant 1.000000e-30 : f32
    %32 = vector.broadcast %cst_26 : f32 to vector<8x8xf32>
    %33 = arith.maximumf %22, %32 : vector<8x8xf32>
    %cst_27 = arith.constant 1.000000e+00 : f32
    %34 = vector.broadcast %cst_27 : f32 to vector<8x8xf32>
    %35 = arith.addf %22, %34 : vector<8x8xf32>
    %cst_28 = arith.constant 1.000000e+00 : f32
    %36 = vector.broadcast %cst_28 : f32 to vector<8x8xf32>
    %37 = arith.select %26, %35, %36 : vector<8x8xi1>, vector<8x8xf32>
    %38 = arith.select %24, %33, %37 : vector<8x8xi1>, vector<8x8xf32>
    %39 = arith.divf %31, %38 : vector<8x8xf32>
    %cst_29 = arith.constant 0.785398185 : f32
    %cst_30 = arith.constant 0.000000e+00 : f32
    %40 = vector.broadcast %cst_29 : f32 to vector<8x8xf32>
    %41 = vector.broadcast %cst_30 : f32 to vector<8x8xf32>
    %42 = arith.select %26, %40, %41 : vector<8x8xi1>, vector<8x8xf32>
    %cst_31 = arith.constant 1.57079637 : f32
    %43 = vector.broadcast %cst_31 : f32 to vector<8x8xf32>
    %44 = arith.select %24, %43, %42 : vector<8x8xi1>, vector<8x8xf32>
    %45 = arith.mulf %39, %39 : vector<8x8xf32>
    %cst_32 = arith.constant 0.0805374458 : f32
    %46 = vector.broadcast %cst_32 : f32 to vector<8x8xf32>
    %47 = arith.mulf %46, %45 : vector<8x8xf32>
    %cst_33 = arith.constant 0.138776854 : f32
    %48 = vector.broadcast %cst_33 : f32 to vector<8x8xf32>
    %49 = arith.subf %47, %48 : vector<8x8xf32>
    %50 = arith.mulf %49, %45 : vector<8x8xf32>
    %cst_34 = arith.constant 0.199777111 : f32
    %51 = vector.broadcast %cst_34 : f32 to vector<8x8xf32>
    %52 = arith.addf %50, %51 : vector<8x8xf32>
    %53 = arith.mulf %52, %45 : vector<8x8xf32>
    %cst_35 = arith.constant 0.333329499 : f32
    %54 = vector.broadcast %cst_35 : f32 to vector<8x8xf32>
    %55 = arith.subf %53, %54 : vector<8x8xf32>
    %56 = arith.addf %44, %39 : vector<8x8xf32>
    %57 = arith.mulf %39, %45 : vector<8x8xf32>
    %58 = arith.mulf %57, %55 : vector<8x8xf32>
    %59 = arith.addf %56, %58 : vector<8x8xf32>
    %60 = arith.mulf %21, %59 : vector<8x8xf32>
    %cst_36 = arith.constant dense<0.000000e+00> : vector<8x32xf32>
    %61 = tpu.matmul %60, %0, %cst_36 {dimension_numbers = #tpu.dot_dimension_numbers<[1], [0], [0], [1], [0, 0, 1, 1], [], []>} : vector<8x8xf32>, vector<8x32xf32>, vector<8x32xf32> -> vector<8x32xf32>
    %62 = arith.mulf %14, %14 : vector<8x8xf32>
    %cst_37 = arith.constant 0.000000e+00 : f32
    %63 = vector.broadcast %cst_37 : f32 to vector<8x8xf32>
    %64 = arith.cmpf olt, %62, %63 : vector<8x8xf32>
    %cst_38 = arith.constant -1.000000e+00 : f32
    %cst_39 = arith.constant 1.000000e+00 : f32
    %65 = vector.broadcast %cst_38 : f32 to vector<8x8xf32>
    %66 = vector.broadcast %cst_39 : f32 to vector<8x8xf32>
    %67 = arith.select %64, %65, %66 : vector<8x8xi1>, vector<8x8xf32>
    %68 = math.absf %62 : vector<8x8xf32>
    %cst_40 = arith.constant 2.41421366 : f32
    %69 = vector.broadcast %cst_40 : f32 to vector<8x8xf32>
    %70 = arith.cmpf ogt, %68, %69 : vector<8x8xf32>
    %cst_41 = arith.constant 0.414213568 : f32
    %71 = vector.broadcast %cst_41 : f32 to vector<8x8xf32>
    %72 = arith.cmpf ogt, %68, %71 : vector<8x8xf32>
    %cst_42 = arith.constant 1.000000e+00 : f32
    %73 = vector.broadcast %cst_42 : f32 to vector<8x8xf32>
    %74 = arith.subf %68, %73 : vector<8x8xf32>
    %75 = arith.select %72, %74, %68 : vector<8x8xi1>, vector<8x8xf32>
    %cst_43 = arith.constant -1.000000e+00 : f32
    %76 = vector.broadcast %cst_43 : f32 to vector<8x8xf32>
    %77 = arith.select %70, %76, %75 : vector<8x8xi1>, vector<8x8xf32>
    %cst_44 = arith.constant 1.000000e-30 : f32
    %78 = vector.broadcast %cst_44 : f32 to vector<8x8xf32>
    %79 = arith.maximumf %68, %78 : vector<8x8xf32>
    %cst_45 = arith.constant 1.000000e+00 : f32
    %80 = vector.broadcast %cst_45 : f32 to vector<8x8xf32>
    %81 = arith.addf %68, %80 : vector<8x8xf32>
    %cst_46 = arith.constant 1.000000e+00 : f32
    %82 = vector.broadcast %cst_46 : f32 to vector<8x8xf32>
    %83 = arith.select %72, %81, %82 : vector<8x8xi1>, vector<8x8xf32>
    %84 = arith.select %70, %79, %83 : vector<8x8xi1>, vector<8x8xf32>
    %85 = arith.divf %77, %84 : vector<8x8xf32>
    %cst_47 = arith.constant 0.785398185 : f32
    %cst_48 = arith.constant 0.000000e+00 : f32
    %86 = vector.broadcast %cst_47 : f32 to vector<8x8xf32>
    %87 = vector.broadcast %cst_48 : f32 to vector<8x8xf32>
    %88 = arith.select %72, %86, %87 : vector<8x8xi1>, vector<8x8xf32>
    %cst_49 = arith.constant 1.57079637 : f32
    %89 = vector.broadcast %cst_49 : f32 to vector<8x8xf32>
    %90 = arith.select %70, %89, %88 : vector<8x8xi1>, vector<8x8xf32>
    %91 = arith.mulf %85, %85 : vector<8x8xf32>
    %cst_50 = arith.constant 0.0805374458 : f32
    %92 = vector.broadcast %cst_50 : f32 to vector<8x8xf32>
    %93 = arith.mulf %92, %91 : vector<8x8xf32>
    %cst_51 = arith.constant 0.138776854 : f32
    %94 = vector.broadcast %cst_51 : f32 to vector<8x8xf32>
    %95 = arith.subf %93, %94 : vector<8x8xf32>
    %96 = arith.mulf %95, %91 : vector<8x8xf32>
    %cst_52 = arith.constant 0.199777111 : f32
    %97 = vector.broadcast %cst_52 : f32 to vector<8x8xf32>
    %98 = arith.addf %96, %97 : vector<8x8xf32>
    %99 = arith.mulf %98, %91 : vector<8x8xf32>
    %cst_53 = arith.constant 0.333329499 : f32
    %100 = vector.broadcast %cst_53 : f32 to vector<8x8xf32>
    %101 = arith.subf %99, %100 : vector<8x8xf32>
    %102 = arith.addf %90, %85 : vector<8x8xf32>
    %103 = arith.mulf %85, %91 : vector<8x8xf32>
    %104 = arith.mulf %103, %101 : vector<8x8xf32>
    %105 = arith.addf %102, %104 : vector<8x8xf32>
    %106 = arith.mulf %67, %105 : vector<8x8xf32>
    %cst_54 = arith.constant dense<0.000000e+00> : vector<8x32xf32>
    %107 = tpu.matmul %106, %1, %cst_54 {dimension_numbers = #tpu.dot_dimension_numbers<[1], [0], [0], [1], [0, 0, 1, 1], [], []>} : vector<8x8xf32>, vector<8x32xf32>, vector<8x32xf32> -> vector<8x32xf32>
    %108 = arith.addf %61, %107 : vector<8x32xf32>
    %109 = vector.broadcast %4 : vector<1x32xf32> to vector<8x32xf32>
    %110 = arith.addf %108, %109 : vector<8x32xf32>
    %c0_55 = arith.constant 0 : index
    %c0_56 = arith.constant 0 : index
    %111 = vector.load %arg3[%c0_55, %c0_56] : memref<8x32xf32, #tpu.memory_space<vmem>>, vector<8x32xf32>
    tpu.vector_store %arg3[%c0_55, %c0_56], %110 {strides = array<i32>} : memref<8x32xf32, #tpu.memory_space<vmem>>, vector<8x32xf32>,
    %cst_57 = arith.constant 0.000000e+00 : f32
    %112 = vector.broadcast %cst_57 : f32 to vector<1x8xf32>
    %113 = arith.cmpf olt, %15, %112 : vector<1x8xf32>
    %cst_58 = arith.constant -1.000000e+00 : f32
    %cst_59 = arith.constant 1.000000e+00 : f32
    %114 = vector.broadcast %cst_58 : f32 to vector<1x8xf32>
    %115 = vector.broadcast %cst_59 : f32 to vector<1x8xf32>
    %116 = arith.select %113, %114, %115 : vector<1x8xi1>, vector<1x8xf32>
    %117 = math.absf %15 : vector<1x8xf32>
    %cst_60 = arith.constant 2.41421366 : f32
    %118 = vector.broadcast %cst_60 : f32 to vector<1x8xf32>
    %119 = arith.cmpf ogt, %117, %118 : vector<1x8xf32>
    %cst_61 = arith.constant 0.414213568 : f32
    %120 = vector.broadcast %cst_61 : f32 to vector<1x8xf32>
    %121 = arith.cmpf ogt, %117, %120 : vector<1x8xf32>
    %cst_62 = arith.constant 1.000000e+00 : f32
    %122 = vector.broadcast %cst_62 : f32 to vector<1x8xf32>
    %123 = arith.subf %117, %122 : vector<1x8xf32>
    %124 = arith.select %121, %123, %117 : vector<1x8xi1>, vector<1x8xf32>
    %cst_63 = arith.constant -1.000000e+00 : f32
    %125 = vector.broadcast %cst_63 : f32 to vector<1x8xf32>
    %126 = arith.select %119, %125, %124 : vector<1x8xi1>, vector<1x8xf32>
    %cst_64 = arith.constant 1.000000e-30 : f32
    %127 = vector.broadcast %cst_64 : f32 to vector<1x8xf32>
    %128 = arith.maximumf %117, %127 : vector<1x8xf32>
    %cst_65 = arith.constant 1.000000e+00 : f32
    %129 = vector.broadcast %cst_65 : f32 to vector<1x8xf32>
    %130 = arith.addf %117, %129 : vector<1x8xf32>
    %cst_66 = arith.constant 1.000000e+00 : f32
    %131 = vector.broadcast %cst_66 : f32 to vector<1x8xf32>
    %132 = arith.select %121, %130, %131 : vector<1x8xi1>, vector<1x8xf32>
    %133 = arith.select %119, %128, %132 : vector<1x8xi1>, vector<1x8xf32>
    %134 = arith.divf %126, %133 : vector<1x8xf32>
    %cst_67 = arith.constant 0.785398185 : f32
    %cst_68 = arith.constant 0.000000e+00 : f32
    %135 = vector.broadcast %cst_67 : f32 to vector<1x8xf32>
    %136 = vector.broadcast %cst_68 : f32 to vector<1x8xf32>
    %137 = arith.select %121, %135, %136 : vector<1x8xi1>, vector<1x8xf32>
    %cst_69 = arith.constant 1.57079637 : f32
    %138 = vector.broadcast %cst_69 : f32 to vector<1x8xf32>
    %139 = arith.select %119, %138, %137 : vector<1x8xi1>, vector<1x8xf32>
    %140 = arith.mulf %134, %134 : vector<1x8xf32>
    %cst_70 = arith.constant 0.0805374458 : f32
    %141 = vector.broadcast %cst_70 : f32 to vector<1x8xf32>
    %142 = arith.mulf %141, %140 : vector<1x8xf32>
    %cst_71 = arith.constant 0.138776854 : f32
    %143 = vector.broadcast %cst_71 : f32 to vector<1x8xf32>
    %144 = arith.subf %142, %143 : vector<1x8xf32>
    %145 = arith.mulf %144, %140 : vector<1x8xf32>
    %cst_72 = arith.constant 0.199777111 : f32
    %146 = vector.broadcast %cst_72 : f32 to vector<1x8xf32>
    %147 = arith.addf %145, %146 : vector<1x8xf32>
    %148 = arith.mulf %147, %140 : vector<1x8xf32>
    %cst_73 = arith.constant 0.333329499 : f32
    %149 = vector.broadcast %cst_73 : f32 to vector<1x8xf32>
    %150 = arith.subf %148, %149 : vector<1x8xf32>
    %151 = arith.addf %139, %134 : vector<1x8xf32>
    %152 = arith.mulf %134, %140 : vector<1x8xf32>
    %153 = arith.mulf %152, %150 : vector<1x8xf32>
    %154 = arith.addf %151, %153 : vector<1x8xf32>
    %155 = arith.mulf %116, %154 : vector<1x8xf32>
    %156 = arith.mulf %15, %15 : vector<1x8xf32>
    %cst_74 = arith.constant 0.000000e+00 : f32
    %157 = vector.broadcast %cst_74 : f32 to vector<1x8xf32>
    %158 = arith.cmpf olt, %156, %157 : vector<1x8xf32>
    %cst_75 = arith.constant -1.000000e+00 : f32
    %cst_76 = arith.constant 1.000000e+00 : f32
    %159 = vector.broadcast %cst_75 : f32 to vector<1x8xf32>
    %160 = vector.broadcast %cst_76 : f32 to vector<1x8xf32>
    %161 = arith.select %158, %159, %160 : vector<1x8xi1>, vector<1x8xf32>
    %162 = math.absf %156 : vector<1x8xf32>
    %cst_77 = arith.constant 2.41421366 : f32
    %163 = vector.broadcast %cst_77 : f32 to vector<1x8xf32>
    %164 = arith.cmpf ogt, %162, %163 : vector<1x8xf32>
    %cst_78 = arith.constant 0.414213568 : f32
    %165 = vector.broadcast %cst_78 : f32 to vector<1x8xf32>
    %166 = arith.cmpf ogt, %162, %165 : vector<1x8xf32>
    %cst_79 = arith.constant 1.000000e+00 : f32
    %167 = vector.broadcast %cst_79 : f32 to vector<1x8xf32>
    %168 = arith.subf %162, %167 : vector<1x8xf32>
    %169 = arith.select %166, %168, %162 : vector<1x8xi1>, vector<1x8xf32>
    %cst_80 = arith.constant -1.000000e+00 : f32
    %170 = vector.broadcast %cst_80 : f32 to vector<1x8xf32>
    %171 = arith.select %164, %170, %169 : vector<1x8xi1>, vector<1x8xf32>
    %cst_81 = arith.constant 1.000000e-30 : f32
    %172 = vector.broadcast %cst_81 : f32 to vector<1x8xf32>
    %173 = arith.maximumf %162, %172 : vector<1x8xf32>
    %cst_82 = arith.constant 1.000000e+00 : f32
    %174 = vector.broadcast %cst_82 : f32 to vector<1x8xf32>
    %175 = arith.addf %162, %174 : vector<1x8xf32>
    %cst_83 = arith.constant 1.000000e+00 : f32
    %176 = vector.broadcast %cst_83 : f32 to vector<1x8xf32>
    %177 = arith.select %166, %175, %176 : vector<1x8xi1>, vector<1x8xf32>
    %178 = arith.select %164, %173, %177 : vector<1x8xi1>, vector<1x8xf32>
    %179 = arith.divf %171, %178 : vector<1x8xf32>
    %cst_84 = arith.constant 0.785398185 : f32
    %cst_85 = arith.constant 0.000000e+00 : f32
    %180 = vector.broadcast %cst_84 : f32 to vector<1x8xf32>
    %181 = vector.broadcast %cst_85 : f32 to vector<1x8xf32>
    %182 = arith.select %166, %180, %181 : vector<1x8xi1>, vector<1x8xf32>
    %cst_86 = arith.constant 1.57079637 : f32
    %183 = vector.broadcast %cst_86 : f32 to vector<1x8xf32>
    %184 = arith.select %164, %183, %182 : vector<1x8xi1>, vector<1x8xf32>
    %185 = arith.mulf %179, %179 : vector<1x8xf32>
    %cst_87 = arith.constant 0.0805374458 : f32
    %186 = vector.broadcast %cst_87 : f32 to vector<1x8xf32>
    %187 = arith.mulf %186, %185 : vector<1x8xf32>
    %cst_88 = arith.constant 0.138776854 : f32
    %188 = vector.broadcast %cst_88 : f32 to vector<1x8xf32>
    %189 = arith.subf %187, %188 : vector<1x8xf32>
    %190 = arith.mulf %189, %185 : vector<1x8xf32>
    %cst_89 = arith.constant 0.199777111 : f32
    %191 = vector.broadcast %cst_89 : f32 to vector<1x8xf32>
    %192 = arith.addf %190, %191 : vector<1x8xf32>
    %193 = arith.mulf %192, %185 : vector<1x8xf32>
    %cst_90 = arith.constant 0.333329499 : f32
    %194 = vector.broadcast %cst_90 : f32 to vector<1x8xf32>
    %195 = arith.subf %193, %194 : vector<1x8xf32>
    %196 = arith.addf %184, %179 : vector<1x8xf32>
    %197 = arith.mulf %179, %185 : vector<1x8xf32>
    %198 = arith.mulf %197, %195 : vector<1x8xf32>
    %199 = arith.addf %196, %198 : vector<1x8xf32>
    %200 = arith.mulf %161, %199 : vector<1x8xf32>
    %cst_91 = arith.constant dense<0.000000e+00> : vector<1x32xf32>
    %201 = tpu.matmul %155, %2, %cst_91 {dimension_numbers = #tpu.dot_dimension_numbers<[1], [0], [0], [1], [0, 0, 1, 1], [], []>} : vector<1x8xf32>, vector<8x32xf32>, vector<1x32xf32> -> vector<1x32xf32>
    %cst_92 = arith.constant dense<0.000000e+00> : vector<1x32xf32>
    %202 = tpu.matmul %200, %3, %cst_92 {dimension_numbers = #tpu.dot_dimension_numbers<[1], [0], [0], [1], [0, 0, 1, 1], [], []>} : vector<1x8xf32>, vector<8x32xf32>, vector<1x32xf32> -> vector<1x32xf32>
    %203 = arith.addf %201, %202 : vector<1x32xf32>
    %c0_93 = arith.constant 0 : index
    %c0_94 = arith.constant 0 : index
    %204 = vector.load %arg3[%c0_93, %c0_94] : memref<8x32xf32, #tpu.memory_space<vmem>>, vector<1x32xf32>
    %205 = arith.addf %203, %204 : vector<1x32xf32>
    %cst_95 = arith.constant 0.000000e+00 : f32
    %206 = vector.broadcast %cst_95 : f32 to vector<1x32xf32>
    %207 = arith.subf %206, %205 : vector<1x32xf32>
    %208 = math.exp %207 : vector<1x32xf32>
    %cst_96 = arith.constant 1.000000e+00 : f32
    %209 = vector.broadcast %cst_96 : f32 to vector<1x32xf32>
    %210 = arith.addf %209, %208 : vector<1x32xf32>
    %cst_97 = arith.constant 1.000000e+00 : f32
    %211 = vector.broadcast %cst_97 : f32 to vector<1x32xf32>
    %212 = arith.divf %211, %210 : vector<1x32xf32>
    %213 = vector.extract_strided_slice %212 {offsets = [0, 0], sizes = [1, 8], strides = [1, 1]} : vector<1x32xf32> to vector<1x8xf32>
    %214 = vector.extract_strided_slice %212 {offsets = [0, 8], sizes = [1, 8], strides = [1, 1]} : vector<1x32xf32> to vector<1x8xf32>
    %215 = vector.extract_strided_slice %212 {offsets = [0, 16], sizes = [1, 8], strides = [1, 1]} : vector<1x32xf32> to vector<1x8xf32>
    %216 = vector.extract_strided_slice %212 {offsets = [0, 24], sizes = [1, 8], strides = [1, 1]} : vector<1x32xf32> to vector<1x8xf32>
    %cst_98 = arith.constant 2.000000e+00 : f32
    %217 = vector.broadcast %cst_98 : f32 to vector<1x8xf32>
    %218 = arith.mulf %217, %216 : vector<1x8xf32>
    %cst_99 = arith.constant 1.000000e+00 : f32
    %219 = vector.broadcast %cst_99 : f32 to vector<1x8xf32>
    %220 = arith.subf %218, %219 : vector<1x8xf32>
    %221 = arith.mulf %16, %213 : vector<1x8xf32>
    %222 = arith.mulf %214, %220 : vector<1x8xf32>
    %223 = arith.addf %221, %222 : vector<1x8xf32>
    %224 = math.tanh %223 : vector<1x8xf32>
    %225 = arith.mulf %215, %224 : vector<1x8xf32>
    %cst_100 = arith.constant 0.000000e+00 : f32
    %226 = vector.broadcast %cst_100 : f32 to vector<1x8xf32>
    %227 = arith.cmpf olt, %225, %226 : vector<1x8xf32>
    %cst_101 = arith.constant -1.000000e+00 : f32
    %cst_102 = arith.constant 1.000000e+00 : f32
    %228 = vector.broadcast %cst_101 : f32 to vector<1x8xf32>
    %229 = vector.broadcast %cst_102 : f32 to vector<1x8xf32>
    %230 = arith.select %227, %228, %229 : vector<1x8xi1>, vector<1x8xf32>
    %231 = math.absf %225 : vector<1x8xf32>
    %cst_103 = arith.constant 2.41421366 : f32
    %232 = vector.broadcast %cst_103 : f32 to vector<1x8xf32>
    %233 = arith.cmpf ogt, %231, %232 : vector<1x8xf32>
    %cst_104 = arith.constant 0.414213568 : f32
    %234 = vector.broadcast %cst_104 : f32 to vector<1x8xf32>
    %235 = arith.cmpf ogt, %231, %234 : vector<1x8xf32>
    %cst_105 = arith.constant 1.000000e+00 : f32
    %236 = vector.broadcast %cst_105 : f32 to vector<1x8xf32>
    %237 = arith.subf %231, %236 : vector<1x8xf32>
    %238 = arith.select %235, %237, %231 : vector<1x8xi1>, vector<1x8xf32>
    %cst_106 = arith.constant -1.000000e+00 : f32
    %239 = vector.broadcast %cst_106 : f32 to vector<1x8xf32>
    %240 = arith.select %233, %239, %238 : vector<1x8xi1>, vector<1x8xf32>
    %cst_107 = arith.constant 1.000000e-30 : f32
    %241 = vector.broadcast %cst_107 : f32 to vector<1x8xf32>
    %242 = arith.maximumf %231, %241 : vector<1x8xf32>
    %cst_108 = arith.constant 1.000000e+00 : f32
    %243 = vector.broadcast %cst_108 : f32 to vector<1x8xf32>
    %244 = arith.addf %231, %243 : vector<1x8xf32>
    %cst_109 = arith.constant 1.000000e+00 : f32
    %245 = vector.broadcast %cst_109 : f32 to vector<1x8xf32>
    %246 = arith.select %235, %244, %245 : vector<1x8xi1>, vector<1x8xf32>
    %247 = arith.select %233, %242, %246 : vector<1x8xi1>, vector<1x8xf32>
    %248 = arith.divf %240, %247 : vector<1x8xf32>
    %cst_110 = arith.constant 0.785398185 : f32
    %cst_111 = arith.constant 0.000000e+00 : f32
    %249 = vector.broadcast %cst_110 : f32 to vector<1x8xf32>
    %250 = vector.broadcast %cst_111 : f32 to vector<1x8xf32>
    %251 = arith.select %235, %249, %250 : vector<1x8xi1>, vector<1x8xf32>
    %cst_112 = arith.constant 1.57079637 : f32
    %252 = vector.broadcast %cst_112 : f32 to vector<1x8xf32>
    %253 = arith.select %233, %252, %251 : vector<1x8xi1>, vector<1x8xf32>
    %254 = arith.mulf %248, %248 : vector<1x8xf32>
    %cst_113 = arith.constant 0.0805374458 : f32
    %255 = vector.broadcast %cst_113 : f32 to vector<1x8xf32>
    %256 = arith.mulf %255, %254 : vector<1x8xf32>
    %cst_114 = arith.constant 0.138776854 : f32
    %257 = vector.broadcast %cst_114 : f32 to vector<1x8xf32>
    %258 = arith.subf %256, %257 : vector<1x8xf32>
    %259 = arith.mulf %258, %254 : vector<1x8xf32>
    %cst_115 = arith.constant 0.199777111 : f32
    %260 = vector.broadcast %cst_115 : f32 to vector<1x8xf32>
    %261 = arith.addf %259, %260 : vector<1x8xf32>
    %262 = arith.mulf %261, %254 : vector<1x8xf32>
    %cst_116 = arith.constant 0.333329499 : f32
    %263 = vector.broadcast %cst_116 : f32 to vector<1x8xf32>
    %264 = arith.subf %262, %263 : vector<1x8xf32>
    %265 = arith.addf %253, %248 : vector<1x8xf32>
    %266 = arith.mulf %248, %254 : vector<1x8xf32>
    %267 = arith.mulf %266, %264 : vector<1x8xf32>
    %268 = arith.addf %265, %267 : vector<1x8xf32>
    %269 = arith.mulf %230, %268 : vector<1x8xf32>
    %cst_117 = arith.constant dense<0.000000e+00> : vector<1x8xf32>
    %270 = tpu.matmul %269, %5, %cst_117 {dimension_numbers = #tpu.dot_dimension_numbers<[1], [0], [0], [1], [0, 0, 1, 1], [], []>} : vector<1x8xf32>, vector<8x8xf32>, vector<1x8xf32> -> vector<1x8xf32>
    %271 = arith.mulf %225, %225 : vector<1x8xf32>
    %cst_118 = arith.constant 0.000000e+00 : f32
    %272 = vector.broadcast %cst_118 : f32 to vector<1x8xf32>
    %273 = arith.cmpf olt, %271, %272 : vector<1x8xf32>
    %cst_119 = arith.constant -1.000000e+00 : f32
    %cst_120 = arith.constant 1.000000e+00 : f32
    %274 = vector.broadcast %cst_119 : f32 to vector<1x8xf32>
    %275 = vector.broadcast %cst_120 : f32 to vector<1x8xf32>
    %276 = arith.select %273, %274, %275 : vector<1x8xi1>, vector<1x8xf32>
    %277 = math.absf %271 : vector<1x8xf32>
    %cst_121 = arith.constant 2.41421366 : f32
    %278 = vector.broadcast %cst_121 : f32 to vector<1x8xf32>
    %279 = arith.cmpf ogt, %277, %278 : vector<1x8xf32>
    %cst_122 = arith.constant 0.414213568 : f32
    %280 = vector.broadcast %cst_122 : f32 to vector<1x8xf32>
    %281 = arith.cmpf ogt, %277, %280 : vector<1x8xf32>
    %cst_123 = arith.constant 1.000000e+00 : f32
    %282 = vector.broadcast %cst_123 : f32 to vector<1x8xf32>
    %283 = arith.subf %277, %282 : vector<1x8xf32>
    %284 = arith.select %281, %283, %277 : vector<1x8xi1>, vector<1x8xf32>
    %cst_124 = arith.constant -1.000000e+00 : f32
    %285 = vector.broadcast %cst_124 : f32 to vector<1x8xf32>
    %286 = arith.select %279, %285, %284 : vector<1x8xi1>, vector<1x8xf32>
    %cst_125 = arith.constant 1.000000e-30 : f32
    %287 = vector.broadcast %cst_125 : f32 to vector<1x8xf32>
    %288 = arith.maximumf %277, %287 : vector<1x8xf32>
    %cst_126 = arith.constant 1.000000e+00 : f32
    %289 = vector.broadcast %cst_126 : f32 to vector<1x8xf32>
    %290 = arith.addf %277, %289 : vector<1x8xf32>
    %cst_127 = arith.constant 1.000000e+00 : f32
    %291 = vector.broadcast %cst_127 : f32 to vector<1x8xf32>
    %292 = arith.select %281, %290, %291 : vector<1x8xi1>, vector<1x8xf32>
    %293 = arith.select %279, %288, %292 : vector<1x8xi1>, vector<1x8xf32>
    %294 = arith.divf %286, %293 : vector<1x8xf32>
    %cst_128 = arith.constant 0.785398185 : f32
    %cst_129 = arith.constant 0.000000e+00 : f32
    %295 = vector.broadcast %cst_128 : f32 to vector<1x8xf32>
    %296 = vector.broadcast %cst_129 : f32 to vector<1x8xf32>
    %297 = arith.select %281, %295, %296 : vector<1x8xi1>, vector<1x8xf32>
    %cst_130 = arith.constant 1.57079637 : f32
    %298 = vector.broadcast %cst_130 : f32 to vector<1x8xf32>
    %299 = arith.select %279, %298, %297 : vector<1x8xi1>, vector<1x8xf32>
    %300 = arith.mulf %294, %294 : vector<1x8xf32>
    %cst_131 = arith.constant 0.0805374458 : f32
    %301 = vector.broadcast %cst_131 : f32 to vector<1x8xf32>
    %302 = arith.mulf %301, %300 : vector<1x8xf32>
    %cst_132 = arith.constant 0.138776854 : f32
    %303 = vector.broadcast %cst_132 : f32 to vector<1x8xf32>
    %304 = arith.subf %302, %303 : vector<1x8xf32>
    %305 = arith.mulf %304, %300 : vector<1x8xf32>
    %cst_133 = arith.constant 0.199777111 : f32
    %306 = vector.broadcast %cst_133 : f32 to vector<1x8xf32>
    %307 = arith.addf %305, %306 : vector<1x8xf32>
    %308 = arith.mulf %307, %300 : vector<1x8xf32>
    %cst_134 = arith.constant 0.333329499 : f32
    %309 = vector.broadcast %cst_134 : f32 to vector<1x8xf32>
    %310 = arith.subf %308, %309 : vector<1x8xf32>
    %311 = arith.addf %299, %294 : vector<1x8xf32>
    %312 = arith.mulf %294, %300 : vector<1x8xf32>
    %313 = arith.mulf %312, %310 : vector<1x8xf32>
    %314 = arith.addf %311, %313 : vector<1x8xf32>
    %315 = arith.mulf %276, %314 : vector<1x8xf32>
    %cst_135 = arith.constant dense<0.000000e+00> : vector<1x8xf32>
    %316 = tpu.matmul %315, %6, %cst_135 {dimension_numbers = #tpu.dot_dimension_numbers<[1], [0], [0], [1], [0, 0, 1, 1], [], []>} : vector<1x8xf32>, vector<8x8xf32>, vector<1x8xf32> -> vector<1x8xf32>
    %317 = arith.addf %270, %316 : vector<1x8xf32>
    %318 = arith.addf %317, %7 : vector<1x8xf32>
    %cst_136 = arith.constant 0.000000e+00 : f32
    %319 = vector.broadcast %cst_136 : f32 to vector<1x8xf32>
    %320 = arith.cmpf olt, %318, %319 : vector<1x8xf32>
    %cst_137 = arith.constant -1.000000e+00 : f32
    %cst_138 = arith.constant 1.000000e+00 : f32
    %321 = vector.broadcast %cst_137 : f32 to vector<1x8xf32>
    %322 = vector.broadcast %cst_138 : f32 to vector<1x8xf32>
    %323 = arith.select %320, %321, %322 : vector<1x8xi1>, vector<1x8xf32>
    %324 = math.absf %318 : vector<1x8xf32>
    %cst_139 = arith.constant 2.41421366 : f32
    %325 = vector.broadcast %cst_139 : f32 to vector<1x8xf32>
    %326 = arith.cmpf ogt, %324, %325 : vector<1x8xf32>
    %cst_140 = arith.constant 0.414213568 : f32
    %327 = vector.broadcast %cst_140 : f32 to vector<1x8xf32>
    %328 = arith.cmpf ogt, %324, %327 : vector<1x8xf32>
    %cst_141 = arith.constant 1.000000e+00 : f32
    %329 = vector.broadcast %cst_141 : f32 to vector<1x8xf32>
    %330 = arith.subf %324, %329 : vector<1x8xf32>
    %331 = arith.select %328, %330, %324 : vector<1x8xi1>, vector<1x8xf32>
    %cst_142 = arith.constant -1.000000e+00 : f32
    %332 = vector.broadcast %cst_142 : f32 to vector<1x8xf32>
    %333 = arith.select %326, %332, %331 : vector<1x8xi1>, vector<1x8xf32>
    %cst_143 = arith.constant 1.000000e-30 : f32
    %334 = vector.broadcast %cst_143 : f32 to vector<1x8xf32>
    %335 = arith.maximumf %324, %334 : vector<1x8xf32>
    %cst_144 = arith.constant 1.000000e+00 : f32
    %336 = vector.broadcast %cst_144 : f32 to vector<1x8xf32>
    %337 = arith.addf %324, %336 : vector<1x8xf32>
    %cst_145 = arith.constant 1.000000e+00 : f32
    %338 = vector.broadcast %cst_145 : f32 to vector<1x8xf32>
    %339 = arith.select %328, %337, %338 : vector<1x8xi1>, vector<1x8xf32>
    %340 = arith.select %326, %335, %339 : vector<1x8xi1>, vector<1x8xf32>
    %341 = arith.divf %333, %340 : vector<1x8xf32>
    %cst_146 = arith.constant 0.785398185 : f32
    %cst_147 = arith.constant 0.000000e+00 : f32
    %342 = vector.broadcast %cst_146 : f32 to vector<1x8xf32>
    %343 = vector.broadcast %cst_147 : f32 to vector<1x8xf32>
    %344 = arith.select %328, %342, %343 : vector<1x8xi1>, vector<1x8xf32>
    %cst_148 = arith.constant 1.57079637 : f32
    %345 = vector.broadcast %cst_148 : f32 to vector<1x8xf32>
    %346 = arith.select %326, %345, %344 : vector<1x8xi1>, vector<1x8xf32>
    %347 = arith.mulf %341, %341 : vector<1x8xf32>
    %cst_149 = arith.constant 0.0805374458 : f32
    %348 = vector.broadcast %cst_149 : f32 to vector<1x8xf32>
    %349 = arith.mulf %348, %347 : vector<1x8xf32>
    %cst_150 = arith.constant 0.138776854 : f32
    %350 = vector.broadcast %cst_150 : f32 to vector<1x8xf32>
    %351 = arith.subf %349, %350 : vector<1x8xf32>
    %352 = arith.mulf %351, %347 : vector<1x8xf32>
    %cst_151 = arith.constant 0.199777111 : f32
    %353 = vector.broadcast %cst_151 : f32 to vector<1x8xf32>
    %354 = arith.addf %352, %353 : vector<1x8xf32>
    %355 = arith.mulf %354, %347 : vector<1x8xf32>
    %cst_152 = arith.constant 0.333329499 : f32
    %356 = vector.broadcast %cst_152 : f32 to vector<1x8xf32>
    %357 = arith.subf %355, %356 : vector<1x8xf32>
    %358 = arith.addf %346, %341 : vector<1x8xf32>
    %359 = arith.mulf %341, %347 : vector<1x8xf32>
    %360 = arith.mulf %359, %357 : vector<1x8xf32>
    %361 = arith.addf %358, %360 : vector<1x8xf32>
    %362 = arith.mulf %323, %361 : vector<1x8xf32>
    %363 = arith.mulf %318, %318 : vector<1x8xf32>
    %cst_153 = arith.constant 0.000000e+00 : f32
    %364 = vector.broadcast %cst_153 : f32 to vector<1x8xf32>
    %365 = arith.cmpf olt, %363, %364 : vector<1x8xf32>
    %cst_154 = arith.constant -1.000000e+00 : f32
    %cst_155 = arith.constant 1.000000e+00 : f32
    %366 = vector.broadcast %cst_154 : f32 to vector<1x8xf32>
    %367 = vector.broadcast %cst_155 : f32 to vector<1x8xf32>
    %368 = arith.select %365, %366, %367 : vector<1x8xi1>, vector<1x8xf32>
    %369 = math.absf %363 : vector<1x8xf32>
    %cst_156 = arith.constant 2.41421366 : f32
    %370 = vector.broadcast %cst_156 : f32 to vector<1x8xf32>
    %371 = arith.cmpf ogt, %369, %370 : vector<1x8xf32>
    %cst_157 = arith.constant 0.414213568 : f32
    %372 = vector.broadcast %cst_157 : f32 to vector<1x8xf32>
    %373 = arith.cmpf ogt, %369, %372 : vector<1x8xf32>
    %cst_158 = arith.constant 1.000000e+00 : f32
    %374 = vector.broadcast %cst_158 : f32 to vector<1x8xf32>
    %375 = arith.subf %369, %374 : vector<1x8xf32>
    %376 = arith.select %373, %375, %369 : vector<1x8xi1>, vector<1x8xf32>
    %cst_159 = arith.constant -1.000000e+00 : f32
    %377 = vector.broadcast %cst_159 : f32 to vector<1x8xf32>
    %378 = arith.select %371, %377, %376 : vector<1x8xi1>, vector<1x8xf32>
    %cst_160 = arith.constant 1.000000e-30 : f32
    %379 = vector.broadcast %cst_160 : f32 to vector<1x8xf32>
    %380 = arith.maximumf %369, %379 : vector<1x8xf32>
    %cst_161 = arith.constant 1.000000e+00 : f32
    %381 = vector.broadcast %cst_161 : f32 to vector<1x8xf32>
    %382 = arith.addf %369, %381 : vector<1x8xf32>
    %cst_162 = arith.constant 1.000000e+00 : f32
    %383 = vector.broadcast %cst_162 : f32 to vector<1x8xf32>
    %384 = arith.select %373, %382, %383 : vector<1x8xi1>, vector<1x8xf32>
    %385 = arith.select %371, %380, %384 : vector<1x8xi1>, vector<1x8xf32>
    %386 = arith.divf %378, %385 : vector<1x8xf32>
    %cst_163 = arith.constant 0.785398185 : f32
    %cst_164 = arith.constant 0.000000e+00 : f32
    %387 = vector.broadcast %cst_163 : f32 to vector<1x8xf32>
    %388 = vector.broadcast %cst_164 : f32 to vector<1x8xf32>
    %389 = arith.select %373, %387, %388 : vector<1x8xi1>, vector<1x8xf32>
    %cst_165 = arith.constant 1.57079637 : f32
    %390 = vector.broadcast %cst_165 : f32 to vector<1x8xf32>
    %391 = arith.select %371, %390, %389 : vector<1x8xi1>, vector<1x8xf32>
    %392 = arith.mulf %386, %386 : vector<1x8xf32>
    %cst_166 = arith.constant 0.0805374458 : f32
    %393 = vector.broadcast %cst_166 : f32 to vector<1x8xf32>
    %394 = arith.mulf %393, %392 : vector<1x8xf32>
    %cst_167 = arith.constant 0.138776854 : f32
    %395 = vector.broadcast %cst_167 : f32 to vector<1x8xf32>
    %396 = arith.subf %394, %395 : vector<1x8xf32>
    %397 = arith.mulf %396, %392 : vector<1x8xf32>
    %cst_168 = arith.constant 0.199777111 : f32
    %398 = vector.broadcast %cst_168 : f32 to vector<1x8xf32>
    %399 = arith.addf %397, %398 : vector<1x8xf32>
    %400 = arith.mulf %399, %392 : vector<1x8xf32>
    %cst_169 = arith.constant 0.333329499 : f32
    %401 = vector.broadcast %cst_169 : f32 to vector<1x8xf32>
    %402 = arith.subf %400, %401 : vector<1x8xf32>
    %403 = arith.addf %391, %386 : vector<1x8xf32>
    %404 = arith.mulf %386, %392 : vector<1x8xf32>
    %405 = arith.mulf %404, %402 : vector<1x8xf32>
    %406 = arith.addf %403, %405 : vector<1x8xf32>
    %407 = arith.mulf %368, %406 : vector<1x8xf32>
    %cst_170 = arith.constant dense<0.000000e+00> : vector<1x32xf32>
    %408 = tpu.matmul %362, %2, %cst_170 {dimension_numbers = #tpu.dot_dimension_numbers<[1], [0], [0], [1], [0, 0, 1, 1], [], []>} : vector<1x8xf32>, vector<8x32xf32>, vector<1x32xf32> -> vector<1x32xf32>
    %cst_171 = arith.constant dense<0.000000e+00> : vector<1x32xf32>
    %409 = tpu.matmul %407, %3, %cst_171 {dimension_numbers = #tpu.dot_dimension_numbers<[1], [0], [0], [1], [0, 0, 1, 1], [], []>} : vector<1x8xf32>, vector<8x32xf32>, vector<1x32xf32> -> vector<1x32xf32>
    %410 = arith.addf %408, %409 : vector<1x32xf32>
    %c1 = arith.constant 1 : index
    %c0_172 = arith.constant 0 : index
    %411 = vector.load %arg3[%c1, %c0_172] : memref<8x32xf32, #tpu.memory_space<vmem>>, vector<1x32xf32>
    %412 = arith.addf %410, %411 : vector<1x32xf32>
    %cst_173 = arith.constant 0.000000e+00 : f32
    %413 = vector.broadcast %cst_173 : f32 to vector<1x32xf32>
    %414 = arith.subf %413, %412 : vector<1x32xf32>
    %415 = math.exp %414 : vector<1x32xf32>
    %cst_174 = arith.constant 1.000000e+00 : f32
    %416 = vector.broadcast %cst_174 : f32 to vector<1x32xf32>
    %417 = arith.addf %416, %415 : vector<1x32xf32>
    %cst_175 = arith.constant 1.000000e+00 : f32
    %418 = vector.broadcast %cst_175 : f32 to vector<1x32xf32>
    %419 = arith.divf %418, %417 : vector<1x32xf32>
    %420 = vector.extract_strided_slice %419 {offsets = [0, 0], sizes = [1, 8], strides = [1, 1]} : vector<1x32xf32> to vector<1x8xf32>
    %421 = vector.extract_strided_slice %419 {offsets = [0, 8], sizes = [1, 8], strides = [1, 1]} : vector<1x32xf32> to vector<1x8xf32>
    %422 = vector.extract_strided_slice %419 {offsets = [0, 16], sizes = [1, 8], strides = [1, 1]} : vector<1x32xf32> to vector<1x8xf32>
    %423 = vector.extract_strided_slice %419 {offsets = [0, 24], sizes = [1, 8], strides = [1, 1]} : vector<1x32xf32> to vector<1x8xf32>
    %cst_176 = arith.constant 2.000000e+00 : f32
    %424 = vector.broadcast %cst_176 : f32 to vector<1x8xf32>
    %425 = arith.mulf %424, %423 : vector<1x8xf32>
    %cst_177 = arith.constant 1.000000e+00 : f32
    %426 = vector.broadcast %cst_177 : f32 to vector<1x8xf32>
    %427 = arith.subf %425, %426 : vector<1x8xf32>
    %428 = arith.mulf %223, %420 : vector<1x8xf32>
    %429 = arith.mulf %421, %427 : vector<1x8xf32>
    %430 = arith.addf %428, %429 : vector<1x8xf32>
    %431 = math.tanh %430 : vector<1x8xf32>
    %432 = arith.mulf %422, %431 : vector<1x8xf32>
    %cst_178 = arith.constant 0.000000e+00 : f32
    %433 = vector.broadcast %cst_178 : f32 to vector<1x8xf32>
    %434 = arith.cmpf olt, %432, %433 : vector<1x8xf32>
    %cst_179 = arith.constant -1.000000e+00 : f32
    %cst_180 = arith.constant 1.000000e+00 : f32
    %435 = vector.broadcast %cst_179 : f32 to vector<1x8xf32>
    %436 = vector.broadcast %cst_180 : f32 to vector<1x8xf32>
    %437 = arith.select %434, %435, %436 : vector<1x8xi1>, vector<1x8xf32>
    %438 = math.absf %432 : vector<1x8xf32>
    %cst_181 = arith.constant 2.41421366 : f32
    %439 = vector.broadcast %cst_181 : f32 to vector<1x8xf32>
    %440 = arith.cmpf ogt, %438, %439 : vector<1x8xf32>
    %cst_182 = arith.constant 0.414213568 : f32
    %441 = vector.broadcast %cst_182 : f32 to vector<1x8xf32>
    %442 = arith.cmpf ogt, %438, %441 : vector<1x8xf32>
    %cst_183 = arith.constant 1.000000e+00 : f32
    %443 = vector.broadcast %cst_183 : f32 to vector<1x8xf32>
    %444 = arith.subf %438, %443 : vector<1x8xf32>
    %445 = arith.select %442, %444, %438 : vector<1x8xi1>, vector<1x8xf32>
    %cst_184 = arith.constant -1.000000e+00 : f32
    %446 = vector.broadcast %cst_184 : f32 to vector<1x8xf32>
    %447 = arith.select %440, %446, %445 : vector<1x8xi1>, vector<1x8xf32>
    %cst_185 = arith.constant 1.000000e-30 : f32
    %448 = vector.broadcast %cst_185 : f32 to vector<1x8xf32>
    %449 = arith.maximumf %438, %448 : vector<1x8xf32>
    %cst_186 = arith.constant 1.000000e+00 : f32
    %450 = vector.broadcast %cst_186 : f32 to vector<1x8xf32>
    %451 = arith.addf %438, %450 : vector<1x8xf32>
    %cst_187 = arith.constant 1.000000e+00 : f32
    %452 = vector.broadcast %cst_187 : f32 to vector<1x8xf32>
    %453 = arith.select %442, %451, %452 : vector<1x8xi1>, vector<1x8xf32>
    %454 = arith.select %440, %449, %453 : vector<1x8xi1>, vector<1x8xf32>
    %455 = arith.divf %447, %454 : vector<1x8xf32>
    %cst_188 = arith.constant 0.785398185 : f32
    %cst_189 = arith.constant 0.000000e+00 : f32
    %456 = vector.broadcast %cst_188 : f32 to vector<1x8xf32>
    %457 = vector.broadcast %cst_189 : f32 to vector<1x8xf32>
    %458 = arith.select %442, %456, %457 : vector<1x8xi1>, vector<1x8xf32>
    %cst_190 = arith.constant 1.57079637 : f32
    %459 = vector.broadcast %cst_190 : f32 to vector<1x8xf32>
    %460 = arith.select %440, %459, %458 : vector<1x8xi1>, vector<1x8xf32>
    %461 = arith.mulf %455, %455 : vector<1x8xf32>
    %cst_191 = arith.constant 0.0805374458 : f32
    %462 = vector.broadcast %cst_191 : f32 to vector<1x8xf32>
    %463 = arith.mulf %462, %461 : vector<1x8xf32>
    %cst_192 = arith.constant 0.138776854 : f32
    %464 = vector.broadcast %cst_192 : f32 to vector<1x8xf32>
    %465 = arith.subf %463, %464 : vector<1x8xf32>
    %466 = arith.mulf %465, %461 : vector<1x8xf32>
    %cst_193 = arith.constant 0.199777111 : f32
    %467 = vector.broadcast %cst_193 : f32 to vector<1x8xf32>
    %468 = arith.addf %466, %467 : vector<1x8xf32>
    %469 = arith.mulf %468, %461 : vector<1x8xf32>
    %cst_194 = arith.constant 0.333329499 : f32
    %470 = vector.broadcast %cst_194 : f32 to vector<1x8xf32>
    %471 = arith.subf %469, %470 : vector<1x8xf32>
    %472 = arith.addf %460, %455 : vector<1x8xf32>
    %473 = arith.mulf %455, %461 : vector<1x8xf32>
    %474 = arith.mulf %473, %471 : vector<1x8xf32>
    %475 = arith.addf %472, %474 : vector<1x8xf32>
    %476 = arith.mulf %437, %475 : vector<1x8xf32>
    %cst_195 = arith.constant dense<0.000000e+00> : vector<1x8xf32>
    %477 = tpu.matmul %476, %5, %cst_195 {dimension_numbers = #tpu.dot_dimension_numbers<[1], [0], [0], [1], [0, 0, 1, 1], [], []>} : vector<1x8xf32>, vector<8x8xf32>, vector<1x8xf32> -> vector<1x8xf32>
    %478 = arith.mulf %432, %432 : vector<1x8xf32>
    %cst_196 = arith.constant 0.000000e+00 : f32
    %479 = vector.broadcast %cst_196 : f32 to vector<1x8xf32>
    %480 = arith.cmpf olt, %478, %479 : vector<1x8xf32>
    %cst_197 = arith.constant -1.000000e+00 : f32
    %cst_198 = arith.constant 1.000000e+00 : f32
    %481 = vector.broadcast %cst_197 : f32 to vector<1x8xf32>
    %482 = vector.broadcast %cst_198 : f32 to vector<1x8xf32>
    %483 = arith.select %480, %481, %482 : vector<1x8xi1>, vector<1x8xf32>
    %484 = math.absf %478 : vector<1x8xf32>
    %cst_199 = arith.constant 2.41421366 : f32
    %485 = vector.broadcast %cst_199 : f32 to vector<1x8xf32>
    %486 = arith.cmpf ogt, %484, %485 : vector<1x8xf32>
    %cst_200 = arith.constant 0.414213568 : f32
    %487 = vector.broadcast %cst_200 : f32 to vector<1x8xf32>
    %488 = arith.cmpf ogt, %484, %487 : vector<1x8xf32>
    %cst_201 = arith.constant 1.000000e+00 : f32
    %489 = vector.broadcast %cst_201 : f32 to vector<1x8xf32>
    %490 = arith.subf %484, %489 : vector<1x8xf32>
    %491 = arith.select %488, %490, %484 : vector<1x8xi1>, vector<1x8xf32>
    %cst_202 = arith.constant -1.000000e+00 : f32
    %492 = vector.broadcast %cst_202 : f32 to vector<1x8xf32>
    %493 = arith.select %486, %492, %491 : vector<1x8xi1>, vector<1x8xf32>
    %cst_203 = arith.constant 1.000000e-30 : f32
    %494 = vector.broadcast %cst_203 : f32 to vector<1x8xf32>
    %495 = arith.maximumf %484, %494 : vector<1x8xf32>
    %cst_204 = arith.constant 1.000000e+00 : f32
    %496 = vector.broadcast %cst_204 : f32 to vector<1x8xf32>
    %497 = arith.addf %484, %496 : vector<1x8xf32>
    %cst_205 = arith.constant 1.000000e+00 : f32
    %498 = vector.broadcast %cst_205 : f32 to vector<1x8xf32>
    %499 = arith.select %488, %497, %498 : vector<1x8xi1>, vector<1x8xf32>
    %500 = arith.select %486, %495, %499 : vector<1x8xi1>, vector<1x8xf32>
    %501 = arith.divf %493, %500 : vector<1x8xf32>
    %cst_206 = arith.constant 0.785398185 : f32
    %cst_207 = arith.constant 0.000000e+00 : f32
    %502 = vector.broadcast %cst_206 : f32 to vector<1x8xf32>
    %503 = vector.broadcast %cst_207 : f32 to vector<1x8xf32>
    %504 = arith.select %488, %502, %503 : vector<1x8xi1>, vector<1x8xf32>
    %cst_208 = arith.constant 1.57079637 : f32
    %505 = vector.broadcast %cst_208 : f32 to vector<1x8xf32>
    %506 = arith.select %486, %505, %504 : vector<1x8xi1>, vector<1x8xf32>
    %507 = arith.mulf %501, %501 : vector<1x8xf32>
    %cst_209 = arith.constant 0.0805374458 : f32
    %508 = vector.broadcast %cst_209 : f32 to vector<1x8xf32>
    %509 = arith.mulf %508, %507 : vector<1x8xf32>
    %cst_210 = arith.constant 0.138776854 : f32
    %510 = vector.broadcast %cst_210 : f32 to vector<1x8xf32>
    %511 = arith.subf %509, %510 : vector<1x8xf32>
    %512 = arith.mulf %511, %507 : vector<1x8xf32>
    %cst_211 = arith.constant 0.199777111 : f32
    %513 = vector.broadcast %cst_211 : f32 to vector<1x8xf32>
    %514 = arith.addf %512, %513 : vector<1x8xf32>
    %515 = arith.mulf %514, %507 : vector<1x8xf32>
    %cst_212 = arith.constant 0.333329499 : f32
    %516 = vector.broadcast %cst_212 : f32 to vector<1x8xf32>
    %517 = arith.subf %515, %516 : vector<1x8xf32>
    %518 = arith.addf %506, %501 : vector<1x8xf32>
    %519 = arith.mulf %501, %507 : vector<1x8xf32>
    %520 = arith.mulf %519, %517 : vector<1x8xf32>
    %521 = arith.addf %518, %520 : vector<1x8xf32>
    %522 = arith.mulf %483, %521 : vector<1x8xf32>
    %cst_213 = arith.constant dense<0.000000e+00> : vector<1x8xf32>
    %523 = tpu.matmul %522, %6, %cst_213 {dimension_numbers = #tpu.dot_dimension_numbers<[1], [0], [0], [1], [0, 0, 1, 1], [], []>} : vector<1x8xf32>, vector<8x8xf32>, vector<1x8xf32> -> vector<1x8xf32>
    %524 = arith.addf %477, %523 : vector<1x8xf32>
    %525 = arith.addf %524, %7 : vector<1x8xf32>
    %cst_214 = arith.constant 0.000000e+00 : f32
    %526 = vector.broadcast %cst_214 : f32 to vector<1x8xf32>
    %527 = arith.cmpf olt, %525, %526 : vector<1x8xf32>
    %cst_215 = arith.constant -1.000000e+00 : f32
    %cst_216 = arith.constant 1.000000e+00 : f32
    %528 = vector.broadcast %cst_215 : f32 to vector<1x8xf32>
    %529 = vector.broadcast %cst_216 : f32 to vector<1x8xf32>
    %530 = arith.select %527, %528, %529 : vector<1x8xi1>, vector<1x8xf32>
    %531 = math.absf %525 : vector<1x8xf32>
    %cst_217 = arith.constant 2.41421366 : f32
    %532 = vector.broadcast %cst_217 : f32 to vector<1x8xf32>
    %533 = arith.cmpf ogt, %531, %532 : vector<1x8xf32>
    %cst_218 = arith.constant 0.414213568 : f32
    %534 = vector.broadcast %cst_218 : f32 to vector<1x8xf32>
    %535 = arith.cmpf ogt, %531, %534 : vector<1x8xf32>
    %cst_219 = arith.constant 1.000000e+00 : f32
    %536 = vector.broadcast %cst_219 : f32 to vector<1x8xf32>
    %537 = arith.subf %531, %536 : vector<1x8xf32>
    %538 = arith.select %535, %537, %531 : vector<1x8xi1>, vector<1x8xf32>
    %cst_220 = arith.constant -1.000000e+00 : f32
    %539 = vector.broadcast %cst_220 : f32 to vector<1x8xf32>
    %540 = arith.select %533, %539, %538 : vector<1x8xi1>, vector<1x8xf32>
    %cst_221 = arith.constant 1.000000e-30 : f32
    %541 = vector.broadcast %cst_221 : f32 to vector<1x8xf32>
    %542 = arith.maximumf %531, %541 : vector<1x8xf32>
    %cst_222 = arith.constant 1.000000e+00 : f32
    %543 = vector.broadcast %cst_222 : f32 to vector<1x8xf32>
    %544 = arith.addf %531, %543 : vector<1x8xf32>
    %cst_223 = arith.constant 1.000000e+00 : f32
    %545 = vector.broadcast %cst_223 : f32 to vector<1x8xf32>
    %546 = arith.select %535, %544, %545 : vector<1x8xi1>, vector<1x8xf32>
    %547 = arith.select %533, %542, %546 : vector<1x8xi1>, vector<1x8xf32>
    %548 = arith.divf %540, %547 : vector<1x8xf32>
    %cst_224 = arith.constant 0.785398185 : f32
    %cst_225 = arith.constant 0.000000e+00 : f32
    %549 = vector.broadcast %cst_224 : f32 to vector<1x8xf32>
    %550 = vector.broadcast %cst_225 : f32 to vector<1x8xf32>
    %551 = arith.select %535, %549, %550 : vector<1x8xi1>, vector<1x8xf32>
    %cst_226 = arith.constant 1.57079637 : f32
    %552 = vector.broadcast %cst_226 : f32 to vector<1x8xf32>
    %553 = arith.select %533, %552, %551 : vector<1x8xi1>, vector<1x8xf32>
    %554 = arith.mulf %548, %548 : vector<1x8xf32>
    %cst_227 = arith.constant 0.0805374458 : f32
    %555 = vector.broadcast %cst_227 : f32 to vector<1x8xf32>
    %556 = arith.mulf %555, %554 : vector<1x8xf32>
    %cst_228 = arith.constant 0.138776854 : f32
    %557 = vector.broadcast %cst_228 : f32 to vector<1x8xf32>
    %558 = arith.subf %556, %557 : vector<1x8xf32>
    %559 = arith.mulf %558, %554 : vector<1x8xf32>
    %cst_229 = arith.constant 0.199777111 : f32
    %560 = vector.broadcast %cst_229 : f32 to vector<1x8xf32>
    %561 = arith.addf %559, %560 : vector<1x8xf32>
    %562 = arith.mulf %561, %554 : vector<1x8xf32>
    %cst_230 = arith.constant 0.333329499 : f32
    %563 = vector.broadcast %cst_230 : f32 to vector<1x8xf32>
    %564 = arith.subf %562, %563 : vector<1x8xf32>
    %565 = arith.addf %553, %548 : vector<1x8xf32>
    %566 = arith.mulf %548, %554 : vector<1x8xf32>
    %567 = arith.mulf %566, %564 : vector<1x8xf32>
    %568 = arith.addf %565, %567 : vector<1x8xf32>
    %569 = arith.mulf %530, %568 : vector<1x8xf32>
    %570 = arith.mulf %525, %525 : vector<1x8xf32>
    %cst_231 = arith.constant 0.000000e+00 : f32
    %571 = vector.broadcast %cst_231 : f32 to vector<1x8xf32>
    %572 = arith.cmpf olt, %570, %571 : vector<1x8xf32>
    %cst_232 = arith.constant -1.000000e+00 : f32
    %cst_233 = arith.constant 1.000000e+00 : f32
    %573 = vector.broadcast %cst_232 : f32 to vector<1x8xf32>
    %574 = vector.broadcast %cst_233 : f32 to vector<1x8xf32>
    %575 = arith.select %572, %573, %574 : vector<1x8xi1>, vector<1x8xf32>
    %576 = math.absf %570 : vector<1x8xf32>
    %cst_234 = arith.constant 2.41421366 : f32
    %577 = vector.broadcast %cst_234 : f32 to vector<1x8xf32>
    %578 = arith.cmpf ogt, %576, %577 : vector<1x8xf32>
    %cst_235 = arith.constant 0.414213568 : f32
    %579 = vector.broadcast %cst_235 : f32 to vector<1x8xf32>
    %580 = arith.cmpf ogt, %576, %579 : vector<1x8xf32>
    %cst_236 = arith.constant 1.000000e+00 : f32
    %581 = vector.broadcast %cst_236 : f32 to vector<1x8xf32>
    %582 = arith.subf %576, %581 : vector<1x8xf32>
    %583 = arith.select %580, %582, %576 : vector<1x8xi1>, vector<1x8xf32>
    %cst_237 = arith.constant -1.000000e+00 : f32
    %584 = vector.broadcast %cst_237 : f32 to vector<1x8xf32>
    %585 = arith.select %578, %584, %583 : vector<1x8xi1>, vector<1x8xf32>
    %cst_238 = arith.constant 1.000000e-30 : f32
    %586 = vector.broadcast %cst_238 : f32 to vector<1x8xf32>
    %587 = arith.maximumf %576, %586 : vector<1x8xf32>
    %cst_239 = arith.constant 1.000000e+00 : f32
    %588 = vector.broadcast %cst_239 : f32 to vector<1x8xf32>
    %589 = arith.addf %576, %588 : vector<1x8xf32>
    %cst_240 = arith.constant 1.000000e+00 : f32
    %590 = vector.broadcast %cst_240 : f32 to vector<1x8xf32>
    %591 = arith.select %580, %589, %590 : vector<1x8xi1>, vector<1x8xf32>
    %592 = arith.select %578, %587, %591 : vector<1x8xi1>, vector<1x8xf32>
    %593 = arith.divf %585, %592 : vector<1x8xf32>
    %cst_241 = arith.constant 0.785398185 : f32
    %cst_242 = arith.constant 0.000000e+00 : f32
    %594 = vector.broadcast %cst_241 : f32 to vector<1x8xf32>
    %595 = vector.broadcast %cst_242 : f32 to vector<1x8xf32>
    %596 = arith.select %580, %594, %595 : vector<1x8xi1>, vector<1x8xf32>
    %cst_243 = arith.constant 1.57079637 : f32
    %597 = vector.broadcast %cst_243 : f32 to vector<1x8xf32>
    %598 = arith.select %578, %597, %596 : vector<1x8xi1>, vector<1x8xf32>
    %599 = arith.mulf %593, %593 : vector<1x8xf32>
    %cst_244 = arith.constant 0.0805374458 : f32
    %600 = vector.broadcast %cst_244 : f32 to vector<1x8xf32>
    %601 = arith.mulf %600, %599 : vector<1x8xf32>
    %cst_245 = arith.constant 0.138776854 : f32
    %602 = vector.broadcast %cst_245 : f32 to vector<1x8xf32>
    %603 = arith.subf %601, %602 : vector<1x8xf32>
    %604 = arith.mulf %603, %599 : vector<1x8xf32>
    %cst_246 = arith.constant 0.199777111 : f32
    %605 = vector.broadcast %cst_246 : f32 to vector<1x8xf32>
    %606 = arith.addf %604, %605 : vector<1x8xf32>
    %607 = arith.mulf %606, %599 : vector<1x8xf32>
    %cst_247 = arith.constant 0.333329499 : f32
    %608 = vector.broadcast %cst_247 : f32 to vector<1x8xf32>
    %609 = arith.subf %607, %608 : vector<1x8xf32>
    %610 = arith.addf %598, %593 : vector<1x8xf32>
    %611 = arith.mulf %593, %599 : vector<1x8xf32>
    %612 = arith.mulf %611, %609 : vector<1x8xf32>
    %613 = arith.addf %610, %612 : vector<1x8xf32>
    %614 = arith.mulf %575, %613 : vector<1x8xf32>
    %cst_248 = arith.constant dense<0.000000e+00> : vector<1x32xf32>
    %615 = tpu.matmul %569, %2, %cst_248 {dimension_numbers = #tpu.dot_dimension_numbers<[1], [0], [0], [1], [0, 0, 1, 1], [], []>} : vector<1x8xf32>, vector<8x32xf32>, vector<1x32xf32> -> vector<1x32xf32>
    %cst_249 = arith.constant dense<0.000000e+00> : vector<1x32xf32>
    %616 = tpu.matmul %614, %3, %cst_249 {dimension_numbers = #tpu.dot_dimension_numbers<[1], [0], [0], [1], [0, 0, 1, 1], [], []>} : vector<1x8xf32>, vector<8x32xf32>, vector<1x32xf32> -> vector<1x32xf32>
    %617 = arith.addf %615, %616 : vector<1x32xf32>
    %c2 = arith.constant 2 : index
    %c0_250 = arith.constant 0 : index
    %618 = vector.load %arg3[%c2, %c0_250] : memref<8x32xf32, #tpu.memory_space<vmem>>, vector<1x32xf32>
    %619 = arith.addf %617, %618 : vector<1x32xf32>
    %cst_251 = arith.constant 0.000000e+00 : f32
    %620 = vector.broadcast %cst_251 : f32 to vector<1x32xf32>
    %621 = arith.subf %620, %619 : vector<1x32xf32>
    %622 = math.exp %621 : vector<1x32xf32>
    %cst_252 = arith.constant 1.000000e+00 : f32
    %623 = vector.broadcast %cst_252 : f32 to vector<1x32xf32>
    %624 = arith.addf %623, %622 : vector<1x32xf32>
    %cst_253 = arith.constant 1.000000e+00 : f32
    %625 = vector.broadcast %cst_253 : f32 to vector<1x32xf32>
    %626 = arith.divf %625, %624 : vector<1x32xf32>
    %627 = vector.extract_strided_slice %626 {offsets = [0, 0], sizes = [1, 8], strides = [1, 1]} : vector<1x32xf32> to vector<1x8xf32>
    %628 = vector.extract_strided_slice %626 {offsets = [0, 8], sizes = [1, 8], strides = [1, 1]} : vector<1x32xf32> to vector<1x8xf32>
    %629 = vector.extract_strided_slice %626 {offsets = [0, 16], sizes = [1, 8], strides = [1, 1]} : vector<1x32xf32> to vector<1x8xf32>
    %630 = vector.extract_strided_slice %626 {offsets = [0, 24], sizes = [1, 8], strides = [1, 1]} : vector<1x32xf32> to vector<1x8xf32>
    %cst_254 = arith.constant 2.000000e+00 : f32
    %631 = vector.broadcast %cst_254 : f32 to vector<1x8xf32>
    %632 = arith.mulf %631, %630 : vector<1x8xf32>
    %cst_255 = arith.constant 1.000000e+00 : f32
    %633 = vector.broadcast %cst_255 : f32 to vector<1x8xf32>
    %634 = arith.subf %632, %633 : vector<1x8xf32>
    %635 = arith.mulf %430, %627 : vector<1x8xf32>
    %636 = arith.mulf %628, %634 : vector<1x8xf32>
    %637 = arith.addf %635, %636 : vector<1x8xf32>
    %638 = math.tanh %637 : vector<1x8xf32>
    %639 = arith.mulf %629, %638 : vector<1x8xf32>
    %cst_256 = arith.constant 0.000000e+00 : f32
    %640 = vector.broadcast %cst_256 : f32 to vector<1x8xf32>
    %641 = arith.cmpf olt, %639, %640 : vector<1x8xf32>
    %cst_257 = arith.constant -1.000000e+00 : f32
    %cst_258 = arith.constant 1.000000e+00 : f32
    %642 = vector.broadcast %cst_257 : f32 to vector<1x8xf32>
    %643 = vector.broadcast %cst_258 : f32 to vector<1x8xf32>
    %644 = arith.select %641, %642, %643 : vector<1x8xi1>, vector<1x8xf32>
    %645 = math.absf %639 : vector<1x8xf32>
    %cst_259 = arith.constant 2.41421366 : f32
    %646 = vector.broadcast %cst_259 : f32 to vector<1x8xf32>
    %647 = arith.cmpf ogt, %645, %646 : vector<1x8xf32>
    %cst_260 = arith.constant 0.414213568 : f32
    %648 = vector.broadcast %cst_260 : f32 to vector<1x8xf32>
    %649 = arith.cmpf ogt, %645, %648 : vector<1x8xf32>
    %cst_261 = arith.constant 1.000000e+00 : f32
    %650 = vector.broadcast %cst_261 : f32 to vector<1x8xf32>
    %651 = arith.subf %645, %650 : vector<1x8xf32>
    %652 = arith.select %649, %651, %645 : vector<1x8xi1>, vector<1x8xf32>
    %cst_262 = arith.constant -1.000000e+00 : f32
    %653 = vector.broadcast %cst_262 : f32 to vector<1x8xf32>
    %654 = arith.select %647, %653, %652 : vector<1x8xi1>, vector<1x8xf32>
    %cst_263 = arith.constant 1.000000e-30 : f32
    %655 = vector.broadcast %cst_263 : f32 to vector<1x8xf32>
    %656 = arith.maximumf %645, %655 : vector<1x8xf32>
    %cst_264 = arith.constant 1.000000e+00 : f32
    %657 = vector.broadcast %cst_264 : f32 to vector<1x8xf32>
    %658 = arith.addf %645, %657 : vector<1x8xf32>
    %cst_265 = arith.constant 1.000000e+00 : f32
    %659 = vector.broadcast %cst_265 : f32 to vector<1x8xf32>
    %660 = arith.select %649, %658, %659 : vector<1x8xi1>, vector<1x8xf32>
    %661 = arith.select %647, %656, %660 : vector<1x8xi1>, vector<1x8xf32>
    %662 = arith.divf %654, %661 : vector<1x8xf32>
    %cst_266 = arith.constant 0.785398185 : f32
    %cst_267 = arith.constant 0.000000e+00 : f32
    %663 = vector.broadcast %cst_266 : f32 to vector<1x8xf32>
    %664 = vector.broadcast %cst_267 : f32 to vector<1x8xf32>
    %665 = arith.select %649, %663, %664 : vector<1x8xi1>, vector<1x8xf32>
    %cst_268 = arith.constant 1.57079637 : f32
    %666 = vector.broadcast %cst_268 : f32 to vector<1x8xf32>
    %667 = arith.select %647, %666, %665 : vector<1x8xi1>, vector<1x8xf32>
    %668 = arith.mulf %662, %662 : vector<1x8xf32>
    %cst_269 = arith.constant 0.0805374458 : f32
    %669 = vector.broadcast %cst_269 : f32 to vector<1x8xf32>
    %670 = arith.mulf %669, %668 : vector<1x8xf32>
    %cst_270 = arith.constant 0.138776854 : f32
    %671 = vector.broadcast %cst_270 : f32 to vector<1x8xf32>
    %672 = arith.subf %670, %671 : vector<1x8xf32>
    %673 = arith.mulf %672, %668 : vector<1x8xf32>
    %cst_271 = arith.constant 0.199777111 : f32
    %674 = vector.broadcast %cst_271 : f32 to vector<1x8xf32>
    %675 = arith.addf %673, %674 : vector<1x8xf32>
    %676 = arith.mulf %675, %668 : vector<1x8xf32>
    %cst_272 = arith.constant 0.333329499 : f32
    %677 = vector.broadcast %cst_272 : f32 to vector<1x8xf32>
    %678 = arith.subf %676, %677 : vector<1x8xf32>
    %679 = arith.addf %667, %662 : vector<1x8xf32>
    %680 = arith.mulf %662, %668 : vector<1x8xf32>
    %681 = arith.mulf %680, %678 : vector<1x8xf32>
    %682 = arith.addf %679, %681 : vector<1x8xf32>
    %683 = arith.mulf %644, %682 : vector<1x8xf32>
    %cst_273 = arith.constant dense<0.000000e+00> : vector<1x8xf32>
    %684 = tpu.matmul %683, %5, %cst_273 {dimension_numbers = #tpu.dot_dimension_numbers<[1], [0], [0], [1], [0, 0, 1, 1], [], []>} : vector<1x8xf32>, vector<8x8xf32>, vector<1x8xf32> -> vector<1x8xf32>
    %685 = arith.mulf %639, %639 : vector<1x8xf32>
    %cst_274 = arith.constant 0.000000e+00 : f32
    %686 = vector.broadcast %cst_274 : f32 to vector<1x8xf32>
    %687 = arith.cmpf olt, %685, %686 : vector<1x8xf32>
    %cst_275 = arith.constant -1.000000e+00 : f32
    %cst_276 = arith.constant 1.000000e+00 : f32
    %688 = vector.broadcast %cst_275 : f32 to vector<1x8xf32>
    %689 = vector.broadcast %cst_276 : f32 to vector<1x8xf32>
    %690 = arith.select %687, %688, %689 : vector<1x8xi1>, vector<1x8xf32>
    %691 = math.absf %685 : vector<1x8xf32>
    %cst_277 = arith.constant 2.41421366 : f32
    %692 = vector.broadcast %cst_277 : f32 to vector<1x8xf32>
    %693 = arith.cmpf ogt, %691, %692 : vector<1x8xf32>
    %cst_278 = arith.constant 0.414213568 : f32
    %694 = vector.broadcast %cst_278 : f32 to vector<1x8xf32>
    %695 = arith.cmpf ogt, %691, %694 : vector<1x8xf32>
    %cst_279 = arith.constant 1.000000e+00 : f32
    %696 = vector.broadcast %cst_279 : f32 to vector<1x8xf32>
    %697 = arith.subf %691, %696 : vector<1x8xf32>
    %698 = arith.select %695, %697, %691 : vector<1x8xi1>, vector<1x8xf32>
    %cst_280 = arith.constant -1.000000e+00 : f32
    %699 = vector.broadcast %cst_280 : f32 to vector<1x8xf32>
    %700 = arith.select %693, %699, %698 : vector<1x8xi1>, vector<1x8xf32>
    %cst_281 = arith.constant 1.000000e-30 : f32
    %701 = vector.broadcast %cst_281 : f32 to vector<1x8xf32>
    %702 = arith.maximumf %691, %701 : vector<1x8xf32>
    %cst_282 = arith.constant 1.000000e+00 : f32
    %703 = vector.broadcast %cst_282 : f32 to vector<1x8xf32>
    %704 = arith.addf %691, %703 : vector<1x8xf32>
    %cst_283 = arith.constant 1.000000e+00 : f32
    %705 = vector.broadcast %cst_283 : f32 to vector<1x8xf32>
    %706 = arith.select %695, %704, %705 : vector<1x8xi1>, vector<1x8xf32>
    %707 = arith.select %693, %702, %706 : vector<1x8xi1>, vector<1x8xf32>
    %708 = arith.divf %700, %707 : vector<1x8xf32>
    %cst_284 = arith.constant 0.785398185 : f32
    %cst_285 = arith.constant 0.000000e+00 : f32
    %709 = vector.broadcast %cst_284 : f32 to vector<1x8xf32>
    %710 = vector.broadcast %cst_285 : f32 to vector<1x8xf32>
    %711 = arith.select %695, %709, %710 : vector<1x8xi1>, vector<1x8xf32>
    %cst_286 = arith.constant 1.57079637 : f32
    %712 = vector.broadcast %cst_286 : f32 to vector<1x8xf32>
    %713 = arith.select %693, %712, %711 : vector<1x8xi1>, vector<1x8xf32>
    %714 = arith.mulf %708, %708 : vector<1x8xf32>
    %cst_287 = arith.constant 0.0805374458 : f32
    %715 = vector.broadcast %cst_287 : f32 to vector<1x8xf32>
    %716 = arith.mulf %715, %714 : vector<1x8xf32>
    %cst_288 = arith.constant 0.138776854 : f32
    %717 = vector.broadcast %cst_288 : f32 to vector<1x8xf32>
    %718 = arith.subf %716, %717 : vector<1x8xf32>
    %719 = arith.mulf %718, %714 : vector<1x8xf32>
    %cst_289 = arith.constant 0.199777111 : f32
    %720 = vector.broadcast %cst_289 : f32 to vector<1x8xf32>
    %721 = arith.addf %719, %720 : vector<1x8xf32>
    %722 = arith.mulf %721, %714 : vector<1x8xf32>
    %cst_290 = arith.constant 0.333329499 : f32
    %723 = vector.broadcast %cst_290 : f32 to vector<1x8xf32>
    %724 = arith.subf %722, %723 : vector<1x8xf32>
    %725 = arith.addf %713, %708 : vector<1x8xf32>
    %726 = arith.mulf %708, %714 : vector<1x8xf32>
    %727 = arith.mulf %726, %724 : vector<1x8xf32>
    %728 = arith.addf %725, %727 : vector<1x8xf32>
    %729 = arith.mulf %690, %728 : vector<1x8xf32>
    %cst_291 = arith.constant dense<0.000000e+00> : vector<1x8xf32>
    %730 = tpu.matmul %729, %6, %cst_291 {dimension_numbers = #tpu.dot_dimension_numbers<[1], [0], [0], [1], [0, 0, 1, 1], [], []>} : vector<1x8xf32>, vector<8x8xf32>, vector<1x8xf32> -> vector<1x8xf32>
    %731 = arith.addf %684, %730 : vector<1x8xf32>
    %732 = arith.addf %731, %7 : vector<1x8xf32>
    %cst_292 = arith.constant 0.000000e+00 : f32
    %733 = vector.broadcast %cst_292 : f32 to vector<1x8xf32>
    %734 = arith.cmpf olt, %732, %733 : vector<1x8xf32>
    %cst_293 = arith.constant -1.000000e+00 : f32
    %cst_294 = arith.constant 1.000000e+00 : f32
    %735 = vector.broadcast %cst_293 : f32 to vector<1x8xf32>
    %736 = vector.broadcast %cst_294 : f32 to vector<1x8xf32>
    %737 = arith.select %734, %735, %736 : vector<1x8xi1>, vector<1x8xf32>
    %738 = math.absf %732 : vector<1x8xf32>
    %cst_295 = arith.constant 2.41421366 : f32
    %739 = vector.broadcast %cst_295 : f32 to vector<1x8xf32>
    %740 = arith.cmpf ogt, %738, %739 : vector<1x8xf32>
    %cst_296 = arith.constant 0.414213568 : f32
    %741 = vector.broadcast %cst_296 : f32 to vector<1x8xf32>
    %742 = arith.cmpf ogt, %738, %741 : vector<1x8xf32>
    %cst_297 = arith.constant 1.000000e+00 : f32
    %743 = vector.broadcast %cst_297 : f32 to vector<1x8xf32>
    %744 = arith.subf %738, %743 : vector<1x8xf32>
    %745 = arith.select %742, %744, %738 : vector<1x8xi1>, vector<1x8xf32>
    %cst_298 = arith.constant -1.000000e+00 : f32
    %746 = vector.broadcast %cst_298 : f32 to vector<1x8xf32>
    %747 = arith.select %740, %746, %745 : vector<1x8xi1>, vector<1x8xf32>
    %cst_299 = arith.constant 1.000000e-30 : f32
    %748 = vector.broadcast %cst_299 : f32 to vector<1x8xf32>
    %749 = arith.maximumf %738, %748 : vector<1x8xf32>
    %cst_300 = arith.constant 1.000000e+00 : f32
    %750 = vector.broadcast %cst_300 : f32 to vector<1x8xf32>
    %751 = arith.addf %738, %750 : vector<1x8xf32>
    %cst_301 = arith.constant 1.000000e+00 : f32
    %752 = vector.broadcast %cst_301 : f32 to vector<1x8xf32>
    %753 = arith.select %742, %751, %752 : vector<1x8xi1>, vector<1x8xf32>
    %754 = arith.select %740, %749, %753 : vector<1x8xi1>, vector<1x8xf32>
    %755 = arith.divf %747, %754 : vector<1x8xf32>
    %cst_302 = arith.constant 0.785398185 : f32
    %cst_303 = arith.constant 0.000000e+00 : f32
    %756 = vector.broadcast %cst_302 : f32 to vector<1x8xf32>
    %757 = vector.broadcast %cst_303 : f32 to vector<1x8xf32>
    %758 = arith.select %742, %756, %757 : vector<1x8xi1>, vector<1x8xf32>
    %cst_304 = arith.constant 1.57079637 : f32
    %759 = vector.broadcast %cst_304 : f32 to vector<1x8xf32>
    %760 = arith.select %740, %759, %758 : vector<1x8xi1>, vector<1x8xf32>
    %761 = arith.mulf %755, %755 : vector<1x8xf32>
    %cst_305 = arith.constant 0.0805374458 : f32
    %762 = vector.broadcast %cst_305 : f32 to vector<1x8xf32>
    %763 = arith.mulf %762, %761 : vector<1x8xf32>
    %cst_306 = arith.constant 0.138776854 : f32
    %764 = vector.broadcast %cst_306 : f32 to vector<1x8xf32>
    %765 = arith.subf %763, %764 : vector<1x8xf32>
    %766 = arith.mulf %765, %761 : vector<1x8xf32>
    %cst_307 = arith.constant 0.199777111 : f32
    %767 = vector.broadcast %cst_307 : f32 to vector<1x8xf32>
    %768 = arith.addf %766, %767 : vector<1x8xf32>
    %769 = arith.mulf %768, %761 : vector<1x8xf32>
    %cst_308 = arith.constant 0.333329499 : f32
    %770 = vector.broadcast %cst_308 : f32 to vector<1x8xf32>
    %771 = arith.subf %769, %770 : vector<1x8xf32>
    %772 = arith.addf %760, %755 : vector<1x8xf32>
    %773 = arith.mulf %755, %761 : vector<1x8xf32>
    %774 = arith.mulf %773, %771 : vector<1x8xf32>
    %775 = arith.addf %772, %774 : vector<1x8xf32>
    %776 = arith.mulf %737, %775 : vector<1x8xf32>
    %777 = arith.mulf %732, %732 : vector<1x8xf32>
    %cst_309 = arith.constant 0.000000e+00 : f32
    %778 = vector.broadcast %cst_309 : f32 to vector<1x8xf32>
    %779 = arith.cmpf olt, %777, %778 : vector<1x8xf32>
    %cst_310 = arith.constant -1.000000e+00 : f32
    %cst_311 = arith.constant 1.000000e+00 : f32
    %780 = vector.broadcast %cst_310 : f32 to vector<1x8xf32>
    %781 = vector.broadcast %cst_311 : f32 to vector<1x8xf32>
    %782 = arith.select %779, %780, %781 : vector<1x8xi1>, vector<1x8xf32>
    %783 = math.absf %777 : vector<1x8xf32>
    %cst_312 = arith.constant 2.41421366 : f32
    %784 = vector.broadcast %cst_312 : f32 to vector<1x8xf32>
    %785 = arith.cmpf ogt, %783, %784 : vector<1x8xf32>
    %cst_313 = arith.constant 0.414213568 : f32
    %786 = vector.broadcast %cst_313 : f32 to vector<1x8xf32>
    %787 = arith.cmpf ogt, %783, %786 : vector<1x8xf32>
    %cst_314 = arith.constant 1.000000e+00 : f32
    %788 = vector.broadcast %cst_314 : f32 to vector<1x8xf32>
    %789 = arith.subf %783, %788 : vector<1x8xf32>
    %790 = arith.select %787, %789, %783 : vector<1x8xi1>, vector<1x8xf32>
    %cst_315 = arith.constant -1.000000e+00 : f32
    %791 = vector.broadcast %cst_315 : f32 to vector<1x8xf32>
    %792 = arith.select %785, %791, %790 : vector<1x8xi1>, vector<1x8xf32>
    %cst_316 = arith.constant 1.000000e-30 : f32
    %793 = vector.broadcast %cst_316 : f32 to vector<1x8xf32>
    %794 = arith.maximumf %783, %793 : vector<1x8xf32>
    %cst_317 = arith.constant 1.000000e+00 : f32
    %795 = vector.broadcast %cst_317 : f32 to vector<1x8xf32>
    %796 = arith.addf %783, %795 : vector<1x8xf32>
    %cst_318 = arith.constant 1.000000e+00 : f32
    %797 = vector.broadcast %cst_318 : f32 to vector<1x8xf32>
    %798 = arith.select %787, %796, %797 : vector<1x8xi1>, vector<1x8xf32>
    %799 = arith.select %785, %794, %798 : vector<1x8xi1>, vector<1x8xf32>
    %800 = arith.divf %792, %799 : vector<1x8xf32>
    %cst_319 = arith.constant 0.785398185 : f32
    %cst_320 = arith.constant 0.000000e+00 : f32
    %801 = vector.broadcast %cst_319 : f32 to vector<1x8xf32>
    %802 = vector.broadcast %cst_320 : f32 to vector<1x8xf32>
    %803 = arith.select %787, %801, %802 : vector<1x8xi1>, vector<1x8xf32>
    %cst_321 = arith.constant 1.57079637 : f32
    %804 = vector.broadcast %cst_321 : f32 to vector<1x8xf32>
    %805 = arith.select %785, %804, %803 : vector<1x8xi1>, vector<1x8xf32>
    %806 = arith.mulf %800, %800 : vector<1x8xf32>
    %cst_322 = arith.constant 0.0805374458 : f32
    %807 = vector.broadcast %cst_322 : f32 to vector<1x8xf32>
    %808 = arith.mulf %807, %806 : vector<1x8xf32>
    %cst_323 = arith.constant 0.138776854 : f32
    %809 = vector.broadcast %cst_323 : f32 to vector<1x8xf32>
    %810 = arith.subf %808, %809 : vector<1x8xf32>
    %811 = arith.mulf %810, %806 : vector<1x8xf32>
    %cst_324 = arith.constant 0.199777111 : f32
    %812 = vector.broadcast %cst_324 : f32 to vector<1x8xf32>
    %813 = arith.addf %811, %812 : vector<1x8xf32>
    %814 = arith.mulf %813, %806 : vector<1x8xf32>
    %cst_325 = arith.constant 0.333329499 : f32
    %815 = vector.broadcast %cst_325 : f32 to vector<1x8xf32>
    %816 = arith.subf %814, %815 : vector<1x8xf32>
    %817 = arith.addf %805, %800 : vector<1x8xf32>
    %818 = arith.mulf %800, %806 : vector<1x8xf32>
    %819 = arith.mulf %818, %816 : vector<1x8xf32>
    %820 = arith.addf %817, %819 : vector<1x8xf32>
    %821 = arith.mulf %782, %820 : vector<1x8xf32>
    %cst_326 = arith.constant dense<0.000000e+00> : vector<1x32xf32>
    %822 = tpu.matmul %776, %2, %cst_326 {dimension_numbers = #tpu.dot_dimension_numbers<[1], [0], [0], [1], [0, 0, 1, 1], [], []>} : vector<1x8xf32>, vector<8x32xf32>, vector<1x32xf32> -> vector<1x32xf32>
    %cst_327 = arith.constant dense<0.000000e+00> : vector<1x32xf32>
    %823 = tpu.matmul %821, %3, %cst_327 {dimension_numbers = #tpu.dot_dimension_numbers<[1], [0], [0], [1], [0, 0, 1, 1], [], []>} : vector<1x8xf32>, vector<8x32xf32>, vector<1x32xf32> -> vector<1x32xf32>
    %824 = arith.addf %822, %823 : vector<1x32xf32>
    %c3 = arith.constant 3 : index
    %c0_328 = arith.constant 0 : index
    %825 = vector.load %arg3[%c3, %c0_328] : memref<8x32xf32, #tpu.memory_space<vmem>>, vector<1x32xf32>
    %826 = arith.addf %824, %825 : vector<1x32xf32>
    %cst_329 = arith.constant 0.000000e+00 : f32
    %827 = vector.broadcast %cst_329 : f32 to vector<1x32xf32>
    %828 = arith.subf %827, %826 : vector<1x32xf32>
    %829 = math.exp %828 : vector<1x32xf32>
    %cst_330 = arith.constant 1.000000e+00 : f32
    %830 = vector.broadcast %cst_330 : f32 to vector<1x32xf32>
    %831 = arith.addf %830, %829 : vector<1x32xf32>
    %cst_331 = arith.constant 1.000000e+00 : f32
    %832 = vector.broadcast %cst_331 : f32 to vector<1x32xf32>
    %833 = arith.divf %832, %831 : vector<1x32xf32>
    %834 = vector.extract_strided_slice %833 {offsets = [0, 0], sizes = [1, 8], strides = [1, 1]} : vector<1x32xf32> to vector<1x8xf32>
    %835 = vector.extract_strided_slice %833 {offsets = [0, 8], sizes = [1, 8], strides = [1, 1]} : vector<1x32xf32> to vector<1x8xf32>
    %836 = vector.extract_strided_slice %833 {offsets = [0, 16], sizes = [1, 8], strides = [1, 1]} : vector<1x32xf32> to vector<1x8xf32>
    %837 = vector.extract_strided_slice %833 {offsets = [0, 24], sizes = [1, 8], strides = [1, 1]} : vector<1x32xf32> to vector<1x8xf32>
    %cst_332 = arith.constant 2.000000e+00 : f32
    %838 = vector.broadcast %cst_332 : f32 to vector<1x8xf32>
    %839 = arith.mulf %838, %837 : vector<1x8xf32>
    %cst_333 = arith.constant 1.000000e+00 : f32
    %840 = vector.broadcast %cst_333 : f32 to vector<1x8xf32>
    %841 = arith.subf %839, %840 : vector<1x8xf32>
    %842 = arith.mulf %637, %834 : vector<1x8xf32>
    %843 = arith.mulf %835, %841 : vector<1x8xf32>
    %844 = arith.addf %842, %843 : vector<1x8xf32>
    %845 = math.tanh %844 : vector<1x8xf32>
    %846 = arith.mulf %836, %845 : vector<1x8xf32>
    %cst_334 = arith.constant 0.000000e+00 : f32
    %847 = vector.broadcast %cst_334 : f32 to vector<1x8xf32>
    %848 = arith.cmpf olt, %846, %847 : vector<1x8xf32>
    %cst_335 = arith.constant -1.000000e+00 : f32
    %cst_336 = arith.constant 1.000000e+00 : f32
    %849 = vector.broadcast %cst_335 : f32 to vector<1x8xf32>
    %850 = vector.broadcast %cst_336 : f32 to vector<1x8xf32>
    %851 = arith.select %848, %849, %850 : vector<1x8xi1>, vector<1x8xf32>
    %852 = math.absf %846 : vector<1x8xf32>
    %cst_337 = arith.constant 2.41421366 : f32
    %853 = vector.broadcast %cst_337 : f32 to vector<1x8xf32>
    %854 = arith.cmpf ogt, %852, %853 : vector<1x8xf32>
    %cst_338 = arith.constant 0.414213568 : f32
    %855 = vector.broadcast %cst_338 : f32 to vector<1x8xf32>
    %856 = arith.cmpf ogt, %852, %855 : vector<1x8xf32>
    %cst_339 = arith.constant 1.000000e+00 : f32
    %857 = vector.broadcast %cst_339 : f32 to vector<1x8xf32>
    %858 = arith.subf %852, %857 : vector<1x8xf32>
    %859 = arith.select %856, %858, %852 : vector<1x8xi1>, vector<1x8xf32>
    %cst_340 = arith.constant -1.000000e+00 : f32
    %860 = vector.broadcast %cst_340 : f32 to vector<1x8xf32>
    %861 = arith.select %854, %860, %859 : vector<1x8xi1>, vector<1x8xf32>
    %cst_341 = arith.constant 1.000000e-30 : f32
    %862 = vector.broadcast %cst_341 : f32 to vector<1x8xf32>
    %863 = arith.maximumf %852, %862 : vector<1x8xf32>
    %cst_342 = arith.constant 1.000000e+00 : f32
    %864 = vector.broadcast %cst_342 : f32 to vector<1x8xf32>
    %865 = arith.addf %852, %864 : vector<1x8xf32>
    %cst_343 = arith.constant 1.000000e+00 : f32
    %866 = vector.broadcast %cst_343 : f32 to vector<1x8xf32>
    %867 = arith.select %856, %865, %866 : vector<1x8xi1>, vector<1x8xf32>
    %868 = arith.select %854, %863, %867 : vector<1x8xi1>, vector<1x8xf32>
    %869 = arith.divf %861, %868 : vector<1x8xf32>
    %cst_344 = arith.constant 0.785398185 : f32
    %cst_345 = arith.constant 0.000000e+00 : f32
    %870 = vector.broadcast %cst_344 : f32 to vector<1x8xf32>
    %871 = vector.broadcast %cst_345 : f32 to vector<1x8xf32>
    %872 = arith.select %856, %870, %871 : vector<1x8xi1>, vector<1x8xf32>
    %cst_346 = arith.constant 1.57079637 : f32
    %873 = vector.broadcast %cst_346 : f32 to vector<1x8xf32>
    %874 = arith.select %854, %873, %872 : vector<1x8xi1>, vector<1x8xf32>
    %875 = arith.mulf %869, %869 : vector<1x8xf32>
    %cst_347 = arith.constant 0.0805374458 : f32
    %876 = vector.broadcast %cst_347 : f32 to vector<1x8xf32>
    %877 = arith.mulf %876, %875 : vector<1x8xf32>
    %cst_348 = arith.constant 0.138776854 : f32
    %878 = vector.broadcast %cst_348 : f32 to vector<1x8xf32>
    %879 = arith.subf %877, %878 : vector<1x8xf32>
    %880 = arith.mulf %879, %875 : vector<1x8xf32>
    %cst_349 = arith.constant 0.199777111 : f32
    %881 = vector.broadcast %cst_349 : f32 to vector<1x8xf32>
    %882 = arith.addf %880, %881 : vector<1x8xf32>
    %883 = arith.mulf %882, %875 : vector<1x8xf32>
    %cst_350 = arith.constant 0.333329499 : f32
    %884 = vector.broadcast %cst_350 : f32 to vector<1x8xf32>
    %885 = arith.subf %883, %884 : vector<1x8xf32>
    %886 = arith.addf %874, %869 : vector<1x8xf32>
    %887 = arith.mulf %869, %875 : vector<1x8xf32>
    %888 = arith.mulf %887, %885 : vector<1x8xf32>
    %889 = arith.addf %886, %888 : vector<1x8xf32>
    %890 = arith.mulf %851, %889 : vector<1x8xf32>
    %cst_351 = arith.constant dense<0.000000e+00> : vector<1x8xf32>
    %891 = tpu.matmul %890, %5, %cst_351 {dimension_numbers = #tpu.dot_dimension_numbers<[1], [0], [0], [1], [0, 0, 1, 1], [], []>} : vector<1x8xf32>, vector<8x8xf32>, vector<1x8xf32> -> vector<1x8xf32>
    %892 = arith.mulf %846, %846 : vector<1x8xf32>
    %cst_352 = arith.constant 0.000000e+00 : f32
    %893 = vector.broadcast %cst_352 : f32 to vector<1x8xf32>
    %894 = arith.cmpf olt, %892, %893 : vector<1x8xf32>
    %cst_353 = arith.constant -1.000000e+00 : f32
    %cst_354 = arith.constant 1.000000e+00 : f32
    %895 = vector.broadcast %cst_353 : f32 to vector<1x8xf32>
    %896 = vector.broadcast %cst_354 : f32 to vector<1x8xf32>
    %897 = arith.select %894, %895, %896 : vector<1x8xi1>, vector<1x8xf32>
    %898 = math.absf %892 : vector<1x8xf32>
    %cst_355 = arith.constant 2.41421366 : f32
    %899 = vector.broadcast %cst_355 : f32 to vector<1x8xf32>
    %900 = arith.cmpf ogt, %898, %899 : vector<1x8xf32>
    %cst_356 = arith.constant 0.414213568 : f32
    %901 = vector.broadcast %cst_356 : f32 to vector<1x8xf32>
    %902 = arith.cmpf ogt, %898, %901 : vector<1x8xf32>
    %cst_357 = arith.constant 1.000000e+00 : f32
    %903 = vector.broadcast %cst_357 : f32 to vector<1x8xf32>
    %904 = arith.subf %898, %903 : vector<1x8xf32>
    %905 = arith.select %902, %904, %898 : vector<1x8xi1>, vector<1x8xf32>
    %cst_358 = arith.constant -1.000000e+00 : f32
    %906 = vector.broadcast %cst_358 : f32 to vector<1x8xf32>
    %907 = arith.select %900, %906, %905 : vector<1x8xi1>, vector<1x8xf32>
    %cst_359 = arith.constant 1.000000e-30 : f32
    %908 = vector.broadcast %cst_359 : f32 to vector<1x8xf32>
    %909 = arith.maximumf %898, %908 : vector<1x8xf32>
    %cst_360 = arith.constant 1.000000e+00 : f32
    %910 = vector.broadcast %cst_360 : f32 to vector<1x8xf32>
    %911 = arith.addf %898, %910 : vector<1x8xf32>
    %cst_361 = arith.constant 1.000000e+00 : f32
    %912 = vector.broadcast %cst_361 : f32 to vector<1x8xf32>
    %913 = arith.select %902, %911, %912 : vector<1x8xi1>, vector<1x8xf32>
    %914 = arith.select %900, %909, %913 : vector<1x8xi1>, vector<1x8xf32>
    %915 = arith.divf %907, %914 : vector<1x8xf32>
    %cst_362 = arith.constant 0.785398185 : f32
    %cst_363 = arith.constant 0.000000e+00 : f32
    %916 = vector.broadcast %cst_362 : f32 to vector<1x8xf32>
    %917 = vector.broadcast %cst_363 : f32 to vector<1x8xf32>
    %918 = arith.select %902, %916, %917 : vector<1x8xi1>, vector<1x8xf32>
    %cst_364 = arith.constant 1.57079637 : f32
    %919 = vector.broadcast %cst_364 : f32 to vector<1x8xf32>
    %920 = arith.select %900, %919, %918 : vector<1x8xi1>, vector<1x8xf32>
    %921 = arith.mulf %915, %915 : vector<1x8xf32>
    %cst_365 = arith.constant 0.0805374458 : f32
    %922 = vector.broadcast %cst_365 : f32 to vector<1x8xf32>
    %923 = arith.mulf %922, %921 : vector<1x8xf32>
    %cst_366 = arith.constant 0.138776854 : f32
    %924 = vector.broadcast %cst_366 : f32 to vector<1x8xf32>
    %925 = arith.subf %923, %924 : vector<1x8xf32>
    %926 = arith.mulf %925, %921 : vector<1x8xf32>
    %cst_367 = arith.constant 0.199777111 : f32
    %927 = vector.broadcast %cst_367 : f32 to vector<1x8xf32>
    %928 = arith.addf %926, %927 : vector<1x8xf32>
    %929 = arith.mulf %928, %921 : vector<1x8xf32>
    %cst_368 = arith.constant 0.333329499 : f32
    %930 = vector.broadcast %cst_368 : f32 to vector<1x8xf32>
    %931 = arith.subf %929, %930 : vector<1x8xf32>
    %932 = arith.addf %920, %915 : vector<1x8xf32>
    %933 = arith.mulf %915, %921 : vector<1x8xf32>
    %934 = arith.mulf %933, %931 : vector<1x8xf32>
    %935 = arith.addf %932, %934 : vector<1x8xf32>
    %936 = arith.mulf %897, %935 : vector<1x8xf32>
    %cst_369 = arith.constant dense<0.000000e+00> : vector<1x8xf32>
    %937 = tpu.matmul %936, %6, %cst_369 {dimension_numbers = #tpu.dot_dimension_numbers<[1], [0], [0], [1], [0, 0, 1, 1], [], []>} : vector<1x8xf32>, vector<8x8xf32>, vector<1x8xf32> -> vector<1x8xf32>
    %938 = arith.addf %891, %937 : vector<1x8xf32>
    %939 = arith.addf %938, %7 : vector<1x8xf32>
    %cst_370 = arith.constant 0.000000e+00 : f32
    %940 = vector.broadcast %cst_370 : f32 to vector<1x8xf32>
    %941 = arith.cmpf olt, %939, %940 : vector<1x8xf32>
    %cst_371 = arith.constant -1.000000e+00 : f32
    %cst_372 = arith.constant 1.000000e+00 : f32
    %942 = vector.broadcast %cst_371 : f32 to vector<1x8xf32>
    %943 = vector.broadcast %cst_372 : f32 to vector<1x8xf32>
    %944 = arith.select %941, %942, %943 : vector<1x8xi1>, vector<1x8xf32>
    %945 = math.absf %939 : vector<1x8xf32>
    %cst_373 = arith.constant 2.41421366 : f32
    %946 = vector.broadcast %cst_373 : f32 to vector<1x8xf32>
    %947 = arith.cmpf ogt, %945, %946 : vector<1x8xf32>
    %cst_374 = arith.constant 0.414213568 : f32
    %948 = vector.broadcast %cst_374 : f32 to vector<1x8xf32>
    %949 = arith.cmpf ogt, %945, %948 : vector<1x8xf32>
    %cst_375 = arith.constant 1.000000e+00 : f32
    %950 = vector.broadcast %cst_375 : f32 to vector<1x8xf32>
    %951 = arith.subf %945, %950 : vector<1x8xf32>
    %952 = arith.select %949, %951, %945 : vector<1x8xi1>, vector<1x8xf32>
    %cst_376 = arith.constant -1.000000e+00 : f32
    %953 = vector.broadcast %cst_376 : f32 to vector<1x8xf32>
    %954 = arith.select %947, %953, %952 : vector<1x8xi1>, vector<1x8xf32>
    %cst_377 = arith.constant 1.000000e-30 : f32
    %955 = vector.broadcast %cst_377 : f32 to vector<1x8xf32>
    %956 = arith.maximumf %945, %955 : vector<1x8xf32>
    %cst_378 = arith.constant 1.000000e+00 : f32
    %957 = vector.broadcast %cst_378 : f32 to vector<1x8xf32>
    %958 = arith.addf %945, %957 : vector<1x8xf32>
    %cst_379 = arith.constant 1.000000e+00 : f32
    %959 = vector.broadcast %cst_379 : f32 to vector<1x8xf32>
    %960 = arith.select %949, %958, %959 : vector<1x8xi1>, vector<1x8xf32>
    %961 = arith.select %947, %956, %960 : vector<1x8xi1>, vector<1x8xf32>
    %962 = arith.divf %954, %961 : vector<1x8xf32>
    %cst_380 = arith.constant 0.785398185 : f32
    %cst_381 = arith.constant 0.000000e+00 : f32
    %963 = vector.broadcast %cst_380 : f32 to vector<1x8xf32>
    %964 = vector.broadcast %cst_381 : f32 to vector<1x8xf32>
    %965 = arith.select %949, %963, %964 : vector<1x8xi1>, vector<1x8xf32>
    %cst_382 = arith.constant 1.57079637 : f32
    %966 = vector.broadcast %cst_382 : f32 to vector<1x8xf32>
    %967 = arith.select %947, %966, %965 : vector<1x8xi1>, vector<1x8xf32>
    %968 = arith.mulf %962, %962 : vector<1x8xf32>
    %cst_383 = arith.constant 0.0805374458 : f32
    %969 = vector.broadcast %cst_383 : f32 to vector<1x8xf32>
    %970 = arith.mulf %969, %968 : vector<1x8xf32>
    %cst_384 = arith.constant 0.138776854 : f32
    %971 = vector.broadcast %cst_384 : f32 to vector<1x8xf32>
    %972 = arith.subf %970, %971 : vector<1x8xf32>
    %973 = arith.mulf %972, %968 : vector<1x8xf32>
    %cst_385 = arith.constant 0.199777111 : f32
    %974 = vector.broadcast %cst_385 : f32 to vector<1x8xf32>
    %975 = arith.addf %973, %974 : vector<1x8xf32>
    %976 = arith.mulf %975, %968 : vector<1x8xf32>
    %cst_386 = arith.constant 0.333329499 : f32
    %977 = vector.broadcast %cst_386 : f32 to vector<1x8xf32>
    %978 = arith.subf %976, %977 : vector<1x8xf32>
    %979 = arith.addf %967, %962 : vector<1x8xf32>
    %980 = arith.mulf %962, %968 : vector<1x8xf32>
    %981 = arith.mulf %980, %978 : vector<1x8xf32>
    %982 = arith.addf %979, %981 : vector<1x8xf32>
    %983 = arith.mulf %944, %982 : vector<1x8xf32>
    %984 = arith.mulf %939, %939 : vector<1x8xf32>
    %cst_387 = arith.constant 0.000000e+00 : f32
    %985 = vector.broadcast %cst_387 : f32 to vector<1x8xf32>
    %986 = arith.cmpf olt, %984, %985 : vector<1x8xf32>
    %cst_388 = arith.constant -1.000000e+00 : f32
    %cst_389 = arith.constant 1.000000e+00 : f32
    %987 = vector.broadcast %cst_388 : f32 to vector<1x8xf32>
    %988 = vector.broadcast %cst_389 : f32 to vector<1x8xf32>
    %989 = arith.select %986, %987, %988 : vector<1x8xi1>, vector<1x8xf32>
    %990 = math.absf %984 : vector<1x8xf32>
    %cst_390 = arith.constant 2.41421366 : f32
    %991 = vector.broadcast %cst_390 : f32 to vector<1x8xf32>
    %992 = arith.cmpf ogt, %990, %991 : vector<1x8xf32>
    %cst_391 = arith.constant 0.414213568 : f32
    %993 = vector.broadcast %cst_391 : f32 to vector<1x8xf32>
    %994 = arith.cmpf ogt, %990, %993 : vector<1x8xf32>
    %cst_392 = arith.constant 1.000000e+00 : f32
    %995 = vector.broadcast %cst_392 : f32 to vector<1x8xf32>
    %996 = arith.subf %990, %995 : vector<1x8xf32>
    %997 = arith.select %994, %996, %990 : vector<1x8xi1>, vector<1x8xf32>
    %cst_393 = arith.constant -1.000000e+00 : f32
    %998 = vector.broadcast %cst_393 : f32 to vector<1x8xf32>
    %999 = arith.select %992, %998, %997 : vector<1x8xi1>, vector<1x8xf32>
    %cst_394 = arith.constant 1.000000e-30 : f32
    %1000 = vector.broadcast %cst_394 : f32 to vector<1x8xf32>
    %1001 = arith.maximumf %990, %1000 : vector<1x8xf32>
    %cst_395 = arith.constant 1.000000e+00 : f32
    %1002 = vector.broadcast %cst_395 : f32 to vector<1x8xf32>
    %1003 = arith.addf %990, %1002 : vector<1x8xf32>
    %cst_396 = arith.constant 1.000000e+00 : f32
    %1004 = vector.broadcast %cst_396 : f32 to vector<1x8xf32>
    %1005 = arith.select %994, %1003, %1004 : vector<1x8xi1>, vector<1x8xf32>
    %1006 = arith.select %992, %1001, %1005 : vector<1x8xi1>, vector<1x8xf32>
    %1007 = arith.divf %999, %1006 : vector<1x8xf32>
    %cst_397 = arith.constant 0.785398185 : f32
    %cst_398 = arith.constant 0.000000e+00 : f32
    %1008 = vector.broadcast %cst_397 : f32 to vector<1x8xf32>
    %1009 = vector.broadcast %cst_398 : f32 to vector<1x8xf32>
    %1010 = arith.select %994, %1008, %1009 : vector<1x8xi1>, vector<1x8xf32>
    %cst_399 = arith.constant 1.57079637 : f32
    %1011 = vector.broadcast %cst_399 : f32 to vector<1x8xf32>
    %1012 = arith.select %992, %1011, %1010 : vector<1x8xi1>, vector<1x8xf32>
    %1013 = arith.mulf %1007, %1007 : vector<1x8xf32>
    %cst_400 = arith.constant 0.0805374458 : f32
    %1014 = vector.broadcast %cst_400 : f32 to vector<1x8xf32>
    %1015 = arith.mulf %1014, %1013 : vector<1x8xf32>
    %cst_401 = arith.constant 0.138776854 : f32
    %1016 = vector.broadcast %cst_401 : f32 to vector<1x8xf32>
    %1017 = arith.subf %1015, %1016 : vector<1x8xf32>
    %1018 = arith.mulf %1017, %1013 : vector<1x8xf32>
    %cst_402 = arith.constant 0.199777111 : f32
    %1019 = vector.broadcast %cst_402 : f32 to vector<1x8xf32>
    %1020 = arith.addf %1018, %1019 : vector<1x8xf32>
    %1021 = arith.mulf %1020, %1013 : vector<1x8xf32>
    %cst_403 = arith.constant 0.333329499 : f32
    %1022 = vector.broadcast %cst_403 : f32 to vector<1x8xf32>
    %1023 = arith.subf %1021, %1022 : vector<1x8xf32>
    %1024 = arith.addf %1012, %1007 : vector<1x8xf32>
    %1025 = arith.mulf %1007, %1013 : vector<1x8xf32>
    %1026 = arith.mulf %1025, %1023 : vector<1x8xf32>
    %1027 = arith.addf %1024, %1026 : vector<1x8xf32>
    %1028 = arith.mulf %989, %1027 : vector<1x8xf32>
    %cst_404 = arith.constant dense<0.000000e+00> : vector<1x32xf32>
    %1029 = tpu.matmul %983, %2, %cst_404 {dimension_numbers = #tpu.dot_dimension_numbers<[1], [0], [0], [1], [0, 0, 1, 1], [], []>} : vector<1x8xf32>, vector<8x32xf32>, vector<1x32xf32> -> vector<1x32xf32>
    %cst_405 = arith.constant dense<0.000000e+00> : vector<1x32xf32>
    %1030 = tpu.matmul %1028, %3, %cst_405 {dimension_numbers = #tpu.dot_dimension_numbers<[1], [0], [0], [1], [0, 0, 1, 1], [], []>} : vector<1x8xf32>, vector<8x32xf32>, vector<1x32xf32> -> vector<1x32xf32>
    %1031 = arith.addf %1029, %1030 : vector<1x32xf32>
    %c4 = arith.constant 4 : index
    %c0_406 = arith.constant 0 : index
    %1032 = vector.load %arg3[%c4, %c0_406] : memref<8x32xf32, #tpu.memory_space<vmem>>, vector<1x32xf32>
    %1033 = arith.addf %1031, %1032 : vector<1x32xf32>
    %cst_407 = arith.constant 0.000000e+00 : f32
    %1034 = vector.broadcast %cst_407 : f32 to vector<1x32xf32>
    %1035 = arith.subf %1034, %1033 : vector<1x32xf32>
    %1036 = math.exp %1035 : vector<1x32xf32>
    %cst_408 = arith.constant 1.000000e+00 : f32
    %1037 = vector.broadcast %cst_408 : f32 to vector<1x32xf32>
    %1038 = arith.addf %1037, %1036 : vector<1x32xf32>
    %cst_409 = arith.constant 1.000000e+00 : f32
    %1039 = vector.broadcast %cst_409 : f32 to vector<1x32xf32>
    %1040 = arith.divf %1039, %1038 : vector<1x32xf32>
    %1041 = vector.extract_strided_slice %1040 {offsets = [0, 0], sizes = [1, 8], strides = [1, 1]} : vector<1x32xf32> to vector<1x8xf32>
    %1042 = vector.extract_strided_slice %1040 {offsets = [0, 8], sizes = [1, 8], strides = [1, 1]} : vector<1x32xf32> to vector<1x8xf32>
    %1043 = vector.extract_strided_slice %1040 {offsets = [0, 16], sizes = [1, 8], strides = [1, 1]} : vector<1x32xf32> to vector<1x8xf32>
    %1044 = vector.extract_strided_slice %1040 {offsets = [0, 24], sizes = [1, 8], strides = [1, 1]} : vector<1x32xf32> to vector<1x8xf32>
    %cst_410 = arith.constant 2.000000e+00 : f32
    %1045 = vector.broadcast %cst_410 : f32 to vector<1x8xf32>
    %1046 = arith.mulf %1045, %1044 : vector<1x8xf32>
    %cst_411 = arith.constant 1.000000e+00 : f32
    %1047 = vector.broadcast %cst_411 : f32 to vector<1x8xf32>
    %1048 = arith.subf %1046, %1047 : vector<1x8xf32>
    %1049 = arith.mulf %844, %1041 : vector<1x8xf32>
    %1050 = arith.mulf %1042, %1048 : vector<1x8xf32>
    %1051 = arith.addf %1049, %1050 : vector<1x8xf32>
    %1052 = math.tanh %1051 : vector<1x8xf32>
    %1053 = arith.mulf %1043, %1052 : vector<1x8xf32>
    %cst_412 = arith.constant 0.000000e+00 : f32
    %1054 = vector.broadcast %cst_412 : f32 to vector<1x8xf32>
    %1055 = arith.cmpf olt, %1053, %1054 : vector<1x8xf32>
    %cst_413 = arith.constant -1.000000e+00 : f32
    %cst_414 = arith.constant 1.000000e+00 : f32
    %1056 = vector.broadcast %cst_413 : f32 to vector<1x8xf32>
    %1057 = vector.broadcast %cst_414 : f32 to vector<1x8xf32>
    %1058 = arith.select %1055, %1056, %1057 : vector<1x8xi1>, vector<1x8xf32>
    %1059 = math.absf %1053 : vector<1x8xf32>
    %cst_415 = arith.constant 2.41421366 : f32
    %1060 = vector.broadcast %cst_415 : f32 to vector<1x8xf32>
    %1061 = arith.cmpf ogt, %1059, %1060 : vector<1x8xf32>
    %cst_416 = arith.constant 0.414213568 : f32
    %1062 = vector.broadcast %cst_416 : f32 to vector<1x8xf32>
    %1063 = arith.cmpf ogt, %1059, %1062 : vector<1x8xf32>
    %cst_417 = arith.constant 1.000000e+00 : f32
    %1064 = vector.broadcast %cst_417 : f32 to vector<1x8xf32>
    %1065 = arith.subf %1059, %1064 : vector<1x8xf32>
    %1066 = arith.select %1063, %1065, %1059 : vector<1x8xi1>, vector<1x8xf32>
    %cst_418 = arith.constant -1.000000e+00 : f32
    %1067 = vector.broadcast %cst_418 : f32 to vector<1x8xf32>
    %1068 = arith.select %1061, %1067, %1066 : vector<1x8xi1>, vector<1x8xf32>
    %cst_419 = arith.constant 1.000000e-30 : f32
    %1069 = vector.broadcast %cst_419 : f32 to vector<1x8xf32>
    %1070 = arith.maximumf %1059, %1069 : vector<1x8xf32>
    %cst_420 = arith.constant 1.000000e+00 : f32
    %1071 = vector.broadcast %cst_420 : f32 to vector<1x8xf32>
    %1072 = arith.addf %1059, %1071 : vector<1x8xf32>
    %cst_421 = arith.constant 1.000000e+00 : f32
    %1073 = vector.broadcast %cst_421 : f32 to vector<1x8xf32>
    %1074 = arith.select %1063, %1072, %1073 : vector<1x8xi1>, vector<1x8xf32>
    %1075 = arith.select %1061, %1070, %1074 : vector<1x8xi1>, vector<1x8xf32>
    %1076 = arith.divf %1068, %1075 : vector<1x8xf32>
    %cst_422 = arith.constant 0.785398185 : f32
    %cst_423 = arith.constant 0.000000e+00 : f32
    %1077 = vector.broadcast %cst_422 : f32 to vector<1x8xf32>
    %1078 = vector.broadcast %cst_423 : f32 to vector<1x8xf32>
    %1079 = arith.select %1063, %1077, %1078 : vector<1x8xi1>, vector<1x8xf32>
    %cst_424 = arith.constant 1.57079637 : f32
    %1080 = vector.broadcast %cst_424 : f32 to vector<1x8xf32>
    %1081 = arith.select %1061, %1080, %1079 : vector<1x8xi1>, vector<1x8xf32>
    %1082 = arith.mulf %1076, %1076 : vector<1x8xf32>
    %cst_425 = arith.constant 0.0805374458 : f32
    %1083 = vector.broadcast %cst_425 : f32 to vector<1x8xf32>
    %1084 = arith.mulf %1083, %1082 : vector<1x8xf32>
    %cst_426 = arith.constant 0.138776854 : f32
    %1085 = vector.broadcast %cst_426 : f32 to vector<1x8xf32>
    %1086 = arith.subf %1084, %1085 : vector<1x8xf32>
    %1087 = arith.mulf %1086, %1082 : vector<1x8xf32>
    %cst_427 = arith.constant 0.199777111 : f32
    %1088 = vector.broadcast %cst_427 : f32 to vector<1x8xf32>
    %1089 = arith.addf %1087, %1088 : vector<1x8xf32>
    %1090 = arith.mulf %1089, %1082 : vector<1x8xf32>
    %cst_428 = arith.constant 0.333329499 : f32
    %1091 = vector.broadcast %cst_428 : f32 to vector<1x8xf32>
    %1092 = arith.subf %1090, %1091 : vector<1x8xf32>
    %1093 = arith.addf %1081, %1076 : vector<1x8xf32>
    %1094 = arith.mulf %1076, %1082 : vector<1x8xf32>
    %1095 = arith.mulf %1094, %1092 : vector<1x8xf32>
    %1096 = arith.addf %1093, %1095 : vector<1x8xf32>
    %1097 = arith.mulf %1058, %1096 : vector<1x8xf32>
    %cst_429 = arith.constant dense<0.000000e+00> : vector<1x8xf32>
    %1098 = tpu.matmul %1097, %5, %cst_429 {dimension_numbers = #tpu.dot_dimension_numbers<[1], [0], [0], [1], [0, 0, 1, 1], [], []>} : vector<1x8xf32>, vector<8x8xf32>, vector<1x8xf32> -> vector<1x8xf32>
    %1099 = arith.mulf %1053, %1053 : vector<1x8xf32>
    %cst_430 = arith.constant 0.000000e+00 : f32
    %1100 = vector.broadcast %cst_430 : f32 to vector<1x8xf32>
    %1101 = arith.cmpf olt, %1099, %1100 : vector<1x8xf32>
    %cst_431 = arith.constant -1.000000e+00 : f32
    %cst_432 = arith.constant 1.000000e+00 : f32
    %1102 = vector.broadcast %cst_431 : f32 to vector<1x8xf32>
    %1103 = vector.broadcast %cst_432 : f32 to vector<1x8xf32>
    %1104 = arith.select %1101, %1102, %1103 : vector<1x8xi1>, vector<1x8xf32>
    %1105 = math.absf %1099 : vector<1x8xf32>
    %cst_433 = arith.constant 2.41421366 : f32
    %1106 = vector.broadcast %cst_433 : f32 to vector<1x8xf32>
    %1107 = arith.cmpf ogt, %1105, %1106 : vector<1x8xf32>
    %cst_434 = arith.constant 0.414213568 : f32
    %1108 = vector.broadcast %cst_434 : f32 to vector<1x8xf32>
    %1109 = arith.cmpf ogt, %1105, %1108 : vector<1x8xf32>
    %cst_435 = arith.constant 1.000000e+00 : f32
    %1110 = vector.broadcast %cst_435 : f32 to vector<1x8xf32>
    %1111 = arith.subf %1105, %1110 : vector<1x8xf32>
    %1112 = arith.select %1109, %1111, %1105 : vector<1x8xi1>, vector<1x8xf32>
    %cst_436 = arith.constant -1.000000e+00 : f32
    %1113 = vector.broadcast %cst_436 : f32 to vector<1x8xf32>
    %1114 = arith.select %1107, %1113, %1112 : vector<1x8xi1>, vector<1x8xf32>
    %cst_437 = arith.constant 1.000000e-30 : f32
    %1115 = vector.broadcast %cst_437 : f32 to vector<1x8xf32>
    %1116 = arith.maximumf %1105, %1115 : vector<1x8xf32>
    %cst_438 = arith.constant 1.000000e+00 : f32
    %1117 = vector.broadcast %cst_438 : f32 to vector<1x8xf32>
    %1118 = arith.addf %1105, %1117 : vector<1x8xf32>
    %cst_439 = arith.constant 1.000000e+00 : f32
    %1119 = vector.broadcast %cst_439 : f32 to vector<1x8xf32>
    %1120 = arith.select %1109, %1118, %1119 : vector<1x8xi1>, vector<1x8xf32>
    %1121 = arith.select %1107, %1116, %1120 : vector<1x8xi1>, vector<1x8xf32>
    %1122 = arith.divf %1114, %1121 : vector<1x8xf32>
    %cst_440 = arith.constant 0.785398185 : f32
    %cst_441 = arith.constant 0.000000e+00 : f32
    %1123 = vector.broadcast %cst_440 : f32 to vector<1x8xf32>
    %1124 = vector.broadcast %cst_441 : f32 to vector<1x8xf32>
    %1125 = arith.select %1109, %1123, %1124 : vector<1x8xi1>, vector<1x8xf32>
    %cst_442 = arith.constant 1.57079637 : f32
    %1126 = vector.broadcast %cst_442 : f32 to vector<1x8xf32>
    %1127 = arith.select %1107, %1126, %1125 : vector<1x8xi1>, vector<1x8xf32>
    %1128 = arith.mulf %1122, %1122 : vector<1x8xf32>
    %cst_443 = arith.constant 0.0805374458 : f32
    %1129 = vector.broadcast %cst_443 : f32 to vector<1x8xf32>
    %1130 = arith.mulf %1129, %1128 : vector<1x8xf32>
    %cst_444 = arith.constant 0.138776854 : f32
    %1131 = vector.broadcast %cst_444 : f32 to vector<1x8xf32>
    %1132 = arith.subf %1130, %1131 : vector<1x8xf32>
    %1133 = arith.mulf %1132, %1128 : vector<1x8xf32>
    %cst_445 = arith.constant 0.199777111 : f32
    %1134 = vector.broadcast %cst_445 : f32 to vector<1x8xf32>
    %1135 = arith.addf %1133, %1134 : vector<1x8xf32>
    %1136 = arith.mulf %1135, %1128 : vector<1x8xf32>
    %cst_446 = arith.constant 0.333329499 : f32
    %1137 = vector.broadcast %cst_446 : f32 to vector<1x8xf32>
    %1138 = arith.subf %1136, %1137 : vector<1x8xf32>
    %1139 = arith.addf %1127, %1122 : vector<1x8xf32>
    %1140 = arith.mulf %1122, %1128 : vector<1x8xf32>
    %1141 = arith.mulf %1140, %1138 : vector<1x8xf32>
    %1142 = arith.addf %1139, %1141 : vector<1x8xf32>
    %1143 = arith.mulf %1104, %1142 : vector<1x8xf32>
    %cst_447 = arith.constant dense<0.000000e+00> : vector<1x8xf32>
    %1144 = tpu.matmul %1143, %6, %cst_447 {dimension_numbers = #tpu.dot_dimension_numbers<[1], [0], [0], [1], [0, 0, 1, 1], [], []>} : vector<1x8xf32>, vector<8x8xf32>, vector<1x8xf32> -> vector<1x8xf32>
    %1145 = arith.addf %1098, %1144 : vector<1x8xf32>
    %1146 = arith.addf %1145, %7 : vector<1x8xf32>
    %cst_448 = arith.constant 0.000000e+00 : f32
    %1147 = vector.broadcast %cst_448 : f32 to vector<1x8xf32>
    %1148 = arith.cmpf olt, %1146, %1147 : vector<1x8xf32>
    %cst_449 = arith.constant -1.000000e+00 : f32
    %cst_450 = arith.constant 1.000000e+00 : f32
    %1149 = vector.broadcast %cst_449 : f32 to vector<1x8xf32>
    %1150 = vector.broadcast %cst_450 : f32 to vector<1x8xf32>
    %1151 = arith.select %1148, %1149, %1150 : vector<1x8xi1>, vector<1x8xf32>
    %1152 = math.absf %1146 : vector<1x8xf32>
    %cst_451 = arith.constant 2.41421366 : f32
    %1153 = vector.broadcast %cst_451 : f32 to vector<1x8xf32>
    %1154 = arith.cmpf ogt, %1152, %1153 : vector<1x8xf32>
    %cst_452 = arith.constant 0.414213568 : f32
    %1155 = vector.broadcast %cst_452 : f32 to vector<1x8xf32>
    %1156 = arith.cmpf ogt, %1152, %1155 : vector<1x8xf32>
    %cst_453 = arith.constant 1.000000e+00 : f32
    %1157 = vector.broadcast %cst_453 : f32 to vector<1x8xf32>
    %1158 = arith.subf %1152, %1157 : vector<1x8xf32>
    %1159 = arith.select %1156, %1158, %1152 : vector<1x8xi1>, vector<1x8xf32>
    %cst_454 = arith.constant -1.000000e+00 : f32
    %1160 = vector.broadcast %cst_454 : f32 to vector<1x8xf32>
    %1161 = arith.select %1154, %1160, %1159 : vector<1x8xi1>, vector<1x8xf32>
    %cst_455 = arith.constant 1.000000e-30 : f32
    %1162 = vector.broadcast %cst_455 : f32 to vector<1x8xf32>
    %1163 = arith.maximumf %1152, %1162 : vector<1x8xf32>
    %cst_456 = arith.constant 1.000000e+00 : f32
    %1164 = vector.broadcast %cst_456 : f32 to vector<1x8xf32>
    %1165 = arith.addf %1152, %1164 : vector<1x8xf32>
    %cst_457 = arith.constant 1.000000e+00 : f32
    %1166 = vector.broadcast %cst_457 : f32 to vector<1x8xf32>
    %1167 = arith.select %1156, %1165, %1166 : vector<1x8xi1>, vector<1x8xf32>
    %1168 = arith.select %1154, %1163, %1167 : vector<1x8xi1>, vector<1x8xf32>
    %1169 = arith.divf %1161, %1168 : vector<1x8xf32>
    %cst_458 = arith.constant 0.785398185 : f32
    %cst_459 = arith.constant 0.000000e+00 : f32
    %1170 = vector.broadcast %cst_458 : f32 to vector<1x8xf32>
    %1171 = vector.broadcast %cst_459 : f32 to vector<1x8xf32>
    %1172 = arith.select %1156, %1170, %1171 : vector<1x8xi1>, vector<1x8xf32>
    %cst_460 = arith.constant 1.57079637 : f32
    %1173 = vector.broadcast %cst_460 : f32 to vector<1x8xf32>
    %1174 = arith.select %1154, %1173, %1172 : vector<1x8xi1>, vector<1x8xf32>
    %1175 = arith.mulf %1169, %1169 : vector<1x8xf32>
    %cst_461 = arith.constant 0.0805374458 : f32
    %1176 = vector.broadcast %cst_461 : f32 to vector<1x8xf32>
    %1177 = arith.mulf %1176, %1175 : vector<1x8xf32>
    %cst_462 = arith.constant 0.138776854 : f32
    %1178 = vector.broadcast %cst_462 : f32 to vector<1x8xf32>
    %1179 = arith.subf %1177, %1178 : vector<1x8xf32>
    %1180 = arith.mulf %1179, %1175 : vector<1x8xf32>
    %cst_463 = arith.constant 0.199777111 : f32
    %1181 = vector.broadcast %cst_463 : f32 to vector<1x8xf32>
    %1182 = arith.addf %1180, %1181 : vector<1x8xf32>
    %1183 = arith.mulf %1182, %1175 : vector<1x8xf32>
    %cst_464 = arith.constant 0.333329499 : f32
    %1184 = vector.broadcast %cst_464 : f32 to vector<1x8xf32>
    %1185 = arith.subf %1183, %1184 : vector<1x8xf32>
    %1186 = arith.addf %1174, %1169 : vector<1x8xf32>
    %1187 = arith.mulf %1169, %1175 : vector<1x8xf32>
    %1188 = arith.mulf %1187, %1185 : vector<1x8xf32>
    %1189 = arith.addf %1186, %1188 : vector<1x8xf32>
    %1190 = arith.mulf %1151, %1189 : vector<1x8xf32>
    %1191 = arith.mulf %1146, %1146 : vector<1x8xf32>
    %cst_465 = arith.constant 0.000000e+00 : f32
    %1192 = vector.broadcast %cst_465 : f32 to vector<1x8xf32>
    %1193 = arith.cmpf olt, %1191, %1192 : vector<1x8xf32>
    %cst_466 = arith.constant -1.000000e+00 : f32
    %cst_467 = arith.constant 1.000000e+00 : f32
    %1194 = vector.broadcast %cst_466 : f32 to vector<1x8xf32>
    %1195 = vector.broadcast %cst_467 : f32 to vector<1x8xf32>
    %1196 = arith.select %1193, %1194, %1195 : vector<1x8xi1>, vector<1x8xf32>
    %1197 = math.absf %1191 : vector<1x8xf32>
    %cst_468 = arith.constant 2.41421366 : f32
    %1198 = vector.broadcast %cst_468 : f32 to vector<1x8xf32>
    %1199 = arith.cmpf ogt, %1197, %1198 : vector<1x8xf32>
    %cst_469 = arith.constant 0.414213568 : f32
    %1200 = vector.broadcast %cst_469 : f32 to vector<1x8xf32>
    %1201 = arith.cmpf ogt, %1197, %1200 : vector<1x8xf32>
    %cst_470 = arith.constant 1.000000e+00 : f32
    %1202 = vector.broadcast %cst_470 : f32 to vector<1x8xf32>
    %1203 = arith.subf %1197, %1202 : vector<1x8xf32>
    %1204 = arith.select %1201, %1203, %1197 : vector<1x8xi1>, vector<1x8xf32>
    %cst_471 = arith.constant -1.000000e+00 : f32
    %1205 = vector.broadcast %cst_471 : f32 to vector<1x8xf32>
    %1206 = arith.select %1199, %1205, %1204 : vector<1x8xi1>, vector<1x8xf32>
    %cst_472 = arith.constant 1.000000e-30 : f32
    %1207 = vector.broadcast %cst_472 : f32 to vector<1x8xf32>
    %1208 = arith.maximumf %1197, %1207 : vector<1x8xf32>
    %cst_473 = arith.constant 1.000000e+00 : f32
    %1209 = vector.broadcast %cst_473 : f32 to vector<1x8xf32>
    %1210 = arith.addf %1197, %1209 : vector<1x8xf32>
    %cst_474 = arith.constant 1.000000e+00 : f32
    %1211 = vector.broadcast %cst_474 : f32 to vector<1x8xf32>
    %1212 = arith.select %1201, %1210, %1211 : vector<1x8xi1>, vector<1x8xf32>
    %1213 = arith.select %1199, %1208, %1212 : vector<1x8xi1>, vector<1x8xf32>
    %1214 = arith.divf %1206, %1213 : vector<1x8xf32>
    %cst_475 = arith.constant 0.785398185 : f32
    %cst_476 = arith.constant 0.000000e+00 : f32
    %1215 = vector.broadcast %cst_475 : f32 to vector<1x8xf32>
    %1216 = vector.broadcast %cst_476 : f32 to vector<1x8xf32>
    %1217 = arith.select %1201, %1215, %1216 : vector<1x8xi1>, vector<1x8xf32>
    %cst_477 = arith.constant 1.57079637 : f32
    %1218 = vector.broadcast %cst_477 : f32 to vector<1x8xf32>
    %1219 = arith.select %1199, %1218, %1217 : vector<1x8xi1>, vector<1x8xf32>
    %1220 = arith.mulf %1214, %1214 : vector<1x8xf32>
    %cst_478 = arith.constant 0.0805374458 : f32
    %1221 = vector.broadcast %cst_478 : f32 to vector<1x8xf32>
    %1222 = arith.mulf %1221, %1220 : vector<1x8xf32>
    %cst_479 = arith.constant 0.138776854 : f32
    %1223 = vector.broadcast %cst_479 : f32 to vector<1x8xf32>
    %1224 = arith.subf %1222, %1223 : vector<1x8xf32>
    %1225 = arith.mulf %1224, %1220 : vector<1x8xf32>
    %cst_480 = arith.constant 0.199777111 : f32
    %1226 = vector.broadcast %cst_480 : f32 to vector<1x8xf32>
    %1227 = arith.addf %1225, %1226 : vector<1x8xf32>
    %1228 = arith.mulf %1227, %1220 : vector<1x8xf32>
    %cst_481 = arith.constant 0.333329499 : f32
    %1229 = vector.broadcast %cst_481 : f32 to vector<1x8xf32>
    %1230 = arith.subf %1228, %1229 : vector<1x8xf32>
    %1231 = arith.addf %1219, %1214 : vector<1x8xf32>
    %1232 = arith.mulf %1214, %1220 : vector<1x8xf32>
    %1233 = arith.mulf %1232, %1230 : vector<1x8xf32>
    %1234 = arith.addf %1231, %1233 : vector<1x8xf32>
    %1235 = arith.mulf %1196, %1234 : vector<1x8xf32>
    %cst_482 = arith.constant dense<0.000000e+00> : vector<1x32xf32>
    %1236 = tpu.matmul %1190, %2, %cst_482 {dimension_numbers = #tpu.dot_dimension_numbers<[1], [0], [0], [1], [0, 0, 1, 1], [], []>} : vector<1x8xf32>, vector<8x32xf32>, vector<1x32xf32> -> vector<1x32xf32>
    %cst_483 = arith.constant dense<0.000000e+00> : vector<1x32xf32>
    %1237 = tpu.matmul %1235, %3, %cst_483 {dimension_numbers = #tpu.dot_dimension_numbers<[1], [0], [0], [1], [0, 0, 1, 1], [], []>} : vector<1x8xf32>, vector<8x32xf32>, vector<1x32xf32> -> vector<1x32xf32>
    %1238 = arith.addf %1236, %1237 : vector<1x32xf32>
    %c5 = arith.constant 5 : index
    %c0_484 = arith.constant 0 : index
    %1239 = vector.load %arg3[%c5, %c0_484] : memref<8x32xf32, #tpu.memory_space<vmem>>, vector<1x32xf32>
    %1240 = arith.addf %1238, %1239 : vector<1x32xf32>
    %cst_485 = arith.constant 0.000000e+00 : f32
    %1241 = vector.broadcast %cst_485 : f32 to vector<1x32xf32>
    %1242 = arith.subf %1241, %1240 : vector<1x32xf32>
    %1243 = math.exp %1242 : vector<1x32xf32>
    %cst_486 = arith.constant 1.000000e+00 : f32
    %1244 = vector.broadcast %cst_486 : f32 to vector<1x32xf32>
    %1245 = arith.addf %1244, %1243 : vector<1x32xf32>
    %cst_487 = arith.constant 1.000000e+00 : f32
    %1246 = vector.broadcast %cst_487 : f32 to vector<1x32xf32>
    %1247 = arith.divf %1246, %1245 : vector<1x32xf32>
    %1248 = vector.extract_strided_slice %1247 {offsets = [0, 0], sizes = [1, 8], strides = [1, 1]} : vector<1x32xf32> to vector<1x8xf32>
    %1249 = vector.extract_strided_slice %1247 {offsets = [0, 8], sizes = [1, 8], strides = [1, 1]} : vector<1x32xf32> to vector<1x8xf32>
    %1250 = vector.extract_strided_slice %1247 {offsets = [0, 16], sizes = [1, 8], strides = [1, 1]} : vector<1x32xf32> to vector<1x8xf32>
    %1251 = vector.extract_strided_slice %1247 {offsets = [0, 24], sizes = [1, 8], strides = [1, 1]} : vector<1x32xf32> to vector<1x8xf32>
    %cst_488 = arith.constant 2.000000e+00 : f32
    %1252 = vector.broadcast %cst_488 : f32 to vector<1x8xf32>
    %1253 = arith.mulf %1252, %1251 : vector<1x8xf32>
    %cst_489 = arith.constant 1.000000e+00 : f32
    %1254 = vector.broadcast %cst_489 : f32 to vector<1x8xf32>
    %1255 = arith.subf %1253, %1254 : vector<1x8xf32>
    %1256 = arith.mulf %1051, %1248 : vector<1x8xf32>
    %1257 = arith.mulf %1249, %1255 : vector<1x8xf32>
    %1258 = arith.addf %1256, %1257 : vector<1x8xf32>
    %1259 = math.tanh %1258 : vector<1x8xf32>
    %1260 = arith.mulf %1250, %1259 : vector<1x8xf32>
    %cst_490 = arith.constant 0.000000e+00 : f32
    %1261 = vector.broadcast %cst_490 : f32 to vector<1x8xf32>
    %1262 = arith.cmpf olt, %1260, %1261 : vector<1x8xf32>
    %cst_491 = arith.constant -1.000000e+00 : f32
    %cst_492 = arith.constant 1.000000e+00 : f32
    %1263 = vector.broadcast %cst_491 : f32 to vector<1x8xf32>
    %1264 = vector.broadcast %cst_492 : f32 to vector<1x8xf32>
    %1265 = arith.select %1262, %1263, %1264 : vector<1x8xi1>, vector<1x8xf32>
    %1266 = math.absf %1260 : vector<1x8xf32>
    %cst_493 = arith.constant 2.41421366 : f32
    %1267 = vector.broadcast %cst_493 : f32 to vector<1x8xf32>
    %1268 = arith.cmpf ogt, %1266, %1267 : vector<1x8xf32>
    %cst_494 = arith.constant 0.414213568 : f32
    %1269 = vector.broadcast %cst_494 : f32 to vector<1x8xf32>
    %1270 = arith.cmpf ogt, %1266, %1269 : vector<1x8xf32>
    %cst_495 = arith.constant 1.000000e+00 : f32
    %1271 = vector.broadcast %cst_495 : f32 to vector<1x8xf32>
    %1272 = arith.subf %1266, %1271 : vector<1x8xf32>
    %1273 = arith.select %1270, %1272, %1266 : vector<1x8xi1>, vector<1x8xf32>
    %cst_496 = arith.constant -1.000000e+00 : f32
    %1274 = vector.broadcast %cst_496 : f32 to vector<1x8xf32>
    %1275 = arith.select %1268, %1274, %1273 : vector<1x8xi1>, vector<1x8xf32>
    %cst_497 = arith.constant 1.000000e-30 : f32
    %1276 = vector.broadcast %cst_497 : f32 to vector<1x8xf32>
    %1277 = arith.maximumf %1266, %1276 : vector<1x8xf32>
    %cst_498 = arith.constant 1.000000e+00 : f32
    %1278 = vector.broadcast %cst_498 : f32 to vector<1x8xf32>
    %1279 = arith.addf %1266, %1278 : vector<1x8xf32>
    %cst_499 = arith.constant 1.000000e+00 : f32
    %1280 = vector.broadcast %cst_499 : f32 to vector<1x8xf32>
    %1281 = arith.select %1270, %1279, %1280 : vector<1x8xi1>, vector<1x8xf32>
    %1282 = arith.select %1268, %1277, %1281 : vector<1x8xi1>, vector<1x8xf32>
    %1283 = arith.divf %1275, %1282 : vector<1x8xf32>
    %cst_500 = arith.constant 0.785398185 : f32
    %cst_501 = arith.constant 0.000000e+00 : f32
    %1284 = vector.broadcast %cst_500 : f32 to vector<1x8xf32>
    %1285 = vector.broadcast %cst_501 : f32 to vector<1x8xf32>
    %1286 = arith.select %1270, %1284, %1285 : vector<1x8xi1>, vector<1x8xf32>
    %cst_502 = arith.constant 1.57079637 : f32
    %1287 = vector.broadcast %cst_502 : f32 to vector<1x8xf32>
    %1288 = arith.select %1268, %1287, %1286 : vector<1x8xi1>, vector<1x8xf32>
    %1289 = arith.mulf %1283, %1283 : vector<1x8xf32>
    %cst_503 = arith.constant 0.0805374458 : f32
    %1290 = vector.broadcast %cst_503 : f32 to vector<1x8xf32>
    %1291 = arith.mulf %1290, %1289 : vector<1x8xf32>
    %cst_504 = arith.constant 0.138776854 : f32
    %1292 = vector.broadcast %cst_504 : f32 to vector<1x8xf32>
    %1293 = arith.subf %1291, %1292 : vector<1x8xf32>
    %1294 = arith.mulf %1293, %1289 : vector<1x8xf32>
    %cst_505 = arith.constant 0.199777111 : f32
    %1295 = vector.broadcast %cst_505 : f32 to vector<1x8xf32>
    %1296 = arith.addf %1294, %1295 : vector<1x8xf32>
    %1297 = arith.mulf %1296, %1289 : vector<1x8xf32>
    %cst_506 = arith.constant 0.333329499 : f32
    %1298 = vector.broadcast %cst_506 : f32 to vector<1x8xf32>
    %1299 = arith.subf %1297, %1298 : vector<1x8xf32>
    %1300 = arith.addf %1288, %1283 : vector<1x8xf32>
    %1301 = arith.mulf %1283, %1289 : vector<1x8xf32>
    %1302 = arith.mulf %1301, %1299 : vector<1x8xf32>
    %1303 = arith.addf %1300, %1302 : vector<1x8xf32>
    %1304 = arith.mulf %1265, %1303 : vector<1x8xf32>
    %cst_507 = arith.constant dense<0.000000e+00> : vector<1x8xf32>
    %1305 = tpu.matmul %1304, %5, %cst_507 {dimension_numbers = #tpu.dot_dimension_numbers<[1], [0], [0], [1], [0, 0, 1, 1], [], []>} : vector<1x8xf32>, vector<8x8xf32>, vector<1x8xf32> -> vector<1x8xf32>
    %1306 = arith.mulf %1260, %1260 : vector<1x8xf32>
    %cst_508 = arith.constant 0.000000e+00 : f32
    %1307 = vector.broadcast %cst_508 : f32 to vector<1x8xf32>
    %1308 = arith.cmpf olt, %1306, %1307 : vector<1x8xf32>
    %cst_509 = arith.constant -1.000000e+00 : f32
    %cst_510 = arith.constant 1.000000e+00 : f32
    %1309 = vector.broadcast %cst_509 : f32 to vector<1x8xf32>
    %1310 = vector.broadcast %cst_510 : f32 to vector<1x8xf32>
    %1311 = arith.select %1308, %1309, %1310 : vector<1x8xi1>, vector<1x8xf32>
    %1312 = math.absf %1306 : vector<1x8xf32>
    %cst_511 = arith.constant 2.41421366 : f32
    %1313 = vector.broadcast %cst_511 : f32 to vector<1x8xf32>
    %1314 = arith.cmpf ogt, %1312, %1313 : vector<1x8xf32>
    %cst_512 = arith.constant 0.414213568 : f32
    %1315 = vector.broadcast %cst_512 : f32 to vector<1x8xf32>
    %1316 = arith.cmpf ogt, %1312, %1315 : vector<1x8xf32>
    %cst_513 = arith.constant 1.000000e+00 : f32
    %1317 = vector.broadcast %cst_513 : f32 to vector<1x8xf32>
    %1318 = arith.subf %1312, %1317 : vector<1x8xf32>
    %1319 = arith.select %1316, %1318, %1312 : vector<1x8xi1>, vector<1x8xf32>
    %cst_514 = arith.constant -1.000000e+00 : f32
    %1320 = vector.broadcast %cst_514 : f32 to vector<1x8xf32>
    %1321 = arith.select %1314, %1320, %1319 : vector<1x8xi1>, vector<1x8xf32>
    %cst_515 = arith.constant 1.000000e-30 : f32
    %1322 = vector.broadcast %cst_515 : f32 to vector<1x8xf32>
    %1323 = arith.maximumf %1312, %1322 : vector<1x8xf32>
    %cst_516 = arith.constant 1.000000e+00 : f32
    %1324 = vector.broadcast %cst_516 : f32 to vector<1x8xf32>
    %1325 = arith.addf %1312, %1324 : vector<1x8xf32>
    %cst_517 = arith.constant 1.000000e+00 : f32
    %1326 = vector.broadcast %cst_517 : f32 to vector<1x8xf32>
    %1327 = arith.select %1316, %1325, %1326 : vector<1x8xi1>, vector<1x8xf32>
    %1328 = arith.select %1314, %1323, %1327 : vector<1x8xi1>, vector<1x8xf32>
    %1329 = arith.divf %1321, %1328 : vector<1x8xf32>
    %cst_518 = arith.constant 0.785398185 : f32
    %cst_519 = arith.constant 0.000000e+00 : f32
    %1330 = vector.broadcast %cst_518 : f32 to vector<1x8xf32>
    %1331 = vector.broadcast %cst_519 : f32 to vector<1x8xf32>
    %1332 = arith.select %1316, %1330, %1331 : vector<1x8xi1>, vector<1x8xf32>
    %cst_520 = arith.constant 1.57079637 : f32
    %1333 = vector.broadcast %cst_520 : f32 to vector<1x8xf32>
    %1334 = arith.select %1314, %1333, %1332 : vector<1x8xi1>, vector<1x8xf32>
    %1335 = arith.mulf %1329, %1329 : vector<1x8xf32>
    %cst_521 = arith.constant 0.0805374458 : f32
    %1336 = vector.broadcast %cst_521 : f32 to vector<1x8xf32>
    %1337 = arith.mulf %1336, %1335 : vector<1x8xf32>
    %cst_522 = arith.constant 0.138776854 : f32
    %1338 = vector.broadcast %cst_522 : f32 to vector<1x8xf32>
    %1339 = arith.subf %1337, %1338 : vector<1x8xf32>
    %1340 = arith.mulf %1339, %1335 : vector<1x8xf32>
    %cst_523 = arith.constant 0.199777111 : f32
    %1341 = vector.broadcast %cst_523 : f32 to vector<1x8xf32>
    %1342 = arith.addf %1340, %1341 : vector<1x8xf32>
    %1343 = arith.mulf %1342, %1335 : vector<1x8xf32>
    %cst_524 = arith.constant 0.333329499 : f32
    %1344 = vector.broadcast %cst_524 : f32 to vector<1x8xf32>
    %1345 = arith.subf %1343, %1344 : vector<1x8xf32>
    %1346 = arith.addf %1334, %1329 : vector<1x8xf32>
    %1347 = arith.mulf %1329, %1335 : vector<1x8xf32>
    %1348 = arith.mulf %1347, %1345 : vector<1x8xf32>
    %1349 = arith.addf %1346, %1348 : vector<1x8xf32>
    %1350 = arith.mulf %1311, %1349 : vector<1x8xf32>
    %cst_525 = arith.constant dense<0.000000e+00> : vector<1x8xf32>
    %1351 = tpu.matmul %1350, %6, %cst_525 {dimension_numbers = #tpu.dot_dimension_numbers<[1], [0], [0], [1], [0, 0, 1, 1], [], []>} : vector<1x8xf32>, vector<8x8xf32>, vector<1x8xf32> -> vector<1x8xf32>
    %1352 = arith.addf %1305, %1351 : vector<1x8xf32>
    %1353 = arith.addf %1352, %7 : vector<1x8xf32>
    %cst_526 = arith.constant 0.000000e+00 : f32
    %1354 = vector.broadcast %cst_526 : f32 to vector<1x8xf32>
    %1355 = arith.cmpf olt, %1353, %1354 : vector<1x8xf32>
    %cst_527 = arith.constant -1.000000e+00 : f32
    %cst_528 = arith.constant 1.000000e+00 : f32
    %1356 = vector.broadcast %cst_527 : f32 to vector<1x8xf32>
    %1357 = vector.broadcast %cst_528 : f32 to vector<1x8xf32>
    %1358 = arith.select %1355, %1356, %1357 : vector<1x8xi1>, vector<1x8xf32>
    %1359 = math.absf %1353 : vector<1x8xf32>
    %cst_529 = arith.constant 2.41421366 : f32
    %1360 = vector.broadcast %cst_529 : f32 to vector<1x8xf32>
    %1361 = arith.cmpf ogt, %1359, %1360 : vector<1x8xf32>
    %cst_530 = arith.constant 0.414213568 : f32
    %1362 = vector.broadcast %cst_530 : f32 to vector<1x8xf32>
    %1363 = arith.cmpf ogt, %1359, %1362 : vector<1x8xf32>
    %cst_531 = arith.constant 1.000000e+00 : f32
    %1364 = vector.broadcast %cst_531 : f32 to vector<1x8xf32>
    %1365 = arith.subf %1359, %1364 : vector<1x8xf32>
    %1366 = arith.select %1363, %1365, %1359 : vector<1x8xi1>, vector<1x8xf32>
    %cst_532 = arith.constant -1.000000e+00 : f32
    %1367 = vector.broadcast %cst_532 : f32 to vector<1x8xf32>
    %1368 = arith.select %1361, %1367, %1366 : vector<1x8xi1>, vector<1x8xf32>
    %cst_533 = arith.constant 1.000000e-30 : f32
    %1369 = vector.broadcast %cst_533 : f32 to vector<1x8xf32>
    %1370 = arith.maximumf %1359, %1369 : vector<1x8xf32>
    %cst_534 = arith.constant 1.000000e+00 : f32
    %1371 = vector.broadcast %cst_534 : f32 to vector<1x8xf32>
    %1372 = arith.addf %1359, %1371 : vector<1x8xf32>
    %cst_535 = arith.constant 1.000000e+00 : f32
    %1373 = vector.broadcast %cst_535 : f32 to vector<1x8xf32>
    %1374 = arith.select %1363, %1372, %1373 : vector<1x8xi1>, vector<1x8xf32>
    %1375 = arith.select %1361, %1370, %1374 : vector<1x8xi1>, vector<1x8xf32>
    %1376 = arith.divf %1368, %1375 : vector<1x8xf32>
    %cst_536 = arith.constant 0.785398185 : f32
    %cst_537 = arith.constant 0.000000e+00 : f32
    %1377 = vector.broadcast %cst_536 : f32 to vector<1x8xf32>
    %1378 = vector.broadcast %cst_537 : f32 to vector<1x8xf32>
    %1379 = arith.select %1363, %1377, %1378 : vector<1x8xi1>, vector<1x8xf32>
    %cst_538 = arith.constant 1.57079637 : f32
    %1380 = vector.broadcast %cst_538 : f32 to vector<1x8xf32>
    %1381 = arith.select %1361, %1380, %1379 : vector<1x8xi1>, vector<1x8xf32>
    %1382 = arith.mulf %1376, %1376 : vector<1x8xf32>
    %cst_539 = arith.constant 0.0805374458 : f32
    %1383 = vector.broadcast %cst_539 : f32 to vector<1x8xf32>
    %1384 = arith.mulf %1383, %1382 : vector<1x8xf32>
    %cst_540 = arith.constant 0.138776854 : f32
    %1385 = vector.broadcast %cst_540 : f32 to vector<1x8xf32>
    %1386 = arith.subf %1384, %1385 : vector<1x8xf32>
    %1387 = arith.mulf %1386, %1382 : vector<1x8xf32>
    %cst_541 = arith.constant 0.199777111 : f32
    %1388 = vector.broadcast %cst_541 : f32 to vector<1x8xf32>
    %1389 = arith.addf %1387, %1388 : vector<1x8xf32>
    %1390 = arith.mulf %1389, %1382 : vector<1x8xf32>
    %cst_542 = arith.constant 0.333329499 : f32
    %1391 = vector.broadcast %cst_542 : f32 to vector<1x8xf32>
    %1392 = arith.subf %1390, %1391 : vector<1x8xf32>
    %1393 = arith.addf %1381, %1376 : vector<1x8xf32>
    %1394 = arith.mulf %1376, %1382 : vector<1x8xf32>
    %1395 = arith.mulf %1394, %1392 : vector<1x8xf32>
    %1396 = arith.addf %1393, %1395 : vector<1x8xf32>
    %1397 = arith.mulf %1358, %1396 : vector<1x8xf32>
    %1398 = arith.mulf %1353, %1353 : vector<1x8xf32>
    %cst_543 = arith.constant 0.000000e+00 : f32
    %1399 = vector.broadcast %cst_543 : f32 to vector<1x8xf32>
    %1400 = arith.cmpf olt, %1398, %1399 : vector<1x8xf32>
    %cst_544 = arith.constant -1.000000e+00 : f32
    %cst_545 = arith.constant 1.000000e+00 : f32
    %1401 = vector.broadcast %cst_544 : f32 to vector<1x8xf32>
    %1402 = vector.broadcast %cst_545 : f32 to vector<1x8xf32>
    %1403 = arith.select %1400, %1401, %1402 : vector<1x8xi1>, vector<1x8xf32>
    %1404 = math.absf %1398 : vector<1x8xf32>
    %cst_546 = arith.constant 2.41421366 : f32
    %1405 = vector.broadcast %cst_546 : f32 to vector<1x8xf32>
    %1406 = arith.cmpf ogt, %1404, %1405 : vector<1x8xf32>
    %cst_547 = arith.constant 0.414213568 : f32
    %1407 = vector.broadcast %cst_547 : f32 to vector<1x8xf32>
    %1408 = arith.cmpf ogt, %1404, %1407 : vector<1x8xf32>
    %cst_548 = arith.constant 1.000000e+00 : f32
    %1409 = vector.broadcast %cst_548 : f32 to vector<1x8xf32>
    %1410 = arith.subf %1404, %1409 : vector<1x8xf32>
    %1411 = arith.select %1408, %1410, %1404 : vector<1x8xi1>, vector<1x8xf32>
    %cst_549 = arith.constant -1.000000e+00 : f32
    %1412 = vector.broadcast %cst_549 : f32 to vector<1x8xf32>
    %1413 = arith.select %1406, %1412, %1411 : vector<1x8xi1>, vector<1x8xf32>
    %cst_550 = arith.constant 1.000000e-30 : f32
    %1414 = vector.broadcast %cst_550 : f32 to vector<1x8xf32>
    %1415 = arith.maximumf %1404, %1414 : vector<1x8xf32>
    %cst_551 = arith.constant 1.000000e+00 : f32
    %1416 = vector.broadcast %cst_551 : f32 to vector<1x8xf32>
    %1417 = arith.addf %1404, %1416 : vector<1x8xf32>
    %cst_552 = arith.constant 1.000000e+00 : f32
    %1418 = vector.broadcast %cst_552 : f32 to vector<1x8xf32>
    %1419 = arith.select %1408, %1417, %1418 : vector<1x8xi1>, vector<1x8xf32>
    %1420 = arith.select %1406, %1415, %1419 : vector<1x8xi1>, vector<1x8xf32>
    %1421 = arith.divf %1413, %1420 : vector<1x8xf32>
    %cst_553 = arith.constant 0.785398185 : f32
    %cst_554 = arith.constant 0.000000e+00 : f32
    %1422 = vector.broadcast %cst_553 : f32 to vector<1x8xf32>
    %1423 = vector.broadcast %cst_554 : f32 to vector<1x8xf32>
    %1424 = arith.select %1408, %1422, %1423 : vector<1x8xi1>, vector<1x8xf32>
    %cst_555 = arith.constant 1.57079637 : f32
    %1425 = vector.broadcast %cst_555 : f32 to vector<1x8xf32>
    %1426 = arith.select %1406, %1425, %1424 : vector<1x8xi1>, vector<1x8xf32>
    %1427 = arith.mulf %1421, %1421 : vector<1x8xf32>
    %cst_556 = arith.constant 0.0805374458 : f32
    %1428 = vector.broadcast %cst_556 : f32 to vector<1x8xf32>
    %1429 = arith.mulf %1428, %1427 : vector<1x8xf32>
    %cst_557 = arith.constant 0.138776854 : f32
    %1430 = vector.broadcast %cst_557 : f32 to vector<1x8xf32>
    %1431 = arith.subf %1429, %1430 : vector<1x8xf32>
    %1432 = arith.mulf %1431, %1427 : vector<1x8xf32>
    %cst_558 = arith.constant 0.199777111 : f32
    %1433 = vector.broadcast %cst_558 : f32 to vector<1x8xf32>
    %1434 = arith.addf %1432, %1433 : vector<1x8xf32>
    %1435 = arith.mulf %1434, %1427 : vector<1x8xf32>
    %cst_559 = arith.constant 0.333329499 : f32
    %1436 = vector.broadcast %cst_559 : f32 to vector<1x8xf32>
    %1437 = arith.subf %1435, %1436 : vector<1x8xf32>
    %1438 = arith.addf %1426, %1421 : vector<1x8xf32>
    %1439 = arith.mulf %1421, %1427 : vector<1x8xf32>
    %1440 = arith.mulf %1439, %1437 : vector<1x8xf32>
    %1441 = arith.addf %1438, %1440 : vector<1x8xf32>
    %1442 = arith.mulf %1403, %1441 : vector<1x8xf32>
    %cst_560 = arith.constant dense<0.000000e+00> : vector<1x32xf32>
    %1443 = tpu.matmul %1397, %2, %cst_560 {dimension_numbers = #tpu.dot_dimension_numbers<[1], [0], [0], [1], [0, 0, 1, 1], [], []>} : vector<1x8xf32>, vector<8x32xf32>, vector<1x32xf32> -> vector<1x32xf32>
    %cst_561 = arith.constant dense<0.000000e+00> : vector<1x32xf32>
    %1444 = tpu.matmul %1442, %3, %cst_561 {dimension_numbers = #tpu.dot_dimension_numbers<[1], [0], [0], [1], [0, 0, 1, 1], [], []>} : vector<1x8xf32>, vector<8x32xf32>, vector<1x32xf32> -> vector<1x32xf32>
    %1445 = arith.addf %1443, %1444 : vector<1x32xf32>
    %c6 = arith.constant 6 : index
    %c0_562 = arith.constant 0 : index
    %1446 = vector.load %arg3[%c6, %c0_562] : memref<8x32xf32, #tpu.memory_space<vmem>>, vector<1x32xf32>
    %1447 = arith.addf %1445, %1446 : vector<1x32xf32>
    %cst_563 = arith.constant 0.000000e+00 : f32
    %1448 = vector.broadcast %cst_563 : f32 to vector<1x32xf32>
    %1449 = arith.subf %1448, %1447 : vector<1x32xf32>
    %1450 = math.exp %1449 : vector<1x32xf32>
    %cst_564 = arith.constant 1.000000e+00 : f32
    %1451 = vector.broadcast %cst_564 : f32 to vector<1x32xf32>
    %1452 = arith.addf %1451, %1450 : vector<1x32xf32>
    %cst_565 = arith.constant 1.000000e+00 : f32
    %1453 = vector.broadcast %cst_565 : f32 to vector<1x32xf32>
    %1454 = arith.divf %1453, %1452 : vector<1x32xf32>
    %1455 = vector.extract_strided_slice %1454 {offsets = [0, 0], sizes = [1, 8], strides = [1, 1]} : vector<1x32xf32> to vector<1x8xf32>
    %1456 = vector.extract_strided_slice %1454 {offsets = [0, 8], sizes = [1, 8], strides = [1, 1]} : vector<1x32xf32> to vector<1x8xf32>
    %1457 = vector.extract_strided_slice %1454 {offsets = [0, 16], sizes = [1, 8], strides = [1, 1]} : vector<1x32xf32> to vector<1x8xf32>
    %1458 = vector.extract_strided_slice %1454 {offsets = [0, 24], sizes = [1, 8], strides = [1, 1]} : vector<1x32xf32> to vector<1x8xf32>
    %cst_566 = arith.constant 2.000000e+00 : f32
    %1459 = vector.broadcast %cst_566 : f32 to vector<1x8xf32>
    %1460 = arith.mulf %1459, %1458 : vector<1x8xf32>
    %cst_567 = arith.constant 1.000000e+00 : f32
    %1461 = vector.broadcast %cst_567 : f32 to vector<1x8xf32>
    %1462 = arith.subf %1460, %1461 : vector<1x8xf32>
    %1463 = arith.mulf %1258, %1455 : vector<1x8xf32>
    %1464 = arith.mulf %1456, %1462 : vector<1x8xf32>
    %1465 = arith.addf %1463, %1464 : vector<1x8xf32>
    %1466 = math.tanh %1465 : vector<1x8xf32>
    %1467 = arith.mulf %1457, %1466 : vector<1x8xf32>
    %cst_568 = arith.constant 0.000000e+00 : f32
    %1468 = vector.broadcast %cst_568 : f32 to vector<1x8xf32>
    %1469 = arith.cmpf olt, %1467, %1468 : vector<1x8xf32>
    %cst_569 = arith.constant -1.000000e+00 : f32
    %cst_570 = arith.constant 1.000000e+00 : f32
    %1470 = vector.broadcast %cst_569 : f32 to vector<1x8xf32>
    %1471 = vector.broadcast %cst_570 : f32 to vector<1x8xf32>
    %1472 = arith.select %1469, %1470, %1471 : vector<1x8xi1>, vector<1x8xf32>
    %1473 = math.absf %1467 : vector<1x8xf32>
    %cst_571 = arith.constant 2.41421366 : f32
    %1474 = vector.broadcast %cst_571 : f32 to vector<1x8xf32>
    %1475 = arith.cmpf ogt, %1473, %1474 : vector<1x8xf32>
    %cst_572 = arith.constant 0.414213568 : f32
    %1476 = vector.broadcast %cst_572 : f32 to vector<1x8xf32>
    %1477 = arith.cmpf ogt, %1473, %1476 : vector<1x8xf32>
    %cst_573 = arith.constant 1.000000e+00 : f32
    %1478 = vector.broadcast %cst_573 : f32 to vector<1x8xf32>
    %1479 = arith.subf %1473, %1478 : vector<1x8xf32>
    %1480 = arith.select %1477, %1479, %1473 : vector<1x8xi1>, vector<1x8xf32>
    %cst_574 = arith.constant -1.000000e+00 : f32
    %1481 = vector.broadcast %cst_574 : f32 to vector<1x8xf32>
    %1482 = arith.select %1475, %1481, %1480 : vector<1x8xi1>, vector<1x8xf32>
    %cst_575 = arith.constant 1.000000e-30 : f32
    %1483 = vector.broadcast %cst_575 : f32 to vector<1x8xf32>
    %1484 = arith.maximumf %1473, %1483 : vector<1x8xf32>
    %cst_576 = arith.constant 1.000000e+00 : f32
    %1485 = vector.broadcast %cst_576 : f32 to vector<1x8xf32>
    %1486 = arith.addf %1473, %1485 : vector<1x8xf32>
    %cst_577 = arith.constant 1.000000e+00 : f32
    %1487 = vector.broadcast %cst_577 : f32 to vector<1x8xf32>
    %1488 = arith.select %1477, %1486, %1487 : vector<1x8xi1>, vector<1x8xf32>
    %1489 = arith.select %1475, %1484, %1488 : vector<1x8xi1>, vector<1x8xf32>
    %1490 = arith.divf %1482, %1489 : vector<1x8xf32>
    %cst_578 = arith.constant 0.785398185 : f32
    %cst_579 = arith.constant 0.000000e+00 : f32
    %1491 = vector.broadcast %cst_578 : f32 to vector<1x8xf32>
    %1492 = vector.broadcast %cst_579 : f32 to vector<1x8xf32>
    %1493 = arith.select %1477, %1491, %1492 : vector<1x8xi1>, vector<1x8xf32>
    %cst_580 = arith.constant 1.57079637 : f32
    %1494 = vector.broadcast %cst_580 : f32 to vector<1x8xf32>
    %1495 = arith.select %1475, %1494, %1493 : vector<1x8xi1>, vector<1x8xf32>
    %1496 = arith.mulf %1490, %1490 : vector<1x8xf32>
    %cst_581 = arith.constant 0.0805374458 : f32
    %1497 = vector.broadcast %cst_581 : f32 to vector<1x8xf32>
    %1498 = arith.mulf %1497, %1496 : vector<1x8xf32>
    %cst_582 = arith.constant 0.138776854 : f32
    %1499 = vector.broadcast %cst_582 : f32 to vector<1x8xf32>
    %1500 = arith.subf %1498, %1499 : vector<1x8xf32>
    %1501 = arith.mulf %1500, %1496 : vector<1x8xf32>
    %cst_583 = arith.constant 0.199777111 : f32
    %1502 = vector.broadcast %cst_583 : f32 to vector<1x8xf32>
    %1503 = arith.addf %1501, %1502 : vector<1x8xf32>
    %1504 = arith.mulf %1503, %1496 : vector<1x8xf32>
    %cst_584 = arith.constant 0.333329499 : f32
    %1505 = vector.broadcast %cst_584 : f32 to vector<1x8xf32>
    %1506 = arith.subf %1504, %1505 : vector<1x8xf32>
    %1507 = arith.addf %1495, %1490 : vector<1x8xf32>
    %1508 = arith.mulf %1490, %1496 : vector<1x8xf32>
    %1509 = arith.mulf %1508, %1506 : vector<1x8xf32>
    %1510 = arith.addf %1507, %1509 : vector<1x8xf32>
    %1511 = arith.mulf %1472, %1510 : vector<1x8xf32>
    %cst_585 = arith.constant dense<0.000000e+00> : vector<1x8xf32>
    %1512 = tpu.matmul %1511, %5, %cst_585 {dimension_numbers = #tpu.dot_dimension_numbers<[1], [0], [0], [1], [0, 0, 1, 1], [], []>} : vector<1x8xf32>, vector<8x8xf32>, vector<1x8xf32> -> vector<1x8xf32>
    %1513 = arith.mulf %1467, %1467 : vector<1x8xf32>
    %cst_586 = arith.constant 0.000000e+00 : f32
    %1514 = vector.broadcast %cst_586 : f32 to vector<1x8xf32>
    %1515 = arith.cmpf olt, %1513, %1514 : vector<1x8xf32>
    %cst_587 = arith.constant -1.000000e+00 : f32
    %cst_588 = arith.constant 1.000000e+00 : f32
    %1516 = vector.broadcast %cst_587 : f32 to vector<1x8xf32>
    %1517 = vector.broadcast %cst_588 : f32 to vector<1x8xf32>
    %1518 = arith.select %1515, %1516, %1517 : vector<1x8xi1>, vector<1x8xf32>
    %1519 = math.absf %1513 : vector<1x8xf32>
    %cst_589 = arith.constant 2.41421366 : f32
    %1520 = vector.broadcast %cst_589 : f32 to vector<1x8xf32>
    %1521 = arith.cmpf ogt, %1519, %1520 : vector<1x8xf32>
    %cst_590 = arith.constant 0.414213568 : f32
    %1522 = vector.broadcast %cst_590 : f32 to vector<1x8xf32>
    %1523 = arith.cmpf ogt, %1519, %1522 : vector<1x8xf32>
    %cst_591 = arith.constant 1.000000e+00 : f32
    %1524 = vector.broadcast %cst_591 : f32 to vector<1x8xf32>
    %1525 = arith.subf %1519, %1524 : vector<1x8xf32>
    %1526 = arith.select %1523, %1525, %1519 : vector<1x8xi1>, vector<1x8xf32>
    %cst_592 = arith.constant -1.000000e+00 : f32
    %1527 = vector.broadcast %cst_592 : f32 to vector<1x8xf32>
    %1528 = arith.select %1521, %1527, %1526 : vector<1x8xi1>, vector<1x8xf32>
    %cst_593 = arith.constant 1.000000e-30 : f32
    %1529 = vector.broadcast %cst_593 : f32 to vector<1x8xf32>
    %1530 = arith.maximumf %1519, %1529 : vector<1x8xf32>
    %cst_594 = arith.constant 1.000000e+00 : f32
    %1531 = vector.broadcast %cst_594 : f32 to vector<1x8xf32>
    %1532 = arith.addf %1519, %1531 : vector<1x8xf32>
    %cst_595 = arith.constant 1.000000e+00 : f32
    %1533 = vector.broadcast %cst_595 : f32 to vector<1x8xf32>
    %1534 = arith.select %1523, %1532, %1533 : vector<1x8xi1>, vector<1x8xf32>
    %1535 = arith.select %1521, %1530, %1534 : vector<1x8xi1>, vector<1x8xf32>
    %1536 = arith.divf %1528, %1535 : vector<1x8xf32>
    %cst_596 = arith.constant 0.785398185 : f32
    %cst_597 = arith.constant 0.000000e+00 : f32
    %1537 = vector.broadcast %cst_596 : f32 to vector<1x8xf32>
    %1538 = vector.broadcast %cst_597 : f32 to vector<1x8xf32>
    %1539 = arith.select %1523, %1537, %1538 : vector<1x8xi1>, vector<1x8xf32>
    %cst_598 = arith.constant 1.57079637 : f32
    %1540 = vector.broadcast %cst_598 : f32 to vector<1x8xf32>
    %1541 = arith.select %1521, %1540, %1539 : vector<1x8xi1>, vector<1x8xf32>
    %1542 = arith.mulf %1536, %1536 : vector<1x8xf32>
    %cst_599 = arith.constant 0.0805374458 : f32
    %1543 = vector.broadcast %cst_599 : f32 to vector<1x8xf32>
    %1544 = arith.mulf %1543, %1542 : vector<1x8xf32>
    %cst_600 = arith.constant 0.138776854 : f32
    %1545 = vector.broadcast %cst_600 : f32 to vector<1x8xf32>
    %1546 = arith.subf %1544, %1545 : vector<1x8xf32>
    %1547 = arith.mulf %1546, %1542 : vector<1x8xf32>
    %cst_601 = arith.constant 0.199777111 : f32
    %1548 = vector.broadcast %cst_601 : f32 to vector<1x8xf32>
    %1549 = arith.addf %1547, %1548 : vector<1x8xf32>
    %1550 = arith.mulf %1549, %1542 : vector<1x8xf32>
    %cst_602 = arith.constant 0.333329499 : f32
    %1551 = vector.broadcast %cst_602 : f32 to vector<1x8xf32>
    %1552 = arith.subf %1550, %1551 : vector<1x8xf32>
    %1553 = arith.addf %1541, %1536 : vector<1x8xf32>
    %1554 = arith.mulf %1536, %1542 : vector<1x8xf32>
    %1555 = arith.mulf %1554, %1552 : vector<1x8xf32>
    %1556 = arith.addf %1553, %1555 : vector<1x8xf32>
    %1557 = arith.mulf %1518, %1556 : vector<1x8xf32>
    %cst_603 = arith.constant dense<0.000000e+00> : vector<1x8xf32>
    %1558 = tpu.matmul %1557, %6, %cst_603 {dimension_numbers = #tpu.dot_dimension_numbers<[1], [0], [0], [1], [0, 0, 1, 1], [], []>} : vector<1x8xf32>, vector<8x8xf32>, vector<1x8xf32> -> vector<1x8xf32>
    %1559 = arith.addf %1512, %1558 : vector<1x8xf32>
    %1560 = arith.addf %1559, %7 : vector<1x8xf32>
    %cst_604 = arith.constant 0.000000e+00 : f32
    %1561 = vector.broadcast %cst_604 : f32 to vector<1x8xf32>
    %1562 = arith.cmpf olt, %1560, %1561 : vector<1x8xf32>
    %cst_605 = arith.constant -1.000000e+00 : f32
    %cst_606 = arith.constant 1.000000e+00 : f32
    %1563 = vector.broadcast %cst_605 : f32 to vector<1x8xf32>
    %1564 = vector.broadcast %cst_606 : f32 to vector<1x8xf32>
    %1565 = arith.select %1562, %1563, %1564 : vector<1x8xi1>, vector<1x8xf32>
    %1566 = math.absf %1560 : vector<1x8xf32>
    %cst_607 = arith.constant 2.41421366 : f32
    %1567 = vector.broadcast %cst_607 : f32 to vector<1x8xf32>
    %1568 = arith.cmpf ogt, %1566, %1567 : vector<1x8xf32>
    %cst_608 = arith.constant 0.414213568 : f32
    %1569 = vector.broadcast %cst_608 : f32 to vector<1x8xf32>
    %1570 = arith.cmpf ogt, %1566, %1569 : vector<1x8xf32>
    %cst_609 = arith.constant 1.000000e+00 : f32
    %1571 = vector.broadcast %cst_609 : f32 to vector<1x8xf32>
    %1572 = arith.subf %1566, %1571 : vector<1x8xf32>
    %1573 = arith.select %1570, %1572, %1566 : vector<1x8xi1>, vector<1x8xf32>
    %cst_610 = arith.constant -1.000000e+00 : f32
    %1574 = vector.broadcast %cst_610 : f32 to vector<1x8xf32>
    %1575 = arith.select %1568, %1574, %1573 : vector<1x8xi1>, vector<1x8xf32>
    %cst_611 = arith.constant 1.000000e-30 : f32
    %1576 = vector.broadcast %cst_611 : f32 to vector<1x8xf32>
    %1577 = arith.maximumf %1566, %1576 : vector<1x8xf32>
    %cst_612 = arith.constant 1.000000e+00 : f32
    %1578 = vector.broadcast %cst_612 : f32 to vector<1x8xf32>
    %1579 = arith.addf %1566, %1578 : vector<1x8xf32>
    %cst_613 = arith.constant 1.000000e+00 : f32
    %1580 = vector.broadcast %cst_613 : f32 to vector<1x8xf32>
    %1581 = arith.select %1570, %1579, %1580 : vector<1x8xi1>, vector<1x8xf32>
    %1582 = arith.select %1568, %1577, %1581 : vector<1x8xi1>, vector<1x8xf32>
    %1583 = arith.divf %1575, %1582 : vector<1x8xf32>
    %cst_614 = arith.constant 0.785398185 : f32
    %cst_615 = arith.constant 0.000000e+00 : f32
    %1584 = vector.broadcast %cst_614 : f32 to vector<1x8xf32>
    %1585 = vector.broadcast %cst_615 : f32 to vector<1x8xf32>
    %1586 = arith.select %1570, %1584, %1585 : vector<1x8xi1>, vector<1x8xf32>
    %cst_616 = arith.constant 1.57079637 : f32
    %1587 = vector.broadcast %cst_616 : f32 to vector<1x8xf32>
    %1588 = arith.select %1568, %1587, %1586 : vector<1x8xi1>, vector<1x8xf32>
    %1589 = arith.mulf %1583, %1583 : vector<1x8xf32>
    %cst_617 = arith.constant 0.0805374458 : f32
    %1590 = vector.broadcast %cst_617 : f32 to vector<1x8xf32>
    %1591 = arith.mulf %1590, %1589 : vector<1x8xf32>
    %cst_618 = arith.constant 0.138776854 : f32
    %1592 = vector.broadcast %cst_618 : f32 to vector<1x8xf32>
    %1593 = arith.subf %1591, %1592 : vector<1x8xf32>
    %1594 = arith.mulf %1593, %1589 : vector<1x8xf32>
    %cst_619 = arith.constant 0.199777111 : f32
    %1595 = vector.broadcast %cst_619 : f32 to vector<1x8xf32>
    %1596 = arith.addf %1594, %1595 : vector<1x8xf32>
    %1597 = arith.mulf %1596, %1589 : vector<1x8xf32>
    %cst_620 = arith.constant 0.333329499 : f32
    %1598 = vector.broadcast %cst_620 : f32 to vector<1x8xf32>
    %1599 = arith.subf %1597, %1598 : vector<1x8xf32>
    %1600 = arith.addf %1588, %1583 : vector<1x8xf32>
    %1601 = arith.mulf %1583, %1589 : vector<1x8xf32>
    %1602 = arith.mulf %1601, %1599 : vector<1x8xf32>
    %1603 = arith.addf %1600, %1602 : vector<1x8xf32>
    %1604 = arith.mulf %1565, %1603 : vector<1x8xf32>
    %1605 = arith.mulf %1560, %1560 : vector<1x8xf32>
    %cst_621 = arith.constant 0.000000e+00 : f32
    %1606 = vector.broadcast %cst_621 : f32 to vector<1x8xf32>
    %1607 = arith.cmpf olt, %1605, %1606 : vector<1x8xf32>
    %cst_622 = arith.constant -1.000000e+00 : f32
    %cst_623 = arith.constant 1.000000e+00 : f32
    %1608 = vector.broadcast %cst_622 : f32 to vector<1x8xf32>
    %1609 = vector.broadcast %cst_623 : f32 to vector<1x8xf32>
    %1610 = arith.select %1607, %1608, %1609 : vector<1x8xi1>, vector<1x8xf32>
    %1611 = math.absf %1605 : vector<1x8xf32>
    %cst_624 = arith.constant 2.41421366 : f32
    %1612 = vector.broadcast %cst_624 : f32 to vector<1x8xf32>
    %1613 = arith.cmpf ogt, %1611, %1612 : vector<1x8xf32>
    %cst_625 = arith.constant 0.414213568 : f32
    %1614 = vector.broadcast %cst_625 : f32 to vector<1x8xf32>
    %1615 = arith.cmpf ogt, %1611, %1614 : vector<1x8xf32>
    %cst_626 = arith.constant 1.000000e+00 : f32
    %1616 = vector.broadcast %cst_626 : f32 to vector<1x8xf32>
    %1617 = arith.subf %1611, %1616 : vector<1x8xf32>
    %1618 = arith.select %1615, %1617, %1611 : vector<1x8xi1>, vector<1x8xf32>
    %cst_627 = arith.constant -1.000000e+00 : f32
    %1619 = vector.broadcast %cst_627 : f32 to vector<1x8xf32>
    %1620 = arith.select %1613, %1619, %1618 : vector<1x8xi1>, vector<1x8xf32>
    %cst_628 = arith.constant 1.000000e-30 : f32
    %1621 = vector.broadcast %cst_628 : f32 to vector<1x8xf32>
    %1622 = arith.maximumf %1611, %1621 : vector<1x8xf32>
    %cst_629 = arith.constant 1.000000e+00 : f32
    %1623 = vector.broadcast %cst_629 : f32 to vector<1x8xf32>
    %1624 = arith.addf %1611, %1623 : vector<1x8xf32>
    %cst_630 = arith.constant 1.000000e+00 : f32
    %1625 = vector.broadcast %cst_630 : f32 to vector<1x8xf32>
    %1626 = arith.select %1615, %1624, %1625 : vector<1x8xi1>, vector<1x8xf32>
    %1627 = arith.select %1613, %1622, %1626 : vector<1x8xi1>, vector<1x8xf32>
    %1628 = arith.divf %1620, %1627 : vector<1x8xf32>
    %cst_631 = arith.constant 0.785398185 : f32
    %cst_632 = arith.constant 0.000000e+00 : f32
    %1629 = vector.broadcast %cst_631 : f32 to vector<1x8xf32>
    %1630 = vector.broadcast %cst_632 : f32 to vector<1x8xf32>
    %1631 = arith.select %1615, %1629, %1630 : vector<1x8xi1>, vector<1x8xf32>
    %cst_633 = arith.constant 1.57079637 : f32
    %1632 = vector.broadcast %cst_633 : f32 to vector<1x8xf32>
    %1633 = arith.select %1613, %1632, %1631 : vector<1x8xi1>, vector<1x8xf32>
    %1634 = arith.mulf %1628, %1628 : vector<1x8xf32>
    %cst_634 = arith.constant 0.0805374458 : f32
    %1635 = vector.broadcast %cst_634 : f32 to vector<1x8xf32>
    %1636 = arith.mulf %1635, %1634 : vector<1x8xf32>
    %cst_635 = arith.constant 0.138776854 : f32
    %1637 = vector.broadcast %cst_635 : f32 to vector<1x8xf32>
    %1638 = arith.subf %1636, %1637 : vector<1x8xf32>
    %1639 = arith.mulf %1638, %1634 : vector<1x8xf32>
    %cst_636 = arith.constant 0.199777111 : f32
    %1640 = vector.broadcast %cst_636 : f32 to vector<1x8xf32>
    %1641 = arith.addf %1639, %1640 : vector<1x8xf32>
    %1642 = arith.mulf %1641, %1634 : vector<1x8xf32>
    %cst_637 = arith.constant 0.333329499 : f32
    %1643 = vector.broadcast %cst_637 : f32 to vector<1x8xf32>
    %1644 = arith.subf %1642, %1643 : vector<1x8xf32>
    %1645 = arith.addf %1633, %1628 : vector<1x8xf32>
    %1646 = arith.mulf %1628, %1634 : vector<1x8xf32>
    %1647 = arith.mulf %1646, %1644 : vector<1x8xf32>
    %1648 = arith.addf %1645, %1647 : vector<1x8xf32>
    %1649 = arith.mulf %1610, %1648 : vector<1x8xf32>
    %cst_638 = arith.constant dense<0.000000e+00> : vector<1x32xf32>
    %1650 = tpu.matmul %1604, %2, %cst_638 {dimension_numbers = #tpu.dot_dimension_numbers<[1], [0], [0], [1], [0, 0, 1, 1], [], []>} : vector<1x8xf32>, vector<8x32xf32>, vector<1x32xf32> -> vector<1x32xf32>
    %cst_639 = arith.constant dense<0.000000e+00> : vector<1x32xf32>
    %1651 = tpu.matmul %1649, %3, %cst_639 {dimension_numbers = #tpu.dot_dimension_numbers<[1], [0], [0], [1], [0, 0, 1, 1], [], []>} : vector<1x8xf32>, vector<8x32xf32>, vector<1x32xf32> -> vector<1x32xf32>
    %1652 = arith.addf %1650, %1651 : vector<1x32xf32>
    %c7 = arith.constant 7 : index
    %c0_640 = arith.constant 0 : index
    %1653 = vector.load %arg3[%c7, %c0_640] : memref<8x32xf32, #tpu.memory_space<vmem>>, vector<1x32xf32>
    %1654 = arith.addf %1652, %1653 : vector<1x32xf32>
    %cst_641 = arith.constant 0.000000e+00 : f32
    %1655 = vector.broadcast %cst_641 : f32 to vector<1x32xf32>
    %1656 = arith.subf %1655, %1654 : vector<1x32xf32>
    %1657 = math.exp %1656 : vector<1x32xf32>
    %cst_642 = arith.constant 1.000000e+00 : f32
    %1658 = vector.broadcast %cst_642 : f32 to vector<1x32xf32>
    %1659 = arith.addf %1658, %1657 : vector<1x32xf32>
    %cst_643 = arith.constant 1.000000e+00 : f32
    %1660 = vector.broadcast %cst_643 : f32 to vector<1x32xf32>
    %1661 = arith.divf %1660, %1659 : vector<1x32xf32>
    %1662 = vector.extract_strided_slice %1661 {offsets = [0, 0], sizes = [1, 8], strides = [1, 1]} : vector<1x32xf32> to vector<1x8xf32>
    %1663 = vector.extract_strided_slice %1661 {offsets = [0, 8], sizes = [1, 8], strides = [1, 1]} : vector<1x32xf32> to vector<1x8xf32>
    %1664 = vector.extract_strided_slice %1661 {offsets = [0, 16], sizes = [1, 8], strides = [1, 1]} : vector<1x32xf32> to vector<1x8xf32>
    %1665 = vector.extract_strided_slice %1661 {offsets = [0, 24], sizes = [1, 8], strides = [1, 1]} : vector<1x32xf32> to vector<1x8xf32>
    %cst_644 = arith.constant 2.000000e+00 : f32
    %1666 = vector.broadcast %cst_644 : f32 to vector<1x8xf32>
    %1667 = arith.mulf %1666, %1665 : vector<1x8xf32>
    %cst_645 = arith.constant 1.000000e+00 : f32
    %1668 = vector.broadcast %cst_645 : f32 to vector<1x8xf32>
    %1669 = arith.subf %1667, %1668 : vector<1x8xf32>
    %1670 = arith.mulf %1465, %1662 : vector<1x8xf32>
    %1671 = arith.mulf %1663, %1669 : vector<1x8xf32>
    %1672 = arith.addf %1670, %1671 : vector<1x8xf32>
    %1673 = math.tanh %1672 : vector<1x8xf32>
    %1674 = arith.mulf %1664, %1673 : vector<1x8xf32>
    %cst_646 = arith.constant 0.000000e+00 : f32
    %1675 = vector.broadcast %cst_646 : f32 to vector<1x8xf32>
    %1676 = arith.cmpf olt, %1674, %1675 : vector<1x8xf32>
    %cst_647 = arith.constant -1.000000e+00 : f32
    %cst_648 = arith.constant 1.000000e+00 : f32
    %1677 = vector.broadcast %cst_647 : f32 to vector<1x8xf32>
    %1678 = vector.broadcast %cst_648 : f32 to vector<1x8xf32>
    %1679 = arith.select %1676, %1677, %1678 : vector<1x8xi1>, vector<1x8xf32>
    %1680 = math.absf %1674 : vector<1x8xf32>
    %cst_649 = arith.constant 2.41421366 : f32
    %1681 = vector.broadcast %cst_649 : f32 to vector<1x8xf32>
    %1682 = arith.cmpf ogt, %1680, %1681 : vector<1x8xf32>
    %cst_650 = arith.constant 0.414213568 : f32
    %1683 = vector.broadcast %cst_650 : f32 to vector<1x8xf32>
    %1684 = arith.cmpf ogt, %1680, %1683 : vector<1x8xf32>
    %cst_651 = arith.constant 1.000000e+00 : f32
    %1685 = vector.broadcast %cst_651 : f32 to vector<1x8xf32>
    %1686 = arith.subf %1680, %1685 : vector<1x8xf32>
    %1687 = arith.select %1684, %1686, %1680 : vector<1x8xi1>, vector<1x8xf32>
    %cst_652 = arith.constant -1.000000e+00 : f32
    %1688 = vector.broadcast %cst_652 : f32 to vector<1x8xf32>
    %1689 = arith.select %1682, %1688, %1687 : vector<1x8xi1>, vector<1x8xf32>
    %cst_653 = arith.constant 1.000000e-30 : f32
    %1690 = vector.broadcast %cst_653 : f32 to vector<1x8xf32>
    %1691 = arith.maximumf %1680, %1690 : vector<1x8xf32>
    %cst_654 = arith.constant 1.000000e+00 : f32
    %1692 = vector.broadcast %cst_654 : f32 to vector<1x8xf32>
    %1693 = arith.addf %1680, %1692 : vector<1x8xf32>
    %cst_655 = arith.constant 1.000000e+00 : f32
    %1694 = vector.broadcast %cst_655 : f32 to vector<1x8xf32>
    %1695 = arith.select %1684, %1693, %1694 : vector<1x8xi1>, vector<1x8xf32>
    %1696 = arith.select %1682, %1691, %1695 : vector<1x8xi1>, vector<1x8xf32>
    %1697 = arith.divf %1689, %1696 : vector<1x8xf32>
    %cst_656 = arith.constant 0.785398185 : f32
    %cst_657 = arith.constant 0.000000e+00 : f32
    %1698 = vector.broadcast %cst_656 : f32 to vector<1x8xf32>
    %1699 = vector.broadcast %cst_657 : f32 to vector<1x8xf32>
    %1700 = arith.select %1684, %1698, %1699 : vector<1x8xi1>, vector<1x8xf32>
    %cst_658 = arith.constant 1.57079637 : f32
    %1701 = vector.broadcast %cst_658 : f32 to vector<1x8xf32>
    %1702 = arith.select %1682, %1701, %1700 : vector<1x8xi1>, vector<1x8xf32>
    %1703 = arith.mulf %1697, %1697 : vector<1x8xf32>
    %cst_659 = arith.constant 0.0805374458 : f32
    %1704 = vector.broadcast %cst_659 : f32 to vector<1x8xf32>
    %1705 = arith.mulf %1704, %1703 : vector<1x8xf32>
    %cst_660 = arith.constant 0.138776854 : f32
    %1706 = vector.broadcast %cst_660 : f32 to vector<1x8xf32>
    %1707 = arith.subf %1705, %1706 : vector<1x8xf32>
    %1708 = arith.mulf %1707, %1703 : vector<1x8xf32>
    %cst_661 = arith.constant 0.199777111 : f32
    %1709 = vector.broadcast %cst_661 : f32 to vector<1x8xf32>
    %1710 = arith.addf %1708, %1709 : vector<1x8xf32>
    %1711 = arith.mulf %1710, %1703 : vector<1x8xf32>
    %cst_662 = arith.constant 0.333329499 : f32
    %1712 = vector.broadcast %cst_662 : f32 to vector<1x8xf32>
    %1713 = arith.subf %1711, %1712 : vector<1x8xf32>
    %1714 = arith.addf %1702, %1697 : vector<1x8xf32>
    %1715 = arith.mulf %1697, %1703 : vector<1x8xf32>
    %1716 = arith.mulf %1715, %1713 : vector<1x8xf32>
    %1717 = arith.addf %1714, %1716 : vector<1x8xf32>
    %1718 = arith.mulf %1679, %1717 : vector<1x8xf32>
    %cst_663 = arith.constant dense<0.000000e+00> : vector<1x8xf32>
    %1719 = tpu.matmul %1718, %5, %cst_663 {dimension_numbers = #tpu.dot_dimension_numbers<[1], [0], [0], [1], [0, 0, 1, 1], [], []>} : vector<1x8xf32>, vector<8x8xf32>, vector<1x8xf32> -> vector<1x8xf32>
    %1720 = arith.mulf %1674, %1674 : vector<1x8xf32>
    %cst_664 = arith.constant 0.000000e+00 : f32
    %1721 = vector.broadcast %cst_664 : f32 to vector<1x8xf32>
    %1722 = arith.cmpf olt, %1720, %1721 : vector<1x8xf32>
    %cst_665 = arith.constant -1.000000e+00 : f32
    %cst_666 = arith.constant 1.000000e+00 : f32
    %1723 = vector.broadcast %cst_665 : f32 to vector<1x8xf32>
    %1724 = vector.broadcast %cst_666 : f32 to vector<1x8xf32>
    %1725 = arith.select %1722, %1723, %1724 : vector<1x8xi1>, vector<1x8xf32>
    %1726 = math.absf %1720 : vector<1x8xf32>
    %cst_667 = arith.constant 2.41421366 : f32
    %1727 = vector.broadcast %cst_667 : f32 to vector<1x8xf32>
    %1728 = arith.cmpf ogt, %1726, %1727 : vector<1x8xf32>
    %cst_668 = arith.constant 0.414213568 : f32
    %1729 = vector.broadcast %cst_668 : f32 to vector<1x8xf32>
    %1730 = arith.cmpf ogt, %1726, %1729 : vector<1x8xf32>
    %cst_669 = arith.constant 1.000000e+00 : f32
    %1731 = vector.broadcast %cst_669 : f32 to vector<1x8xf32>
    %1732 = arith.subf %1726, %1731 : vector<1x8xf32>
    %1733 = arith.select %1730, %1732, %1726 : vector<1x8xi1>, vector<1x8xf32>
    %cst_670 = arith.constant -1.000000e+00 : f32
    %1734 = vector.broadcast %cst_670 : f32 to vector<1x8xf32>
    %1735 = arith.select %1728, %1734, %1733 : vector<1x8xi1>, vector<1x8xf32>
    %cst_671 = arith.constant 1.000000e-30 : f32
    %1736 = vector.broadcast %cst_671 : f32 to vector<1x8xf32>
    %1737 = arith.maximumf %1726, %1736 : vector<1x8xf32>
    %cst_672 = arith.constant 1.000000e+00 : f32
    %1738 = vector.broadcast %cst_672 : f32 to vector<1x8xf32>
    %1739 = arith.addf %1726, %1738 : vector<1x8xf32>
    %cst_673 = arith.constant 1.000000e+00 : f32
    %1740 = vector.broadcast %cst_673 : f32 to vector<1x8xf32>
    %1741 = arith.select %1730, %1739, %1740 : vector<1x8xi1>, vector<1x8xf32>
    %1742 = arith.select %1728, %1737, %1741 : vector<1x8xi1>, vector<1x8xf32>
    %1743 = arith.divf %1735, %1742 : vector<1x8xf32>
    %cst_674 = arith.constant 0.785398185 : f32
    %cst_675 = arith.constant 0.000000e+00 : f32
    %1744 = vector.broadcast %cst_674 : f32 to vector<1x8xf32>
    %1745 = vector.broadcast %cst_675 : f32 to vector<1x8xf32>
    %1746 = arith.select %1730, %1744, %1745 : vector<1x8xi1>, vector<1x8xf32>
    %cst_676 = arith.constant 1.57079637 : f32
    %1747 = vector.broadcast %cst_676 : f32 to vector<1x8xf32>
    %1748 = arith.select %1728, %1747, %1746 : vector<1x8xi1>, vector<1x8xf32>
    %1749 = arith.mulf %1743, %1743 : vector<1x8xf32>
    %cst_677 = arith.constant 0.0805374458 : f32
    %1750 = vector.broadcast %cst_677 : f32 to vector<1x8xf32>
    %1751 = arith.mulf %1750, %1749 : vector<1x8xf32>
    %cst_678 = arith.constant 0.138776854 : f32
    %1752 = vector.broadcast %cst_678 : f32 to vector<1x8xf32>
    %1753 = arith.subf %1751, %1752 : vector<1x8xf32>
    %1754 = arith.mulf %1753, %1749 : vector<1x8xf32>
    %cst_679 = arith.constant 0.199777111 : f32
    %1755 = vector.broadcast %cst_679 : f32 to vector<1x8xf32>
    %1756 = arith.addf %1754, %1755 : vector<1x8xf32>
    %1757 = arith.mulf %1756, %1749 : vector<1x8xf32>
    %cst_680 = arith.constant 0.333329499 : f32
    %1758 = vector.broadcast %cst_680 : f32 to vector<1x8xf32>
    %1759 = arith.subf %1757, %1758 : vector<1x8xf32>
    %1760 = arith.addf %1748, %1743 : vector<1x8xf32>
    %1761 = arith.mulf %1743, %1749 : vector<1x8xf32>
    %1762 = arith.mulf %1761, %1759 : vector<1x8xf32>
    %1763 = arith.addf %1760, %1762 : vector<1x8xf32>
    %1764 = arith.mulf %1725, %1763 : vector<1x8xf32>
    %cst_681 = arith.constant dense<0.000000e+00> : vector<1x8xf32>
    %1765 = tpu.matmul %1764, %6, %cst_681 {dimension_numbers = #tpu.dot_dimension_numbers<[1], [0], [0], [1], [0, 0, 1, 1], [], []>} : vector<1x8xf32>, vector<8x8xf32>, vector<1x8xf32> -> vector<1x8xf32>
    %1766 = arith.addf %1719, %1765 : vector<1x8xf32>
    %1767 = arith.addf %1766, %7 : vector<1x8xf32>
    %cst_682 = arith.constant 0.000000e+00 : f32
    %1768 = vector.broadcast %cst_682 : f32 to vector<1x8xf32>
    %1769 = arith.cmpf olt, %1767, %1768 : vector<1x8xf32>
    %cst_683 = arith.constant -1.000000e+00 : f32
    %cst_684 = arith.constant 1.000000e+00 : f32
    %1770 = vector.broadcast %cst_683 : f32 to vector<1x8xf32>
    %1771 = vector.broadcast %cst_684 : f32 to vector<1x8xf32>
    %1772 = arith.select %1769, %1770, %1771 : vector<1x8xi1>, vector<1x8xf32>
    %1773 = math.absf %1767 : vector<1x8xf32>
    %cst_685 = arith.constant 2.41421366 : f32
    %1774 = vector.broadcast %cst_685 : f32 to vector<1x8xf32>
    %1775 = arith.cmpf ogt, %1773, %1774 : vector<1x8xf32>
    %cst_686 = arith.constant 0.414213568 : f32
    %1776 = vector.broadcast %cst_686 : f32 to vector<1x8xf32>
    %1777 = arith.cmpf ogt, %1773, %1776 : vector<1x8xf32>
    %cst_687 = arith.constant 1.000000e+00 : f32
    %1778 = vector.broadcast %cst_687 : f32 to vector<1x8xf32>
    %1779 = arith.subf %1773, %1778 : vector<1x8xf32>
    %1780 = arith.select %1777, %1779, %1773 : vector<1x8xi1>, vector<1x8xf32>
    %cst_688 = arith.constant -1.000000e+00 : f32
    %1781 = vector.broadcast %cst_688 : f32 to vector<1x8xf32>
    %1782 = arith.select %1775, %1781, %1780 : vector<1x8xi1>, vector<1x8xf32>
    %cst_689 = arith.constant 1.000000e-30 : f32
    %1783 = vector.broadcast %cst_689 : f32 to vector<1x8xf32>
    %1784 = arith.maximumf %1773, %1783 : vector<1x8xf32>
    %cst_690 = arith.constant 1.000000e+00 : f32
    %1785 = vector.broadcast %cst_690 : f32 to vector<1x8xf32>
    %1786 = arith.addf %1773, %1785 : vector<1x8xf32>
    %cst_691 = arith.constant 1.000000e+00 : f32
    %1787 = vector.broadcast %cst_691 : f32 to vector<1x8xf32>
    %1788 = arith.select %1777, %1786, %1787 : vector<1x8xi1>, vector<1x8xf32>
    %1789 = arith.select %1775, %1784, %1788 : vector<1x8xi1>, vector<1x8xf32>
    %1790 = arith.divf %1782, %1789 : vector<1x8xf32>
    %cst_692 = arith.constant 0.785398185 : f32
    %cst_693 = arith.constant 0.000000e+00 : f32
    %1791 = vector.broadcast %cst_692 : f32 to vector<1x8xf32>
    %1792 = vector.broadcast %cst_693 : f32 to vector<1x8xf32>
    %1793 = arith.select %1777, %1791, %1792 : vector<1x8xi1>, vector<1x8xf32>
    %cst_694 = arith.constant 1.57079637 : f32
    %1794 = vector.broadcast %cst_694 : f32 to vector<1x8xf32>
    %1795 = arith.select %1775, %1794, %1793 : vector<1x8xi1>, vector<1x8xf32>
    %1796 = arith.mulf %1790, %1790 : vector<1x8xf32>
    %cst_695 = arith.constant 0.0805374458 : f32
    %1797 = vector.broadcast %cst_695 : f32 to vector<1x8xf32>
    %1798 = arith.mulf %1797, %1796 : vector<1x8xf32>
    %cst_696 = arith.constant 0.138776854 : f32
    %1799 = vector.broadcast %cst_696 : f32 to vector<1x8xf32>
    %1800 = arith.subf %1798, %1799 : vector<1x8xf32>
    %1801 = arith.mulf %1800, %1796 : vector<1x8xf32>
    %cst_697 = arith.constant 0.199777111 : f32
    %1802 = vector.broadcast %cst_697 : f32 to vector<1x8xf32>
    %1803 = arith.addf %1801, %1802 : vector<1x8xf32>
    %1804 = arith.mulf %1803, %1796 : vector<1x8xf32>
    %cst_698 = arith.constant 0.333329499 : f32
    %1805 = vector.broadcast %cst_698 : f32 to vector<1x8xf32>
    %1806 = arith.subf %1804, %1805 : vector<1x8xf32>
    %1807 = arith.addf %1795, %1790 : vector<1x8xf32>
    %1808 = arith.mulf %1790, %1796 : vector<1x8xf32>
    %1809 = arith.mulf %1808, %1806 : vector<1x8xf32>
    %1810 = arith.addf %1807, %1809 : vector<1x8xf32>
    %1811 = arith.mulf %1772, %1810 : vector<1x8xf32>
    %1812 = arith.mulf %1767, %1767 : vector<1x8xf32>
    %cst_699 = arith.constant 0.000000e+00 : f32
    %1813 = vector.broadcast %cst_699 : f32 to vector<1x8xf32>
    %1814 = arith.cmpf olt, %1812, %1813 : vector<1x8xf32>
    %cst_700 = arith.constant -1.000000e+00 : f32
    %cst_701 = arith.constant 1.000000e+00 : f32
    %1815 = vector.broadcast %cst_700 : f32 to vector<1x8xf32>
    %1816 = vector.broadcast %cst_701 : f32 to vector<1x8xf32>
    %1817 = arith.select %1814, %1815, %1816 : vector<1x8xi1>, vector<1x8xf32>
    %1818 = math.absf %1812 : vector<1x8xf32>
    %cst_702 = arith.constant 2.41421366 : f32
    %1819 = vector.broadcast %cst_702 : f32 to vector<1x8xf32>
    %1820 = arith.cmpf ogt, %1818, %1819 : vector<1x8xf32>
    %cst_703 = arith.constant 0.414213568 : f32
    %1821 = vector.broadcast %cst_703 : f32 to vector<1x8xf32>
    %1822 = arith.cmpf ogt, %1818, %1821 : vector<1x8xf32>
    %cst_704 = arith.constant 1.000000e+00 : f32
    %1823 = vector.broadcast %cst_704 : f32 to vector<1x8xf32>
    %1824 = arith.subf %1818, %1823 : vector<1x8xf32>
    %1825 = arith.select %1822, %1824, %1818 : vector<1x8xi1>, vector<1x8xf32>
    %cst_705 = arith.constant -1.000000e+00 : f32
    %1826 = vector.broadcast %cst_705 : f32 to vector<1x8xf32>
    %1827 = arith.select %1820, %1826, %1825 : vector<1x8xi1>, vector<1x8xf32>
    %cst_706 = arith.constant 1.000000e-30 : f32
    %1828 = vector.broadcast %cst_706 : f32 to vector<1x8xf32>
    %1829 = arith.maximumf %1818, %1828 : vector<1x8xf32>
    %cst_707 = arith.constant 1.000000e+00 : f32
    %1830 = vector.broadcast %cst_707 : f32 to vector<1x8xf32>
    %1831 = arith.addf %1818, %1830 : vector<1x8xf32>
    %cst_708 = arith.constant 1.000000e+00 : f32
    %1832 = vector.broadcast %cst_708 : f32 to vector<1x8xf32>
    %1833 = arith.select %1822, %1831, %1832 : vector<1x8xi1>, vector<1x8xf32>
    %1834 = arith.select %1820, %1829, %1833 : vector<1x8xi1>, vector<1x8xf32>
    %1835 = arith.divf %1827, %1834 : vector<1x8xf32>
    %cst_709 = arith.constant 0.785398185 : f32
    %cst_710 = arith.constant 0.000000e+00 : f32
    %1836 = vector.broadcast %cst_709 : f32 to vector<1x8xf32>
    %1837 = vector.broadcast %cst_710 : f32 to vector<1x8xf32>
    %1838 = arith.select %1822, %1836, %1837 : vector<1x8xi1>, vector<1x8xf32>
    %cst_711 = arith.constant 1.57079637 : f32
    %1839 = vector.broadcast %cst_711 : f32 to vector<1x8xf32>
    %1840 = arith.select %1820, %1839, %1838 : vector<1x8xi1>, vector<1x8xf32>
    %1841 = arith.mulf %1835, %1835 : vector<1x8xf32>
    %cst_712 = arith.constant 0.0805374458 : f32
    %1842 = vector.broadcast %cst_712 : f32 to vector<1x8xf32>
    %1843 = arith.mulf %1842, %1841 : vector<1x8xf32>
    %cst_713 = arith.constant 0.138776854 : f32
    %1844 = vector.broadcast %cst_713 : f32 to vector<1x8xf32>
    %1845 = arith.subf %1843, %1844 : vector<1x8xf32>
    %1846 = arith.mulf %1845, %1841 : vector<1x8xf32>
    %cst_714 = arith.constant 0.199777111 : f32
    %1847 = vector.broadcast %cst_714 : f32 to vector<1x8xf32>
    %1848 = arith.addf %1846, %1847 : vector<1x8xf32>
    %1849 = arith.mulf %1848, %1841 : vector<1x8xf32>
    %cst_715 = arith.constant 0.333329499 : f32
    %1850 = vector.broadcast %cst_715 : f32 to vector<1x8xf32>
    %1851 = arith.subf %1849, %1850 : vector<1x8xf32>
    %1852 = arith.addf %1840, %1835 : vector<1x8xf32>
    %1853 = arith.mulf %1835, %1841 : vector<1x8xf32>
    %1854 = arith.mulf %1853, %1851 : vector<1x8xf32>
    %1855 = arith.addf %1852, %1854 : vector<1x8xf32>
    %1856 = arith.mulf %1817, %1855 : vector<1x8xf32>
    %cst_716 = arith.constant dense<0.000000e+00> : vector<1x32xf32>
    %1857 = tpu.matmul %1811, %8, %cst_716 {dimension_numbers = #tpu.dot_dimension_numbers<[1], [0], [0], [1], [0, 0, 1, 1], [], []>} : vector<1x8xf32>, vector<8x32xf32>, vector<1x32xf32> -> vector<1x32xf32>
    %cst_717 = arith.constant dense<0.000000e+00> : vector<1x32xf32>
    %1858 = tpu.matmul %1856, %9, %cst_717 {dimension_numbers = #tpu.dot_dimension_numbers<[1], [0], [0], [1], [0, 0, 1, 1], [], []>} : vector<1x8xf32>, vector<8x32xf32>, vector<1x32xf32> -> vector<1x32xf32>
    %1859 = arith.addf %1857, %1858 : vector<1x32xf32>
    %1860 = arith.addf %1859, %10 : vector<1x32xf32>
    %cst_718 = arith.constant 0.000000e+00 : f32
    %1861 = vector.broadcast %cst_718 : f32 to vector<1x32xf32>
    %1862 = arith.subf %1861, %1860 : vector<1x32xf32>
    %1863 = math.exp %1862 : vector<1x32xf32>
    %cst_719 = arith.constant 1.000000e+00 : f32
    %1864 = vector.broadcast %cst_719 : f32 to vector<1x32xf32>
    %1865 = arith.addf %1864, %1863 : vector<1x32xf32>
    %cst_720 = arith.constant 1.000000e+00 : f32
    %1866 = vector.broadcast %cst_720 : f32 to vector<1x32xf32>
    %1867 = arith.divf %1866, %1865 : vector<1x32xf32>
    %1868 = vector.extract_strided_slice %1867 {offsets = [0, 0], sizes = [1, 8], strides = [1, 1]} : vector<1x32xf32> to vector<1x8xf32>
    %1869 = vector.extract_strided_slice %1867 {offsets = [0, 8], sizes = [1, 8], strides = [1, 1]} : vector<1x32xf32> to vector<1x8xf32>
    %1870 = vector.extract_strided_slice %1867 {offsets = [0, 16], sizes = [1, 8], strides = [1, 1]} : vector<1x32xf32> to vector<1x8xf32>
    %1871 = vector.extract_strided_slice %1867 {offsets = [0, 24], sizes = [1, 8], strides = [1, 1]} : vector<1x32xf32> to vector<1x8xf32>
    %cst_721 = arith.constant 2.000000e+00 : f32
    %1872 = vector.broadcast %cst_721 : f32 to vector<1x8xf32>
    %1873 = arith.mulf %1872, %1871 : vector<1x8xf32>
    %cst_722 = arith.constant 1.000000e+00 : f32
    %1874 = vector.broadcast %cst_722 : f32 to vector<1x8xf32>
    %1875 = arith.subf %1873, %1874 : vector<1x8xf32>
    %1876 = arith.mulf %1672, %1868 : vector<1x8xf32>
    %1877 = arith.mulf %1869, %1875 : vector<1x8xf32>
    %1878 = arith.addf %1876, %1877 : vector<1x8xf32>
    %1879 = math.tanh %1878 : vector<1x8xf32>
    %1880 = arith.mulf %1870, %1879 : vector<1x8xf32>
    %cst_723 = arith.constant 0.000000e+00 : f32
    %1881 = vector.broadcast %cst_723 : f32 to vector<1x8xf32>
    %1882 = arith.cmpf olt, %1880, %1881 : vector<1x8xf32>
    %cst_724 = arith.constant -1.000000e+00 : f32
    %cst_725 = arith.constant 1.000000e+00 : f32
    %1883 = vector.broadcast %cst_724 : f32 to vector<1x8xf32>
    %1884 = vector.broadcast %cst_725 : f32 to vector<1x8xf32>
    %1885 = arith.select %1882, %1883, %1884 : vector<1x8xi1>, vector<1x8xf32>
    %1886 = math.absf %1880 : vector<1x8xf32>
    %cst_726 = arith.constant 2.41421366 : f32
    %1887 = vector.broadcast %cst_726 : f32 to vector<1x8xf32>
    %1888 = arith.cmpf ogt, %1886, %1887 : vector<1x8xf32>
    %cst_727 = arith.constant 0.414213568 : f32
    %1889 = vector.broadcast %cst_727 : f32 to vector<1x8xf32>
    %1890 = arith.cmpf ogt, %1886, %1889 : vector<1x8xf32>
    %cst_728 = arith.constant 1.000000e+00 : f32
    %1891 = vector.broadcast %cst_728 : f32 to vector<1x8xf32>
    %1892 = arith.subf %1886, %1891 : vector<1x8xf32>
    %1893 = arith.select %1890, %1892, %1886 : vector<1x8xi1>, vector<1x8xf32>
    %cst_729 = arith.constant -1.000000e+00 : f32
    %1894 = vector.broadcast %cst_729 : f32 to vector<1x8xf32>
    %1895 = arith.select %1888, %1894, %1893 : vector<1x8xi1>, vector<1x8xf32>
    %cst_730 = arith.constant 1.000000e-30 : f32
    %1896 = vector.broadcast %cst_730 : f32 to vector<1x8xf32>
    %1897 = arith.maximumf %1886, %1896 : vector<1x8xf32>
    %cst_731 = arith.constant 1.000000e+00 : f32
    %1898 = vector.broadcast %cst_731 : f32 to vector<1x8xf32>
    %1899 = arith.addf %1886, %1898 : vector<1x8xf32>
    %cst_732 = arith.constant 1.000000e+00 : f32
    %1900 = vector.broadcast %cst_732 : f32 to vector<1x8xf32>
    %1901 = arith.select %1890, %1899, %1900 : vector<1x8xi1>, vector<1x8xf32>
    %1902 = arith.select %1888, %1897, %1901 : vector<1x8xi1>, vector<1x8xf32>
    %1903 = arith.divf %1895, %1902 : vector<1x8xf32>
    %cst_733 = arith.constant 0.785398185 : f32
    %cst_734 = arith.constant 0.000000e+00 : f32
    %1904 = vector.broadcast %cst_733 : f32 to vector<1x8xf32>
    %1905 = vector.broadcast %cst_734 : f32 to vector<1x8xf32>
    %1906 = arith.select %1890, %1904, %1905 : vector<1x8xi1>, vector<1x8xf32>
    %cst_735 = arith.constant 1.57079637 : f32
    %1907 = vector.broadcast %cst_735 : f32 to vector<1x8xf32>
    %1908 = arith.select %1888, %1907, %1906 : vector<1x8xi1>, vector<1x8xf32>
    %1909 = arith.mulf %1903, %1903 : vector<1x8xf32>
    %cst_736 = arith.constant 0.0805374458 : f32
    %1910 = vector.broadcast %cst_736 : f32 to vector<1x8xf32>
    %1911 = arith.mulf %1910, %1909 : vector<1x8xf32>
    %cst_737 = arith.constant 0.138776854 : f32
    %1912 = vector.broadcast %cst_737 : f32 to vector<1x8xf32>
    %1913 = arith.subf %1911, %1912 : vector<1x8xf32>
    %1914 = arith.mulf %1913, %1909 : vector<1x8xf32>
    %cst_738 = arith.constant 0.199777111 : f32
    %1915 = vector.broadcast %cst_738 : f32 to vector<1x8xf32>
    %1916 = arith.addf %1914, %1915 : vector<1x8xf32>
    %1917 = arith.mulf %1916, %1909 : vector<1x8xf32>
    %cst_739 = arith.constant 0.333329499 : f32
    %1918 = vector.broadcast %cst_739 : f32 to vector<1x8xf32>
    %1919 = arith.subf %1917, %1918 : vector<1x8xf32>
    %1920 = arith.addf %1908, %1903 : vector<1x8xf32>
    %1921 = arith.mulf %1903, %1909 : vector<1x8xf32>
    %1922 = arith.mulf %1921, %1919 : vector<1x8xf32>
    %1923 = arith.addf %1920, %1922 : vector<1x8xf32>
    %1924 = arith.mulf %1885, %1923 : vector<1x8xf32>
    %cst_740 = arith.constant dense<0.000000e+00> : vector<1x9xf32>
    %1925 = tpu.matmul %1924, %11, %cst_740 {dimension_numbers = #tpu.dot_dimension_numbers<[1], [0], [0], [1], [0, 0, 1, 1], [], []>} : vector<1x8xf32>, vector<8x9xf32>, vector<1x9xf32> -> vector<1x9xf32>
    %1926 = arith.mulf %1880, %1880 : vector<1x8xf32>
    %cst_741 = arith.constant 0.000000e+00 : f32
    %1927 = vector.broadcast %cst_741 : f32 to vector<1x8xf32>
    %1928 = arith.cmpf olt, %1926, %1927 : vector<1x8xf32>
    %cst_742 = arith.constant -1.000000e+00 : f32
    %cst_743 = arith.constant 1.000000e+00 : f32
    %1929 = vector.broadcast %cst_742 : f32 to vector<1x8xf32>
    %1930 = vector.broadcast %cst_743 : f32 to vector<1x8xf32>
    %1931 = arith.select %1928, %1929, %1930 : vector<1x8xi1>, vector<1x8xf32>
    %1932 = math.absf %1926 : vector<1x8xf32>
    %cst_744 = arith.constant 2.41421366 : f32
    %1933 = vector.broadcast %cst_744 : f32 to vector<1x8xf32>
    %1934 = arith.cmpf ogt, %1932, %1933 : vector<1x8xf32>
    %cst_745 = arith.constant 0.414213568 : f32
    %1935 = vector.broadcast %cst_745 : f32 to vector<1x8xf32>
    %1936 = arith.cmpf ogt, %1932, %1935 : vector<1x8xf32>
    %cst_746 = arith.constant 1.000000e+00 : f32
    %1937 = vector.broadcast %cst_746 : f32 to vector<1x8xf32>
    %1938 = arith.subf %1932, %1937 : vector<1x8xf32>
    %1939 = arith.select %1936, %1938, %1932 : vector<1x8xi1>, vector<1x8xf32>
    %cst_747 = arith.constant -1.000000e+00 : f32
    %1940 = vector.broadcast %cst_747 : f32 to vector<1x8xf32>
    %1941 = arith.select %1934, %1940, %1939 : vector<1x8xi1>, vector<1x8xf32>
    %cst_748 = arith.constant 1.000000e-30 : f32
    %1942 = vector.broadcast %cst_748 : f32 to vector<1x8xf32>
    %1943 = arith.maximumf %1932, %1942 : vector<1x8xf32>
    %cst_749 = arith.constant 1.000000e+00 : f32
    %1944 = vector.broadcast %cst_749 : f32 to vector<1x8xf32>
    %1945 = arith.addf %1932, %1944 : vector<1x8xf32>
    %cst_750 = arith.constant 1.000000e+00 : f32
    %1946 = vector.broadcast %cst_750 : f32 to vector<1x8xf32>
    %1947 = arith.select %1936, %1945, %1946 : vector<1x8xi1>, vector<1x8xf32>
    %1948 = arith.select %1934, %1943, %1947 : vector<1x8xi1>, vector<1x8xf32>
    %1949 = arith.divf %1941, %1948 : vector<1x8xf32>
    %cst_751 = arith.constant 0.785398185 : f32
    %cst_752 = arith.constant 0.000000e+00 : f32
    %1950 = vector.broadcast %cst_751 : f32 to vector<1x8xf32>
    %1951 = vector.broadcast %cst_752 : f32 to vector<1x8xf32>
    %1952 = arith.select %1936, %1950, %1951 : vector<1x8xi1>, vector<1x8xf32>
    %cst_753 = arith.constant 1.57079637 : f32
    %1953 = vector.broadcast %cst_753 : f32 to vector<1x8xf32>
    %1954 = arith.select %1934, %1953, %1952 : vector<1x8xi1>, vector<1x8xf32>
    %1955 = arith.mulf %1949, %1949 : vector<1x8xf32>
    %cst_754 = arith.constant 0.0805374458 : f32
    %1956 = vector.broadcast %cst_754 : f32 to vector<1x8xf32>
    %1957 = arith.mulf %1956, %1955 : vector<1x8xf32>
    %cst_755 = arith.constant 0.138776854 : f32
    %1958 = vector.broadcast %cst_755 : f32 to vector<1x8xf32>
    %1959 = arith.subf %1957, %1958 : vector<1x8xf32>
    %1960 = arith.mulf %1959, %1955 : vector<1x8xf32>
    %cst_756 = arith.constant 0.199777111 : f32
    %1961 = vector.broadcast %cst_756 : f32 to vector<1x8xf32>
    %1962 = arith.addf %1960, %1961 : vector<1x8xf32>
    %1963 = arith.mulf %1962, %1955 : vector<1x8xf32>
    %cst_757 = arith.constant 0.333329499 : f32
    %1964 = vector.broadcast %cst_757 : f32 to vector<1x8xf32>
    %1965 = arith.subf %1963, %1964 : vector<1x8xf32>
    %1966 = arith.addf %1954, %1949 : vector<1x8xf32>
    %1967 = arith.mulf %1949, %1955 : vector<1x8xf32>
    %1968 = arith.mulf %1967, %1965 : vector<1x8xf32>
    %1969 = arith.addf %1966, %1968 : vector<1x8xf32>
    %1970 = arith.mulf %1931, %1969 : vector<1x8xf32>
    %cst_758 = arith.constant dense<0.000000e+00> : vector<1x9xf32>
    %1971 = tpu.matmul %1970, %12, %cst_758 {dimension_numbers = #tpu.dot_dimension_numbers<[1], [0], [0], [1], [0, 0, 1, 1], [], []>} : vector<1x8xf32>, vector<8x9xf32>, vector<1x9xf32> -> vector<1x9xf32>
    %1972 = arith.addf %1925, %1971 : vector<1x9xf32>
    %1973 = arith.addf %1972, %13 : vector<1x9xf32>
    %1974 = vector.extract_strided_slice %1973 {offsets = [0, 0], sizes = [1, 8], strides = [1, 1]} : vector<1x9xf32> to vector<1x8xf32>
    %1975 = vector.extract_strided_slice %1973 {offsets = [0, 8], sizes = [1, 1], strides = [1, 1]} : vector<1x9xf32> to vector<1x1xf32>
    %cst_759 = arith.constant 0.000000e+00 : f32
    %1976 = vector.broadcast %cst_759 : f32 to vector<1x8xf32>
    %1977 = arith.cmpf olt, %1974, %1976 : vector<1x8xf32>
    %cst_760 = arith.constant -1.000000e+00 : f32
    %cst_761 = arith.constant 1.000000e+00 : f32
    %1978 = vector.broadcast %cst_760 : f32 to vector<1x8xf32>
    %1979 = vector.broadcast %cst_761 : f32 to vector<1x8xf32>
    %1980 = arith.select %1977, %1978, %1979 : vector<1x8xi1>, vector<1x8xf32>
    %1981 = math.absf %1974 : vector<1x8xf32>
    %cst_762 = arith.constant 2.41421366 : f32
    %1982 = vector.broadcast %cst_762 : f32 to vector<1x8xf32>
    %1983 = arith.cmpf ogt, %1981, %1982 : vector<1x8xf32>
    %cst_763 = arith.constant 0.414213568 : f32
    %1984 = vector.broadcast %cst_763 : f32 to vector<1x8xf32>
    %1985 = arith.cmpf ogt, %1981, %1984 : vector<1x8xf32>
    %cst_764 = arith.constant 1.000000e+00 : f32
    %1986 = vector.broadcast %cst_764 : f32 to vector<1x8xf32>
    %1987 = arith.subf %1981, %1986 : vector<1x8xf32>
    %1988 = arith.select %1985, %1987, %1981 : vector<1x8xi1>, vector<1x8xf32>
    %cst_765 = arith.constant -1.000000e+00 : f32
    %1989 = vector.broadcast %cst_765 : f32 to vector<1x8xf32>
    %1990 = arith.select %1983, %1989, %1988 : vector<1x8xi1>, vector<1x8xf32>
    %cst_766 = arith.constant 1.000000e-30 : f32
    %1991 = vector.broadcast %cst_766 : f32 to vector<1x8xf32>
    %1992 = arith.maximumf %1981, %1991 : vector<1x8xf32>
    %cst_767 = arith.constant 1.000000e+00 : f32
    %1993 = vector.broadcast %cst_767 : f32 to vector<1x8xf32>
    %1994 = arith.addf %1981, %1993 : vector<1x8xf32>
    %cst_768 = arith.constant 1.000000e+00 : f32
    %1995 = vector.broadcast %cst_768 : f32 to vector<1x8xf32>
    %1996 = arith.select %1985, %1994, %1995 : vector<1x8xi1>, vector<1x8xf32>
    %1997 = arith.select %1983, %1992, %1996 : vector<1x8xi1>, vector<1x8xf32>
    %1998 = arith.divf %1990, %1997 : vector<1x8xf32>
    %cst_769 = arith.constant 0.785398185 : f32
    %cst_770 = arith.constant 0.000000e+00 : f32
    %1999 = vector.broadcast %cst_769 : f32 to vector<1x8xf32>
    %2000 = vector.broadcast %cst_770 : f32 to vector<1x8xf32>
    %2001 = arith.select %1985, %1999, %2000 : vector<1x8xi1>, vector<1x8xf32>
    %cst_771 = arith.constant 1.57079637 : f32
    %2002 = vector.broadcast %cst_771 : f32 to vector<1x8xf32>
    %2003 = arith.select %1983, %2002, %2001 : vector<1x8xi1>, vector<1x8xf32>
    %2004 = arith.mulf %1998, %1998 : vector<1x8xf32>
    %cst_772 = arith.constant 0.0805374458 : f32
    %2005 = vector.broadcast %cst_772 : f32 to vector<1x8xf32>
    %2006 = arith.mulf %2005, %2004 : vector<1x8xf32>
    %cst_773 = arith.constant 0.138776854 : f32
    %2007 = vector.broadcast %cst_773 : f32 to vector<1x8xf32>
    %2008 = arith.subf %2006, %2007 : vector<1x8xf32>
    %2009 = arith.mulf %2008, %2004 : vector<1x8xf32>
    %cst_774 = arith.constant 0.199777111 : f32
    %2010 = vector.broadcast %cst_774 : f32 to vector<1x8xf32>
    %2011 = arith.addf %2009, %2010 : vector<1x8xf32>
    %2012 = arith.mulf %2011, %2004 : vector<1x8xf32>
    %cst_775 = arith.constant 0.333329499 : f32
    %2013 = vector.broadcast %cst_775 : f32 to vector<1x8xf32>
    %2014 = arith.subf %2012, %2013 : vector<1x8xf32>
    %2015 = arith.addf %2003, %1998 : vector<1x8xf32>
    %2016 = arith.mulf %1998, %2004 : vector<1x8xf32>
    %2017 = arith.mulf %2016, %2014 : vector<1x8xf32>
    %2018 = arith.addf %2015, %2017 : vector<1x8xf32>
    %2019 = arith.mulf %1980, %2018 : vector<1x8xf32>
    %2020 = arith.mulf %1974, %1974 : vector<1x8xf32>
    %cst_776 = arith.constant 0.000000e+00 : f32
    %2021 = vector.broadcast %cst_776 : f32 to vector<1x8xf32>
    %2022 = arith.cmpf olt, %2020, %2021 : vector<1x8xf32>
    %cst_777 = arith.constant -1.000000e+00 : f32
    %cst_778 = arith.constant 1.000000e+00 : f32
    %2023 = vector.broadcast %cst_777 : f32 to vector<1x8xf32>
    %2024 = vector.broadcast %cst_778 : f32 to vector<1x8xf32>
    %2025 = arith.select %2022, %2023, %2024 : vector<1x8xi1>, vector<1x8xf32>
    %2026 = math.absf %2020 : vector<1x8xf32>
    %cst_779 = arith.constant 2.41421366 : f32
    %2027 = vector.broadcast %cst_779 : f32 to vector<1x8xf32>
    %2028 = arith.cmpf ogt, %2026, %2027 : vector<1x8xf32>
    %cst_780 = arith.constant 0.414213568 : f32
    %2029 = vector.broadcast %cst_780 : f32 to vector<1x8xf32>
    %2030 = arith.cmpf ogt, %2026, %2029 : vector<1x8xf32>
    %cst_781 = arith.constant 1.000000e+00 : f32
    %2031 = vector.broadcast %cst_781 : f32 to vector<1x8xf32>
    %2032 = arith.subf %2026, %2031 : vector<1x8xf32>
    %2033 = arith.select %2030, %2032, %2026 : vector<1x8xi1>, vector<1x8xf32>
    %cst_782 = arith.constant -1.000000e+00 : f32
    %2034 = vector.broadcast %cst_782 : f32 to vector<1x8xf32>
    %2035 = arith.select %2028, %2034, %2033 : vector<1x8xi1>, vector<1x8xf32>
    %cst_783 = arith.constant 1.000000e-30 : f32
    %2036 = vector.broadcast %cst_783 : f32 to vector<1x8xf32>
    %2037 = arith.maximumf %2026, %2036 : vector<1x8xf32>
    %cst_784 = arith.constant 1.000000e+00 : f32
    %2038 = vector.broadcast %cst_784 : f32 to vector<1x8xf32>
    %2039 = arith.addf %2026, %2038 : vector<1x8xf32>
    %cst_785 = arith.constant 1.000000e+00 : f32
    %2040 = vector.broadcast %cst_785 : f32 to vector<1x8xf32>
    %2041 = arith.select %2030, %2039, %2040 : vector<1x8xi1>, vector<1x8xf32>
    %2042 = arith.select %2028, %2037, %2041 : vector<1x8xi1>, vector<1x8xf32>
    %2043 = arith.divf %2035, %2042 : vector<1x8xf32>
    %cst_786 = arith.constant 0.785398185 : f32
    %cst_787 = arith.constant 0.000000e+00 : f32
    %2044 = vector.broadcast %cst_786 : f32 to vector<1x8xf32>
    %2045 = vector.broadcast %cst_787 : f32 to vector<1x8xf32>
    %2046 = arith.select %2030, %2044, %2045 : vector<1x8xi1>, vector<1x8xf32>
    %cst_788 = arith.constant 1.57079637 : f32
    %2047 = vector.broadcast %cst_788 : f32 to vector<1x8xf32>
    %2048 = arith.select %2028, %2047, %2046 : vector<1x8xi1>, vector<1x8xf32>
    %2049 = arith.mulf %2043, %2043 : vector<1x8xf32>
    %cst_789 = arith.constant 0.0805374458 : f32
    %2050 = vector.broadcast %cst_789 : f32 to vector<1x8xf32>
    %2051 = arith.mulf %2050, %2049 : vector<1x8xf32>
    %cst_790 = arith.constant 0.138776854 : f32
    %2052 = vector.broadcast %cst_790 : f32 to vector<1x8xf32>
    %2053 = arith.subf %2051, %2052 : vector<1x8xf32>
    %2054 = arith.mulf %2053, %2049 : vector<1x8xf32>
    %cst_791 = arith.constant 0.199777111 : f32
    %2055 = vector.broadcast %cst_791 : f32 to vector<1x8xf32>
    %2056 = arith.addf %2054, %2055 : vector<1x8xf32>
    %2057 = arith.mulf %2056, %2049 : vector<1x8xf32>
    %cst_792 = arith.constant 0.333329499 : f32
    %2058 = vector.broadcast %cst_792 : f32 to vector<1x8xf32>
    %2059 = arith.subf %2057, %2058 : vector<1x8xf32>
    %2060 = arith.addf %2048, %2043 : vector<1x8xf32>
    %2061 = arith.mulf %2043, %2049 : vector<1x8xf32>
    %2062 = arith.mulf %2061, %2059 : vector<1x8xf32>
    %2063 = arith.addf %2060, %2062 : vector<1x8xf32>
    %2064 = arith.mulf %2025, %2063 : vector<1x8xf32>
    %cst_793 = arith.constant dense<0.000000e+00> : vector<1x32xf32>
    %2065 = tpu.matmul %2019, %8, %cst_793 {dimension_numbers = #tpu.dot_dimension_numbers<[1], [0], [0], [1], [0, 0, 1, 1], [], []>} : vector<1x8xf32>, vector<8x32xf32>, vector<1x32xf32> -> vector<1x32xf32>
    %cst_794 = arith.constant dense<0.000000e+00> : vector<1x32xf32>
    %2066 = tpu.matmul %2064, %9, %cst_794 {dimension_numbers = #tpu.dot_dimension_numbers<[1], [0], [0], [1], [0, 0, 1, 1], [], []>} : vector<1x8xf32>, vector<8x32xf32>, vector<1x32xf32> -> vector<1x32xf32>
    %2067 = arith.addf %2065, %2066 : vector<1x32xf32>
    %2068 = arith.addf %2067, %10 : vector<1x32xf32>
    %cst_795 = arith.constant 0.000000e+00 : f32
    %2069 = vector.broadcast %cst_795 : f32 to vector<1x32xf32>
    %2070 = arith.subf %2069, %2068 : vector<1x32xf32>
    %2071 = math.exp %2070 : vector<1x32xf32>
    %cst_796 = arith.constant 1.000000e+00 : f32
    %2072 = vector.broadcast %cst_796 : f32 to vector<1x32xf32>
    %2073 = arith.addf %2072, %2071 : vector<1x32xf32>
    %cst_797 = arith.constant 1.000000e+00 : f32
    %2074 = vector.broadcast %cst_797 : f32 to vector<1x32xf32>
    %2075 = arith.divf %2074, %2073 : vector<1x32xf32>
    %2076 = vector.extract_strided_slice %2075 {offsets = [0, 0], sizes = [1, 8], strides = [1, 1]} : vector<1x32xf32> to vector<1x8xf32>
    %2077 = vector.extract_strided_slice %2075 {offsets = [0, 8], sizes = [1, 8], strides = [1, 1]} : vector<1x32xf32> to vector<1x8xf32>
    %2078 = vector.extract_strided_slice %2075 {offsets = [0, 16], sizes = [1, 8], strides = [1, 1]} : vector<1x32xf32> to vector<1x8xf32>
    %2079 = vector.extract_strided_slice %2075 {offsets = [0, 24], sizes = [1, 8], strides = [1, 1]} : vector<1x32xf32> to vector<1x8xf32>
    %cst_798 = arith.constant 2.000000e+00 : f32
    %2080 = vector.broadcast %cst_798 : f32 to vector<1x8xf32>
    %2081 = arith.mulf %2080, %2079 : vector<1x8xf32>
    %cst_799 = arith.constant 1.000000e+00 : f32
    %2082 = vector.broadcast %cst_799 : f32 to vector<1x8xf32>
    %2083 = arith.subf %2081, %2082 : vector<1x8xf32>
    %2084 = arith.mulf %1878, %2076 : vector<1x8xf32>
    %2085 = arith.mulf %2077, %2083 : vector<1x8xf32>
    %2086 = arith.addf %2084, %2085 : vector<1x8xf32>
    %2087 = math.tanh %2086 : vector<1x8xf32>
    %2088 = arith.mulf %2078, %2087 : vector<1x8xf32>
    %cst_800 = arith.constant 0.000000e+00 : f32
    %2089 = vector.broadcast %cst_800 : f32 to vector<1x8xf32>
    %2090 = arith.cmpf olt, %2088, %2089 : vector<1x8xf32>
    %cst_801 = arith.constant -1.000000e+00 : f32
    %cst_802 = arith.constant 1.000000e+00 : f32
    %2091 = vector.broadcast %cst_801 : f32 to vector<1x8xf32>
    %2092 = vector.broadcast %cst_802 : f32 to vector<1x8xf32>
    %2093 = arith.select %2090, %2091, %2092 : vector<1x8xi1>, vector<1x8xf32>
    %2094 = math.absf %2088 : vector<1x8xf32>
    %cst_803 = arith.constant 2.41421366 : f32
    %2095 = vector.broadcast %cst_803 : f32 to vector<1x8xf32>
    %2096 = arith.cmpf ogt, %2094, %2095 : vector<1x8xf32>
    %cst_804 = arith.constant 0.414213568 : f32
    %2097 = vector.broadcast %cst_804 : f32 to vector<1x8xf32>
    %2098 = arith.cmpf ogt, %2094, %2097 : vector<1x8xf32>
    %cst_805 = arith.constant 1.000000e+00 : f32
    %2099 = vector.broadcast %cst_805 : f32 to vector<1x8xf32>
    %2100 = arith.subf %2094, %2099 : vector<1x8xf32>
    %2101 = arith.select %2098, %2100, %2094 : vector<1x8xi1>, vector<1x8xf32>
    %cst_806 = arith.constant -1.000000e+00 : f32
    %2102 = vector.broadcast %cst_806 : f32 to vector<1x8xf32>
    %2103 = arith.select %2096, %2102, %2101 : vector<1x8xi1>, vector<1x8xf32>
    %cst_807 = arith.constant 1.000000e-30 : f32
    %2104 = vector.broadcast %cst_807 : f32 to vector<1x8xf32>
    %2105 = arith.maximumf %2094, %2104 : vector<1x8xf32>
    %cst_808 = arith.constant 1.000000e+00 : f32
    %2106 = vector.broadcast %cst_808 : f32 to vector<1x8xf32>
    %2107 = arith.addf %2094, %2106 : vector<1x8xf32>
    %cst_809 = arith.constant 1.000000e+00 : f32
    %2108 = vector.broadcast %cst_809 : f32 to vector<1x8xf32>
    %2109 = arith.select %2098, %2107, %2108 : vector<1x8xi1>, vector<1x8xf32>
    %2110 = arith.select %2096, %2105, %2109 : vector<1x8xi1>, vector<1x8xf32>
    %2111 = arith.divf %2103, %2110 : vector<1x8xf32>
    %cst_810 = arith.constant 0.785398185 : f32
    %cst_811 = arith.constant 0.000000e+00 : f32
    %2112 = vector.broadcast %cst_810 : f32 to vector<1x8xf32>
    %2113 = vector.broadcast %cst_811 : f32 to vector<1x8xf32>
    %2114 = arith.select %2098, %2112, %2113 : vector<1x8xi1>, vector<1x8xf32>
    %cst_812 = arith.constant 1.57079637 : f32
    %2115 = vector.broadcast %cst_812 : f32 to vector<1x8xf32>
    %2116 = arith.select %2096, %2115, %2114 : vector<1x8xi1>, vector<1x8xf32>
    %2117 = arith.mulf %2111, %2111 : vector<1x8xf32>
    %cst_813 = arith.constant 0.0805374458 : f32
    %2118 = vector.broadcast %cst_813 : f32 to vector<1x8xf32>
    %2119 = arith.mulf %2118, %2117 : vector<1x8xf32>
    %cst_814 = arith.constant 0.138776854 : f32
    %2120 = vector.broadcast %cst_814 : f32 to vector<1x8xf32>
    %2121 = arith.subf %2119, %2120 : vector<1x8xf32>
    %2122 = arith.mulf %2121, %2117 : vector<1x8xf32>
    %cst_815 = arith.constant 0.199777111 : f32
    %2123 = vector.broadcast %cst_815 : f32 to vector<1x8xf32>
    %2124 = arith.addf %2122, %2123 : vector<1x8xf32>
    %2125 = arith.mulf %2124, %2117 : vector<1x8xf32>
    %cst_816 = arith.constant 0.333329499 : f32
    %2126 = vector.broadcast %cst_816 : f32 to vector<1x8xf32>
    %2127 = arith.subf %2125, %2126 : vector<1x8xf32>
    %2128 = arith.addf %2116, %2111 : vector<1x8xf32>
    %2129 = arith.mulf %2111, %2117 : vector<1x8xf32>
    %2130 = arith.mulf %2129, %2127 : vector<1x8xf32>
    %2131 = arith.addf %2128, %2130 : vector<1x8xf32>
    %2132 = arith.mulf %2093, %2131 : vector<1x8xf32>
    %cst_817 = arith.constant dense<0.000000e+00> : vector<1x9xf32>
    %2133 = tpu.matmul %2132, %11, %cst_817 {dimension_numbers = #tpu.dot_dimension_numbers<[1], [0], [0], [1], [0, 0, 1, 1], [], []>} : vector<1x8xf32>, vector<8x9xf32>, vector<1x9xf32> -> vector<1x9xf32>
    %2134 = arith.mulf %2088, %2088 : vector<1x8xf32>
    %cst_818 = arith.constant 0.000000e+00 : f32
    %2135 = vector.broadcast %cst_818 : f32 to vector<1x8xf32>
    %2136 = arith.cmpf olt, %2134, %2135 : vector<1x8xf32>
    %cst_819 = arith.constant -1.000000e+00 : f32
    %cst_820 = arith.constant 1.000000e+00 : f32
    %2137 = vector.broadcast %cst_819 : f32 to vector<1x8xf32>
    %2138 = vector.broadcast %cst_820 : f32 to vector<1x8xf32>
    %2139 = arith.select %2136, %2137, %2138 : vector<1x8xi1>, vector<1x8xf32>
    %2140 = math.absf %2134 : vector<1x8xf32>
    %cst_821 = arith.constant 2.41421366 : f32
    %2141 = vector.broadcast %cst_821 : f32 to vector<1x8xf32>
    %2142 = arith.cmpf ogt, %2140, %2141 : vector<1x8xf32>
    %cst_822 = arith.constant 0.414213568 : f32
    %2143 = vector.broadcast %cst_822 : f32 to vector<1x8xf32>
    %2144 = arith.cmpf ogt, %2140, %2143 : vector<1x8xf32>
    %cst_823 = arith.constant 1.000000e+00 : f32
    %2145 = vector.broadcast %cst_823 : f32 to vector<1x8xf32>
    %2146 = arith.subf %2140, %2145 : vector<1x8xf32>
    %2147 = arith.select %2144, %2146, %2140 : vector<1x8xi1>, vector<1x8xf32>
    %cst_824 = arith.constant -1.000000e+00 : f32
    %2148 = vector.broadcast %cst_824 : f32 to vector<1x8xf32>
    %2149 = arith.select %2142, %2148, %2147 : vector<1x8xi1>, vector<1x8xf32>
    %cst_825 = arith.constant 1.000000e-30 : f32
    %2150 = vector.broadcast %cst_825 : f32 to vector<1x8xf32>
    %2151 = arith.maximumf %2140, %2150 : vector<1x8xf32>
    %cst_826 = arith.constant 1.000000e+00 : f32
    %2152 = vector.broadcast %cst_826 : f32 to vector<1x8xf32>
    %2153 = arith.addf %2140, %2152 : vector<1x8xf32>
    %cst_827 = arith.constant 1.000000e+00 : f32
    %2154 = vector.broadcast %cst_827 : f32 to vector<1x8xf32>
    %2155 = arith.select %2144, %2153, %2154 : vector<1x8xi1>, vector<1x8xf32>
    %2156 = arith.select %2142, %2151, %2155 : vector<1x8xi1>, vector<1x8xf32>
    %2157 = arith.divf %2149, %2156 : vector<1x8xf32>
    %cst_828 = arith.constant 0.785398185 : f32
    %cst_829 = arith.constant 0.000000e+00 : f32
    %2158 = vector.broadcast %cst_828 : f32 to vector<1x8xf32>
    %2159 = vector.broadcast %cst_829 : f32 to vector<1x8xf32>
    %2160 = arith.select %2144, %2158, %2159 : vector<1x8xi1>, vector<1x8xf32>
    %cst_830 = arith.constant 1.57079637 : f32
    %2161 = vector.broadcast %cst_830 : f32 to vector<1x8xf32>
    %2162 = arith.select %2142, %2161, %2160 : vector<1x8xi1>, vector<1x8xf32>
    %2163 = arith.mulf %2157, %2157 : vector<1x8xf32>
    %cst_831 = arith.constant 0.0805374458 : f32
    %2164 = vector.broadcast %cst_831 : f32 to vector<1x8xf32>
    %2165 = arith.mulf %2164, %2163 : vector<1x8xf32>
    %cst_832 = arith.constant 0.138776854 : f32
    %2166 = vector.broadcast %cst_832 : f32 to vector<1x8xf32>
    %2167 = arith.subf %2165, %2166 : vector<1x8xf32>
    %2168 = arith.mulf %2167, %2163 : vector<1x8xf32>
    %cst_833 = arith.constant 0.199777111 : f32
    %2169 = vector.broadcast %cst_833 : f32 to vector<1x8xf32>
    %2170 = arith.addf %2168, %2169 : vector<1x8xf32>
    %2171 = arith.mulf %2170, %2163 : vector<1x8xf32>
    %cst_834 = arith.constant 0.333329499 : f32
    %2172 = vector.broadcast %cst_834 : f32 to vector<1x8xf32>
    %2173 = arith.subf %2171, %2172 : vector<1x8xf32>
    %2174 = arith.addf %2162, %2157 : vector<1x8xf32>
    %2175 = arith.mulf %2157, %2163 : vector<1x8xf32>
    %2176 = arith.mulf %2175, %2173 : vector<1x8xf32>
    %2177 = arith.addf %2174, %2176 : vector<1x8xf32>
    %2178 = arith.mulf %2139, %2177 : vector<1x8xf32>
    %cst_835 = arith.constant dense<0.000000e+00> : vector<1x9xf32>
    %2179 = tpu.matmul %2178, %12, %cst_835 {dimension_numbers = #tpu.dot_dimension_numbers<[1], [0], [0], [1], [0, 0, 1, 1], [], []>} : vector<1x8xf32>, vector<8x9xf32>, vector<1x9xf32> -> vector<1x9xf32>
    %2180 = arith.addf %2133, %2179 : vector<1x9xf32>
    %2181 = arith.addf %2180, %13 : vector<1x9xf32>
    %2182 = vector.extract_strided_slice %2181 {offsets = [0, 0], sizes = [1, 8], strides = [1, 1]} : vector<1x9xf32> to vector<1x8xf32>
    %2183 = vector.extract_strided_slice %2181 {offsets = [0, 8], sizes = [1, 1], strides = [1, 1]} : vector<1x9xf32> to vector<1x1xf32>
    %cst_836 = arith.constant 0.000000e+00 : f32
    %2184 = vector.broadcast %cst_836 : f32 to vector<1x8xf32>
    %2185 = arith.cmpf olt, %2182, %2184 : vector<1x8xf32>
    %cst_837 = arith.constant -1.000000e+00 : f32
    %cst_838 = arith.constant 1.000000e+00 : f32
    %2186 = vector.broadcast %cst_837 : f32 to vector<1x8xf32>
    %2187 = vector.broadcast %cst_838 : f32 to vector<1x8xf32>
    %2188 = arith.select %2185, %2186, %2187 : vector<1x8xi1>, vector<1x8xf32>
    %2189 = math.absf %2182 : vector<1x8xf32>
    %cst_839 = arith.constant 2.41421366 : f32
    %2190 = vector.broadcast %cst_839 : f32 to vector<1x8xf32>
    %2191 = arith.cmpf ogt, %2189, %2190 : vector<1x8xf32>
    %cst_840 = arith.constant 0.414213568 : f32
    %2192 = vector.broadcast %cst_840 : f32 to vector<1x8xf32>
    %2193 = arith.cmpf ogt, %2189, %2192 : vector<1x8xf32>
    %cst_841 = arith.constant 1.000000e+00 : f32
    %2194 = vector.broadcast %cst_841 : f32 to vector<1x8xf32>
    %2195 = arith.subf %2189, %2194 : vector<1x8xf32>
    %2196 = arith.select %2193, %2195, %2189 : vector<1x8xi1>, vector<1x8xf32>
    %cst_842 = arith.constant -1.000000e+00 : f32
    %2197 = vector.broadcast %cst_842 : f32 to vector<1x8xf32>
    %2198 = arith.select %2191, %2197, %2196 : vector<1x8xi1>, vector<1x8xf32>
    %cst_843 = arith.constant 1.000000e-30 : f32
    %2199 = vector.broadcast %cst_843 : f32 to vector<1x8xf32>
    %2200 = arith.maximumf %2189, %2199 : vector<1x8xf32>
    %cst_844 = arith.constant 1.000000e+00 : f32
    %2201 = vector.broadcast %cst_844 : f32 to vector<1x8xf32>
    %2202 = arith.addf %2189, %2201 : vector<1x8xf32>
    %cst_845 = arith.constant 1.000000e+00 : f32
    %2203 = vector.broadcast %cst_845 : f32 to vector<1x8xf32>
    %2204 = arith.select %2193, %2202, %2203 : vector<1x8xi1>, vector<1x8xf32>
    %2205 = arith.select %2191, %2200, %2204 : vector<1x8xi1>, vector<1x8xf32>
    %2206 = arith.divf %2198, %2205 : vector<1x8xf32>
    %cst_846 = arith.constant 0.785398185 : f32
    %cst_847 = arith.constant 0.000000e+00 : f32
    %2207 = vector.broadcast %cst_846 : f32 to vector<1x8xf32>
    %2208 = vector.broadcast %cst_847 : f32 to vector<1x8xf32>
    %2209 = arith.select %2193, %2207, %2208 : vector<1x8xi1>, vector<1x8xf32>
    %cst_848 = arith.constant 1.57079637 : f32
    %2210 = vector.broadcast %cst_848 : f32 to vector<1x8xf32>
    %2211 = arith.select %2191, %2210, %2209 : vector<1x8xi1>, vector<1x8xf32>
    %2212 = arith.mulf %2206, %2206 : vector<1x8xf32>
    %cst_849 = arith.constant 0.0805374458 : f32
    %2213 = vector.broadcast %cst_849 : f32 to vector<1x8xf32>
    %2214 = arith.mulf %2213, %2212 : vector<1x8xf32>
    %cst_850 = arith.constant 0.138776854 : f32
    %2215 = vector.broadcast %cst_850 : f32 to vector<1x8xf32>
    %2216 = arith.subf %2214, %2215 : vector<1x8xf32>
    %2217 = arith.mulf %2216, %2212 : vector<1x8xf32>
    %cst_851 = arith.constant 0.199777111 : f32
    %2218 = vector.broadcast %cst_851 : f32 to vector<1x8xf32>
    %2219 = arith.addf %2217, %2218 : vector<1x8xf32>
    %2220 = arith.mulf %2219, %2212 : vector<1x8xf32>
    %cst_852 = arith.constant 0.333329499 : f32
    %2221 = vector.broadcast %cst_852 : f32 to vector<1x8xf32>
    %2222 = arith.subf %2220, %2221 : vector<1x8xf32>
    %2223 = arith.addf %2211, %2206 : vector<1x8xf32>
    %2224 = arith.mulf %2206, %2212 : vector<1x8xf32>
    %2225 = arith.mulf %2224, %2222 : vector<1x8xf32>
    %2226 = arith.addf %2223, %2225 : vector<1x8xf32>
    %2227 = arith.mulf %2188, %2226 : vector<1x8xf32>
    %2228 = arith.mulf %2182, %2182 : vector<1x8xf32>
    %cst_853 = arith.constant 0.000000e+00 : f32
    %2229 = vector.broadcast %cst_853 : f32 to vector<1x8xf32>
    %2230 = arith.cmpf olt, %2228, %2229 : vector<1x8xf32>
    %cst_854 = arith.constant -1.000000e+00 : f32
    %cst_855 = arith.constant 1.000000e+00 : f32
    %2231 = vector.broadcast %cst_854 : f32 to vector<1x8xf32>
    %2232 = vector.broadcast %cst_855 : f32 to vector<1x8xf32>
    %2233 = arith.select %2230, %2231, %2232 : vector<1x8xi1>, vector<1x8xf32>
    %2234 = math.absf %2228 : vector<1x8xf32>
    %cst_856 = arith.constant 2.41421366 : f32
    %2235 = vector.broadcast %cst_856 : f32 to vector<1x8xf32>
    %2236 = arith.cmpf ogt, %2234, %2235 : vector<1x8xf32>
    %cst_857 = arith.constant 0.414213568 : f32
    %2237 = vector.broadcast %cst_857 : f32 to vector<1x8xf32>
    %2238 = arith.cmpf ogt, %2234, %2237 : vector<1x8xf32>
    %cst_858 = arith.constant 1.000000e+00 : f32
    %2239 = vector.broadcast %cst_858 : f32 to vector<1x8xf32>
    %2240 = arith.subf %2234, %2239 : vector<1x8xf32>
    %2241 = arith.select %2238, %2240, %2234 : vector<1x8xi1>, vector<1x8xf32>
    %cst_859 = arith.constant -1.000000e+00 : f32
    %2242 = vector.broadcast %cst_859 : f32 to vector<1x8xf32>
    %2243 = arith.select %2236, %2242, %2241 : vector<1x8xi1>, vector<1x8xf32>
    %cst_860 = arith.constant 1.000000e-30 : f32
    %2244 = vector.broadcast %cst_860 : f32 to vector<1x8xf32>
    %2245 = arith.maximumf %2234, %2244 : vector<1x8xf32>
    %cst_861 = arith.constant 1.000000e+00 : f32
    %2246 = vector.broadcast %cst_861 : f32 to vector<1x8xf32>
    %2247 = arith.addf %2234, %2246 : vector<1x8xf32>
    %cst_862 = arith.constant 1.000000e+00 : f32
    %2248 = vector.broadcast %cst_862 : f32 to vector<1x8xf32>
    %2249 = arith.select %2238, %2247, %2248 : vector<1x8xi1>, vector<1x8xf32>
    %2250 = arith.select %2236, %2245, %2249 : vector<1x8xi1>, vector<1x8xf32>
    %2251 = arith.divf %2243, %2250 : vector<1x8xf32>
    %cst_863 = arith.constant 0.785398185 : f32
    %cst_864 = arith.constant 0.000000e+00 : f32
    %2252 = vector.broadcast %cst_863 : f32 to vector<1x8xf32>
    %2253 = vector.broadcast %cst_864 : f32 to vector<1x8xf32>
    %2254 = arith.select %2238, %2252, %2253 : vector<1x8xi1>, vector<1x8xf32>
    %cst_865 = arith.constant 1.57079637 : f32
    %2255 = vector.broadcast %cst_865 : f32 to vector<1x8xf32>
    %2256 = arith.select %2236, %2255, %2254 : vector<1x8xi1>, vector<1x8xf32>
    %2257 = arith.mulf %2251, %2251 : vector<1x8xf32>
    %cst_866 = arith.constant 0.0805374458 : f32
    %2258 = vector.broadcast %cst_866 : f32 to vector<1x8xf32>
    %2259 = arith.mulf %2258, %2257 : vector<1x8xf32>
    %cst_867 = arith.constant 0.138776854 : f32
    %2260 = vector.broadcast %cst_867 : f32 to vector<1x8xf32>
    %2261 = arith.subf %2259, %2260 : vector<1x8xf32>
    %2262 = arith.mulf %2261, %2257 : vector<1x8xf32>
    %cst_868 = arith.constant 0.199777111 : f32
    %2263 = vector.broadcast %cst_868 : f32 to vector<1x8xf32>
    %2264 = arith.addf %2262, %2263 : vector<1x8xf32>
    %2265 = arith.mulf %2264, %2257 : vector<1x8xf32>
    %cst_869 = arith.constant 0.333329499 : f32
    %2266 = vector.broadcast %cst_869 : f32 to vector<1x8xf32>
    %2267 = arith.subf %2265, %2266 : vector<1x8xf32>
    %2268 = arith.addf %2256, %2251 : vector<1x8xf32>
    %2269 = arith.mulf %2251, %2257 : vector<1x8xf32>
    %2270 = arith.mulf %2269, %2267 : vector<1x8xf32>
    %2271 = arith.addf %2268, %2270 : vector<1x8xf32>
    %2272 = arith.mulf %2233, %2271 : vector<1x8xf32>
    %cst_870 = arith.constant dense<0.000000e+00> : vector<1x32xf32>
    %2273 = tpu.matmul %2227, %8, %cst_870 {dimension_numbers = #tpu.dot_dimension_numbers<[1], [0], [0], [1], [0, 0, 1, 1], [], []>} : vector<1x8xf32>, vector<8x32xf32>, vector<1x32xf32> -> vector<1x32xf32>
    %cst_871 = arith.constant dense<0.000000e+00> : vector<1x32xf32>
    %2274 = tpu.matmul %2272, %9, %cst_871 {dimension_numbers = #tpu.dot_dimension_numbers<[1], [0], [0], [1], [0, 0, 1, 1], [], []>} : vector<1x8xf32>, vector<8x32xf32>, vector<1x32xf32> -> vector<1x32xf32>
    %2275 = arith.addf %2273, %2274 : vector<1x32xf32>
    %2276 = arith.addf %2275, %10 : vector<1x32xf32>
    %cst_872 = arith.constant 0.000000e+00 : f32
    %2277 = vector.broadcast %cst_872 : f32 to vector<1x32xf32>
    %2278 = arith.subf %2277, %2276 : vector<1x32xf32>
    %2279 = math.exp %2278 : vector<1x32xf32>
    %cst_873 = arith.constant 1.000000e+00 : f32
    %2280 = vector.broadcast %cst_873 : f32 to vector<1x32xf32>
    %2281 = arith.addf %2280, %2279 : vector<1x32xf32>
    %cst_874 = arith.constant 1.000000e+00 : f32
    %2282 = vector.broadcast %cst_874 : f32 to vector<1x32xf32>
    %2283 = arith.divf %2282, %2281 : vector<1x32xf32>
    %2284 = vector.extract_strided_slice %2283 {offsets = [0, 0], sizes = [1, 8], strides = [1, 1]} : vector<1x32xf32> to vector<1x8xf32>
    %2285 = vector.extract_strided_slice %2283 {offsets = [0, 8], sizes = [1, 8], strides = [1, 1]} : vector<1x32xf32> to vector<1x8xf32>
    %2286 = vector.extract_strided_slice %2283 {offsets = [0, 16], sizes = [1, 8], strides = [1, 1]} : vector<1x32xf32> to vector<1x8xf32>
    %2287 = vector.extract_strided_slice %2283 {offsets = [0, 24], sizes = [1, 8], strides = [1, 1]} : vector<1x32xf32> to vector<1x8xf32>
    %cst_875 = arith.constant 2.000000e+00 : f32
    %2288 = vector.broadcast %cst_875 : f32 to vector<1x8xf32>
    %2289 = arith.mulf %2288, %2287 : vector<1x8xf32>
    %cst_876 = arith.constant 1.000000e+00 : f32
    %2290 = vector.broadcast %cst_876 : f32 to vector<1x8xf32>
    %2291 = arith.subf %2289, %2290 : vector<1x8xf32>
    %2292 = arith.mulf %2086, %2284 : vector<1x8xf32>
    %2293 = arith.mulf %2285, %2291 : vector<1x8xf32>
    %2294 = arith.addf %2292, %2293 : vector<1x8xf32>
    %2295 = math.tanh %2294 : vector<1x8xf32>
    %2296 = arith.mulf %2286, %2295 : vector<1x8xf32>
    %cst_877 = arith.constant 0.000000e+00 : f32
    %2297 = vector.broadcast %cst_877 : f32 to vector<1x8xf32>
    %2298 = arith.cmpf olt, %2296, %2297 : vector<1x8xf32>
    %cst_878 = arith.constant -1.000000e+00 : f32
    %cst_879 = arith.constant 1.000000e+00 : f32
    %2299 = vector.broadcast %cst_878 : f32 to vector<1x8xf32>
    %2300 = vector.broadcast %cst_879 : f32 to vector<1x8xf32>
    %2301 = arith.select %2298, %2299, %2300 : vector<1x8xi1>, vector<1x8xf32>
    %2302 = math.absf %2296 : vector<1x8xf32>
    %cst_880 = arith.constant 2.41421366 : f32
    %2303 = vector.broadcast %cst_880 : f32 to vector<1x8xf32>
    %2304 = arith.cmpf ogt, %2302, %2303 : vector<1x8xf32>
    %cst_881 = arith.constant 0.414213568 : f32
    %2305 = vector.broadcast %cst_881 : f32 to vector<1x8xf32>
    %2306 = arith.cmpf ogt, %2302, %2305 : vector<1x8xf32>
    %cst_882 = arith.constant 1.000000e+00 : f32
    %2307 = vector.broadcast %cst_882 : f32 to vector<1x8xf32>
    %2308 = arith.subf %2302, %2307 : vector<1x8xf32>
    %2309 = arith.select %2306, %2308, %2302 : vector<1x8xi1>, vector<1x8xf32>
    %cst_883 = arith.constant -1.000000e+00 : f32
    %2310 = vector.broadcast %cst_883 : f32 to vector<1x8xf32>
    %2311 = arith.select %2304, %2310, %2309 : vector<1x8xi1>, vector<1x8xf32>
    %cst_884 = arith.constant 1.000000e-30 : f32
    %2312 = vector.broadcast %cst_884 : f32 to vector<1x8xf32>
    %2313 = arith.maximumf %2302, %2312 : vector<1x8xf32>
    %cst_885 = arith.constant 1.000000e+00 : f32
    %2314 = vector.broadcast %cst_885 : f32 to vector<1x8xf32>
    %2315 = arith.addf %2302, %2314 : vector<1x8xf32>
    %cst_886 = arith.constant 1.000000e+00 : f32
    %2316 = vector.broadcast %cst_886 : f32 to vector<1x8xf32>
    %2317 = arith.select %2306, %2315, %2316 : vector<1x8xi1>, vector<1x8xf32>
    %2318 = arith.select %2304, %2313, %2317 : vector<1x8xi1>, vector<1x8xf32>
    %2319 = arith.divf %2311, %2318 : vector<1x8xf32>
    %cst_887 = arith.constant 0.785398185 : f32
    %cst_888 = arith.constant 0.000000e+00 : f32
    %2320 = vector.broadcast %cst_887 : f32 to vector<1x8xf32>
    %2321 = vector.broadcast %cst_888 : f32 to vector<1x8xf32>
    %2322 = arith.select %2306, %2320, %2321 : vector<1x8xi1>, vector<1x8xf32>
    %cst_889 = arith.constant 1.57079637 : f32
    %2323 = vector.broadcast %cst_889 : f32 to vector<1x8xf32>
    %2324 = arith.select %2304, %2323, %2322 : vector<1x8xi1>, vector<1x8xf32>
    %2325 = arith.mulf %2319, %2319 : vector<1x8xf32>
    %cst_890 = arith.constant 0.0805374458 : f32
    %2326 = vector.broadcast %cst_890 : f32 to vector<1x8xf32>
    %2327 = arith.mulf %2326, %2325 : vector<1x8xf32>
    %cst_891 = arith.constant 0.138776854 : f32
    %2328 = vector.broadcast %cst_891 : f32 to vector<1x8xf32>
    %2329 = arith.subf %2327, %2328 : vector<1x8xf32>
    %2330 = arith.mulf %2329, %2325 : vector<1x8xf32>
    %cst_892 = arith.constant 0.199777111 : f32
    %2331 = vector.broadcast %cst_892 : f32 to vector<1x8xf32>
    %2332 = arith.addf %2330, %2331 : vector<1x8xf32>
    %2333 = arith.mulf %2332, %2325 : vector<1x8xf32>
    %cst_893 = arith.constant 0.333329499 : f32
    %2334 = vector.broadcast %cst_893 : f32 to vector<1x8xf32>
    %2335 = arith.subf %2333, %2334 : vector<1x8xf32>
    %2336 = arith.addf %2324, %2319 : vector<1x8xf32>
    %2337 = arith.mulf %2319, %2325 : vector<1x8xf32>
    %2338 = arith.mulf %2337, %2335 : vector<1x8xf32>
    %2339 = arith.addf %2336, %2338 : vector<1x8xf32>
    %2340 = arith.mulf %2301, %2339 : vector<1x8xf32>
    %cst_894 = arith.constant dense<0.000000e+00> : vector<1x9xf32>
    %2341 = tpu.matmul %2340, %11, %cst_894 {dimension_numbers = #tpu.dot_dimension_numbers<[1], [0], [0], [1], [0, 0, 1, 1], [], []>} : vector<1x8xf32>, vector<8x9xf32>, vector<1x9xf32> -> vector<1x9xf32>
    %2342 = arith.mulf %2296, %2296 : vector<1x8xf32>
    %cst_895 = arith.constant 0.000000e+00 : f32
    %2343 = vector.broadcast %cst_895 : f32 to vector<1x8xf32>
    %2344 = arith.cmpf olt, %2342, %2343 : vector<1x8xf32>
    %cst_896 = arith.constant -1.000000e+00 : f32
    %cst_897 = arith.constant 1.000000e+00 : f32
    %2345 = vector.broadcast %cst_896 : f32 to vector<1x8xf32>
    %2346 = vector.broadcast %cst_897 : f32 to vector<1x8xf32>
    %2347 = arith.select %2344, %2345, %2346 : vector<1x8xi1>, vector<1x8xf32>
    %2348 = math.absf %2342 : vector<1x8xf32>
    %cst_898 = arith.constant 2.41421366 : f32
    %2349 = vector.broadcast %cst_898 : f32 to vector<1x8xf32>
    %2350 = arith.cmpf ogt, %2348, %2349 : vector<1x8xf32>
    %cst_899 = arith.constant 0.414213568 : f32
    %2351 = vector.broadcast %cst_899 : f32 to vector<1x8xf32>
    %2352 = arith.cmpf ogt, %2348, %2351 : vector<1x8xf32>
    %cst_900 = arith.constant 1.000000e+00 : f32
    %2353 = vector.broadcast %cst_900 : f32 to vector<1x8xf32>
    %2354 = arith.subf %2348, %2353 : vector<1x8xf32>
    %2355 = arith.select %2352, %2354, %2348 : vector<1x8xi1>, vector<1x8xf32>
    %cst_901 = arith.constant -1.000000e+00 : f32
    %2356 = vector.broadcast %cst_901 : f32 to vector<1x8xf32>
    %2357 = arith.select %2350, %2356, %2355 : vector<1x8xi1>, vector<1x8xf32>
    %cst_902 = arith.constant 1.000000e-30 : f32
    %2358 = vector.broadcast %cst_902 : f32 to vector<1x8xf32>
    %2359 = arith.maximumf %2348, %2358 : vector<1x8xf32>
    %cst_903 = arith.constant 1.000000e+00 : f32
    %2360 = vector.broadcast %cst_903 : f32 to vector<1x8xf32>
    %2361 = arith.addf %2348, %2360 : vector<1x8xf32>
    %cst_904 = arith.constant 1.000000e+00 : f32
    %2362 = vector.broadcast %cst_904 : f32 to vector<1x8xf32>
    %2363 = arith.select %2352, %2361, %2362 : vector<1x8xi1>, vector<1x8xf32>
    %2364 = arith.select %2350, %2359, %2363 : vector<1x8xi1>, vector<1x8xf32>
    %2365 = arith.divf %2357, %2364 : vector<1x8xf32>
    %cst_905 = arith.constant 0.785398185 : f32
    %cst_906 = arith.constant 0.000000e+00 : f32
    %2366 = vector.broadcast %cst_905 : f32 to vector<1x8xf32>
    %2367 = vector.broadcast %cst_906 : f32 to vector<1x8xf32>
    %2368 = arith.select %2352, %2366, %2367 : vector<1x8xi1>, vector<1x8xf32>
    %cst_907 = arith.constant 1.57079637 : f32
    %2369 = vector.broadcast %cst_907 : f32 to vector<1x8xf32>
    %2370 = arith.select %2350, %2369, %2368 : vector<1x8xi1>, vector<1x8xf32>
    %2371 = arith.mulf %2365, %2365 : vector<1x8xf32>
    %cst_908 = arith.constant 0.0805374458 : f32
    %2372 = vector.broadcast %cst_908 : f32 to vector<1x8xf32>
    %2373 = arith.mulf %2372, %2371 : vector<1x8xf32>
    %cst_909 = arith.constant 0.138776854 : f32
    %2374 = vector.broadcast %cst_909 : f32 to vector<1x8xf32>
    %2375 = arith.subf %2373, %2374 : vector<1x8xf32>
    %2376 = arith.mulf %2375, %2371 : vector<1x8xf32>
    %cst_910 = arith.constant 0.199777111 : f32
    %2377 = vector.broadcast %cst_910 : f32 to vector<1x8xf32>
    %2378 = arith.addf %2376, %2377 : vector<1x8xf32>
    %2379 = arith.mulf %2378, %2371 : vector<1x8xf32>
    %cst_911 = arith.constant 0.333329499 : f32
    %2380 = vector.broadcast %cst_911 : f32 to vector<1x8xf32>
    %2381 = arith.subf %2379, %2380 : vector<1x8xf32>
    %2382 = arith.addf %2370, %2365 : vector<1x8xf32>
    %2383 = arith.mulf %2365, %2371 : vector<1x8xf32>
    %2384 = arith.mulf %2383, %2381 : vector<1x8xf32>
    %2385 = arith.addf %2382, %2384 : vector<1x8xf32>
    %2386 = arith.mulf %2347, %2385 : vector<1x8xf32>
    %cst_912 = arith.constant dense<0.000000e+00> : vector<1x9xf32>
    %2387 = tpu.matmul %2386, %12, %cst_912 {dimension_numbers = #tpu.dot_dimension_numbers<[1], [0], [0], [1], [0, 0, 1, 1], [], []>} : vector<1x8xf32>, vector<8x9xf32>, vector<1x9xf32> -> vector<1x9xf32>
    %2388 = arith.addf %2341, %2387 : vector<1x9xf32>
    %2389 = arith.addf %2388, %13 : vector<1x9xf32>
    %2390 = vector.extract_strided_slice %2389 {offsets = [0, 0], sizes = [1, 8], strides = [1, 1]} : vector<1x9xf32> to vector<1x8xf32>
    %2391 = vector.extract_strided_slice %2389 {offsets = [0, 8], sizes = [1, 1], strides = [1, 1]} : vector<1x9xf32> to vector<1x1xf32>
    %cst_913 = arith.constant 0.000000e+00 : f32
    %2392 = vector.broadcast %cst_913 : f32 to vector<1x8xf32>
    %2393 = arith.cmpf olt, %2390, %2392 : vector<1x8xf32>
    %cst_914 = arith.constant -1.000000e+00 : f32
    %cst_915 = arith.constant 1.000000e+00 : f32
    %2394 = vector.broadcast %cst_914 : f32 to vector<1x8xf32>
    %2395 = vector.broadcast %cst_915 : f32 to vector<1x8xf32>
    %2396 = arith.select %2393, %2394, %2395 : vector<1x8xi1>, vector<1x8xf32>
    %2397 = math.absf %2390 : vector<1x8xf32>
    %cst_916 = arith.constant 2.41421366 : f32
    %2398 = vector.broadcast %cst_916 : f32 to vector<1x8xf32>
    %2399 = arith.cmpf ogt, %2397, %2398 : vector<1x8xf32>
    %cst_917 = arith.constant 0.414213568 : f32
    %2400 = vector.broadcast %cst_917 : f32 to vector<1x8xf32>
    %2401 = arith.cmpf ogt, %2397, %2400 : vector<1x8xf32>
    %cst_918 = arith.constant 1.000000e+00 : f32
    %2402 = vector.broadcast %cst_918 : f32 to vector<1x8xf32>
    %2403 = arith.subf %2397, %2402 : vector<1x8xf32>
    %2404 = arith.select %2401, %2403, %2397 : vector<1x8xi1>, vector<1x8xf32>
    %cst_919 = arith.constant -1.000000e+00 : f32
    %2405 = vector.broadcast %cst_919 : f32 to vector<1x8xf32>
    %2406 = arith.select %2399, %2405, %2404 : vector<1x8xi1>, vector<1x8xf32>
    %cst_920 = arith.constant 1.000000e-30 : f32
    %2407 = vector.broadcast %cst_920 : f32 to vector<1x8xf32>
    %2408 = arith.maximumf %2397, %2407 : vector<1x8xf32>
    %cst_921 = arith.constant 1.000000e+00 : f32
    %2409 = vector.broadcast %cst_921 : f32 to vector<1x8xf32>
    %2410 = arith.addf %2397, %2409 : vector<1x8xf32>
    %cst_922 = arith.constant 1.000000e+00 : f32
    %2411 = vector.broadcast %cst_922 : f32 to vector<1x8xf32>
    %2412 = arith.select %2401, %2410, %2411 : vector<1x8xi1>, vector<1x8xf32>
    %2413 = arith.select %2399, %2408, %2412 : vector<1x8xi1>, vector<1x8xf32>
    %2414 = arith.divf %2406, %2413 : vector<1x8xf32>
    %cst_923 = arith.constant 0.785398185 : f32
    %cst_924 = arith.constant 0.000000e+00 : f32
    %2415 = vector.broadcast %cst_923 : f32 to vector<1x8xf32>
    %2416 = vector.broadcast %cst_924 : f32 to vector<1x8xf32>
    %2417 = arith.select %2401, %2415, %2416 : vector<1x8xi1>, vector<1x8xf32>
    %cst_925 = arith.constant 1.57079637 : f32
    %2418 = vector.broadcast %cst_925 : f32 to vector<1x8xf32>
    %2419 = arith.select %2399, %2418, %2417 : vector<1x8xi1>, vector<1x8xf32>
    %2420 = arith.mulf %2414, %2414 : vector<1x8xf32>
    %cst_926 = arith.constant 0.0805374458 : f32
    %2421 = vector.broadcast %cst_926 : f32 to vector<1x8xf32>
    %2422 = arith.mulf %2421, %2420 : vector<1x8xf32>
    %cst_927 = arith.constant 0.138776854 : f32
    %2423 = vector.broadcast %cst_927 : f32 to vector<1x8xf32>
    %2424 = arith.subf %2422, %2423 : vector<1x8xf32>
    %2425 = arith.mulf %2424, %2420 : vector<1x8xf32>
    %cst_928 = arith.constant 0.199777111 : f32
    %2426 = vector.broadcast %cst_928 : f32 to vector<1x8xf32>
    %2427 = arith.addf %2425, %2426 : vector<1x8xf32>
    %2428 = arith.mulf %2427, %2420 : vector<1x8xf32>
    %cst_929 = arith.constant 0.333329499 : f32
    %2429 = vector.broadcast %cst_929 : f32 to vector<1x8xf32>
    %2430 = arith.subf %2428, %2429 : vector<1x8xf32>
    %2431 = arith.addf %2419, %2414 : vector<1x8xf32>
    %2432 = arith.mulf %2414, %2420 : vector<1x8xf32>
    %2433 = arith.mulf %2432, %2430 : vector<1x8xf32>
    %2434 = arith.addf %2431, %2433 : vector<1x8xf32>
    %2435 = arith.mulf %2396, %2434 : vector<1x8xf32>
    %2436 = arith.mulf %2390, %2390 : vector<1x8xf32>
    %cst_930 = arith.constant 0.000000e+00 : f32
    %2437 = vector.broadcast %cst_930 : f32 to vector<1x8xf32>
    %2438 = arith.cmpf olt, %2436, %2437 : vector<1x8xf32>
    %cst_931 = arith.constant -1.000000e+00 : f32
    %cst_932 = arith.constant 1.000000e+00 : f32
    %2439 = vector.broadcast %cst_931 : f32 to vector<1x8xf32>
    %2440 = vector.broadcast %cst_932 : f32 to vector<1x8xf32>
    %2441 = arith.select %2438, %2439, %2440 : vector<1x8xi1>, vector<1x8xf32>
    %2442 = math.absf %2436 : vector<1x8xf32>
    %cst_933 = arith.constant 2.41421366 : f32
    %2443 = vector.broadcast %cst_933 : f32 to vector<1x8xf32>
    %2444 = arith.cmpf ogt, %2442, %2443 : vector<1x8xf32>
    %cst_934 = arith.constant 0.414213568 : f32
    %2445 = vector.broadcast %cst_934 : f32 to vector<1x8xf32>
    %2446 = arith.cmpf ogt, %2442, %2445 : vector<1x8xf32>
    %cst_935 = arith.constant 1.000000e+00 : f32
    %2447 = vector.broadcast %cst_935 : f32 to vector<1x8xf32>
    %2448 = arith.subf %2442, %2447 : vector<1x8xf32>
    %2449 = arith.select %2446, %2448, %2442 : vector<1x8xi1>, vector<1x8xf32>
    %cst_936 = arith.constant -1.000000e+00 : f32
    %2450 = vector.broadcast %cst_936 : f32 to vector<1x8xf32>
    %2451 = arith.select %2444, %2450, %2449 : vector<1x8xi1>, vector<1x8xf32>
    %cst_937 = arith.constant 1.000000e-30 : f32
    %2452 = vector.broadcast %cst_937 : f32 to vector<1x8xf32>
    %2453 = arith.maximumf %2442, %2452 : vector<1x8xf32>
    %cst_938 = arith.constant 1.000000e+00 : f32
    %2454 = vector.broadcast %cst_938 : f32 to vector<1x8xf32>
    %2455 = arith.addf %2442, %2454 : vector<1x8xf32>
    %cst_939 = arith.constant 1.000000e+00 : f32
    %2456 = vector.broadcast %cst_939 : f32 to vector<1x8xf32>
    %2457 = arith.select %2446, %2455, %2456 : vector<1x8xi1>, vector<1x8xf32>
    %2458 = arith.select %2444, %2453, %2457 : vector<1x8xi1>, vector<1x8xf32>
    %2459 = arith.divf %2451, %2458 : vector<1x8xf32>
    %cst_940 = arith.constant 0.785398185 : f32
    %cst_941 = arith.constant 0.000000e+00 : f32
    %2460 = vector.broadcast %cst_940 : f32 to vector<1x8xf32>
    %2461 = vector.broadcast %cst_941 : f32 to vector<1x8xf32>
    %2462 = arith.select %2446, %2460, %2461 : vector<1x8xi1>, vector<1x8xf32>
    %cst_942 = arith.constant 1.57079637 : f32
    %2463 = vector.broadcast %cst_942 : f32 to vector<1x8xf32>
    %2464 = arith.select %2444, %2463, %2462 : vector<1x8xi1>, vector<1x8xf32>
    %2465 = arith.mulf %2459, %2459 : vector<1x8xf32>
    %cst_943 = arith.constant 0.0805374458 : f32
    %2466 = vector.broadcast %cst_943 : f32 to vector<1x8xf32>
    %2467 = arith.mulf %2466, %2465 : vector<1x8xf32>
    %cst_944 = arith.constant 0.138776854 : f32
    %2468 = vector.broadcast %cst_944 : f32 to vector<1x8xf32>
    %2469 = arith.subf %2467, %2468 : vector<1x8xf32>
    %2470 = arith.mulf %2469, %2465 : vector<1x8xf32>
    %cst_945 = arith.constant 0.199777111 : f32
    %2471 = vector.broadcast %cst_945 : f32 to vector<1x8xf32>
    %2472 = arith.addf %2470, %2471 : vector<1x8xf32>
    %2473 = arith.mulf %2472, %2465 : vector<1x8xf32>
    %cst_946 = arith.constant 0.333329499 : f32
    %2474 = vector.broadcast %cst_946 : f32 to vector<1x8xf32>
    %2475 = arith.subf %2473, %2474 : vector<1x8xf32>
    %2476 = arith.addf %2464, %2459 : vector<1x8xf32>
    %2477 = arith.mulf %2459, %2465 : vector<1x8xf32>
    %2478 = arith.mulf %2477, %2475 : vector<1x8xf32>
    %2479 = arith.addf %2476, %2478 : vector<1x8xf32>
    %2480 = arith.mulf %2441, %2479 : vector<1x8xf32>
    %cst_947 = arith.constant dense<0.000000e+00> : vector<1x32xf32>
    %2481 = tpu.matmul %2435, %8, %cst_947 {dimension_numbers = #tpu.dot_dimension_numbers<[1], [0], [0], [1], [0, 0, 1, 1], [], []>} : vector<1x8xf32>, vector<8x32xf32>, vector<1x32xf32> -> vector<1x32xf32>
    %cst_948 = arith.constant dense<0.000000e+00> : vector<1x32xf32>
    %2482 = tpu.matmul %2480, %9, %cst_948 {dimension_numbers = #tpu.dot_dimension_numbers<[1], [0], [0], [1], [0, 0, 1, 1], [], []>} : vector<1x8xf32>, vector<8x32xf32>, vector<1x32xf32> -> vector<1x32xf32>
    %2483 = arith.addf %2481, %2482 : vector<1x32xf32>
    %2484 = arith.addf %2483, %10 : vector<1x32xf32>
    %cst_949 = arith.constant 0.000000e+00 : f32
    %2485 = vector.broadcast %cst_949 : f32 to vector<1x32xf32>
    %2486 = arith.subf %2485, %2484 : vector<1x32xf32>
    %2487 = math.exp %2486 : vector<1x32xf32>
    %cst_950 = arith.constant 1.000000e+00 : f32
    %2488 = vector.broadcast %cst_950 : f32 to vector<1x32xf32>
    %2489 = arith.addf %2488, %2487 : vector<1x32xf32>
    %cst_951 = arith.constant 1.000000e+00 : f32
    %2490 = vector.broadcast %cst_951 : f32 to vector<1x32xf32>
    %2491 = arith.divf %2490, %2489 : vector<1x32xf32>
    %2492 = vector.extract_strided_slice %2491 {offsets = [0, 0], sizes = [1, 8], strides = [1, 1]} : vector<1x32xf32> to vector<1x8xf32>
    %2493 = vector.extract_strided_slice %2491 {offsets = [0, 8], sizes = [1, 8], strides = [1, 1]} : vector<1x32xf32> to vector<1x8xf32>
    %2494 = vector.extract_strided_slice %2491 {offsets = [0, 16], sizes = [1, 8], strides = [1, 1]} : vector<1x32xf32> to vector<1x8xf32>
    %2495 = vector.extract_strided_slice %2491 {offsets = [0, 24], sizes = [1, 8], strides = [1, 1]} : vector<1x32xf32> to vector<1x8xf32>
    %cst_952 = arith.constant 2.000000e+00 : f32
    %2496 = vector.broadcast %cst_952 : f32 to vector<1x8xf32>
    %2497 = arith.mulf %2496, %2495 : vector<1x8xf32>
    %cst_953 = arith.constant 1.000000e+00 : f32
    %2498 = vector.broadcast %cst_953 : f32 to vector<1x8xf32>
    %2499 = arith.subf %2497, %2498 : vector<1x8xf32>
    %2500 = arith.mulf %2294, %2492 : vector<1x8xf32>
    %2501 = arith.mulf %2493, %2499 : vector<1x8xf32>
    %2502 = arith.addf %2500, %2501 : vector<1x8xf32>
    %2503 = math.tanh %2502 : vector<1x8xf32>
    %2504 = arith.mulf %2494, %2503 : vector<1x8xf32>
    %cst_954 = arith.constant 0.000000e+00 : f32
    %2505 = vector.broadcast %cst_954 : f32 to vector<1x8xf32>
    %2506 = arith.cmpf olt, %2504, %2505 : vector<1x8xf32>
    %cst_955 = arith.constant -1.000000e+00 : f32
    %cst_956 = arith.constant 1.000000e+00 : f32
    %2507 = vector.broadcast %cst_955 : f32 to vector<1x8xf32>
    %2508 = vector.broadcast %cst_956 : f32 to vector<1x8xf32>
    %2509 = arith.select %2506, %2507, %2508 : vector<1x8xi1>, vector<1x8xf32>
    %2510 = math.absf %2504 : vector<1x8xf32>
    %cst_957 = arith.constant 2.41421366 : f32
    %2511 = vector.broadcast %cst_957 : f32 to vector<1x8xf32>
    %2512 = arith.cmpf ogt, %2510, %2511 : vector<1x8xf32>
    %cst_958 = arith.constant 0.414213568 : f32
    %2513 = vector.broadcast %cst_958 : f32 to vector<1x8xf32>
    %2514 = arith.cmpf ogt, %2510, %2513 : vector<1x8xf32>
    %cst_959 = arith.constant 1.000000e+00 : f32
    %2515 = vector.broadcast %cst_959 : f32 to vector<1x8xf32>
    %2516 = arith.subf %2510, %2515 : vector<1x8xf32>
    %2517 = arith.select %2514, %2516, %2510 : vector<1x8xi1>, vector<1x8xf32>
    %cst_960 = arith.constant -1.000000e+00 : f32
    %2518 = vector.broadcast %cst_960 : f32 to vector<1x8xf32>
    %2519 = arith.select %2512, %2518, %2517 : vector<1x8xi1>, vector<1x8xf32>
    %cst_961 = arith.constant 1.000000e-30 : f32
    %2520 = vector.broadcast %cst_961 : f32 to vector<1x8xf32>
    %2521 = arith.maximumf %2510, %2520 : vector<1x8xf32>
    %cst_962 = arith.constant 1.000000e+00 : f32
    %2522 = vector.broadcast %cst_962 : f32 to vector<1x8xf32>
    %2523 = arith.addf %2510, %2522 : vector<1x8xf32>
    %cst_963 = arith.constant 1.000000e+00 : f32
    %2524 = vector.broadcast %cst_963 : f32 to vector<1x8xf32>
    %2525 = arith.select %2514, %2523, %2524 : vector<1x8xi1>, vector<1x8xf32>
    %2526 = arith.select %2512, %2521, %2525 : vector<1x8xi1>, vector<1x8xf32>
    %2527 = arith.divf %2519, %2526 : vector<1x8xf32>
    %cst_964 = arith.constant 0.785398185 : f32
    %cst_965 = arith.constant 0.000000e+00 : f32
    %2528 = vector.broadcast %cst_964 : f32 to vector<1x8xf32>
    %2529 = vector.broadcast %cst_965 : f32 to vector<1x8xf32>
    %2530 = arith.select %2514, %2528, %2529 : vector<1x8xi1>, vector<1x8xf32>
    %cst_966 = arith.constant 1.57079637 : f32
    %2531 = vector.broadcast %cst_966 : f32 to vector<1x8xf32>
    %2532 = arith.select %2512, %2531, %2530 : vector<1x8xi1>, vector<1x8xf32>
    %2533 = arith.mulf %2527, %2527 : vector<1x8xf32>
    %cst_967 = arith.constant 0.0805374458 : f32
    %2534 = vector.broadcast %cst_967 : f32 to vector<1x8xf32>
    %2535 = arith.mulf %2534, %2533 : vector<1x8xf32>
    %cst_968 = arith.constant 0.138776854 : f32
    %2536 = vector.broadcast %cst_968 : f32 to vector<1x8xf32>
    %2537 = arith.subf %2535, %2536 : vector<1x8xf32>
    %2538 = arith.mulf %2537, %2533 : vector<1x8xf32>
    %cst_969 = arith.constant 0.199777111 : f32
    %2539 = vector.broadcast %cst_969 : f32 to vector<1x8xf32>
    %2540 = arith.addf %2538, %2539 : vector<1x8xf32>
    %2541 = arith.mulf %2540, %2533 : vector<1x8xf32>
    %cst_970 = arith.constant 0.333329499 : f32
    %2542 = vector.broadcast %cst_970 : f32 to vector<1x8xf32>
    %2543 = arith.subf %2541, %2542 : vector<1x8xf32>
    %2544 = arith.addf %2532, %2527 : vector<1x8xf32>
    %2545 = arith.mulf %2527, %2533 : vector<1x8xf32>
    %2546 = arith.mulf %2545, %2543 : vector<1x8xf32>
    %2547 = arith.addf %2544, %2546 : vector<1x8xf32>
    %2548 = arith.mulf %2509, %2547 : vector<1x8xf32>
    %cst_971 = arith.constant dense<0.000000e+00> : vector<1x9xf32>
    %2549 = tpu.matmul %2548, %11, %cst_971 {dimension_numbers = #tpu.dot_dimension_numbers<[1], [0], [0], [1], [0, 0, 1, 1], [], []>} : vector<1x8xf32>, vector<8x9xf32>, vector<1x9xf32> -> vector<1x9xf32>
    %2550 = arith.mulf %2504, %2504 : vector<1x8xf32>
    %cst_972 = arith.constant 0.000000e+00 : f32
    %2551 = vector.broadcast %cst_972 : f32 to vector<1x8xf32>
    %2552 = arith.cmpf olt, %2550, %2551 : vector<1x8xf32>
    %cst_973 = arith.constant -1.000000e+00 : f32
    %cst_974 = arith.constant 1.000000e+00 : f32
    %2553 = vector.broadcast %cst_973 : f32 to vector<1x8xf32>
    %2554 = vector.broadcast %cst_974 : f32 to vector<1x8xf32>
    %2555 = arith.select %2552, %2553, %2554 : vector<1x8xi1>, vector<1x8xf32>
    %2556 = math.absf %2550 : vector<1x8xf32>
    %cst_975 = arith.constant 2.41421366 : f32
    %2557 = vector.broadcast %cst_975 : f32 to vector<1x8xf32>
    %2558 = arith.cmpf ogt, %2556, %2557 : vector<1x8xf32>
    %cst_976 = arith.constant 0.414213568 : f32
    %2559 = vector.broadcast %cst_976 : f32 to vector<1x8xf32>
    %2560 = arith.cmpf ogt, %2556, %2559 : vector<1x8xf32>
    %cst_977 = arith.constant 1.000000e+00 : f32
    %2561 = vector.broadcast %cst_977 : f32 to vector<1x8xf32>
    %2562 = arith.subf %2556, %2561 : vector<1x8xf32>
    %2563 = arith.select %2560, %2562, %2556 : vector<1x8xi1>, vector<1x8xf32>
    %cst_978 = arith.constant -1.000000e+00 : f32
    %2564 = vector.broadcast %cst_978 : f32 to vector<1x8xf32>
    %2565 = arith.select %2558, %2564, %2563 : vector<1x8xi1>, vector<1x8xf32>
    %cst_979 = arith.constant 1.000000e-30 : f32
    %2566 = vector.broadcast %cst_979 : f32 to vector<1x8xf32>
    %2567 = arith.maximumf %2556, %2566 : vector<1x8xf32>
    %cst_980 = arith.constant 1.000000e+00 : f32
    %2568 = vector.broadcast %cst_980 : f32 to vector<1x8xf32>
    %2569 = arith.addf %2556, %2568 : vector<1x8xf32>
    %cst_981 = arith.constant 1.000000e+00 : f32
    %2570 = vector.broadcast %cst_981 : f32 to vector<1x8xf32>
    %2571 = arith.select %2560, %2569, %2570 : vector<1x8xi1>, vector<1x8xf32>
    %2572 = arith.select %2558, %2567, %2571 : vector<1x8xi1>, vector<1x8xf32>
    %2573 = arith.divf %2565, %2572 : vector<1x8xf32>
    %cst_982 = arith.constant 0.785398185 : f32
    %cst_983 = arith.constant 0.000000e+00 : f32
    %2574 = vector.broadcast %cst_982 : f32 to vector<1x8xf32>
    %2575 = vector.broadcast %cst_983 : f32 to vector<1x8xf32>
    %2576 = arith.select %2560, %2574, %2575 : vector<1x8xi1>, vector<1x8xf32>
    %cst_984 = arith.constant 1.57079637 : f32
    %2577 = vector.broadcast %cst_984 : f32 to vector<1x8xf32>
    %2578 = arith.select %2558, %2577, %2576 : vector<1x8xi1>, vector<1x8xf32>
    %2579 = arith.mulf %2573, %2573 : vector<1x8xf32>
    %cst_985 = arith.constant 0.0805374458 : f32
    %2580 = vector.broadcast %cst_985 : f32 to vector<1x8xf32>
    %2581 = arith.mulf %2580, %2579 : vector<1x8xf32>
    %cst_986 = arith.constant 0.138776854 : f32
    %2582 = vector.broadcast %cst_986 : f32 to vector<1x8xf32>
    %2583 = arith.subf %2581, %2582 : vector<1x8xf32>
    %2584 = arith.mulf %2583, %2579 : vector<1x8xf32>
    %cst_987 = arith.constant 0.199777111 : f32
    %2585 = vector.broadcast %cst_987 : f32 to vector<1x8xf32>
    %2586 = arith.addf %2584, %2585 : vector<1x8xf32>
    %2587 = arith.mulf %2586, %2579 : vector<1x8xf32>
    %cst_988 = arith.constant 0.333329499 : f32
    %2588 = vector.broadcast %cst_988 : f32 to vector<1x8xf32>
    %2589 = arith.subf %2587, %2588 : vector<1x8xf32>
    %2590 = arith.addf %2578, %2573 : vector<1x8xf32>
    %2591 = arith.mulf %2573, %2579 : vector<1x8xf32>
    %2592 = arith.mulf %2591, %2589 : vector<1x8xf32>
    %2593 = arith.addf %2590, %2592 : vector<1x8xf32>
    %2594 = arith.mulf %2555, %2593 : vector<1x8xf32>
    %cst_989 = arith.constant dense<0.000000e+00> : vector<1x9xf32>
    %2595 = tpu.matmul %2594, %12, %cst_989 {dimension_numbers = #tpu.dot_dimension_numbers<[1], [0], [0], [1], [0, 0, 1, 1], [], []>} : vector<1x8xf32>, vector<8x9xf32>, vector<1x9xf32> -> vector<1x9xf32>
    %2596 = arith.addf %2549, %2595 : vector<1x9xf32>
    %2597 = arith.addf %2596, %13 : vector<1x9xf32>
    %2598 = vector.extract_strided_slice %2597 {offsets = [0, 0], sizes = [1, 8], strides = [1, 1]} : vector<1x9xf32> to vector<1x8xf32>
    %2599 = vector.extract_strided_slice %2597 {offsets = [0, 8], sizes = [1, 1], strides = [1, 1]} : vector<1x9xf32> to vector<1x1xf32>
    %cst_990 = arith.constant 0.000000e+00 : f32
    %2600 = vector.broadcast %cst_990 : f32 to vector<1x8xf32>
    %2601 = arith.cmpf olt, %2598, %2600 : vector<1x8xf32>
    %cst_991 = arith.constant -1.000000e+00 : f32
    %cst_992 = arith.constant 1.000000e+00 : f32
    %2602 = vector.broadcast %cst_991 : f32 to vector<1x8xf32>
    %2603 = vector.broadcast %cst_992 : f32 to vector<1x8xf32>
    %2604 = arith.select %2601, %2602, %2603 : vector<1x8xi1>, vector<1x8xf32>
    %2605 = math.absf %2598 : vector<1x8xf32>
    %cst_993 = arith.constant 2.41421366 : f32
    %2606 = vector.broadcast %cst_993 : f32 to vector<1x8xf32>
    %2607 = arith.cmpf ogt, %2605, %2606 : vector<1x8xf32>
    %cst_994 = arith.constant 0.414213568 : f32
    %2608 = vector.broadcast %cst_994 : f32 to vector<1x8xf32>
    %2609 = arith.cmpf ogt, %2605, %2608 : vector<1x8xf32>
    %cst_995 = arith.constant 1.000000e+00 : f32
    %2610 = vector.broadcast %cst_995 : f32 to vector<1x8xf32>
    %2611 = arith.subf %2605, %2610 : vector<1x8xf32>
    %2612 = arith.select %2609, %2611, %2605 : vector<1x8xi1>, vector<1x8xf32>
    %cst_996 = arith.constant -1.000000e+00 : f32
    %2613 = vector.broadcast %cst_996 : f32 to vector<1x8xf32>
    %2614 = arith.select %2607, %2613, %2612 : vector<1x8xi1>, vector<1x8xf32>
    %cst_997 = arith.constant 1.000000e-30 : f32
    %2615 = vector.broadcast %cst_997 : f32 to vector<1x8xf32>
    %2616 = arith.maximumf %2605, %2615 : vector<1x8xf32>
    %cst_998 = arith.constant 1.000000e+00 : f32
    %2617 = vector.broadcast %cst_998 : f32 to vector<1x8xf32>
    %2618 = arith.addf %2605, %2617 : vector<1x8xf32>
    %cst_999 = arith.constant 1.000000e+00 : f32
    %2619 = vector.broadcast %cst_999 : f32 to vector<1x8xf32>
    %2620 = arith.select %2609, %2618, %2619 : vector<1x8xi1>, vector<1x8xf32>
    %2621 = arith.select %2607, %2616, %2620 : vector<1x8xi1>, vector<1x8xf32>
    %2622 = arith.divf %2614, %2621 : vector<1x8xf32>
    %cst_1000 = arith.constant 0.785398185 : f32
    %cst_1001 = arith.constant 0.000000e+00 : f32
    %2623 = vector.broadcast %cst_1000 : f32 to vector<1x8xf32>
    %2624 = vector.broadcast %cst_1001 : f32 to vector<1x8xf32>
    %2625 = arith.select %2609, %2623, %2624 : vector<1x8xi1>, vector<1x8xf32>
    %cst_1002 = arith.constant 1.57079637 : f32
    %2626 = vector.broadcast %cst_1002 : f32 to vector<1x8xf32>
    %2627 = arith.select %2607, %2626, %2625 : vector<1x8xi1>, vector<1x8xf32>
    %2628 = arith.mulf %2622, %2622 : vector<1x8xf32>
    %cst_1003 = arith.constant 0.0805374458 : f32
    %2629 = vector.broadcast %cst_1003 : f32 to vector<1x8xf32>
    %2630 = arith.mulf %2629, %2628 : vector<1x8xf32>
    %cst_1004 = arith.constant 0.138776854 : f32
    %2631 = vector.broadcast %cst_1004 : f32 to vector<1x8xf32>
    %2632 = arith.subf %2630, %2631 : vector<1x8xf32>
    %2633 = arith.mulf %2632, %2628 : vector<1x8xf32>
    %cst_1005 = arith.constant 0.199777111 : f32
    %2634 = vector.broadcast %cst_1005 : f32 to vector<1x8xf32>
    %2635 = arith.addf %2633, %2634 : vector<1x8xf32>
    %2636 = arith.mulf %2635, %2628 : vector<1x8xf32>
    %cst_1006 = arith.constant 0.333329499 : f32
    %2637 = vector.broadcast %cst_1006 : f32 to vector<1x8xf32>
    %2638 = arith.subf %2636, %2637 : vector<1x8xf32>
    %2639 = arith.addf %2627, %2622 : vector<1x8xf32>
    %2640 = arith.mulf %2622, %2628 : vector<1x8xf32>
    %2641 = arith.mulf %2640, %2638 : vector<1x8xf32>
    %2642 = arith.addf %2639, %2641 : vector<1x8xf32>
    %2643 = arith.mulf %2604, %2642 : vector<1x8xf32>
    %2644 = arith.mulf %2598, %2598 : vector<1x8xf32>
    %cst_1007 = arith.constant 0.000000e+00 : f32
    %2645 = vector.broadcast %cst_1007 : f32 to vector<1x8xf32>
    %2646 = arith.cmpf olt, %2644, %2645 : vector<1x8xf32>
    %cst_1008 = arith.constant -1.000000e+00 : f32
    %cst_1009 = arith.constant 1.000000e+00 : f32
    %2647 = vector.broadcast %cst_1008 : f32 to vector<1x8xf32>
    %2648 = vector.broadcast %cst_1009 : f32 to vector<1x8xf32>
    %2649 = arith.select %2646, %2647, %2648 : vector<1x8xi1>, vector<1x8xf32>
    %2650 = math.absf %2644 : vector<1x8xf32>
    %cst_1010 = arith.constant 2.41421366 : f32
    %2651 = vector.broadcast %cst_1010 : f32 to vector<1x8xf32>
    %2652 = arith.cmpf ogt, %2650, %2651 : vector<1x8xf32>
    %cst_1011 = arith.constant 0.414213568 : f32
    %2653 = vector.broadcast %cst_1011 : f32 to vector<1x8xf32>
    %2654 = arith.cmpf ogt, %2650, %2653 : vector<1x8xf32>
    %cst_1012 = arith.constant 1.000000e+00 : f32
    %2655 = vector.broadcast %cst_1012 : f32 to vector<1x8xf32>
    %2656 = arith.subf %2650, %2655 : vector<1x8xf32>
    %2657 = arith.select %2654, %2656, %2650 : vector<1x8xi1>, vector<1x8xf32>
    %cst_1013 = arith.constant -1.000000e+00 : f32
    %2658 = vector.broadcast %cst_1013 : f32 to vector<1x8xf32>
    %2659 = arith.select %2652, %2658, %2657 : vector<1x8xi1>, vector<1x8xf32>
    %cst_1014 = arith.constant 1.000000e-30 : f32
    %2660 = vector.broadcast %cst_1014 : f32 to vector<1x8xf32>
    %2661 = arith.maximumf %2650, %2660 : vector<1x8xf32>
    %cst_1015 = arith.constant 1.000000e+00 : f32
    %2662 = vector.broadcast %cst_1015 : f32 to vector<1x8xf32>
    %2663 = arith.addf %2650, %2662 : vector<1x8xf32>
    %cst_1016 = arith.constant 1.000000e+00 : f32
    %2664 = vector.broadcast %cst_1016 : f32 to vector<1x8xf32>
    %2665 = arith.select %2654, %2663, %2664 : vector<1x8xi1>, vector<1x8xf32>
    %2666 = arith.select %2652, %2661, %2665 : vector<1x8xi1>, vector<1x8xf32>
    %2667 = arith.divf %2659, %2666 : vector<1x8xf32>
    %cst_1017 = arith.constant 0.785398185 : f32
    %cst_1018 = arith.constant 0.000000e+00 : f32
    %2668 = vector.broadcast %cst_1017 : f32 to vector<1x8xf32>
    %2669 = vector.broadcast %cst_1018 : f32 to vector<1x8xf32>
    %2670 = arith.select %2654, %2668, %2669 : vector<1x8xi1>, vector<1x8xf32>
    %cst_1019 = arith.constant 1.57079637 : f32
    %2671 = vector.broadcast %cst_1019 : f32 to vector<1x8xf32>
    %2672 = arith.select %2652, %2671, %2670 : vector<1x8xi1>, vector<1x8xf32>
    %2673 = arith.mulf %2667, %2667 : vector<1x8xf32>
    %cst_1020 = arith.constant 0.0805374458 : f32
    %2674 = vector.broadcast %cst_1020 : f32 to vector<1x8xf32>
    %2675 = arith.mulf %2674, %2673 : vector<1x8xf32>
    %cst_1021 = arith.constant 0.138776854 : f32
    %2676 = vector.broadcast %cst_1021 : f32 to vector<1x8xf32>
    %2677 = arith.subf %2675, %2676 : vector<1x8xf32>
    %2678 = arith.mulf %2677, %2673 : vector<1x8xf32>
    %cst_1022 = arith.constant 0.199777111 : f32
    %2679 = vector.broadcast %cst_1022 : f32 to vector<1x8xf32>
    %2680 = arith.addf %2678, %2679 : vector<1x8xf32>
    %2681 = arith.mulf %2680, %2673 : vector<1x8xf32>
    %cst_1023 = arith.constant 0.333329499 : f32
    %2682 = vector.broadcast %cst_1023 : f32 to vector<1x8xf32>
    %2683 = arith.subf %2681, %2682 : vector<1x8xf32>
    %2684 = arith.addf %2672, %2667 : vector<1x8xf32>
    %2685 = arith.mulf %2667, %2673 : vector<1x8xf32>
    %2686 = arith.mulf %2685, %2683 : vector<1x8xf32>
    %2687 = arith.addf %2684, %2686 : vector<1x8xf32>
    %2688 = arith.mulf %2649, %2687 : vector<1x8xf32>
    %cst_1024 = arith.constant dense<0.000000e+00> : vector<1x32xf32>
    %2689 = tpu.matmul %2643, %8, %cst_1024 {dimension_numbers = #tpu.dot_dimension_numbers<[1], [0], [0], [1], [0, 0, 1, 1], [], []>} : vector<1x8xf32>, vector<8x32xf32>, vector<1x32xf32> -> vector<1x32xf32>
    %cst_1025 = arith.constant dense<0.000000e+00> : vector<1x32xf32>
    %2690 = tpu.matmul %2688, %9, %cst_1025 {dimension_numbers = #tpu.dot_dimension_numbers<[1], [0], [0], [1], [0, 0, 1, 1], [], []>} : vector<1x8xf32>, vector<8x32xf32>, vector<1x32xf32> -> vector<1x32xf32>
    %2691 = arith.addf %2689, %2690 : vector<1x32xf32>
    %2692 = arith.addf %2691, %10 : vector<1x32xf32>
    %cst_1026 = arith.constant 0.000000e+00 : f32
    %2693 = vector.broadcast %cst_1026 : f32 to vector<1x32xf32>
    %2694 = arith.subf %2693, %2692 : vector<1x32xf32>
    %2695 = math.exp %2694 : vector<1x32xf32>
    %cst_1027 = arith.constant 1.000000e+00 : f32
    %2696 = vector.broadcast %cst_1027 : f32 to vector<1x32xf32>
    %2697 = arith.addf %2696, %2695 : vector<1x32xf32>
    %cst_1028 = arith.constant 1.000000e+00 : f32
    %2698 = vector.broadcast %cst_1028 : f32 to vector<1x32xf32>
    %2699 = arith.divf %2698, %2697 : vector<1x32xf32>
    %2700 = vector.extract_strided_slice %2699 {offsets = [0, 0], sizes = [1, 8], strides = [1, 1]} : vector<1x32xf32> to vector<1x8xf32>
    %2701 = vector.extract_strided_slice %2699 {offsets = [0, 8], sizes = [1, 8], strides = [1, 1]} : vector<1x32xf32> to vector<1x8xf32>
    %2702 = vector.extract_strided_slice %2699 {offsets = [0, 16], sizes = [1, 8], strides = [1, 1]} : vector<1x32xf32> to vector<1x8xf32>
    %2703 = vector.extract_strided_slice %2699 {offsets = [0, 24], sizes = [1, 8], strides = [1, 1]} : vector<1x32xf32> to vector<1x8xf32>
    %cst_1029 = arith.constant 2.000000e+00 : f32
    %2704 = vector.broadcast %cst_1029 : f32 to vector<1x8xf32>
    %2705 = arith.mulf %2704, %2703 : vector<1x8xf32>
    %cst_1030 = arith.constant 1.000000e+00 : f32
    %2706 = vector.broadcast %cst_1030 : f32 to vector<1x8xf32>
    %2707 = arith.subf %2705, %2706 : vector<1x8xf32>
    %2708 = arith.mulf %2502, %2700 : vector<1x8xf32>
    %2709 = arith.mulf %2701, %2707 : vector<1x8xf32>
    %2710 = arith.addf %2708, %2709 : vector<1x8xf32>
    %2711 = math.tanh %2710 : vector<1x8xf32>
    %2712 = arith.mulf %2702, %2711 : vector<1x8xf32>
    %cst_1031 = arith.constant 0.000000e+00 : f32
    %2713 = vector.broadcast %cst_1031 : f32 to vector<1x8xf32>
    %2714 = arith.cmpf olt, %2712, %2713 : vector<1x8xf32>
    %cst_1032 = arith.constant -1.000000e+00 : f32
    %cst_1033 = arith.constant 1.000000e+00 : f32
    %2715 = vector.broadcast %cst_1032 : f32 to vector<1x8xf32>
    %2716 = vector.broadcast %cst_1033 : f32 to vector<1x8xf32>
    %2717 = arith.select %2714, %2715, %2716 : vector<1x8xi1>, vector<1x8xf32>
    %2718 = math.absf %2712 : vector<1x8xf32>
    %cst_1034 = arith.constant 2.41421366 : f32
    %2719 = vector.broadcast %cst_1034 : f32 to vector<1x8xf32>
    %2720 = arith.cmpf ogt, %2718, %2719 : vector<1x8xf32>
    %cst_1035 = arith.constant 0.414213568 : f32
    %2721 = vector.broadcast %cst_1035 : f32 to vector<1x8xf32>
    %2722 = arith.cmpf ogt, %2718, %2721 : vector<1x8xf32>
    %cst_1036 = arith.constant 1.000000e+00 : f32
    %2723 = vector.broadcast %cst_1036 : f32 to vector<1x8xf32>
    %2724 = arith.subf %2718, %2723 : vector<1x8xf32>
    %2725 = arith.select %2722, %2724, %2718 : vector<1x8xi1>, vector<1x8xf32>
    %cst_1037 = arith.constant -1.000000e+00 : f32
    %2726 = vector.broadcast %cst_1037 : f32 to vector<1x8xf32>
    %2727 = arith.select %2720, %2726, %2725 : vector<1x8xi1>, vector<1x8xf32>
    %cst_1038 = arith.constant 1.000000e-30 : f32
    %2728 = vector.broadcast %cst_1038 : f32 to vector<1x8xf32>
    %2729 = arith.maximumf %2718, %2728 : vector<1x8xf32>
    %cst_1039 = arith.constant 1.000000e+00 : f32
    %2730 = vector.broadcast %cst_1039 : f32 to vector<1x8xf32>
    %2731 = arith.addf %2718, %2730 : vector<1x8xf32>
    %cst_1040 = arith.constant 1.000000e+00 : f32
    %2732 = vector.broadcast %cst_1040 : f32 to vector<1x8xf32>
    %2733 = arith.select %2722, %2731, %2732 : vector<1x8xi1>, vector<1x8xf32>
    %2734 = arith.select %2720, %2729, %2733 : vector<1x8xi1>, vector<1x8xf32>
    %2735 = arith.divf %2727, %2734 : vector<1x8xf32>
    %cst_1041 = arith.constant 0.785398185 : f32
    %cst_1042 = arith.constant 0.000000e+00 : f32
    %2736 = vector.broadcast %cst_1041 : f32 to vector<1x8xf32>
    %2737 = vector.broadcast %cst_1042 : f32 to vector<1x8xf32>
    %2738 = arith.select %2722, %2736, %2737 : vector<1x8xi1>, vector<1x8xf32>
    %cst_1043 = arith.constant 1.57079637 : f32
    %2739 = vector.broadcast %cst_1043 : f32 to vector<1x8xf32>
    %2740 = arith.select %2720, %2739, %2738 : vector<1x8xi1>, vector<1x8xf32>
    %2741 = arith.mulf %2735, %2735 : vector<1x8xf32>
    %cst_1044 = arith.constant 0.0805374458 : f32
    %2742 = vector.broadcast %cst_1044 : f32 to vector<1x8xf32>
    %2743 = arith.mulf %2742, %2741 : vector<1x8xf32>
    %cst_1045 = arith.constant 0.138776854 : f32
    %2744 = vector.broadcast %cst_1045 : f32 to vector<1x8xf32>
    %2745 = arith.subf %2743, %2744 : vector<1x8xf32>
    %2746 = arith.mulf %2745, %2741 : vector<1x8xf32>
    %cst_1046 = arith.constant 0.199777111 : f32
    %2747 = vector.broadcast %cst_1046 : f32 to vector<1x8xf32>
    %2748 = arith.addf %2746, %2747 : vector<1x8xf32>
    %2749 = arith.mulf %2748, %2741 : vector<1x8xf32>
    %cst_1047 = arith.constant 0.333329499 : f32
    %2750 = vector.broadcast %cst_1047 : f32 to vector<1x8xf32>
    %2751 = arith.subf %2749, %2750 : vector<1x8xf32>
    %2752 = arith.addf %2740, %2735 : vector<1x8xf32>
    %2753 = arith.mulf %2735, %2741 : vector<1x8xf32>
    %2754 = arith.mulf %2753, %2751 : vector<1x8xf32>
    %2755 = arith.addf %2752, %2754 : vector<1x8xf32>
    %2756 = arith.mulf %2717, %2755 : vector<1x8xf32>
    %cst_1048 = arith.constant dense<0.000000e+00> : vector<1x9xf32>
    %2757 = tpu.matmul %2756, %11, %cst_1048 {dimension_numbers = #tpu.dot_dimension_numbers<[1], [0], [0], [1], [0, 0, 1, 1], [], []>} : vector<1x8xf32>, vector<8x9xf32>, vector<1x9xf32> -> vector<1x9xf32>
    %2758 = arith.mulf %2712, %2712 : vector<1x8xf32>
    %cst_1049 = arith.constant 0.000000e+00 : f32
    %2759 = vector.broadcast %cst_1049 : f32 to vector<1x8xf32>
    %2760 = arith.cmpf olt, %2758, %2759 : vector<1x8xf32>
    %cst_1050 = arith.constant -1.000000e+00 : f32
    %cst_1051 = arith.constant 1.000000e+00 : f32
    %2761 = vector.broadcast %cst_1050 : f32 to vector<1x8xf32>
    %2762 = vector.broadcast %cst_1051 : f32 to vector<1x8xf32>
    %2763 = arith.select %2760, %2761, %2762 : vector<1x8xi1>, vector<1x8xf32>
    %2764 = math.absf %2758 : vector<1x8xf32>
    %cst_1052 = arith.constant 2.41421366 : f32
    %2765 = vector.broadcast %cst_1052 : f32 to vector<1x8xf32>
    %2766 = arith.cmpf ogt, %2764, %2765 : vector<1x8xf32>
    %cst_1053 = arith.constant 0.414213568 : f32
    %2767 = vector.broadcast %cst_1053 : f32 to vector<1x8xf32>
    %2768 = arith.cmpf ogt, %2764, %2767 : vector<1x8xf32>
    %cst_1054 = arith.constant 1.000000e+00 : f32
    %2769 = vector.broadcast %cst_1054 : f32 to vector<1x8xf32>
    %2770 = arith.subf %2764, %2769 : vector<1x8xf32>
    %2771 = arith.select %2768, %2770, %2764 : vector<1x8xi1>, vector<1x8xf32>
    %cst_1055 = arith.constant -1.000000e+00 : f32
    %2772 = vector.broadcast %cst_1055 : f32 to vector<1x8xf32>
    %2773 = arith.select %2766, %2772, %2771 : vector<1x8xi1>, vector<1x8xf32>
    %cst_1056 = arith.constant 1.000000e-30 : f32
    %2774 = vector.broadcast %cst_1056 : f32 to vector<1x8xf32>
    %2775 = arith.maximumf %2764, %2774 : vector<1x8xf32>
    %cst_1057 = arith.constant 1.000000e+00 : f32
    %2776 = vector.broadcast %cst_1057 : f32 to vector<1x8xf32>
    %2777 = arith.addf %2764, %2776 : vector<1x8xf32>
    %cst_1058 = arith.constant 1.000000e+00 : f32
    %2778 = vector.broadcast %cst_1058 : f32 to vector<1x8xf32>
    %2779 = arith.select %2768, %2777, %2778 : vector<1x8xi1>, vector<1x8xf32>
    %2780 = arith.select %2766, %2775, %2779 : vector<1x8xi1>, vector<1x8xf32>
    %2781 = arith.divf %2773, %2780 : vector<1x8xf32>
    %cst_1059 = arith.constant 0.785398185 : f32
    %cst_1060 = arith.constant 0.000000e+00 : f32
    %2782 = vector.broadcast %cst_1059 : f32 to vector<1x8xf32>
    %2783 = vector.broadcast %cst_1060 : f32 to vector<1x8xf32>
    %2784 = arith.select %2768, %2782, %2783 : vector<1x8xi1>, vector<1x8xf32>
    %cst_1061 = arith.constant 1.57079637 : f32
    %2785 = vector.broadcast %cst_1061 : f32 to vector<1x8xf32>
    %2786 = arith.select %2766, %2785, %2784 : vector<1x8xi1>, vector<1x8xf32>
    %2787 = arith.mulf %2781, %2781 : vector<1x8xf32>
    %cst_1062 = arith.constant 0.0805374458 : f32
    %2788 = vector.broadcast %cst_1062 : f32 to vector<1x8xf32>
    %2789 = arith.mulf %2788, %2787 : vector<1x8xf32>
    %cst_1063 = arith.constant 0.138776854 : f32
    %2790 = vector.broadcast %cst_1063 : f32 to vector<1x8xf32>
    %2791 = arith.subf %2789, %2790 : vector<1x8xf32>
    %2792 = arith.mulf %2791, %2787 : vector<1x8xf32>
    %cst_1064 = arith.constant 0.199777111 : f32
    %2793 = vector.broadcast %cst_1064 : f32 to vector<1x8xf32>
    %2794 = arith.addf %2792, %2793 : vector<1x8xf32>
    %2795 = arith.mulf %2794, %2787 : vector<1x8xf32>
    %cst_1065 = arith.constant 0.333329499 : f32
    %2796 = vector.broadcast %cst_1065 : f32 to vector<1x8xf32>
    %2797 = arith.subf %2795, %2796 : vector<1x8xf32>
    %2798 = arith.addf %2786, %2781 : vector<1x8xf32>
    %2799 = arith.mulf %2781, %2787 : vector<1x8xf32>
    %2800 = arith.mulf %2799, %2797 : vector<1x8xf32>
    %2801 = arith.addf %2798, %2800 : vector<1x8xf32>
    %2802 = arith.mulf %2763, %2801 : vector<1x8xf32>
    %cst_1066 = arith.constant dense<0.000000e+00> : vector<1x9xf32>
    %2803 = tpu.matmul %2802, %12, %cst_1066 {dimension_numbers = #tpu.dot_dimension_numbers<[1], [0], [0], [1], [0, 0, 1, 1], [], []>} : vector<1x8xf32>, vector<8x9xf32>, vector<1x9xf32> -> vector<1x9xf32>
    %2804 = arith.addf %2757, %2803 : vector<1x9xf32>
    %2805 = arith.addf %2804, %13 : vector<1x9xf32>
    %2806 = vector.extract_strided_slice %2805 {offsets = [0, 0], sizes = [1, 8], strides = [1, 1]} : vector<1x9xf32> to vector<1x8xf32>
    %2807 = vector.extract_strided_slice %2805 {offsets = [0, 8], sizes = [1, 1], strides = [1, 1]} : vector<1x9xf32> to vector<1x1xf32>
    %cst_1067 = arith.constant 0.000000e+00 : f32
    %2808 = vector.broadcast %cst_1067 : f32 to vector<1x8xf32>
    %2809 = arith.cmpf olt, %2806, %2808 : vector<1x8xf32>
    %cst_1068 = arith.constant -1.000000e+00 : f32
    %cst_1069 = arith.constant 1.000000e+00 : f32
    %2810 = vector.broadcast %cst_1068 : f32 to vector<1x8xf32>
    %2811 = vector.broadcast %cst_1069 : f32 to vector<1x8xf32>
    %2812 = arith.select %2809, %2810, %2811 : vector<1x8xi1>, vector<1x8xf32>
    %2813 = math.absf %2806 : vector<1x8xf32>
    %cst_1070 = arith.constant 2.41421366 : f32
    %2814 = vector.broadcast %cst_1070 : f32 to vector<1x8xf32>
    %2815 = arith.cmpf ogt, %2813, %2814 : vector<1x8xf32>
    %cst_1071 = arith.constant 0.414213568 : f32
    %2816 = vector.broadcast %cst_1071 : f32 to vector<1x8xf32>
    %2817 = arith.cmpf ogt, %2813, %2816 : vector<1x8xf32>
    %cst_1072 = arith.constant 1.000000e+00 : f32
    %2818 = vector.broadcast %cst_1072 : f32 to vector<1x8xf32>
    %2819 = arith.subf %2813, %2818 : vector<1x8xf32>
    %2820 = arith.select %2817, %2819, %2813 : vector<1x8xi1>, vector<1x8xf32>
    %cst_1073 = arith.constant -1.000000e+00 : f32
    %2821 = vector.broadcast %cst_1073 : f32 to vector<1x8xf32>
    %2822 = arith.select %2815, %2821, %2820 : vector<1x8xi1>, vector<1x8xf32>
    %cst_1074 = arith.constant 1.000000e-30 : f32
    %2823 = vector.broadcast %cst_1074 : f32 to vector<1x8xf32>
    %2824 = arith.maximumf %2813, %2823 : vector<1x8xf32>
    %cst_1075 = arith.constant 1.000000e+00 : f32
    %2825 = vector.broadcast %cst_1075 : f32 to vector<1x8xf32>
    %2826 = arith.addf %2813, %2825 : vector<1x8xf32>
    %cst_1076 = arith.constant 1.000000e+00 : f32
    %2827 = vector.broadcast %cst_1076 : f32 to vector<1x8xf32>
    %2828 = arith.select %2817, %2826, %2827 : vector<1x8xi1>, vector<1x8xf32>
    %2829 = arith.select %2815, %2824, %2828 : vector<1x8xi1>, vector<1x8xf32>
    %2830 = arith.divf %2822, %2829 : vector<1x8xf32>
    %cst_1077 = arith.constant 0.785398185 : f32
    %cst_1078 = arith.constant 0.000000e+00 : f32
    %2831 = vector.broadcast %cst_1077 : f32 to vector<1x8xf32>
    %2832 = vector.broadcast %cst_1078 : f32 to vector<1x8xf32>
    %2833 = arith.select %2817, %2831, %2832 : vector<1x8xi1>, vector<1x8xf32>
    %cst_1079 = arith.constant 1.57079637 : f32
    %2834 = vector.broadcast %cst_1079 : f32 to vector<1x8xf32>
    %2835 = arith.select %2815, %2834, %2833 : vector<1x8xi1>, vector<1x8xf32>
    %2836 = arith.mulf %2830, %2830 : vector<1x8xf32>
    %cst_1080 = arith.constant 0.0805374458 : f32
    %2837 = vector.broadcast %cst_1080 : f32 to vector<1x8xf32>
    %2838 = arith.mulf %2837, %2836 : vector<1x8xf32>
    %cst_1081 = arith.constant 0.138776854 : f32
    %2839 = vector.broadcast %cst_1081 : f32 to vector<1x8xf32>
    %2840 = arith.subf %2838, %2839 : vector<1x8xf32>
    %2841 = arith.mulf %2840, %2836 : vector<1x8xf32>
    %cst_1082 = arith.constant 0.199777111 : f32
    %2842 = vector.broadcast %cst_1082 : f32 to vector<1x8xf32>
    %2843 = arith.addf %2841, %2842 : vector<1x8xf32>
    %2844 = arith.mulf %2843, %2836 : vector<1x8xf32>
    %cst_1083 = arith.constant 0.333329499 : f32
    %2845 = vector.broadcast %cst_1083 : f32 to vector<1x8xf32>
    %2846 = arith.subf %2844, %2845 : vector<1x8xf32>
    %2847 = arith.addf %2835, %2830 : vector<1x8xf32>
    %2848 = arith.mulf %2830, %2836 : vector<1x8xf32>
    %2849 = arith.mulf %2848, %2846 : vector<1x8xf32>
    %2850 = arith.addf %2847, %2849 : vector<1x8xf32>
    %2851 = arith.mulf %2812, %2850 : vector<1x8xf32>
    %2852 = arith.mulf %2806, %2806 : vector<1x8xf32>
    %cst_1084 = arith.constant 0.000000e+00 : f32
    %2853 = vector.broadcast %cst_1084 : f32 to vector<1x8xf32>
    %2854 = arith.cmpf olt, %2852, %2853 : vector<1x8xf32>
    %cst_1085 = arith.constant -1.000000e+00 : f32
    %cst_1086 = arith.constant 1.000000e+00 : f32
    %2855 = vector.broadcast %cst_1085 : f32 to vector<1x8xf32>
    %2856 = vector.broadcast %cst_1086 : f32 to vector<1x8xf32>
    %2857 = arith.select %2854, %2855, %2856 : vector<1x8xi1>, vector<1x8xf32>
    %2858 = math.absf %2852 : vector<1x8xf32>
    %cst_1087 = arith.constant 2.41421366 : f32
    %2859 = vector.broadcast %cst_1087 : f32 to vector<1x8xf32>
    %2860 = arith.cmpf ogt, %2858, %2859 : vector<1x8xf32>
    %cst_1088 = arith.constant 0.414213568 : f32
    %2861 = vector.broadcast %cst_1088 : f32 to vector<1x8xf32>
    %2862 = arith.cmpf ogt, %2858, %2861 : vector<1x8xf32>
    %cst_1089 = arith.constant 1.000000e+00 : f32
    %2863 = vector.broadcast %cst_1089 : f32 to vector<1x8xf32>
    %2864 = arith.subf %2858, %2863 : vector<1x8xf32>
    %2865 = arith.select %2862, %2864, %2858 : vector<1x8xi1>, vector<1x8xf32>
    %cst_1090 = arith.constant -1.000000e+00 : f32
    %2866 = vector.broadcast %cst_1090 : f32 to vector<1x8xf32>
    %2867 = arith.select %2860, %2866, %2865 : vector<1x8xi1>, vector<1x8xf32>
    %cst_1091 = arith.constant 1.000000e-30 : f32
    %2868 = vector.broadcast %cst_1091 : f32 to vector<1x8xf32>
    %2869 = arith.maximumf %2858, %2868 : vector<1x8xf32>
    %cst_1092 = arith.constant 1.000000e+00 : f32
    %2870 = vector.broadcast %cst_1092 : f32 to vector<1x8xf32>
    %2871 = arith.addf %2858, %2870 : vector<1x8xf32>
    %cst_1093 = arith.constant 1.000000e+00 : f32
    %2872 = vector.broadcast %cst_1093 : f32 to vector<1x8xf32>
    %2873 = arith.select %2862, %2871, %2872 : vector<1x8xi1>, vector<1x8xf32>
    %2874 = arith.select %2860, %2869, %2873 : vector<1x8xi1>, vector<1x8xf32>
    %2875 = arith.divf %2867, %2874 : vector<1x8xf32>
    %cst_1094 = arith.constant 0.785398185 : f32
    %cst_1095 = arith.constant 0.000000e+00 : f32
    %2876 = vector.broadcast %cst_1094 : f32 to vector<1x8xf32>
    %2877 = vector.broadcast %cst_1095 : f32 to vector<1x8xf32>
    %2878 = arith.select %2862, %2876, %2877 : vector<1x8xi1>, vector<1x8xf32>
    %cst_1096 = arith.constant 1.57079637 : f32
    %2879 = vector.broadcast %cst_1096 : f32 to vector<1x8xf32>
    %2880 = arith.select %2860, %2879, %2878 : vector<1x8xi1>, vector<1x8xf32>
    %2881 = arith.mulf %2875, %2875 : vector<1x8xf32>
    %cst_1097 = arith.constant 0.0805374458 : f32
    %2882 = vector.broadcast %cst_1097 : f32 to vector<1x8xf32>
    %2883 = arith.mulf %2882, %2881 : vector<1x8xf32>
    %cst_1098 = arith.constant 0.138776854 : f32
    %2884 = vector.broadcast %cst_1098 : f32 to vector<1x8xf32>
    %2885 = arith.subf %2883, %2884 : vector<1x8xf32>
    %2886 = arith.mulf %2885, %2881 : vector<1x8xf32>
    %cst_1099 = arith.constant 0.199777111 : f32
    %2887 = vector.broadcast %cst_1099 : f32 to vector<1x8xf32>
    %2888 = arith.addf %2886, %2887 : vector<1x8xf32>
    %2889 = arith.mulf %2888, %2881 : vector<1x8xf32>
    %cst_1100 = arith.constant 0.333329499 : f32
    %2890 = vector.broadcast %cst_1100 : f32 to vector<1x8xf32>
    %2891 = arith.subf %2889, %2890 : vector<1x8xf32>
    %2892 = arith.addf %2880, %2875 : vector<1x8xf32>
    %2893 = arith.mulf %2875, %2881 : vector<1x8xf32>
    %2894 = arith.mulf %2893, %2891 : vector<1x8xf32>
    %2895 = arith.addf %2892, %2894 : vector<1x8xf32>
    %2896 = arith.mulf %2857, %2895 : vector<1x8xf32>
    %cst_1101 = arith.constant dense<0.000000e+00> : vector<1x32xf32>
    %2897 = tpu.matmul %2851, %8, %cst_1101 {dimension_numbers = #tpu.dot_dimension_numbers<[1], [0], [0], [1], [0, 0, 1, 1], [], []>} : vector<1x8xf32>, vector<8x32xf32>, vector<1x32xf32> -> vector<1x32xf32>
    %cst_1102 = arith.constant dense<0.000000e+00> : vector<1x32xf32>
    %2898 = tpu.matmul %2896, %9, %cst_1102 {dimension_numbers = #tpu.dot_dimension_numbers<[1], [0], [0], [1], [0, 0, 1, 1], [], []>} : vector<1x8xf32>, vector<8x32xf32>, vector<1x32xf32> -> vector<1x32xf32>
    %2899 = arith.addf %2897, %2898 : vector<1x32xf32>
    %2900 = arith.addf %2899, %10 : vector<1x32xf32>
    %cst_1103 = arith.constant 0.000000e+00 : f32
    %2901 = vector.broadcast %cst_1103 : f32 to vector<1x32xf32>
    %2902 = arith.subf %2901, %2900 : vector<1x32xf32>
    %2903 = math.exp %2902 : vector<1x32xf32>
    %cst_1104 = arith.constant 1.000000e+00 : f32
    %2904 = vector.broadcast %cst_1104 : f32 to vector<1x32xf32>
    %2905 = arith.addf %2904, %2903 : vector<1x32xf32>
    %cst_1105 = arith.constant 1.000000e+00 : f32
    %2906 = vector.broadcast %cst_1105 : f32 to vector<1x32xf32>
    %2907 = arith.divf %2906, %2905 : vector<1x32xf32>
    %2908 = vector.extract_strided_slice %2907 {offsets = [0, 0], sizes = [1, 8], strides = [1, 1]} : vector<1x32xf32> to vector<1x8xf32>
    %2909 = vector.extract_strided_slice %2907 {offsets = [0, 8], sizes = [1, 8], strides = [1, 1]} : vector<1x32xf32> to vector<1x8xf32>
    %2910 = vector.extract_strided_slice %2907 {offsets = [0, 16], sizes = [1, 8], strides = [1, 1]} : vector<1x32xf32> to vector<1x8xf32>
    %2911 = vector.extract_strided_slice %2907 {offsets = [0, 24], sizes = [1, 8], strides = [1, 1]} : vector<1x32xf32> to vector<1x8xf32>
    %cst_1106 = arith.constant 2.000000e+00 : f32
    %2912 = vector.broadcast %cst_1106 : f32 to vector<1x8xf32>
    %2913 = arith.mulf %2912, %2911 : vector<1x8xf32>
    %cst_1107 = arith.constant 1.000000e+00 : f32
    %2914 = vector.broadcast %cst_1107 : f32 to vector<1x8xf32>
    %2915 = arith.subf %2913, %2914 : vector<1x8xf32>
    %2916 = arith.mulf %2710, %2908 : vector<1x8xf32>
    %2917 = arith.mulf %2909, %2915 : vector<1x8xf32>
    %2918 = arith.addf %2916, %2917 : vector<1x8xf32>
    %2919 = math.tanh %2918 : vector<1x8xf32>
    %2920 = arith.mulf %2910, %2919 : vector<1x8xf32>
    %cst_1108 = arith.constant 0.000000e+00 : f32
    %2921 = vector.broadcast %cst_1108 : f32 to vector<1x8xf32>
    %2922 = arith.cmpf olt, %2920, %2921 : vector<1x8xf32>
    %cst_1109 = arith.constant -1.000000e+00 : f32
    %cst_1110 = arith.constant 1.000000e+00 : f32
    %2923 = vector.broadcast %cst_1109 : f32 to vector<1x8xf32>
    %2924 = vector.broadcast %cst_1110 : f32 to vector<1x8xf32>
    %2925 = arith.select %2922, %2923, %2924 : vector<1x8xi1>, vector<1x8xf32>
    %2926 = math.absf %2920 : vector<1x8xf32>
    %cst_1111 = arith.constant 2.41421366 : f32
    %2927 = vector.broadcast %cst_1111 : f32 to vector<1x8xf32>
    %2928 = arith.cmpf ogt, %2926, %2927 : vector<1x8xf32>
    %cst_1112 = arith.constant 0.414213568 : f32
    %2929 = vector.broadcast %cst_1112 : f32 to vector<1x8xf32>
    %2930 = arith.cmpf ogt, %2926, %2929 : vector<1x8xf32>
    %cst_1113 = arith.constant 1.000000e+00 : f32
    %2931 = vector.broadcast %cst_1113 : f32 to vector<1x8xf32>
    %2932 = arith.subf %2926, %2931 : vector<1x8xf32>
    %2933 = arith.select %2930, %2932, %2926 : vector<1x8xi1>, vector<1x8xf32>
    %cst_1114 = arith.constant -1.000000e+00 : f32
    %2934 = vector.broadcast %cst_1114 : f32 to vector<1x8xf32>
    %2935 = arith.select %2928, %2934, %2933 : vector<1x8xi1>, vector<1x8xf32>
    %cst_1115 = arith.constant 1.000000e-30 : f32
    %2936 = vector.broadcast %cst_1115 : f32 to vector<1x8xf32>
    %2937 = arith.maximumf %2926, %2936 : vector<1x8xf32>
    %cst_1116 = arith.constant 1.000000e+00 : f32
    %2938 = vector.broadcast %cst_1116 : f32 to vector<1x8xf32>
    %2939 = arith.addf %2926, %2938 : vector<1x8xf32>
    %cst_1117 = arith.constant 1.000000e+00 : f32
    %2940 = vector.broadcast %cst_1117 : f32 to vector<1x8xf32>
    %2941 = arith.select %2930, %2939, %2940 : vector<1x8xi1>, vector<1x8xf32>
    %2942 = arith.select %2928, %2937, %2941 : vector<1x8xi1>, vector<1x8xf32>
    %2943 = arith.divf %2935, %2942 : vector<1x8xf32>
    %cst_1118 = arith.constant 0.785398185 : f32
    %cst_1119 = arith.constant 0.000000e+00 : f32
    %2944 = vector.broadcast %cst_1118 : f32 to vector<1x8xf32>
    %2945 = vector.broadcast %cst_1119 : f32 to vector<1x8xf32>
    %2946 = arith.select %2930, %2944, %2945 : vector<1x8xi1>, vector<1x8xf32>
    %cst_1120 = arith.constant 1.57079637 : f32
    %2947 = vector.broadcast %cst_1120 : f32 to vector<1x8xf32>
    %2948 = arith.select %2928, %2947, %2946 : vector<1x8xi1>, vector<1x8xf32>
    %2949 = arith.mulf %2943, %2943 : vector<1x8xf32>
    %cst_1121 = arith.constant 0.0805374458 : f32
    %2950 = vector.broadcast %cst_1121 : f32 to vector<1x8xf32>
    %2951 = arith.mulf %2950, %2949 : vector<1x8xf32>
    %cst_1122 = arith.constant 0.138776854 : f32
    %2952 = vector.broadcast %cst_1122 : f32 to vector<1x8xf32>
    %2953 = arith.subf %2951, %2952 : vector<1x8xf32>
    %2954 = arith.mulf %2953, %2949 : vector<1x8xf32>
    %cst_1123 = arith.constant 0.199777111 : f32
    %2955 = vector.broadcast %cst_1123 : f32 to vector<1x8xf32>
    %2956 = arith.addf %2954, %2955 : vector<1x8xf32>
    %2957 = arith.mulf %2956, %2949 : vector<1x8xf32>
    %cst_1124 = arith.constant 0.333329499 : f32
    %2958 = vector.broadcast %cst_1124 : f32 to vector<1x8xf32>
    %2959 = arith.subf %2957, %2958 : vector<1x8xf32>
    %2960 = arith.addf %2948, %2943 : vector<1x8xf32>
    %2961 = arith.mulf %2943, %2949 : vector<1x8xf32>
    %2962 = arith.mulf %2961, %2959 : vector<1x8xf32>
    %2963 = arith.addf %2960, %2962 : vector<1x8xf32>
    %2964 = arith.mulf %2925, %2963 : vector<1x8xf32>
    %cst_1125 = arith.constant dense<0.000000e+00> : vector<1x9xf32>
    %2965 = tpu.matmul %2964, %11, %cst_1125 {dimension_numbers = #tpu.dot_dimension_numbers<[1], [0], [0], [1], [0, 0, 1, 1], [], []>} : vector<1x8xf32>, vector<8x9xf32>, vector<1x9xf32> -> vector<1x9xf32>
    %2966 = arith.mulf %2920, %2920 : vector<1x8xf32>
    %cst_1126 = arith.constant 0.000000e+00 : f32
    %2967 = vector.broadcast %cst_1126 : f32 to vector<1x8xf32>
    %2968 = arith.cmpf olt, %2966, %2967 : vector<1x8xf32>
    %cst_1127 = arith.constant -1.000000e+00 : f32
    %cst_1128 = arith.constant 1.000000e+00 : f32
    %2969 = vector.broadcast %cst_1127 : f32 to vector<1x8xf32>
    %2970 = vector.broadcast %cst_1128 : f32 to vector<1x8xf32>
    %2971 = arith.select %2968, %2969, %2970 : vector<1x8xi1>, vector<1x8xf32>
    %2972 = math.absf %2966 : vector<1x8xf32>
    %cst_1129 = arith.constant 2.41421366 : f32
    %2973 = vector.broadcast %cst_1129 : f32 to vector<1x8xf32>
    %2974 = arith.cmpf ogt, %2972, %2973 : vector<1x8xf32>
    %cst_1130 = arith.constant 0.414213568 : f32
    %2975 = vector.broadcast %cst_1130 : f32 to vector<1x8xf32>
    %2976 = arith.cmpf ogt, %2972, %2975 : vector<1x8xf32>
    %cst_1131 = arith.constant 1.000000e+00 : f32
    %2977 = vector.broadcast %cst_1131 : f32 to vector<1x8xf32>
    %2978 = arith.subf %2972, %2977 : vector<1x8xf32>
    %2979 = arith.select %2976, %2978, %2972 : vector<1x8xi1>, vector<1x8xf32>
    %cst_1132 = arith.constant -1.000000e+00 : f32
    %2980 = vector.broadcast %cst_1132 : f32 to vector<1x8xf32>
    %2981 = arith.select %2974, %2980, %2979 : vector<1x8xi1>, vector<1x8xf32>
    %cst_1133 = arith.constant 1.000000e-30 : f32
    %2982 = vector.broadcast %cst_1133 : f32 to vector<1x8xf32>
    %2983 = arith.maximumf %2972, %2982 : vector<1x8xf32>
    %cst_1134 = arith.constant 1.000000e+00 : f32
    %2984 = vector.broadcast %cst_1134 : f32 to vector<1x8xf32>
    %2985 = arith.addf %2972, %2984 : vector<1x8xf32>
    %cst_1135 = arith.constant 1.000000e+00 : f32
    %2986 = vector.broadcast %cst_1135 : f32 to vector<1x8xf32>
    %2987 = arith.select %2976, %2985, %2986 : vector<1x8xi1>, vector<1x8xf32>
    %2988 = arith.select %2974, %2983, %2987 : vector<1x8xi1>, vector<1x8xf32>
    %2989 = arith.divf %2981, %2988 : vector<1x8xf32>
    %cst_1136 = arith.constant 0.785398185 : f32
    %cst_1137 = arith.constant 0.000000e+00 : f32
    %2990 = vector.broadcast %cst_1136 : f32 to vector<1x8xf32>
    %2991 = vector.broadcast %cst_1137 : f32 to vector<1x8xf32>
    %2992 = arith.select %2976, %2990, %2991 : vector<1x8xi1>, vector<1x8xf32>
    %cst_1138 = arith.constant 1.57079637 : f32
    %2993 = vector.broadcast %cst_1138 : f32 to vector<1x8xf32>
    %2994 = arith.select %2974, %2993, %2992 : vector<1x8xi1>, vector<1x8xf32>
    %2995 = arith.mulf %2989, %2989 : vector<1x8xf32>
    %cst_1139 = arith.constant 0.0805374458 : f32
    %2996 = vector.broadcast %cst_1139 : f32 to vector<1x8xf32>
    %2997 = arith.mulf %2996, %2995 : vector<1x8xf32>
    %cst_1140 = arith.constant 0.138776854 : f32
    %2998 = vector.broadcast %cst_1140 : f32 to vector<1x8xf32>
    %2999 = arith.subf %2997, %2998 : vector<1x8xf32>
    %3000 = arith.mulf %2999, %2995 : vector<1x8xf32>
    %cst_1141 = arith.constant 0.199777111 : f32
    %3001 = vector.broadcast %cst_1141 : f32 to vector<1x8xf32>
    %3002 = arith.addf %3000, %3001 : vector<1x8xf32>
    %3003 = arith.mulf %3002, %2995 : vector<1x8xf32>
    %cst_1142 = arith.constant 0.333329499 : f32
    %3004 = vector.broadcast %cst_1142 : f32 to vector<1x8xf32>
    %3005 = arith.subf %3003, %3004 : vector<1x8xf32>
    %3006 = arith.addf %2994, %2989 : vector<1x8xf32>
    %3007 = arith.mulf %2989, %2995 : vector<1x8xf32>
    %3008 = arith.mulf %3007, %3005 : vector<1x8xf32>
    %3009 = arith.addf %3006, %3008 : vector<1x8xf32>
    %3010 = arith.mulf %2971, %3009 : vector<1x8xf32>
    %cst_1143 = arith.constant dense<0.000000e+00> : vector<1x9xf32>
    %3011 = tpu.matmul %3010, %12, %cst_1143 {dimension_numbers = #tpu.dot_dimension_numbers<[1], [0], [0], [1], [0, 0, 1, 1], [], []>} : vector<1x8xf32>, vector<8x9xf32>, vector<1x9xf32> -> vector<1x9xf32>
    %3012 = arith.addf %2965, %3011 : vector<1x9xf32>
    %3013 = arith.addf %3012, %13 : vector<1x9xf32>
    %3014 = vector.extract_strided_slice %3013 {offsets = [0, 0], sizes = [1, 8], strides = [1, 1]} : vector<1x9xf32> to vector<1x8xf32>
    %3015 = vector.extract_strided_slice %3013 {offsets = [0, 8], sizes = [1, 1], strides = [1, 1]} : vector<1x9xf32> to vector<1x1xf32>
    %cst_1144 = arith.constant 0.000000e+00 : f32
    %3016 = vector.broadcast %cst_1144 : f32 to vector<1x8xf32>
    %3017 = arith.cmpf olt, %3014, %3016 : vector<1x8xf32>
    %cst_1145 = arith.constant -1.000000e+00 : f32
    %cst_1146 = arith.constant 1.000000e+00 : f32
    %3018 = vector.broadcast %cst_1145 : f32 to vector<1x8xf32>
    %3019 = vector.broadcast %cst_1146 : f32 to vector<1x8xf32>
    %3020 = arith.select %3017, %3018, %3019 : vector<1x8xi1>, vector<1x8xf32>
    %3021 = math.absf %3014 : vector<1x8xf32>
    %cst_1147 = arith.constant 2.41421366 : f32
    %3022 = vector.broadcast %cst_1147 : f32 to vector<1x8xf32>
    %3023 = arith.cmpf ogt, %3021, %3022 : vector<1x8xf32>
    %cst_1148 = arith.constant 0.414213568 : f32
    %3024 = vector.broadcast %cst_1148 : f32 to vector<1x8xf32>
    %3025 = arith.cmpf ogt, %3021, %3024 : vector<1x8xf32>
    %cst_1149 = arith.constant 1.000000e+00 : f32
    %3026 = vector.broadcast %cst_1149 : f32 to vector<1x8xf32>
    %3027 = arith.subf %3021, %3026 : vector<1x8xf32>
    %3028 = arith.select %3025, %3027, %3021 : vector<1x8xi1>, vector<1x8xf32>
    %cst_1150 = arith.constant -1.000000e+00 : f32
    %3029 = vector.broadcast %cst_1150 : f32 to vector<1x8xf32>
    %3030 = arith.select %3023, %3029, %3028 : vector<1x8xi1>, vector<1x8xf32>
    %cst_1151 = arith.constant 1.000000e-30 : f32
    %3031 = vector.broadcast %cst_1151 : f32 to vector<1x8xf32>
    %3032 = arith.maximumf %3021, %3031 : vector<1x8xf32>
    %cst_1152 = arith.constant 1.000000e+00 : f32
    %3033 = vector.broadcast %cst_1152 : f32 to vector<1x8xf32>
    %3034 = arith.addf %3021, %3033 : vector<1x8xf32>
    %cst_1153 = arith.constant 1.000000e+00 : f32
    %3035 = vector.broadcast %cst_1153 : f32 to vector<1x8xf32>
    %3036 = arith.select %3025, %3034, %3035 : vector<1x8xi1>, vector<1x8xf32>
    %3037 = arith.select %3023, %3032, %3036 : vector<1x8xi1>, vector<1x8xf32>
    %3038 = arith.divf %3030, %3037 : vector<1x8xf32>
    %cst_1154 = arith.constant 0.785398185 : f32
    %cst_1155 = arith.constant 0.000000e+00 : f32
    %3039 = vector.broadcast %cst_1154 : f32 to vector<1x8xf32>
    %3040 = vector.broadcast %cst_1155 : f32 to vector<1x8xf32>
    %3041 = arith.select %3025, %3039, %3040 : vector<1x8xi1>, vector<1x8xf32>
    %cst_1156 = arith.constant 1.57079637 : f32
    %3042 = vector.broadcast %cst_1156 : f32 to vector<1x8xf32>
    %3043 = arith.select %3023, %3042, %3041 : vector<1x8xi1>, vector<1x8xf32>
    %3044 = arith.mulf %3038, %3038 : vector<1x8xf32>
    %cst_1157 = arith.constant 0.0805374458 : f32
    %3045 = vector.broadcast %cst_1157 : f32 to vector<1x8xf32>
    %3046 = arith.mulf %3045, %3044 : vector<1x8xf32>
    %cst_1158 = arith.constant 0.138776854 : f32
    %3047 = vector.broadcast %cst_1158 : f32 to vector<1x8xf32>
    %3048 = arith.subf %3046, %3047 : vector<1x8xf32>
    %3049 = arith.mulf %3048, %3044 : vector<1x8xf32>
    %cst_1159 = arith.constant 0.199777111 : f32
    %3050 = vector.broadcast %cst_1159 : f32 to vector<1x8xf32>
    %3051 = arith.addf %3049, %3050 : vector<1x8xf32>
    %3052 = arith.mulf %3051, %3044 : vector<1x8xf32>
    %cst_1160 = arith.constant 0.333329499 : f32
    %3053 = vector.broadcast %cst_1160 : f32 to vector<1x8xf32>
    %3054 = arith.subf %3052, %3053 : vector<1x8xf32>
    %3055 = arith.addf %3043, %3038 : vector<1x8xf32>
    %3056 = arith.mulf %3038, %3044 : vector<1x8xf32>
    %3057 = arith.mulf %3056, %3054 : vector<1x8xf32>
    %3058 = arith.addf %3055, %3057 : vector<1x8xf32>
    %3059 = arith.mulf %3020, %3058 : vector<1x8xf32>
    %3060 = arith.mulf %3014, %3014 : vector<1x8xf32>
    %cst_1161 = arith.constant 0.000000e+00 : f32
    %3061 = vector.broadcast %cst_1161 : f32 to vector<1x8xf32>
    %3062 = arith.cmpf olt, %3060, %3061 : vector<1x8xf32>
    %cst_1162 = arith.constant -1.000000e+00 : f32
    %cst_1163 = arith.constant 1.000000e+00 : f32
    %3063 = vector.broadcast %cst_1162 : f32 to vector<1x8xf32>
    %3064 = vector.broadcast %cst_1163 : f32 to vector<1x8xf32>
    %3065 = arith.select %3062, %3063, %3064 : vector<1x8xi1>, vector<1x8xf32>
    %3066 = math.absf %3060 : vector<1x8xf32>
    %cst_1164 = arith.constant 2.41421366 : f32
    %3067 = vector.broadcast %cst_1164 : f32 to vector<1x8xf32>
    %3068 = arith.cmpf ogt, %3066, %3067 : vector<1x8xf32>
    %cst_1165 = arith.constant 0.414213568 : f32
    %3069 = vector.broadcast %cst_1165 : f32 to vector<1x8xf32>
    %3070 = arith.cmpf ogt, %3066, %3069 : vector<1x8xf32>
    %cst_1166 = arith.constant 1.000000e+00 : f32
    %3071 = vector.broadcast %cst_1166 : f32 to vector<1x8xf32>
    %3072 = arith.subf %3066, %3071 : vector<1x8xf32>
    %3073 = arith.select %3070, %3072, %3066 : vector<1x8xi1>, vector<1x8xf32>
    %cst_1167 = arith.constant -1.000000e+00 : f32
    %3074 = vector.broadcast %cst_1167 : f32 to vector<1x8xf32>
    %3075 = arith.select %3068, %3074, %3073 : vector<1x8xi1>, vector<1x8xf32>
    %cst_1168 = arith.constant 1.000000e-30 : f32
    %3076 = vector.broadcast %cst_1168 : f32 to vector<1x8xf32>
    %3077 = arith.maximumf %3066, %3076 : vector<1x8xf32>
    %cst_1169 = arith.constant 1.000000e+00 : f32
    %3078 = vector.broadcast %cst_1169 : f32 to vector<1x8xf32>
    %3079 = arith.addf %3066, %3078 : vector<1x8xf32>
    %cst_1170 = arith.constant 1.000000e+00 : f32
    %3080 = vector.broadcast %cst_1170 : f32 to vector<1x8xf32>
    %3081 = arith.select %3070, %3079, %3080 : vector<1x8xi1>, vector<1x8xf32>
    %3082 = arith.select %3068, %3077, %3081 : vector<1x8xi1>, vector<1x8xf32>
    %3083 = arith.divf %3075, %3082 : vector<1x8xf32>
    %cst_1171 = arith.constant 0.785398185 : f32
    %cst_1172 = arith.constant 0.000000e+00 : f32
    %3084 = vector.broadcast %cst_1171 : f32 to vector<1x8xf32>
    %3085 = vector.broadcast %cst_1172 : f32 to vector<1x8xf32>
    %3086 = arith.select %3070, %3084, %3085 : vector<1x8xi1>, vector<1x8xf32>
    %cst_1173 = arith.constant 1.57079637 : f32
    %3087 = vector.broadcast %cst_1173 : f32 to vector<1x8xf32>
    %3088 = arith.select %3068, %3087, %3086 : vector<1x8xi1>, vector<1x8xf32>
    %3089 = arith.mulf %3083, %3083 : vector<1x8xf32>
    %cst_1174 = arith.constant 0.0805374458 : f32
    %3090 = vector.broadcast %cst_1174 : f32 to vector<1x8xf32>
    %3091 = arith.mulf %3090, %3089 : vector<1x8xf32>
    %cst_1175 = arith.constant 0.138776854 : f32
    %3092 = vector.broadcast %cst_1175 : f32 to vector<1x8xf32>
    %3093 = arith.subf %3091, %3092 : vector<1x8xf32>
    %3094 = arith.mulf %3093, %3089 : vector<1x8xf32>
    %cst_1176 = arith.constant 0.199777111 : f32
    %3095 = vector.broadcast %cst_1176 : f32 to vector<1x8xf32>
    %3096 = arith.addf %3094, %3095 : vector<1x8xf32>
    %3097 = arith.mulf %3096, %3089 : vector<1x8xf32>
    %cst_1177 = arith.constant 0.333329499 : f32
    %3098 = vector.broadcast %cst_1177 : f32 to vector<1x8xf32>
    %3099 = arith.subf %3097, %3098 : vector<1x8xf32>
    %3100 = arith.addf %3088, %3083 : vector<1x8xf32>
    %3101 = arith.mulf %3083, %3089 : vector<1x8xf32>
    %3102 = arith.mulf %3101, %3099 : vector<1x8xf32>
    %3103 = arith.addf %3100, %3102 : vector<1x8xf32>
    %3104 = arith.mulf %3065, %3103 : vector<1x8xf32>
    %cst_1178 = arith.constant dense<0.000000e+00> : vector<1x32xf32>
    %3105 = tpu.matmul %3059, %8, %cst_1178 {dimension_numbers = #tpu.dot_dimension_numbers<[1], [0], [0], [1], [0, 0, 1, 1], [], []>} : vector<1x8xf32>, vector<8x32xf32>, vector<1x32xf32> -> vector<1x32xf32>
    %cst_1179 = arith.constant dense<0.000000e+00> : vector<1x32xf32>
    %3106 = tpu.matmul %3104, %9, %cst_1179 {dimension_numbers = #tpu.dot_dimension_numbers<[1], [0], [0], [1], [0, 0, 1, 1], [], []>} : vector<1x8xf32>, vector<8x32xf32>, vector<1x32xf32> -> vector<1x32xf32>
    %3107 = arith.addf %3105, %3106 : vector<1x32xf32>
    %3108 = arith.addf %3107, %10 : vector<1x32xf32>
    %cst_1180 = arith.constant 0.000000e+00 : f32
    %3109 = vector.broadcast %cst_1180 : f32 to vector<1x32xf32>
    %3110 = arith.subf %3109, %3108 : vector<1x32xf32>
    %3111 = math.exp %3110 : vector<1x32xf32>
    %cst_1181 = arith.constant 1.000000e+00 : f32
    %3112 = vector.broadcast %cst_1181 : f32 to vector<1x32xf32>
    %3113 = arith.addf %3112, %3111 : vector<1x32xf32>
    %cst_1182 = arith.constant 1.000000e+00 : f32
    %3114 = vector.broadcast %cst_1182 : f32 to vector<1x32xf32>
    %3115 = arith.divf %3114, %3113 : vector<1x32xf32>
    %3116 = vector.extract_strided_slice %3115 {offsets = [0, 0], sizes = [1, 8], strides = [1, 1]} : vector<1x32xf32> to vector<1x8xf32>
    %3117 = vector.extract_strided_slice %3115 {offsets = [0, 8], sizes = [1, 8], strides = [1, 1]} : vector<1x32xf32> to vector<1x8xf32>
    %3118 = vector.extract_strided_slice %3115 {offsets = [0, 16], sizes = [1, 8], strides = [1, 1]} : vector<1x32xf32> to vector<1x8xf32>
    %3119 = vector.extract_strided_slice %3115 {offsets = [0, 24], sizes = [1, 8], strides = [1, 1]} : vector<1x32xf32> to vector<1x8xf32>
    %cst_1183 = arith.constant 2.000000e+00 : f32
    %3120 = vector.broadcast %cst_1183 : f32 to vector<1x8xf32>
    %3121 = arith.mulf %3120, %3119 : vector<1x8xf32>
    %cst_1184 = arith.constant 1.000000e+00 : f32
    %3122 = vector.broadcast %cst_1184 : f32 to vector<1x8xf32>
    %3123 = arith.subf %3121, %3122 : vector<1x8xf32>
    %3124 = arith.mulf %2918, %3116 : vector<1x8xf32>
    %3125 = arith.mulf %3117, %3123 : vector<1x8xf32>
    %3126 = arith.addf %3124, %3125 : vector<1x8xf32>
    %3127 = math.tanh %3126 : vector<1x8xf32>
    %3128 = arith.mulf %3118, %3127 : vector<1x8xf32>
    %cst_1185 = arith.constant 0.000000e+00 : f32
    %3129 = vector.broadcast %cst_1185 : f32 to vector<1x8xf32>
    %3130 = arith.cmpf olt, %3128, %3129 : vector<1x8xf32>
    %cst_1186 = arith.constant -1.000000e+00 : f32
    %cst_1187 = arith.constant 1.000000e+00 : f32
    %3131 = vector.broadcast %cst_1186 : f32 to vector<1x8xf32>
    %3132 = vector.broadcast %cst_1187 : f32 to vector<1x8xf32>
    %3133 = arith.select %3130, %3131, %3132 : vector<1x8xi1>, vector<1x8xf32>
    %3134 = math.absf %3128 : vector<1x8xf32>
    %cst_1188 = arith.constant 2.41421366 : f32
    %3135 = vector.broadcast %cst_1188 : f32 to vector<1x8xf32>
    %3136 = arith.cmpf ogt, %3134, %3135 : vector<1x8xf32>
    %cst_1189 = arith.constant 0.414213568 : f32
    %3137 = vector.broadcast %cst_1189 : f32 to vector<1x8xf32>
    %3138 = arith.cmpf ogt, %3134, %3137 : vector<1x8xf32>
    %cst_1190 = arith.constant 1.000000e+00 : f32
    %3139 = vector.broadcast %cst_1190 : f32 to vector<1x8xf32>
    %3140 = arith.subf %3134, %3139 : vector<1x8xf32>
    %3141 = arith.select %3138, %3140, %3134 : vector<1x8xi1>, vector<1x8xf32>
    %cst_1191 = arith.constant -1.000000e+00 : f32
    %3142 = vector.broadcast %cst_1191 : f32 to vector<1x8xf32>
    %3143 = arith.select %3136, %3142, %3141 : vector<1x8xi1>, vector<1x8xf32>
    %cst_1192 = arith.constant 1.000000e-30 : f32
    %3144 = vector.broadcast %cst_1192 : f32 to vector<1x8xf32>
    %3145 = arith.maximumf %3134, %3144 : vector<1x8xf32>
    %cst_1193 = arith.constant 1.000000e+00 : f32
    %3146 = vector.broadcast %cst_1193 : f32 to vector<1x8xf32>
    %3147 = arith.addf %3134, %3146 : vector<1x8xf32>
    %cst_1194 = arith.constant 1.000000e+00 : f32
    %3148 = vector.broadcast %cst_1194 : f32 to vector<1x8xf32>
    %3149 = arith.select %3138, %3147, %3148 : vector<1x8xi1>, vector<1x8xf32>
    %3150 = arith.select %3136, %3145, %3149 : vector<1x8xi1>, vector<1x8xf32>
    %3151 = arith.divf %3143, %3150 : vector<1x8xf32>
    %cst_1195 = arith.constant 0.785398185 : f32
    %cst_1196 = arith.constant 0.000000e+00 : f32
    %3152 = vector.broadcast %cst_1195 : f32 to vector<1x8xf32>
    %3153 = vector.broadcast %cst_1196 : f32 to vector<1x8xf32>
    %3154 = arith.select %3138, %3152, %3153 : vector<1x8xi1>, vector<1x8xf32>
    %cst_1197 = arith.constant 1.57079637 : f32
    %3155 = vector.broadcast %cst_1197 : f32 to vector<1x8xf32>
    %3156 = arith.select %3136, %3155, %3154 : vector<1x8xi1>, vector<1x8xf32>
    %3157 = arith.mulf %3151, %3151 : vector<1x8xf32>
    %cst_1198 = arith.constant 0.0805374458 : f32
    %3158 = vector.broadcast %cst_1198 : f32 to vector<1x8xf32>
    %3159 = arith.mulf %3158, %3157 : vector<1x8xf32>
    %cst_1199 = arith.constant 0.138776854 : f32
    %3160 = vector.broadcast %cst_1199 : f32 to vector<1x8xf32>
    %3161 = arith.subf %3159, %3160 : vector<1x8xf32>
    %3162 = arith.mulf %3161, %3157 : vector<1x8xf32>
    %cst_1200 = arith.constant 0.199777111 : f32
    %3163 = vector.broadcast %cst_1200 : f32 to vector<1x8xf32>
    %3164 = arith.addf %3162, %3163 : vector<1x8xf32>
    %3165 = arith.mulf %3164, %3157 : vector<1x8xf32>
    %cst_1201 = arith.constant 0.333329499 : f32
    %3166 = vector.broadcast %cst_1201 : f32 to vector<1x8xf32>
    %3167 = arith.subf %3165, %3166 : vector<1x8xf32>
    %3168 = arith.addf %3156, %3151 : vector<1x8xf32>
    %3169 = arith.mulf %3151, %3157 : vector<1x8xf32>
    %3170 = arith.mulf %3169, %3167 : vector<1x8xf32>
    %3171 = arith.addf %3168, %3170 : vector<1x8xf32>
    %3172 = arith.mulf %3133, %3171 : vector<1x8xf32>
    %cst_1202 = arith.constant dense<0.000000e+00> : vector<1x9xf32>
    %3173 = tpu.matmul %3172, %11, %cst_1202 {dimension_numbers = #tpu.dot_dimension_numbers<[1], [0], [0], [1], [0, 0, 1, 1], [], []>} : vector<1x8xf32>, vector<8x9xf32>, vector<1x9xf32> -> vector<1x9xf32>
    %3174 = arith.mulf %3128, %3128 : vector<1x8xf32>
    %cst_1203 = arith.constant 0.000000e+00 : f32
    %3175 = vector.broadcast %cst_1203 : f32 to vector<1x8xf32>
    %3176 = arith.cmpf olt, %3174, %3175 : vector<1x8xf32>
    %cst_1204 = arith.constant -1.000000e+00 : f32
    %cst_1205 = arith.constant 1.000000e+00 : f32
    %3177 = vector.broadcast %cst_1204 : f32 to vector<1x8xf32>
    %3178 = vector.broadcast %cst_1205 : f32 to vector<1x8xf32>
    %3179 = arith.select %3176, %3177, %3178 : vector<1x8xi1>, vector<1x8xf32>
    %3180 = math.absf %3174 : vector<1x8xf32>
    %cst_1206 = arith.constant 2.41421366 : f32
    %3181 = vector.broadcast %cst_1206 : f32 to vector<1x8xf32>
    %3182 = arith.cmpf ogt, %3180, %3181 : vector<1x8xf32>
    %cst_1207 = arith.constant 0.414213568 : f32
    %3183 = vector.broadcast %cst_1207 : f32 to vector<1x8xf32>
    %3184 = arith.cmpf ogt, %3180, %3183 : vector<1x8xf32>
    %cst_1208 = arith.constant 1.000000e+00 : f32
    %3185 = vector.broadcast %cst_1208 : f32 to vector<1x8xf32>
    %3186 = arith.subf %3180, %3185 : vector<1x8xf32>
    %3187 = arith.select %3184, %3186, %3180 : vector<1x8xi1>, vector<1x8xf32>
    %cst_1209 = arith.constant -1.000000e+00 : f32
    %3188 = vector.broadcast %cst_1209 : f32 to vector<1x8xf32>
    %3189 = arith.select %3182, %3188, %3187 : vector<1x8xi1>, vector<1x8xf32>
    %cst_1210 = arith.constant 1.000000e-30 : f32
    %3190 = vector.broadcast %cst_1210 : f32 to vector<1x8xf32>
    %3191 = arith.maximumf %3180, %3190 : vector<1x8xf32>
    %cst_1211 = arith.constant 1.000000e+00 : f32
    %3192 = vector.broadcast %cst_1211 : f32 to vector<1x8xf32>
    %3193 = arith.addf %3180, %3192 : vector<1x8xf32>
    %cst_1212 = arith.constant 1.000000e+00 : f32
    %3194 = vector.broadcast %cst_1212 : f32 to vector<1x8xf32>
    %3195 = arith.select %3184, %3193, %3194 : vector<1x8xi1>, vector<1x8xf32>
    %3196 = arith.select %3182, %3191, %3195 : vector<1x8xi1>, vector<1x8xf32>
    %3197 = arith.divf %3189, %3196 : vector<1x8xf32>
    %cst_1213 = arith.constant 0.785398185 : f32
    %cst_1214 = arith.constant 0.000000e+00 : f32
    %3198 = vector.broadcast %cst_1213 : f32 to vector<1x8xf32>
    %3199 = vector.broadcast %cst_1214 : f32 to vector<1x8xf32>
    %3200 = arith.select %3184, %3198, %3199 : vector<1x8xi1>, vector<1x8xf32>
    %cst_1215 = arith.constant 1.57079637 : f32
    %3201 = vector.broadcast %cst_1215 : f32 to vector<1x8xf32>
    %3202 = arith.select %3182, %3201, %3200 : vector<1x8xi1>, vector<1x8xf32>
    %3203 = arith.mulf %3197, %3197 : vector<1x8xf32>
    %cst_1216 = arith.constant 0.0805374458 : f32
    %3204 = vector.broadcast %cst_1216 : f32 to vector<1x8xf32>
    %3205 = arith.mulf %3204, %3203 : vector<1x8xf32>
    %cst_1217 = arith.constant 0.138776854 : f32
    %3206 = vector.broadcast %cst_1217 : f32 to vector<1x8xf32>
    %3207 = arith.subf %3205, %3206 : vector<1x8xf32>
    %3208 = arith.mulf %3207, %3203 : vector<1x8xf32>
    %cst_1218 = arith.constant 0.199777111 : f32
    %3209 = vector.broadcast %cst_1218 : f32 to vector<1x8xf32>
    %3210 = arith.addf %3208, %3209 : vector<1x8xf32>
    %3211 = arith.mulf %3210, %3203 : vector<1x8xf32>
    %cst_1219 = arith.constant 0.333329499 : f32
    %3212 = vector.broadcast %cst_1219 : f32 to vector<1x8xf32>
    %3213 = arith.subf %3211, %3212 : vector<1x8xf32>
    %3214 = arith.addf %3202, %3197 : vector<1x8xf32>
    %3215 = arith.mulf %3197, %3203 : vector<1x8xf32>
    %3216 = arith.mulf %3215, %3213 : vector<1x8xf32>
    %3217 = arith.addf %3214, %3216 : vector<1x8xf32>
    %3218 = arith.mulf %3179, %3217 : vector<1x8xf32>
    %cst_1220 = arith.constant dense<0.000000e+00> : vector<1x9xf32>
    %3219 = tpu.matmul %3218, %12, %cst_1220 {dimension_numbers = #tpu.dot_dimension_numbers<[1], [0], [0], [1], [0, 0, 1, 1], [], []>} : vector<1x8xf32>, vector<8x9xf32>, vector<1x9xf32> -> vector<1x9xf32>
    %3220 = arith.addf %3173, %3219 : vector<1x9xf32>
    %3221 = arith.addf %3220, %13 : vector<1x9xf32>
    %3222 = vector.extract_strided_slice %3221 {offsets = [0, 0], sizes = [1, 8], strides = [1, 1]} : vector<1x9xf32> to vector<1x8xf32>
    %3223 = vector.extract_strided_slice %3221 {offsets = [0, 8], sizes = [1, 1], strides = [1, 1]} : vector<1x9xf32> to vector<1x1xf32>
    %cst_1221 = arith.constant 0.000000e+00 : f32
    %3224 = vector.broadcast %cst_1221 : f32 to vector<1x8xf32>
    %3225 = arith.cmpf olt, %3222, %3224 : vector<1x8xf32>
    %cst_1222 = arith.constant -1.000000e+00 : f32
    %cst_1223 = arith.constant 1.000000e+00 : f32
    %3226 = vector.broadcast %cst_1222 : f32 to vector<1x8xf32>
    %3227 = vector.broadcast %cst_1223 : f32 to vector<1x8xf32>
    %3228 = arith.select %3225, %3226, %3227 : vector<1x8xi1>, vector<1x8xf32>
    %3229 = math.absf %3222 : vector<1x8xf32>
    %cst_1224 = arith.constant 2.41421366 : f32
    %3230 = vector.broadcast %cst_1224 : f32 to vector<1x8xf32>
    %3231 = arith.cmpf ogt, %3229, %3230 : vector<1x8xf32>
    %cst_1225 = arith.constant 0.414213568 : f32
    %3232 = vector.broadcast %cst_1225 : f32 to vector<1x8xf32>
    %3233 = arith.cmpf ogt, %3229, %3232 : vector<1x8xf32>
    %cst_1226 = arith.constant 1.000000e+00 : f32
    %3234 = vector.broadcast %cst_1226 : f32 to vector<1x8xf32>
    %3235 = arith.subf %3229, %3234 : vector<1x8xf32>
    %3236 = arith.select %3233, %3235, %3229 : vector<1x8xi1>, vector<1x8xf32>
    %cst_1227 = arith.constant -1.000000e+00 : f32
    %3237 = vector.broadcast %cst_1227 : f32 to vector<1x8xf32>
    %3238 = arith.select %3231, %3237, %3236 : vector<1x8xi1>, vector<1x8xf32>
    %cst_1228 = arith.constant 1.000000e-30 : f32
    %3239 = vector.broadcast %cst_1228 : f32 to vector<1x8xf32>
    %3240 = arith.maximumf %3229, %3239 : vector<1x8xf32>
    %cst_1229 = arith.constant 1.000000e+00 : f32
    %3241 = vector.broadcast %cst_1229 : f32 to vector<1x8xf32>
    %3242 = arith.addf %3229, %3241 : vector<1x8xf32>
    %cst_1230 = arith.constant 1.000000e+00 : f32
    %3243 = vector.broadcast %cst_1230 : f32 to vector<1x8xf32>
    %3244 = arith.select %3233, %3242, %3243 : vector<1x8xi1>, vector<1x8xf32>
    %3245 = arith.select %3231, %3240, %3244 : vector<1x8xi1>, vector<1x8xf32>
    %3246 = arith.divf %3238, %3245 : vector<1x8xf32>
    %cst_1231 = arith.constant 0.785398185 : f32
    %cst_1232 = arith.constant 0.000000e+00 : f32
    %3247 = vector.broadcast %cst_1231 : f32 to vector<1x8xf32>
    %3248 = vector.broadcast %cst_1232 : f32 to vector<1x8xf32>
    %3249 = arith.select %3233, %3247, %3248 : vector<1x8xi1>, vector<1x8xf32>
    %cst_1233 = arith.constant 1.57079637 : f32
    %3250 = vector.broadcast %cst_1233 : f32 to vector<1x8xf32>
    %3251 = arith.select %3231, %3250, %3249 : vector<1x8xi1>, vector<1x8xf32>
    %3252 = arith.mulf %3246, %3246 : vector<1x8xf32>
    %cst_1234 = arith.constant 0.0805374458 : f32
    %3253 = vector.broadcast %cst_1234 : f32 to vector<1x8xf32>
    %3254 = arith.mulf %3253, %3252 : vector<1x8xf32>
    %cst_1235 = arith.constant 0.138776854 : f32
    %3255 = vector.broadcast %cst_1235 : f32 to vector<1x8xf32>
    %3256 = arith.subf %3254, %3255 : vector<1x8xf32>
    %3257 = arith.mulf %3256, %3252 : vector<1x8xf32>
    %cst_1236 = arith.constant 0.199777111 : f32
    %3258 = vector.broadcast %cst_1236 : f32 to vector<1x8xf32>
    %3259 = arith.addf %3257, %3258 : vector<1x8xf32>
    %3260 = arith.mulf %3259, %3252 : vector<1x8xf32>
    %cst_1237 = arith.constant 0.333329499 : f32
    %3261 = vector.broadcast %cst_1237 : f32 to vector<1x8xf32>
    %3262 = arith.subf %3260, %3261 : vector<1x8xf32>
    %3263 = arith.addf %3251, %3246 : vector<1x8xf32>
    %3264 = arith.mulf %3246, %3252 : vector<1x8xf32>
    %3265 = arith.mulf %3264, %3262 : vector<1x8xf32>
    %3266 = arith.addf %3263, %3265 : vector<1x8xf32>
    %3267 = arith.mulf %3228, %3266 : vector<1x8xf32>
    %3268 = arith.mulf %3222, %3222 : vector<1x8xf32>
    %cst_1238 = arith.constant 0.000000e+00 : f32
    %3269 = vector.broadcast %cst_1238 : f32 to vector<1x8xf32>
    %3270 = arith.cmpf olt, %3268, %3269 : vector<1x8xf32>
    %cst_1239 = arith.constant -1.000000e+00 : f32
    %cst_1240 = arith.constant 1.000000e+00 : f32
    %3271 = vector.broadcast %cst_1239 : f32 to vector<1x8xf32>
    %3272 = vector.broadcast %cst_1240 : f32 to vector<1x8xf32>
    %3273 = arith.select %3270, %3271, %3272 : vector<1x8xi1>, vector<1x8xf32>
    %3274 = math.absf %3268 : vector<1x8xf32>
    %cst_1241 = arith.constant 2.41421366 : f32
    %3275 = vector.broadcast %cst_1241 : f32 to vector<1x8xf32>
    %3276 = arith.cmpf ogt, %3274, %3275 : vector<1x8xf32>
    %cst_1242 = arith.constant 0.414213568 : f32
    %3277 = vector.broadcast %cst_1242 : f32 to vector<1x8xf32>
    %3278 = arith.cmpf ogt, %3274, %3277 : vector<1x8xf32>
    %cst_1243 = arith.constant 1.000000e+00 : f32
    %3279 = vector.broadcast %cst_1243 : f32 to vector<1x8xf32>
    %3280 = arith.subf %3274, %3279 : vector<1x8xf32>
    %3281 = arith.select %3278, %3280, %3274 : vector<1x8xi1>, vector<1x8xf32>
    %cst_1244 = arith.constant -1.000000e+00 : f32
    %3282 = vector.broadcast %cst_1244 : f32 to vector<1x8xf32>
    %3283 = arith.select %3276, %3282, %3281 : vector<1x8xi1>, vector<1x8xf32>
    %cst_1245 = arith.constant 1.000000e-30 : f32
    %3284 = vector.broadcast %cst_1245 : f32 to vector<1x8xf32>
    %3285 = arith.maximumf %3274, %3284 : vector<1x8xf32>
    %cst_1246 = arith.constant 1.000000e+00 : f32
    %3286 = vector.broadcast %cst_1246 : f32 to vector<1x8xf32>
    %3287 = arith.addf %3274, %3286 : vector<1x8xf32>
    %cst_1247 = arith.constant 1.000000e+00 : f32
    %3288 = vector.broadcast %cst_1247 : f32 to vector<1x8xf32>
    %3289 = arith.select %3278, %3287, %3288 : vector<1x8xi1>, vector<1x8xf32>
    %3290 = arith.select %3276, %3285, %3289 : vector<1x8xi1>, vector<1x8xf32>
    %3291 = arith.divf %3283, %3290 : vector<1x8xf32>
    %cst_1248 = arith.constant 0.785398185 : f32
    %cst_1249 = arith.constant 0.000000e+00 : f32
    %3292 = vector.broadcast %cst_1248 : f32 to vector<1x8xf32>
    %3293 = vector.broadcast %cst_1249 : f32 to vector<1x8xf32>
    %3294 = arith.select %3278, %3292, %3293 : vector<1x8xi1>, vector<1x8xf32>
    %cst_1250 = arith.constant 1.57079637 : f32
    %3295 = vector.broadcast %cst_1250 : f32 to vector<1x8xf32>
    %3296 = arith.select %3276, %3295, %3294 : vector<1x8xi1>, vector<1x8xf32>
    %3297 = arith.mulf %3291, %3291 : vector<1x8xf32>
    %cst_1251 = arith.constant 0.0805374458 : f32
    %3298 = vector.broadcast %cst_1251 : f32 to vector<1x8xf32>
    %3299 = arith.mulf %3298, %3297 : vector<1x8xf32>
    %cst_1252 = arith.constant 0.138776854 : f32
    %3300 = vector.broadcast %cst_1252 : f32 to vector<1x8xf32>
    %3301 = arith.subf %3299, %3300 : vector<1x8xf32>
    %3302 = arith.mulf %3301, %3297 : vector<1x8xf32>
    %cst_1253 = arith.constant 0.199777111 : f32
    %3303 = vector.broadcast %cst_1253 : f32 to vector<1x8xf32>
    %3304 = arith.addf %3302, %3303 : vector<1x8xf32>
    %3305 = arith.mulf %3304, %3297 : vector<1x8xf32>
    %cst_1254 = arith.constant 0.333329499 : f32
    %3306 = vector.broadcast %cst_1254 : f32 to vector<1x8xf32>
    %3307 = arith.subf %3305, %3306 : vector<1x8xf32>
    %3308 = arith.addf %3296, %3291 : vector<1x8xf32>
    %3309 = arith.mulf %3291, %3297 : vector<1x8xf32>
    %3310 = arith.mulf %3309, %3307 : vector<1x8xf32>
    %3311 = arith.addf %3308, %3310 : vector<1x8xf32>
    %3312 = arith.mulf %3273, %3311 : vector<1x8xf32>
    %cst_1255 = arith.constant dense<0.000000e+00> : vector<1x32xf32>
    %3313 = tpu.matmul %3267, %8, %cst_1255 {dimension_numbers = #tpu.dot_dimension_numbers<[1], [0], [0], [1], [0, 0, 1, 1], [], []>} : vector<1x8xf32>, vector<8x32xf32>, vector<1x32xf32> -> vector<1x32xf32>
    %cst_1256 = arith.constant dense<0.000000e+00> : vector<1x32xf32>
    %3314 = tpu.matmul %3312, %9, %cst_1256 {dimension_numbers = #tpu.dot_dimension_numbers<[1], [0], [0], [1], [0, 0, 1, 1], [], []>} : vector<1x8xf32>, vector<8x32xf32>, vector<1x32xf32> -> vector<1x32xf32>
    %3315 = arith.addf %3313, %3314 : vector<1x32xf32>
    %3316 = arith.addf %3315, %10 : vector<1x32xf32>
    %cst_1257 = arith.constant 0.000000e+00 : f32
    %3317 = vector.broadcast %cst_1257 : f32 to vector<1x32xf32>
    %3318 = arith.subf %3317, %3316 : vector<1x32xf32>
    %3319 = math.exp %3318 : vector<1x32xf32>
    %cst_1258 = arith.constant 1.000000e+00 : f32
    %3320 = vector.broadcast %cst_1258 : f32 to vector<1x32xf32>
    %3321 = arith.addf %3320, %3319 : vector<1x32xf32>
    %cst_1259 = arith.constant 1.000000e+00 : f32
    %3322 = vector.broadcast %cst_1259 : f32 to vector<1x32xf32>
    %3323 = arith.divf %3322, %3321 : vector<1x32xf32>
    %3324 = vector.extract_strided_slice %3323 {offsets = [0, 0], sizes = [1, 8], strides = [1, 1]} : vector<1x32xf32> to vector<1x8xf32>
    %3325 = vector.extract_strided_slice %3323 {offsets = [0, 8], sizes = [1, 8], strides = [1, 1]} : vector<1x32xf32> to vector<1x8xf32>
    %3326 = vector.extract_strided_slice %3323 {offsets = [0, 16], sizes = [1, 8], strides = [1, 1]} : vector<1x32xf32> to vector<1x8xf32>
    %3327 = vector.extract_strided_slice %3323 {offsets = [0, 24], sizes = [1, 8], strides = [1, 1]} : vector<1x32xf32> to vector<1x8xf32>
    %cst_1260 = arith.constant 2.000000e+00 : f32
    %3328 = vector.broadcast %cst_1260 : f32 to vector<1x8xf32>
    %3329 = arith.mulf %3328, %3327 : vector<1x8xf32>
    %cst_1261 = arith.constant 1.000000e+00 : f32
    %3330 = vector.broadcast %cst_1261 : f32 to vector<1x8xf32>
    %3331 = arith.subf %3329, %3330 : vector<1x8xf32>
    %3332 = arith.mulf %3126, %3324 : vector<1x8xf32>
    %3333 = arith.mulf %3325, %3331 : vector<1x8xf32>
    %3334 = arith.addf %3332, %3333 : vector<1x8xf32>
    %3335 = math.tanh %3334 : vector<1x8xf32>
    %3336 = arith.mulf %3326, %3335 : vector<1x8xf32>
    %cst_1262 = arith.constant 0.000000e+00 : f32
    %3337 = vector.broadcast %cst_1262 : f32 to vector<1x8xf32>
    %3338 = arith.cmpf olt, %3336, %3337 : vector<1x8xf32>
    %cst_1263 = arith.constant -1.000000e+00 : f32
    %cst_1264 = arith.constant 1.000000e+00 : f32
    %3339 = vector.broadcast %cst_1263 : f32 to vector<1x8xf32>
    %3340 = vector.broadcast %cst_1264 : f32 to vector<1x8xf32>
    %3341 = arith.select %3338, %3339, %3340 : vector<1x8xi1>, vector<1x8xf32>
    %3342 = math.absf %3336 : vector<1x8xf32>
    %cst_1265 = arith.constant 2.41421366 : f32
    %3343 = vector.broadcast %cst_1265 : f32 to vector<1x8xf32>
    %3344 = arith.cmpf ogt, %3342, %3343 : vector<1x8xf32>
    %cst_1266 = arith.constant 0.414213568 : f32
    %3345 = vector.broadcast %cst_1266 : f32 to vector<1x8xf32>
    %3346 = arith.cmpf ogt, %3342, %3345 : vector<1x8xf32>
    %cst_1267 = arith.constant 1.000000e+00 : f32
    %3347 = vector.broadcast %cst_1267 : f32 to vector<1x8xf32>
    %3348 = arith.subf %3342, %3347 : vector<1x8xf32>
    %3349 = arith.select %3346, %3348, %3342 : vector<1x8xi1>, vector<1x8xf32>
    %cst_1268 = arith.constant -1.000000e+00 : f32
    %3350 = vector.broadcast %cst_1268 : f32 to vector<1x8xf32>
    %3351 = arith.select %3344, %3350, %3349 : vector<1x8xi1>, vector<1x8xf32>
    %cst_1269 = arith.constant 1.000000e-30 : f32
    %3352 = vector.broadcast %cst_1269 : f32 to vector<1x8xf32>
    %3353 = arith.maximumf %3342, %3352 : vector<1x8xf32>
    %cst_1270 = arith.constant 1.000000e+00 : f32
    %3354 = vector.broadcast %cst_1270 : f32 to vector<1x8xf32>
    %3355 = arith.addf %3342, %3354 : vector<1x8xf32>
    %cst_1271 = arith.constant 1.000000e+00 : f32
    %3356 = vector.broadcast %cst_1271 : f32 to vector<1x8xf32>
    %3357 = arith.select %3346, %3355, %3356 : vector<1x8xi1>, vector<1x8xf32>
    %3358 = arith.select %3344, %3353, %3357 : vector<1x8xi1>, vector<1x8xf32>
    %3359 = arith.divf %3351, %3358 : vector<1x8xf32>
    %cst_1272 = arith.constant 0.785398185 : f32
    %cst_1273 = arith.constant 0.000000e+00 : f32
    %3360 = vector.broadcast %cst_1272 : f32 to vector<1x8xf32>
    %3361 = vector.broadcast %cst_1273 : f32 to vector<1x8xf32>
    %3362 = arith.select %3346, %3360, %3361 : vector<1x8xi1>, vector<1x8xf32>
    %cst_1274 = arith.constant 1.57079637 : f32
    %3363 = vector.broadcast %cst_1274 : f32 to vector<1x8xf32>
    %3364 = arith.select %3344, %3363, %3362 : vector<1x8xi1>, vector<1x8xf32>
    %3365 = arith.mulf %3359, %3359 : vector<1x8xf32>
    %cst_1275 = arith.constant 0.0805374458 : f32
    %3366 = vector.broadcast %cst_1275 : f32 to vector<1x8xf32>
    %3367 = arith.mulf %3366, %3365 : vector<1x8xf32>
    %cst_1276 = arith.constant 0.138776854 : f32
    %3368 = vector.broadcast %cst_1276 : f32 to vector<1x8xf32>
    %3369 = arith.subf %3367, %3368 : vector<1x8xf32>
    %3370 = arith.mulf %3369, %3365 : vector<1x8xf32>
    %cst_1277 = arith.constant 0.199777111 : f32
    %3371 = vector.broadcast %cst_1277 : f32 to vector<1x8xf32>
    %3372 = arith.addf %3370, %3371 : vector<1x8xf32>
    %3373 = arith.mulf %3372, %3365 : vector<1x8xf32>
    %cst_1278 = arith.constant 0.333329499 : f32
    %3374 = vector.broadcast %cst_1278 : f32 to vector<1x8xf32>
    %3375 = arith.subf %3373, %3374 : vector<1x8xf32>
    %3376 = arith.addf %3364, %3359 : vector<1x8xf32>
    %3377 = arith.mulf %3359, %3365 : vector<1x8xf32>
    %3378 = arith.mulf %3377, %3375 : vector<1x8xf32>
    %3379 = arith.addf %3376, %3378 : vector<1x8xf32>
    %3380 = arith.mulf %3341, %3379 : vector<1x8xf32>
    %cst_1279 = arith.constant dense<0.000000e+00> : vector<1x9xf32>
    %3381 = tpu.matmul %3380, %11, %cst_1279 {dimension_numbers = #tpu.dot_dimension_numbers<[1], [0], [0], [1], [0, 0, 1, 1], [], []>} : vector<1x8xf32>, vector<8x9xf32>, vector<1x9xf32> -> vector<1x9xf32>
    %3382 = arith.mulf %3336, %3336 : vector<1x8xf32>
    %cst_1280 = arith.constant 0.000000e+00 : f32
    %3383 = vector.broadcast %cst_1280 : f32 to vector<1x8xf32>
    %3384 = arith.cmpf olt, %3382, %3383 : vector<1x8xf32>
    %cst_1281 = arith.constant -1.000000e+00 : f32
    %cst_1282 = arith.constant 1.000000e+00 : f32
    %3385 = vector.broadcast %cst_1281 : f32 to vector<1x8xf32>
    %3386 = vector.broadcast %cst_1282 : f32 to vector<1x8xf32>
    %3387 = arith.select %3384, %3385, %3386 : vector<1x8xi1>, vector<1x8xf32>
    %3388 = math.absf %3382 : vector<1x8xf32>
    %cst_1283 = arith.constant 2.41421366 : f32
    %3389 = vector.broadcast %cst_1283 : f32 to vector<1x8xf32>
    %3390 = arith.cmpf ogt, %3388, %3389 : vector<1x8xf32>
    %cst_1284 = arith.constant 0.414213568 : f32
    %3391 = vector.broadcast %cst_1284 : f32 to vector<1x8xf32>
    %3392 = arith.cmpf ogt, %3388, %3391 : vector<1x8xf32>
    %cst_1285 = arith.constant 1.000000e+00 : f32
    %3393 = vector.broadcast %cst_1285 : f32 to vector<1x8xf32>
    %3394 = arith.subf %3388, %3393 : vector<1x8xf32>
    %3395 = arith.select %3392, %3394, %3388 : vector<1x8xi1>, vector<1x8xf32>
    %cst_1286 = arith.constant -1.000000e+00 : f32
    %3396 = vector.broadcast %cst_1286 : f32 to vector<1x8xf32>
    %3397 = arith.select %3390, %3396, %3395 : vector<1x8xi1>, vector<1x8xf32>
    %cst_1287 = arith.constant 1.000000e-30 : f32
    %3398 = vector.broadcast %cst_1287 : f32 to vector<1x8xf32>
    %3399 = arith.maximumf %3388, %3398 : vector<1x8xf32>
    %cst_1288 = arith.constant 1.000000e+00 : f32
    %3400 = vector.broadcast %cst_1288 : f32 to vector<1x8xf32>
    %3401 = arith.addf %3388, %3400 : vector<1x8xf32>
    %cst_1289 = arith.constant 1.000000e+00 : f32
    %3402 = vector.broadcast %cst_1289 : f32 to vector<1x8xf32>
    %3403 = arith.select %3392, %3401, %3402 : vector<1x8xi1>, vector<1x8xf32>
    %3404 = arith.select %3390, %3399, %3403 : vector<1x8xi1>, vector<1x8xf32>
    %3405 = arith.divf %3397, %3404 : vector<1x8xf32>
    %cst_1290 = arith.constant 0.785398185 : f32
    %cst_1291 = arith.constant 0.000000e+00 : f32
    %3406 = vector.broadcast %cst_1290 : f32 to vector<1x8xf32>
    %3407 = vector.broadcast %cst_1291 : f32 to vector<1x8xf32>
    %3408 = arith.select %3392, %3406, %3407 : vector<1x8xi1>, vector<1x8xf32>
    %cst_1292 = arith.constant 1.57079637 : f32
    %3409 = vector.broadcast %cst_1292 : f32 to vector<1x8xf32>
    %3410 = arith.select %3390, %3409, %3408 : vector<1x8xi1>, vector<1x8xf32>
    %3411 = arith.mulf %3405, %3405 : vector<1x8xf32>
    %cst_1293 = arith.constant 0.0805374458 : f32
    %3412 = vector.broadcast %cst_1293 : f32 to vector<1x8xf32>
    %3413 = arith.mulf %3412, %3411 : vector<1x8xf32>
    %cst_1294 = arith.constant 0.138776854 : f32
    %3414 = vector.broadcast %cst_1294 : f32 to vector<1x8xf32>
    %3415 = arith.subf %3413, %3414 : vector<1x8xf32>
    %3416 = arith.mulf %3415, %3411 : vector<1x8xf32>
    %cst_1295 = arith.constant 0.199777111 : f32
    %3417 = vector.broadcast %cst_1295 : f32 to vector<1x8xf32>
    %3418 = arith.addf %3416, %3417 : vector<1x8xf32>
    %3419 = arith.mulf %3418, %3411 : vector<1x8xf32>
    %cst_1296 = arith.constant 0.333329499 : f32
    %3420 = vector.broadcast %cst_1296 : f32 to vector<1x8xf32>
    %3421 = arith.subf %3419, %3420 : vector<1x8xf32>
    %3422 = arith.addf %3410, %3405 : vector<1x8xf32>
    %3423 = arith.mulf %3405, %3411 : vector<1x8xf32>
    %3424 = arith.mulf %3423, %3421 : vector<1x8xf32>
    %3425 = arith.addf %3422, %3424 : vector<1x8xf32>
    %3426 = arith.mulf %3387, %3425 : vector<1x8xf32>
    %cst_1297 = arith.constant dense<0.000000e+00> : vector<1x9xf32>
    %3427 = tpu.matmul %3426, %12, %cst_1297 {dimension_numbers = #tpu.dot_dimension_numbers<[1], [0], [0], [1], [0, 0, 1, 1], [], []>} : vector<1x8xf32>, vector<8x9xf32>, vector<1x9xf32> -> vector<1x9xf32>
    %3428 = arith.addf %3381, %3427 : vector<1x9xf32>
    %3429 = arith.addf %3428, %13 : vector<1x9xf32>
    %3430 = vector.extract_strided_slice %3429 {offsets = [0, 8], sizes = [1, 1], strides = [1, 1]} : vector<1x9xf32> to vector<1x1xf32>
    %3431 = tpu.concatenate %1975, %2183, %2391, %2599, %2807, %3015, %3223, %3430 in 1 : vector<1x1xf32>, vector<1x1xf32>, vector<1x1xf32>, vector<1x1xf32>, vector<1x1xf32>, vector<1x1xf32>, vector<1x1xf32>, vector<1x1xf32> -> vector<1x8xf32>
    %c0_1298 = arith.constant 0 : index
    %c0_1299 = arith.constant 0 : index
    %3432 = vector.load %arg2[%c0_1298, %c0_1299] : memref<1x8xf32, #tpu.memory_space<vmem>>, vector<1x8xf32>
    tpu.vector_store %arg2[%c0_1298, %c0_1299], %3431 {strides = array<i32>} : memref<1x8xf32, #tpu.memory_space<vmem>>, vector<1x8xf32>,
    return
  }
}

</mosaic_0001>

<llo_original>
// kernel: autoencoded_vqlstm_forward.1
$region0: #{autoencoded_vqlstm_forward.1}
  #allocation0 [shape = 'u32[]', space=smem, size = 0x4, offset = 0x4, fixed_abs, tag = 'smem constant byte address 0x4 - core index']
  #allocation1 [shape = 'u32[72,128]{1,0:T(1,128)}', space=vmem, size = 0x9000, scoped, tag = 'internal scratch']
  #allocation2 [shape = 'f32[8,32]{1,0:T(8,128)}', space=vmem, size = 0x1000, scoped, tag = 'scratch operand']
  %s0 = inlined_call_operand.vmem [shape: f32[24,8], index: 0, kind: input, shape index: {}]
  %s1 = inlined_call_operand.vmem [shape: f32[112,32], index: 1, kind: input, shape index: {}]
  %s2 = inlined_call_operand.hbm [shape: f32[1,8], index: 2, kind: output, shape index: {}]
  %s3 = sld [smem:[#allocation0]]
  $region18: #{autoencoded_vqlstm_forward.1} parent=0
    _
  %s5 = ssub.s32 1, %s3
  %s6 = scalar_select 0, %s5, %s3
  $region1: #{autoencoded_vqlstm_forward.1} parent=0
    #allocation3 [shape = 'u8[512]{0}', space=vmem, size = 0x400, scoped, tag = 'output window, operand 0, single buffered']
    #allocation4 [shape = 's32[1]{0}', space=sflag, size = 0x4, scoped, tag = 'scoped memory for autoencoded_vqlstm_forward.1']
    %7 = vsyncpa [#allocation4], 0
    // Predicated region
    $region2: #{autoencoded_vqlstm_forward.1} parent=1 // pred_check
      _
    $region3: #{autoencoded_vqlstm_forward.1} parent=1 // pred_check_branch
      %9 = sbr.rel (0) target = $region5
    $region4: #{autoencoded_vqlstm_forward.1} parent=1 // pred_region
      _
    $region5: #{autoencoded_vqlstm_forward.1} parent=1 // pred_fallthru
      _
    // Predicated region
    $region6: #{autoencoded_vqlstm_forward.1} parent=1 // pred_check
      _
    $region7: #{autoencoded_vqlstm_forward.1} parent=1 // pred_check_branch
      %11 = sbr.rel (0) target = $region9
    $region8: #{autoencoded_vqlstm_forward.1} parent=1 // pred_region
      _
    $region9: #{autoencoded_vqlstm_forward.1} parent=1 // pred_fallthru
      _
    %v12 = vld [vmem:[%s1] sm:$0xff]
    %v13 = vld [vmem:[%s1 + $0x8] sm:$0xff]
    %v14 = vld [vmem:[%s1 + $0x10] sm:$0xff]
    %v15 = vld [vmem:[%s1 + $0x18] sm:$0xff]
    %v16 = vld [vmem:[%s1 + $0x20] sm:$0x1]
    %v17 = vld [vmem:[%s1 + $0x28] sm:$0xff]
    %v18 = vld [vmem:[%s1 + $0x30] sm:$0xff]
    %v19 = vld [vmem:[%s1 + $0x38] sm:$0x1]
    %v20 = vld [vmem:[%s1 + $0x40] sm:$0xff]
    %v21 = vld [vmem:[%s1 + $0x48] sm:$0xff]
    %v22 = vld [vmem:[%s1 + $0x50] sm:$0x1]
    %v23 = vld [vmem:[%s1 + $0x58] sm:$0xff]
    %v24 = vld [vmem:[%s1 + $0x60] sm:$0xff]
    %v25 = vld [vmem:[%s1 + $0x68] sm:$0x1]
    %v26 = vld [vmem:[%s0] sm:$0xff]
    %v27 = vld [vmem:[%s0 + $0x8] sm:$0x1]
    %v28 = vld [vmem:[%s0 + $0x10] sm:$0x1]
    %vm29 = vcmp.lt.f32.partialorder %v26, 0.0
    %v30 = vsel %vm29, -1.0, 1.0
    %v31 = vand.u32 2147483647, %v26
    %vm32 = vcmp.gt.f32.partialorder %v31, 2.4142137
    %vm33 = vcmp.gt.f32.partialorder %v31, 0.41421357
    %v34 = vsub.f32 %v31, 1.0
    %v35 = vsel %vm33, %v34, %v31
    %v36 = vsel %vm32, -1.0, %v35
    %v37 = vmax.f32 %v31, 1e-30
    %v38 = vadd.f32 %v31, 1.0
    %v39 = vsel %vm33, %v38, 1.0
    %v40 = vsel %vm32, %v37, %v39
    %v41 = vrcp.pop %v40
    %v42 = vmul.f32 %v40, %v41
    %v43 = vsub.f32 1.0, %v42
    %v44 = vmul.f32 %v41, %v43
    %v45 = vadd.f32 %v41, %v44
    %vm46 = vweird.f32 %v40
    %vm47 = vweird.f32 %v41
    %vm48 = vmor %vm46, %vm47
    %v49 = vsel %vm48, %v41, %v45
    %v50 = vand.u32 2147483647, %v40
    %vm51 = vcmp.eq.f32.partialorder %v50, 8.507059e+37
    %v52 = vand.u32 %v40, 2147483648
    %v53 = vor.u32 1.1754944e-38, %v52
    %v54 = vsel %vm51, %v53, %v49
    %v55 = vmul.f32 %v36, %v54
    %v56 = vsel %vm33, 0.7853982, 0.0
    %v57 = vsel %vm32, 1.5707964, %v56
    %v58 = vmul.f32 %v55, %v55
    %v59 = vmul.f32 %v58, 0.080537446
    %v60 = vsub.f32 %v59, 0.13877685
    %v61 = vmul.f32 %v60, %v58
    %v62 = vadd.f32 %v61, 0.19977711
    %v63 = vmul.f32 %v62, %v58
    %v64 = vsub.f32 %v63, 0.3333295
    %v65 = vadd.f32 %v57, %v55
    %v66 = vmul.f32 %v55, %v58
    %v67 = vmul.f32 %v66, %v64
    %v68 = vadd.f32 %v65, %v67
    %v69 = vmul.f32 %v30, %v68
    %v70 = vmul.f32 %v26, %v26
    %vm71 = vcmp.lt.f32.partialorder %v70, 0.0
    %v72 = vsel %vm71, -1.0, 1.0
    %v73 = vand.u32 2147483647, %v70
    %vm74 = vcmp.gt.f32.partialorder %v73, 2.4142137
    %vm75 = vcmp.gt.f32.partialorder %v73, 0.41421357
    %v76 = vsub.f32 %v73, 1.0
    %v77 = vsel %vm75, %v76, %v73
    %v78 = vsel %vm74, -1.0, %v77
    %v79 = vmax.f32 %v73, 1e-30
    %v80 = vadd.f32 %v73, 1.0
    %v81 = vsel %vm75, %v80, 1.0
    %v82 = vsel %vm74, %v79, %v81
    %v83 = vrcp.pop %v82
    %v84 = vmul.f32 %v82, %v83
    %v85 = vsub.f32 1.0, %v84
    %v86 = vmul.f32 %v83, %v85
    %v87 = vadd.f32 %v83, %v86
    %vm88 = vweird.f32 %v82
    %vm89 = vweird.f32 %v83
    %vm90 = vmor %vm88, %vm89
    %v91 = vsel %vm90, %v83, %v87
    %v92 = vand.u32 2147483647, %v82
    %vm93 = vcmp.eq.f32.partialorder %v92, 8.507059e+37
    %v94 = vand.u32 %v82, 2147483648
    %v95 = vor.u32 1.1754944e-38, %v94
    %v96 = vsel %vm93, %v95, %v91
    %v97 = vmul.f32 %v78, %v96
    %v98 = vsel %vm75, 0.7853982, 0.0
    %v99 = vsel %vm74, 1.5707964, %v98
    %v100 = vmul.f32 %v97, %v97
    %v101 = vmul.f32 %v100, 0.080537446
    %v102 = vsub.f32 %v101, 0.13877685
    %v103 = vmul.f32 %v102, %v100
    %v104 = vadd.f32 %v103, 0.19977711
    %v105 = vmul.f32 %v104, %v100
    %v106 = vsub.f32 %v105, 0.3333295
    %v107 = vadd.f32 %v99, %v97
    %v108 = vmul.f32 %v97, %v100
    %v109 = vmul.f32 %v108, %v106
    %v110 = vadd.f32 %v107, %v109
    %v111 = vmul.f32 %v72, %v110
    %vm112 = vcmask 64512
    %v114 = vsel %vm112, %v111, 0
    %116 = vmatpush.msra.mxu0 0.0
    %117 = vmatpush.msra.mxu0 0.0
    %118 = vmatpush.msra.mxu0 0.0
    %119 = vmatpush.msra.mxu0 0.0
    %120 = vmatpush.msra.mxu0 0.0
    %121 = vmatpush.msra.mxu0 0.0
    %122 = vmatpush.msra.mxu0 0.0
    %123 = vmatpush.msra.mxu0 0.0
    %124 = vmatpush.msra.mxu0 0.0
    %125 = vmatpush.msra.mxu0 0.0
    %126 = vmatpush.msra.mxu0 0.0
    %127 = vmatpush.msra.mxu0 0.0
    %128 = vmatpush.msra.mxu0 0.0
    %129 = vmatpush.msra.mxu0 0.0
    %130 = vmatpush.msra.mxu0 0.0
    %131 = vmatpush.msra.mxu0 %v13
    %132 = vmatmul.f32.gmra.mxu0 %v114
    %v133 = vpop.f32.mrf.mxu0
    %v134 = vadd.f32 0.0, %v133
    %135 = vdwg.mxu0
    %v137 = vsel %vm112, %v69, 0
    %139 = vmatpush.msra.mxu0 0.0
    %140 = vmatpush.msra.mxu0 0.0
    %141 = vmatpush.msra.mxu0 0.0
    %142 = vmatpush.msra.mxu0 0.0
    %143 = vmatpush.msra.mxu0 0.0
    %144 = vmatpush.msra.mxu0 0.0
    %145 = vmatpush.msra.mxu0 0.0
    %146 = vmatpush.msra.mxu0 0.0
    %147 = vmatpush.msra.mxu0 0.0
    %148 = vmatpush.msra.mxu0 0.0
    %149 = vmatpush.msra.mxu0 0.0
    %150 = vmatpush.msra.mxu0 0.0
    %151 = vmatpush.msra.mxu0 0.0
    %152 = vmatpush.msra.mxu0 0.0
    %153 = vmatpush.msra.mxu0 0.0
    %154 = vmatpush.msra.mxu0 %v12
    %155 = vmatmul.f32.gmra.mxu0 %v137
    %v156 = vpop.f32.mrf.mxu0
    %v157 = vadd.f32 %v134, %v156
    %158 = vdwg.mxu0
    %v159 = vperm.slane %v16, 0
    %v160 = vadd.f32 %v157, %v159
    %vm161 = vcmask 261120
    %162 = vst.msk [vmem:[#allocation2] sm:$0xff] %vm161, %v160
    %vm163 = vcmp.lt.f32.partialorder %v27, 0.0
    %v164 = vsel %vm163, -1.0, 1.0
    %v165 = vand.u32 2147483647, %v27
    %vm166 = vcmp.gt.f32.partialorder %v165, 2.4142137
    %vm167 = vcmp.gt.f32.partialorder %v165, 0.41421357
    %v168 = vsub.f32 %v165, 1.0
    %v169 = vsel %vm167, %v168, %v165
    %v170 = vsel %vm166, -1.0, %v169
    %v171 = vmax.f32 %v165, 1e-30
    %v172 = vadd.f32 %v165, 1.0
    %v173 = vsel %vm167, %v172, 1.0
    %v174 = vsel %vm166, %v171, %v173
    %v175 = vrcp.pop %v174
    %v176 = vmul.f32 %v174, %v175
    %v177 = vsub.f32 1.0, %v176
    %v178 = vmul.f32 %v175, %v177
    %v179 = vadd.f32 %v175, %v178
    %vm180 = vweird.f32 %v174
    %vm181 = vweird.f32 %v175
    %vm182 = vmor %vm180, %vm181
    %v183 = vsel %vm182, %v175, %v179
    %v184 = vand.u32 2147483647, %v174
    %vm185 = vcmp.eq.f32.partialorder %v184, 8.507059e+37
    %v186 = vand.u32 %v174, 2147483648
    %v187 = vor.u32 1.1754944e-38, %v186
    %v188 = vsel %vm185, %v187, %v183
    %v189 = vmul.f32 %v170, %v188
    %v190 = vsel %vm167, 0.7853982, 0.0
    %v191 = vsel %vm166, 1.5707964, %v190
    %v192 = vmul.f32 %v189, %v189
    %v193 = vmul.f32 %v192, 0.080537446
    %v194 = vsub.f32 %v193, 0.13877685
    %v195 = vmul.f32 %v194, %v192
    %v196 = vadd.f32 %v195, 0.19977711
    %v197 = vmul.f32 %v196, %v192
    %v198 = vsub.f32 %v197, 0.3333295
    %v199 = vadd.f32 %v191, %v189
    %v200 = vmul.f32 %v189, %v192
    %v201 = vmul.f32 %v200, %v198
    %v202 = vadd.f32 %v199, %v201
    %v203 = vmul.f32 %v164, %v202
    %v204 = vmul.f32 %v27, %v27
    %vm205 = vcmp.lt.f32.partialorder %v204, 0.0
    %v206 = vsel %vm205, -1.0, 1.0
    %v207 = vand.u32 2147483647, %v204
    %vm208 = vcmp.gt.f32.partialorder %v207, 2.4142137
    %vm209 = vcmp.gt.f32.partialorder %v207, 0.41421357
    %v210 = vsub.f32 %v207, 1.0
    %v211 = vsel %vm209, %v210, %v207
    %v212 = vsel %vm208, -1.0, %v211
    %v213 = vmax.f32 %v207, 1e-30
    %v214 = vadd.f32 %v207, 1.0
    %v215 = vsel %vm209, %v214, 1.0
    %v216 = vsel %vm208, %v213, %v215
    %v217 = vrcp.pop %v216
    %v218 = vmul.f32 %v216, %v217
    %v219 = vsub.f32 1.0, %v218
    %v220 = vmul.f32 %v217, %v219
    %v221 = vadd.f32 %v217, %v220
    %vm222 = vweird.f32 %v216
    %vm223 = vweird.f32 %v217
    %vm224 = vmor %vm222, %vm223
    %v225 = vsel %vm224, %v217, %v221
    %v226 = vand.u32 2147483647, %v216
    %vm227 = vcmp.eq.f32.partialorder %v226, 8.507059e+37
    %v228 = vand.u32 %v216, 2147483648
    %v229 = vor.u32 1.1754944e-38, %v228
    %v230 = vsel %vm227, %v229, %v225
    %v231 = vmul.f32 %v212, %v230
    %v232 = vsel %vm209, 0.7853982, 0.0
    %v233 = vsel %vm208, 1.5707964, %v232
    %v234 = vmul.f32 %v231, %v231
    %v235 = vmul.f32 %v234, 0.080537446
    %v236 = vsub.f32 %v235, 0.13877685
    %v237 = vmul.f32 %v236, %v234
    %v238 = vadd.f32 %v237, 0.19977711
    %v239 = vmul.f32 %v238, %v234
    %v240 = vsub.f32 %v239, 0.3333295
    %v241 = vadd.f32 %v233, %v231
    %v242 = vmul.f32 %v231, %v234
    %v243 = vmul.f32 %v242, %v240
    %v244 = vadd.f32 %v241, %v243
    %v245 = vmul.f32 %v206, %v244
    %v247 = vsel %vm112, %v245, 0
    %249 = vmatpush.msra.mxu0 0.0
    %250 = vmatpush.msra.mxu0 0.0
    %251 = vmatpush.msra.mxu0 0.0
    %252 = vmatpush.msra.mxu0 0.0
    %253 = vmatpush.msra.mxu0 0.0
    %254 = vmatpush.msra.mxu0 0.0
    %255 = vmatpush.msra.mxu0 0.0
    %256 = vmatpush.msra.mxu0 0.0
    %257 = vmatpush.msra.mxu0 0.0
    %258 = vmatpush.msra.mxu0 0.0
    %259 = vmatpush.msra.mxu0 0.0
    %260 = vmatpush.msra.mxu0 0.0
    %261 = vmatpush.msra.mxu0 0.0
    %262 = vmatpush.msra.mxu0 0.0
    %263 = vmatpush.msra.mxu0 0.0
    %264 = vmatpush.msra.mxu0 %v15
    %265 = vmatmul.f32.gmra.mxu0 %v247
    %v266 = vpop.f32.mrf.mxu0
    %v267 = vadd.f32 0.0, %v266
    %268 = vdwg.mxu0
    %v270 = vsel %vm112, %v203, 0
    %272 = vmatpush.msra.mxu0 0.0
    %273 = vmatpush.msra.mxu0 0.0
    %274 = vmatpush.msra.mxu0 0.0
    %275 = vmatpush.msra.mxu0 0.0
    %276 = vmatpush.msra.mxu0 0.0
    %277 = vmatpush.msra.mxu0 0.0
    %278 = vmatpush.msra.mxu0 0.0
    %279 = vmatpush.msra.mxu0 0.0
    %280 = vmatpush.msra.mxu0 0.0
    %281 = vmatpush.msra.mxu0 0.0
    %282 = vmatpush.msra.mxu0 0.0
    %283 = vmatpush.msra.mxu0 0.0
    %284 = vmatpush.msra.mxu0 0.0
    %285 = vmatpush.msra.mxu0 0.0
    %286 = vmatpush.msra.mxu0 0.0
    %287 = vmatpush.msra.mxu0 %v14
    %288 = vmatmul.f32.gmra.mxu0 %v270
    %v289 = vpop.f32.mrf.mxu0
    %v290 = vadd.f32 %v267, %v289
    %291 = vdwg.mxu0
    %v292 = vld [vmem:[#allocation2] sm:$0x1]
    %v293 = vadd.f32 %v290, %v292
    %v294 = vsub.f32 0.0, %v293
    %v295 = vmul.f32 %v294, 1.442695
    %v296 = vpow.pop %v295
    %v297 = vadd.f32 %v296, 1.0
    %v298 = vrcp.pop %v297
    %v299 = vmul.f32 %v297, %v298
    %v300 = vsub.f32 1.0, %v299
    %v301 = vmul.f32 %v298, %v300
    %v302 = vadd.f32 %v298, %v301
    %vm303 = vweird.f32 %v297
    %vm304 = vweird.f32 %v298
    %vm305 = vmor %vm303, %vm304
    %v306 = vsel %vm305, %v298, %v302
    %v307 = vand.u32 2147483647, %v297
    %vm308 = vcmp.eq.f32.partialorder %v307, 8.507059e+37
    %v309 = vand.u32 %v297, 2147483648
    %v310 = vor.u32 1.1754944e-38, %v309
    %v311 = vsel %vm308, %v310, %v306
    %v312 = vmul.f32 1.0, %v311
    %v313 = vmul.f32 %v312, 2.0
    %v314 = vsub.f32 %v313, 1.0
    %v315 = vmul.f32 %v28, %v312
    %317 = vrot.lane.b32.xlu0 %v314, 112
    %v318 = vpop.permute.xlu0 %317
    %v320 = vmul.f32 %v312, %v318
    %322 = vrot.lane.b32.xlu0 %v320, 120
    %v323 = vpop.permute.xlu0 %322
    %v325 = vadd.f32 %v315, %v323
    %v326 = vtanh.pop %v325
    %328 = vrot.lane.b32.xlu0 %v326, 16
    %v329 = vpop.permute.xlu0 %328
    %v331 = vmul.f32 %v312, %v329
    %vm332 = vcmp.lt.f32.partialorder %v331, 0.0
    %v333 = vsel %vm332, -1.0, 1.0
    %v334 = vand.u32 2147483647, %v331
    %vm335 = vcmp.gt.f32.partialorder %v334, 2.4142137
    %vm336 = vcmp.gt.f32.partialorder %v334, 0.41421357
    %v337 = vsub.f32 %v334, 1.0
    %v338 = vsel %vm336, %v337, %v334
    %v339 = vsel %vm335, -1.0, %v338
    %v340 = vmax.f32 %v334, 1e-30
    %v341 = vadd.f32 %v334, 1.0
    %v342 = vsel %vm336, %v341, 1.0
    %v343 = vsel %vm335, %v340, %v342
    %v344 = vrcp.pop %v343
    %v345 = vmul.f32 %v343, %v344
    %v346 = vsub.f32 1.0, %v345
    %v347 = vmul.f32 %v344, %v346
    %v348 = vadd.f32 %v344, %v347
    %vm349 = vweird.f32 %v343
    %vm350 = vweird.f32 %v344
    %vm351 = vmor %vm349, %vm350
    %v352 = vsel %vm351, %v344, %v348
    %v353 = vand.u32 2147483647, %v343
    %vm354 = vcmp.eq.f32.partialorder %v353, 8.507059e+37
    %v355 = vand.u32 %v343, 2147483648
    %v356 = vor.u32 1.1754944e-38, %v355
    %v357 = vsel %vm354, %v356, %v352
    %v358 = vmul.f32 %v339, %v357
    %v359 = vsel %vm336, 0.7853982, 0.0
    %v360 = vsel %vm335, 1.5707964, %v359
    %v361 = vmul.f32 %v358, %v358
    %v362 = vmul.f32 %v361, 0.080537446
    %v363 = vsub.f32 %v362, 0.13877685
    %v364 = vmul.f32 %v363, %v361
    %v365 = vadd.f32 %v364, 0.19977711
    %v366 = vmul.f32 %v365, %v361
    %v367 = vsub.f32 %v366, 0.3333295
    %v368 = vadd.f32 %v360, %v358
    %v369 = vmul.f32 %v358, %v361
    %v370 = vmul.f32 %v369, %v367
    %v371 = vadd.f32 %v368, %v370
    %v372 = vmul.f32 %v333, %v371
    %v373 = vmul.f32 %v331, %v331
    %vm374 = vcmp.lt.f32.partialorder %v373, 0.0
    %v375 = vsel %vm374, -1.0, 1.0
    %v376 = vand.u32 2147483647, %v373
    %vm377 = vcmp.gt.f32.partialorder %v376, 2.4142137
    %vm378 = vcmp.gt.f32.partialorder %v376, 0.41421357
    %v379 = vsub.f32 %v376, 1.0
    %v380 = vsel %vm378, %v379, %v376
    %v381 = vsel %vm377, -1.0, %v380
    %v382 = vmax.f32 %v376, 1e-30
    %v383 = vadd.f32 %v376, 1.0
    %v384 = vsel %vm378, %v383, 1.0
    %v385 = vsel %vm377, %v382, %v384
    %v386 = vrcp.pop %v385
    %v387 = vmul.f32 %v385, %v386
    %v388 = vsub.f32 1.0, %v387
    %v389 = vmul.f32 %v386, %v388
    %v390 = vadd.f32 %v386, %v389
    %vm391 = vweird.f32 %v385
    %vm392 = vweird.f32 %v386
    %vm393 = vmor %vm391, %vm392
    %v394 = vsel %vm393, %v386, %v390
    %v395 = vand.u32 2147483647, %v385
    %vm396 = vcmp.eq.f32.partialorder %v395, 8.507059e+37
    %v397 = vand.u32 %v385, 2147483648
    %v398 = vor.u32 1.1754944e-38, %v397
    %v399 = vsel %vm396, %v398, %v394
    %v400 = vmul.f32 %v381, %v399
    %v401 = vsel %vm378, 0.7853982, 0.0
    %v402 = vsel %vm377, 1.5707964, %v401
    %v403 = vmul.f32 %v400, %v400
    %v404 = vmul.f32 %v403, 0.080537446
    %v405 = vsub.f32 %v404, 0.13877685
    %v406 = vmul.f32 %v405, %v403
    %v407 = vadd.f32 %v406, 0.19977711
    %v408 = vmul.f32 %v407, %v403
    %v409 = vsub.f32 %v408, 0.3333295
    %v410 = vadd.f32 %v402, %v400
    %v411 = vmul.f32 %v400, %v403
    %v412 = vmul.f32 %v411, %v409
    %v413 = vadd.f32 %v410, %v412
    %v414 = vmul.f32 %v375, %v413
    %416 = vrot.lane.b32.xlu0 %v414, 112
    %v417 = vpop.permute.xlu0 %416
    %v418 = vsel %vm112, %v417, 0
    %420 = vmatpush.msra.mxu0 0.0
    %421 = vmatpush.msra.mxu0 0.0
    %422 = vmatpush.msra.mxu0 0.0
    %423 = vmatpush.msra.mxu0 0.0
    %424 = vmatpush.msra.mxu0 0.0
    %425 = vmatpush.msra.mxu0 0.0
    %426 = vmatpush.msra.mxu0 0.0
    %427 = vmatpush.msra.mxu0 0.0
    %428 = vmatpush.msra.mxu0 0.0
    %429 = vmatpush.msra.mxu0 0.0
    %430 = vmatpush.msra.mxu0 0.0
    %431 = vmatpush.msra.mxu0 0.0
    %432 = vmatpush.msra.mxu0 0.0
    %433 = vmatpush.msra.mxu0 0.0
    %434 = vmatpush.msra.mxu0 0.0
    %435 = vmatpush.msra.mxu0 %v18
    %436 = vmatmul.f32.gmra.mxu0 %v418
    %v437 = vpop.f32.mrf.mxu0
    %v438 = vadd.f32 0.0, %v437
    %439 = vdwg.mxu0
    %441 = vrot.lane.b32.xlu0 %v372, 112
    %v442 = vpop.permute.xlu0 %441
    %v443 = vsel %vm112, %v442, 0
    %445 = vmatpush.msra.mxu0 0.0
    %446 = vmatpush.msra.mxu0 0.0
    %447 = vmatpush.msra.mxu0 0.0
    %448 = vmatpush.msra.mxu0 0.0
    %449 = vmatpush.msra.mxu0 0.0
    %450 = vmatpush.msra.mxu0 0.0
    %451 = vmatpush.msra.mxu0 0.0
    %452 = vmatpush.msra.mxu0 0.0
    %453 = vmatpush.msra.mxu0 0.0
    %454 = vmatpush.msra.mxu0 0.0
    %455 = vmatpush.msra.mxu0 0.0
    %456 = vmatpush.msra.mxu0 0.0
    %457 = vmatpush.msra.mxu0 0.0
    %458 = vmatpush.msra.mxu0 0.0
    %459 = vmatpush.msra.mxu0 0.0
    %460 = vmatpush.msra.mxu0 %v17
    %461 = vmatmul.f32.gmra.mxu0 %v443
    %v462 = vpop.f32.mrf.mxu0
    %v463 = vadd.f32 %v438, %v462
    %464 = vdwg.mxu0
    %v465 = vadd.f32 %v463, %v19
    %vm466 = vcmp.lt.f32.partialorder %v465, 0.0
    %v467 = vsel %vm466, -1.0, 1.0
    %v468 = vand.u32 2147483647, %v465
    %vm469 = vcmp.gt.f32.partialorder %v468, 2.4142137
    %vm470 = vcmp.gt.f32.partialorder %v468, 0.41421357
    %v471 = vsub.f32 %v468, 1.0
    %v472 = vsel %vm470, %v471, %v468
    %v473 = vsel %vm469, -1.0, %v472
    %v474 = vmax.f32 %v468, 1e-30
    %v475 = vadd.f32 %v468, 1.0
    %v476 = vsel %vm470, %v475, 1.0
    %v477 = vsel %vm469, %v474, %v476
    %v478 = vrcp.pop %v477
    %v479 = vmul.f32 %v477, %v478
    %v480 = vsub.f32 1.0, %v479
    %v481 = vmul.f32 %v478, %v480
    %v482 = vadd.f32 %v478, %v481
    %vm483 = vweird.f32 %v477
    %vm484 = vweird.f32 %v478
    %vm485 = vmor %vm483, %vm484
    %v486 = vsel %vm485, %v478, %v482
    %v487 = vand.u32 2147483647, %v477
    %vm488 = vcmp.eq.f32.partialorder %v487, 8.507059e+37
    %v489 = vand.u32 %v477, 2147483648
    %v490 = vor.u32 1.1754944e-38, %v489
    %v491 = vsel %vm488, %v490, %v486
    %v492 = vmul.f32 %v473, %v491
    %v493 = vsel %vm470, 0.7853982, 0.0
    %v494 = vsel %vm469, 1.5707964, %v493
    %v495 = vmul.f32 %v492, %v492
    %v496 = vmul.f32 %v495, 0.080537446
    %v497 = vsub.f32 %v496, 0.13877685
    %v498 = vmul.f32 %v497, %v495
    %v499 = vadd.f32 %v498, 0.19977711
    %v500 = vmul.f32 %v499, %v495
    %v501 = vsub.f32 %v500, 0.3333295
    %v502 = vadd.f32 %v494, %v492
    %v503 = vmul.f32 %v492, %v495
    %v504 = vmul.f32 %v503, %v501
    %v505 = vadd.f32 %v502, %v504
    %v506 = vmul.f32 %v467, %v505
    %v507 = vmul.f32 %v465, %v465
    %vm508 = vcmp.lt.f32.partialorder %v507, 0.0
    %v509 = vsel %vm508, -1.0, 1.0
    %v510 = vand.u32 2147483647, %v507
    %vm511 = vcmp.gt.f32.partialorder %v510, 2.4142137
    %vm512 = vcmp.gt.f32.partialorder %v510, 0.41421357
    %v513 = vsub.f32 %v510, 1.0
    %v514 = vsel %vm512, %v513, %v510
    %v515 = vsel %vm511, -1.0, %v514
    %v516 = vmax.f32 %v510, 1e-30
    %v517 = vadd.f32 %v510, 1.0
    %v518 = vsel %vm512, %v517, 1.0
    %v519 = vsel %vm511, %v516, %v518
    %v520 = vrcp.pop %v519
    %v521 = vmul.f32 %v519, %v520
    %v522 = vsub.f32 1.0, %v521
    %v523 = vmul.f32 %v520, %v522
    %v524 = vadd.f32 %v520, %v523
    %vm525 = vweird.f32 %v519
    %vm526 = vweird.f32 %v520
    %vm527 = vmor %vm525, %vm526
    %v528 = vsel %vm527, %v520, %v524
    %v529 = vand.u32 2147483647, %v519
    %vm530 = vcmp.eq.f32.partialorder %v529, 8.507059e+37
    %v531 = vand.u32 %v519, 2147483648
    %v532 = vor.u32 1.1754944e-38, %v531
    %v533 = vsel %vm530, %v532, %v528
    %v534 = vmul.f32 %v515, %v533
    %v535 = vsel %vm512, 0.7853982, 0.0
    %v536 = vsel %vm511, 1.5707964, %v535
    %v537 = vmul.f32 %v534, %v534
    %v538 = vmul.f32 %v537, 0.080537446
    %v539 = vsub.f32 %v538, 0.13877685
    %v540 = vmul.f32 %v539, %v537
    %v541 = vadd.f32 %v540, 0.19977711
    %v542 = vmul.f32 %v541, %v537
    %v543 = vsub.f32 %v542, 0.3333295
    %v544 = vadd.f32 %v536, %v534
    %v545 = vmul.f32 %v534, %v537
    %v546 = vmul.f32 %v545, %v543
    %v547 = vadd.f32 %v544, %v546
    %v548 = vmul.f32 %v509, %v547
    %v550 = vsel %vm112, %v548, 0
    %552 = vmatpush.msra.mxu0 0.0
    %553 = vmatpush.msra.mxu0 0.0
    %554 = vmatpush.msra.mxu0 0.0
    %555 = vmatpush.msra.mxu0 0.0
    %556 = vmatpush.msra.mxu0 0.0
    %557 = vmatpush.msra.mxu0 0.0
    %558 = vmatpush.msra.mxu0 0.0
    %559 = vmatpush.msra.mxu0 0.0
    %560 = vmatpush.msra.mxu0 0.0
    %561 = vmatpush.msra.mxu0 0.0
    %562 = vmatpush.msra.mxu0 0.0
    %563 = vmatpush.msra.mxu0 0.0
    %564 = vmatpush.msra.mxu0 0.0
    %565 = vmatpush.msra.mxu0 0.0
    %566 = vmatpush.msra.mxu0 0.0
    %567 = vmatpush.msra.mxu0 %v15
    %568 = vmatmul.f32.gmra.mxu0 %v550
    %v569 = vpop.f32.mrf.mxu0
    %v570 = vadd.f32 0.0, %v569
    %571 = vdwg.mxu0
    %v573 = vsel %vm112, %v506, 0
    %575 = vmatpush.msra.mxu0 0.0
    %576 = vmatpush.msra.mxu0 0.0
    %577 = vmatpush.msra.mxu0 0.0
    %578 = vmatpush.msra.mxu0 0.0
    %579 = vmatpush.msra.mxu0 0.0
    %580 = vmatpush.msra.mxu0 0.0
    %581 = vmatpush.msra.mxu0 0.0
    %582 = vmatpush.msra.mxu0 0.0
    %583 = vmatpush.msra.mxu0 0.0
    %584 = vmatpush.msra.mxu0 0.0
    %585 = vmatpush.msra.mxu0 0.0
    %586 = vmatpush.msra.mxu0 0.0
    %587 = vmatpush.msra.mxu0 0.0
    %588 = vmatpush.msra.mxu0 0.0
    %589 = vmatpush.msra.mxu0 0.0
    %590 = vmatpush.msra.mxu0 %v14
    %591 = vmatmul.f32.gmra.mxu0 %v573
    %v592 = vpop.f32.mrf.mxu0
    %v593 = vadd.f32 %v570, %v592
    %594 = vdwg.mxu0
    %v595 = vld [vmem:[#allocation2 + $0x1] sm:$0x1]
    %v596 = vadd.f32 %v593, %v595
    %v597 = vsub.f32 0.0, %v596
    %v598 = vmul.f32 %v597, 1.442695
    %v599 = vpow.pop %v598
    %v600 = vadd.f32 %v599, 1.0
    %v601 = vrcp.pop %v600
    %v602 = vmul.f32 %v600, %v601
    %v603 = vsub.f32 1.0, %v602
    %v604 = vmul.f32 %v601, %v603
    %v605 = vadd.f32 %v601, %v604
    %vm606 = vweird.f32 %v600
    %vm607 = vweird.f32 %v601
    %vm608 = vmor %vm606, %vm607
    %v609 = vsel %vm608, %v601, %v605
    %v610 = vand.u32 2147483647, %v600
    %vm611 = vcmp.eq.f32.partialorder %v610, 8.507059e+37
    %v612 = vand.u32 %v600, 2147483648
    %v613 = vor.u32 1.1754944e-38, %v612
    %v614 = vsel %vm611, %v613, %v609
    %v615 = vmul.f32 1.0, %v614
    %v616 = vmul.f32 %v615, 2.0
    %v617 = vsub.f32 %v616, 1.0
    %v618 = vmul.f32 %v325, %v615
    %620 = vrot.lane.b32.xlu0 %v617, 112
    %v621 = vpop.permute.xlu0 %620
    %v623 = vmul.f32 %v615, %v621
    %625 = vrot.lane.b32.xlu0 %v623, 120
    %v626 = vpop.permute.xlu0 %625
    %v628 = vadd.f32 %v618, %v626
    %v629 = vtanh.pop %v628
    %631 = vrot.lane.b32.xlu0 %v629, 16
    %v632 = vpop.permute.xlu0 %631
    %v634 = vmul.f32 %v615, %v632
    %vm635 = vcmp.lt.f32.partialorder %v634, 0.0
    %v636 = vsel %vm635, -1.0, 1.0
    %v637 = vand.u32 2147483647, %v634
    %vm638 = vcmp.gt.f32.partialorder %v637, 2.4142137
    %vm639 = vcmp.gt.f32.partialorder %v637, 0.41421357
    %v640 = vsub.f32 %v637, 1.0
    %v641 = vsel %vm639, %v640, %v637
    %v642 = vsel %vm638, -1.0, %v641
    %v643 = vmax.f32 %v637, 1e-30
    %v644 = vadd.f32 %v637, 1.0
    %v645 = vsel %vm639, %v644, 1.0
    %v646 = vsel %vm638, %v643, %v645
    %v647 = vrcp.pop %v646
    %v648 = vmul.f32 %v646, %v647
    %v649 = vsub.f32 1.0, %v648
    %v650 = vmul.f32 %v647, %v649
    %v651 = vadd.f32 %v647, %v650
    %vm652 = vweird.f32 %v646
    %vm653 = vweird.f32 %v647
    %vm654 = vmor %vm652, %vm653
    %v655 = vsel %vm654, %v647, %v651
    %v656 = vand.u32 2147483647, %v646
    %vm657 = vcmp.eq.f32.partialorder %v656, 8.507059e+37
    %v658 = vand.u32 %v646, 2147483648
    %v659 = vor.u32 1.1754944e-38, %v658
    %v660 = vsel %vm657, %v659, %v655
    %v661 = vmul.f32 %v642, %v660
    %v662 = vsel %vm639, 0.7853982, 0.0
    %v663 = vsel %vm638, 1.5707964, %v662
    %v664 = vmul.f32 %v661, %v661
    %v665 = vmul.f32 %v664, 0.080537446
    %v666 = vsub.f32 %v665, 0.13877685
    %v667 = vmul.f32 %v666, %v664
    %v668 = vadd.f32 %v667, 0.19977711
    %v669 = vmul.f32 %v668, %v664
    %v670 = vsub.f32 %v669, 0.3333295
    %v671 = vadd.f32 %v663, %v661
    %v672 = vmul.f32 %v661, %v664
    %v673 = vmul.f32 %v672, %v670
    %v674 = vadd.f32 %v671, %v673
    %v675 = vmul.f32 %v636, %v674
    %v676 = vmul.f32 %v634, %v634
    %vm677 = vcmp.lt.f32.partialorder %v676, 0.0
    %v678 = vsel %vm677, -1.0, 1.0
    %v679 = vand.u32 2147483647, %v676
    %vm680 = vcmp.gt.f32.partialorder %v679, 2.4142137
    %vm681 = vcmp.gt.f32.partialorder %v679, 0.41421357
    %v682 = vsub.f32 %v679, 1.0
    %v683 = vsel %vm681, %v682, %v679
    %v684 = vsel %vm680, -1.0, %v683
    %v685 = vmax.f32 %v679, 1e-30
    %v686 = vadd.f32 %v679, 1.0
    %v687 = vsel %vm681, %v686, 1.0
    %v688 = vsel %vm680, %v685, %v687
    %v689 = vrcp.pop %v688
    %v690 = vmul.f32 %v688, %v689
    %v691 = vsub.f32 1.0, %v690
    %v692 = vmul.f32 %v689, %v691
    %v693 = vadd.f32 %v689, %v692
    %vm694 = vweird.f32 %v688
    %vm695 = vweird.f32 %v689
    %vm696 = vmor %vm694, %vm695
    %v697 = vsel %vm696, %v689, %v693
    %v698 = vand.u32 2147483647, %v688
    %vm699 = vcmp.eq.f32.partialorder %v698, 8.507059e+37
    %v700 = vand.u32 %v688, 2147483648
    %v701 = vor.u32 1.1754944e-38, %v700
    %v702 = vsel %vm699, %v701, %v697
    %v703 = vmul.f32 %v684, %v702
    %v704 = vsel %vm681, 0.7853982, 0.0
    %v705 = vsel %vm680, 1.5707964, %v704
    %v706 = vmul.f32 %v703, %v703
    %v707 = vmul.f32 %v706, 0.080537446
    %v708 = vsub.f32 %v707, 0.13877685
    %v709 = vmul.f32 %v708, %v706
    %v710 = vadd.f32 %v709, 0.19977711
    %v711 = vmul.f32 %v710, %v706
    %v712 = vsub.f32 %v711, 0.3333295
    %v713 = vadd.f32 %v705, %v703
    %v714 = vmul.f32 %v703, %v706
    %v715 = vmul.f32 %v714, %v712
    %v716 = vadd.f32 %v713, %v715
    %v717 = vmul.f32 %v678, %v716
    %719 = vrot.lane.b32.xlu0 %v717, 112
    %v720 = vpop.permute.xlu0 %719
    %v721 = vsel %vm112, %v720, 0
    %723 = vmatpush.msra.mxu0 0.0
    %724 = vmatpush.msra.mxu0 0.0
    %725 = vmatpush.msra.mxu0 0.0
    %726 = vmatpush.msra.mxu0 0.0
    %727 = vmatpush.msra.mxu0 0.0
    %728 = vmatpush.msra.mxu0 0.0
    %729 = vmatpush.msra.mxu0 0.0
    %730 = vmatpush.msra.mxu0 0.0
    %731 = vmatpush.msra.mxu0 0.0
    %732 = vmatpush.msra.mxu0 0.0
    %733 = vmatpush.msra.mxu0 0.0
    %734 = vmatpush.msra.mxu0 0.0
    %735 = vmatpush.msra.mxu0 0.0
    %736 = vmatpush.msra.mxu0 0.0
    %737 = vmatpush.msra.mxu0 0.0
    %738 = vmatpush.msra.mxu0 %v18
    %739 = vmatmul.f32.gmra.mxu0 %v721
    %v740 = vpop.f32.mrf.mxu0
    %v741 = vadd.f32 0.0, %v740
    %742 = vdwg.mxu0
    %744 = vrot.lane.b32.xlu0 %v675, 112
    %v745 = vpop.permute.xlu0 %744
    %v746 = vsel %vm112, %v745, 0
    %748 = vmatpush.msra.mxu0 0.0
    %749 = vmatpush.msra.mxu0 0.0
    %750 = vmatpush.msra.mxu0 0.0
    %751 = vmatpush.msra.mxu0 0.0
    %752 = vmatpush.msra.mxu0 0.0
    %753 = vmatpush.msra.mxu0 0.0
    %754 = vmatpush.msra.mxu0 0.0
    %755 = vmatpush.msra.mxu0 0.0
    %756 = vmatpush.msra.mxu0 0.0
    %757 = vmatpush.msra.mxu0 0.0
    %758 = vmatpush.msra.mxu0 0.0
    %759 = vmatpush.msra.mxu0 0.0
    %760 = vmatpush.msra.mxu0 0.0
    %761 = vmatpush.msra.mxu0 0.0
    %762 = vmatpush.msra.mxu0 0.0
    %763 = vmatpush.msra.mxu0 %v17
    %764 = vmatmul.f32.gmra.mxu0 %v746
    %v765 = vpop.f32.mrf.mxu0
    %v766 = vadd.f32 %v741, %v765
    %767 = vdwg.mxu0
    %v768 = vadd.f32 %v766, %v19
    %vm769 = vcmp.lt.f32.partialorder %v768, 0.0
    %v770 = vsel %vm769, -1.0, 1.0
    %v771 = vand.u32 2147483647, %v768
    %vm772 = vcmp.gt.f32.partialorder %v771, 2.4142137
    %vm773 = vcmp.gt.f32.partialorder %v771, 0.41421357
    %v774 = vsub.f32 %v771, 1.0
    %v775 = vsel %vm773, %v774, %v771
    %v776 = vsel %vm772, -1.0, %v775
    %v777 = vmax.f32 %v771, 1e-30
    %v778 = vadd.f32 %v771, 1.0
    %v779 = vsel %vm773, %v778, 1.0
    %v780 = vsel %vm772, %v777, %v779
    %v781 = vrcp.pop %v780
    %v782 = vmul.f32 %v780, %v781
    %v783 = vsub.f32 1.0, %v782
    %v784 = vmul.f32 %v781, %v783
    %v785 = vadd.f32 %v781, %v784
    %vm786 = vweird.f32 %v780
    %vm787 = vweird.f32 %v781
    %vm788 = vmor %vm786, %vm787
    %v789 = vsel %vm788, %v781, %v785
    %v790 = vand.u32 2147483647, %v780
    %vm791 = vcmp.eq.f32.partialorder %v790, 8.507059e+37
    %v792 = vand.u32 %v780, 2147483648
    %v793 = vor.u32 1.1754944e-38, %v792
    %v794 = vsel %vm791, %v793, %v789
    %v795 = vmul.f32 %v776, %v794
    %v796 = vsel %vm773, 0.7853982, 0.0
    %v797 = vsel %vm772, 1.5707964, %v796
    %v798 = vmul.f32 %v795, %v795
    %v799 = vmul.f32 %v798, 0.080537446
    %v800 = vsub.f32 %v799, 0.13877685
    %v801 = vmul.f32 %v800, %v798
    %v802 = vadd.f32 %v801, 0.19977711
    %v803 = vmul.f32 %v802, %v798
    %v804 = vsub.f32 %v803, 0.3333295
    %v805 = vadd.f32 %v797, %v795
    %v806 = vmul.f32 %v795, %v798
    %v807 = vmul.f32 %v806, %v804
    %v808 = vadd.f32 %v805, %v807
    %v809 = vmul.f32 %v770, %v808
    %v810 = vmul.f32 %v768, %v768
    %vm811 = vcmp.lt.f32.partialorder %v810, 0.0
    %v812 = vsel %vm811, -1.0, 1.0
    %v813 = vand.u32 2147483647, %v810
    %vm814 = vcmp.gt.f32.partialorder %v813, 2.4142137
    %vm815 = vcmp.gt.f32.partialorder %v813, 0.41421357
    %v816 = vsub.f32 %v813, 1.0
    %v817 = vsel %vm815, %v816, %v813
    %v818 = vsel %vm814, -1.0, %v817
    %v819 = vmax.f32 %v813, 1e-30
    %v820 = vadd.f32 %v813, 1.0
    %v821 = vsel %vm815, %v820, 1.0
    %v822 = vsel %vm814, %v819, %v821
    %v823 = vrcp.pop %v822
    %v824 = vmul.f32 %v822, %v823
    %v825 = vsub.f32 1.0, %v824
    %v826 = vmul.f32 %v823, %v825
    %v827 = vadd.f32 %v823, %v826
    %vm828 = vweird.f32 %v822
    %vm829 = vweird.f32 %v823
    %vm830 = vmor %vm828, %vm829
    %v831 = vsel %vm830, %v823, %v827
    %v832 = vand.u32 2147483647, %v822
    %vm833 = vcmp.eq.f32.partialorder %v832, 8.507059e+37
    %v834 = vand.u32 %v822, 2147483648
    %v835 = vor.u32 1.1754944e-38, %v834
    %v836 = vsel %vm833, %v835, %v831
    %v837 = vmul.f32 %v818, %v836
    %v838 = vsel %vm815, 0.7853982, 0.0
    %v839 = vsel %vm814, 1.5707964, %v838
    %v840 = vmul.f32 %v837, %v837
    %v841 = vmul.f32 %v840, 0.080537446
    %v842 = vsub.f32 %v841, 0.13877685
    %v843 = vmul.f32 %v842, %v840
    %v844 = vadd.f32 %v843, 0.19977711
    %v845 = vmul.f32 %v844, %v840
    %v846 = vsub.f32 %v845, 0.3333295
    %v847 = vadd.f32 %v839, %v837
    %v848 = vmul.f32 %v837, %v840
    %v849 = vmul.f32 %v848, %v846
    %v850 = vadd.f32 %v847, %v849
    %v851 = vmul.f32 %v812, %v850
    %v853 = vsel %vm112, %v851, 0
    %855 = vmatpush.msra.mxu0 0.0
    %856 = vmatpush.msra.mxu0 0.0
    %857 = vmatpush.msra.mxu0 0.0
    %858 = vmatpush.msra.mxu0 0.0
    %859 = vmatpush.msra.mxu0 0.0
    %860 = vmatpush.msra.mxu0 0.0
    %861 = vmatpush.msra.mxu0 0.0
    %862 = vmatpush.msra.mxu0 0.0
    %863 = vmatpush.msra.mxu0 0.0
    %864 = vmatpush.msra.mxu0 0.0
    %865 = vmatpush.msra.mxu0 0.0
    %866 = vmatpush.msra.mxu0 0.0
    %867 = vmatpush.msra.mxu0 0.0
    %868 = vmatpush.msra.mxu0 0.0
    %869 = vmatpush.msra.mxu0 0.0
    %870 = vmatpush.msra.mxu0 %v15
    %871 = vmatmul.f32.gmra.mxu0 %v853
    %v872 = vpop.f32.mrf.mxu0
    %v873 = vadd.f32 0.0, %v872
    %874 = vdwg.mxu0
    %v876 = vsel %vm112, %v809, 0
    %878 = vmatpush.msra.mxu0 0.0
    %879 = vmatpush.msra.mxu0 0.0
    %880 = vmatpush.msra.mxu0 0.0
    %881 = vmatpush.msra.mxu0 0.0
    %882 = vmatpush.msra.mxu0 0.0
    %883 = vmatpush.msra.mxu0 0.0
    %884 = vmatpush.msra.mxu0 0.0
    %885 = vmatpush.msra.mxu0 0.0
    %886 = vmatpush.msra.mxu0 0.0
    %887 = vmatpush.msra.mxu0 0.0
    %888 = vmatpush.msra.mxu0 0.0
    %889 = vmatpush.msra.mxu0 0.0
    %890 = vmatpush.msra.mxu0 0.0
    %891 = vmatpush.msra.mxu0 0.0
    %892 = vmatpush.msra.mxu0 0.0
    %893 = vmatpush.msra.mxu0 %v14
    %894 = vmatmul.f32.gmra.mxu0 %v876
    %v895 = vpop.f32.mrf.mxu0
    %v896 = vadd.f32 %v873, %v895
    %897 = vdwg.mxu0
    %v898 = vld [vmem:[#allocation2 + $0x2] sm:$0x1]
    %v899 = vadd.f32 %v896, %v898
    %v900 = vsub.f32 0.0, %v899
    %v901 = vmul.f32 %v900, 1.442695
    %v902 = vpow.pop %v901
    %v903 = vadd.f32 %v902, 1.0
    %v904 = vrcp.pop %v903
    %v905 = vmul.f32 %v903, %v904
    %v906 = vsub.f32 1.0, %v905
    %v907 = vmul.f32 %v904, %v906
    %v908 = vadd.f32 %v904, %v907
    %vm909 = vweird.f32 %v903
    %vm910 = vweird.f32 %v904
    %vm911 = vmor %vm909, %vm910
    %v912 = vsel %vm911, %v904, %v908
    %v913 = vand.u32 2147483647, %v903
    %vm914 = vcmp.eq.f32.partialorder %v913, 8.507059e+37
    %v915 = vand.u32 %v903, 2147483648
    %v916 = vor.u32 1.1754944e-38, %v915
    %v917 = vsel %vm914, %v916, %v912
    %v918 = vmul.f32 1.0, %v917
    %v919 = vmul.f32 %v918, 2.0
    %v920 = vsub.f32 %v919, 1.0
    %v921 = vmul.f32 %v628, %v918
    %923 = vrot.lane.b32.xlu0 %v920, 112
    %v924 = vpop.permute.xlu0 %923
    %v926 = vmul.f32 %v918, %v924
    %928 = vrot.lane.b32.xlu0 %v926, 120
    %v929 = vpop.permute.xlu0 %928
    %v931 = vadd.f32 %v921, %v929
    %v932 = vtanh.pop %v931
    %934 = vrot.lane.b32.xlu0 %v932, 16
    %v935 = vpop.permute.xlu0 %934
    %v937 = vmul.f32 %v918, %v935
    %vm938 = vcmp.lt.f32.partialorder %v937, 0.0
    %v939 = vsel %vm938, -1.0, 1.0
    %v940 = vand.u32 2147483647, %v937
    %vm941 = vcmp.gt.f32.partialorder %v940, 2.4142137
    %vm942 = vcmp.gt.f32.partialorder %v940, 0.41421357
    %v943 = vsub.f32 %v940, 1.0
    %v944 = vsel %vm942, %v943, %v940
    %v945 = vsel %vm941, -1.0, %v944
    %v946 = vmax.f32 %v940, 1e-30
    %v947 = vadd.f32 %v940, 1.0
    %v948 = vsel %vm942, %v947, 1.0
    %v949 = vsel %vm941, %v946, %v948
    %v950 = vrcp.pop %v949
    %v951 = vmul.f32 %v949, %v950
    %v952 = vsub.f32 1.0, %v951
    %v953 = vmul.f32 %v950, %v952
    %v954 = vadd.f32 %v950, %v953
    %vm955 = vweird.f32 %v949
    %vm956 = vweird.f32 %v950
    %vm957 = vmor %vm955, %vm956
    %v958 = vsel %vm957, %v950, %v954
    %v959 = vand.u32 2147483647, %v949
    %vm960 = vcmp.eq.f32.partialorder %v959, 8.507059e+37
    %v961 = vand.u32 %v949, 2147483648
    %v962 = vor.u32 1.1754944e-38, %v961
    %v963 = vsel %vm960, %v962, %v958
    %v964 = vmul.f32 %v945, %v963
    %v965 = vsel %vm942, 0.7853982, 0.0
    %v966 = vsel %vm941, 1.5707964, %v965
    %v967 = vmul.f32 %v964, %v964
    %v968 = vmul.f32 %v967, 0.080537446
    %v969 = vsub.f32 %v968, 0.13877685
    %v970 = vmul.f32 %v969, %v967
    %v971 = vadd.f32 %v970, 0.19977711
    %v972 = vmul.f32 %v971, %v967
    %v973 = vsub.f32 %v972, 0.3333295
    %v974 = vadd.f32 %v966, %v964
    %v975 = vmul.f32 %v964, %v967
    %v976 = vmul.f32 %v975, %v973
    %v977 = vadd.f32 %v974, %v976
    %v978 = vmul.f32 %v939, %v977
    %v979 = vmul.f32 %v937, %v937
    %vm980 = vcmp.lt.f32.partialorder %v979, 0.0
    %v981 = vsel %vm980, -1.0, 1.0
    %v982 = vand.u32 2147483647, %v979
    %vm983 = vcmp.gt.f32.partialorder %v982, 2.4142137
    %vm984 = vcmp.gt.f32.partialorder %v982, 0.41421357
    %v985 = vsub.f32 %v982, 1.0
    %v986 = vsel %vm984, %v985, %v982
    %v987 = vsel %vm983, -1.0, %v986
    %v988 = vmax.f32 %v982, 1e-30
    %v989 = vadd.f32 %v982, 1.0
    %v990 = vsel %vm984, %v989, 1.0
    %v991 = vsel %vm983, %v988, %v990
    %v992 = vrcp.pop %v991
    %v993 = vmul.f32 %v991, %v992
    %v994 = vsub.f32 1.0, %v993
    %v995 = vmul.f32 %v992, %v994
    %v996 = vadd.f32 %v992, %v995
    %vm997 = vweird.f32 %v991
    %vm998 = vweird.f32 %v992
    %vm999 = vmor %vm997, %vm998
    %v1000 = vsel %vm999, %v992, %v996
    %v1001 = vand.u32 2147483647, %v991
    %vm1002 = vcmp.eq.f32.partialorder %v1001, 8.507059e+37
    %v1003 = vand.u32 %v991, 2147483648
    %v1004 = vor.u32 1.1754944e-38, %v1003
    %v1005 = vsel %vm1002, %v1004, %v1000
    %v1006 = vmul.f32 %v987, %v1005
    %v1007 = vsel %vm984, 0.7853982, 0.0
    %v1008 = vsel %vm983, 1.5707964, %v1007
    %v1009 = vmul.f32 %v1006, %v1006
    %v1010 = vmul.f32 %v1009, 0.080537446
    %v1011 = vsub.f32 %v1010, 0.13877685
    %v1012 = vmul.f32 %v1011, %v1009
    %v1013 = vadd.f32 %v1012, 0.19977711
    %v1014 = vmul.f32 %v1013, %v1009
    %v1015 = vsub.f32 %v1014, 0.3333295
    %v1016 = vadd.f32 %v1008, %v1006
    %v1017 = vmul.f32 %v1006, %v1009
    %v1018 = vmul.f32 %v1017, %v1015
    %v1019 = vadd.f32 %v1016, %v1018
    %v1020 = vmul.f32 %v981, %v1019
    %1022 = vrot.lane.b32.xlu0 %v1020, 112
    %v1023 = vpop.permute.xlu0 %1022
    %v1024 = vsel %vm112, %v1023, 0
    %1026 = vmatpush.msra.mxu0 0.0
    %1027 = vmatpush.msra.mxu0 0.0
    %1028 = vmatpush.msra.mxu0 0.0
    %1029 = vmatpush.msra.mxu0 0.0
    %1030 = vmatpush.msra.mxu0 0.0
    %1031 = vmatpush.msra.mxu0 0.0
    %1032 = vmatpush.msra.mxu0 0.0
    %1033 = vmatpush.msra.mxu0 0.0
    %1034 = vmatpush.msra.mxu0 0.0
    %1035 = vmatpush.msra.mxu0 0.0
    %1036 = vmatpush.msra.mxu0 0.0
    %1037 = vmatpush.msra.mxu0 0.0
    %1038 = vmatpush.msra.mxu0 0.0
    %1039 = vmatpush.msra.mxu0 0.0
    %1040 = vmatpush.msra.mxu0 0.0
    %1041 = vmatpush.msra.mxu0 %v18
    %1042 = vmatmul.f32.gmra.mxu0 %v1024
    %v1043 = vpop.f32.mrf.mxu0
    %v1044 = vadd.f32 0.0, %v1043
    %1045 = vdwg.mxu0
    %1047 = vrot.lane.b32.xlu0 %v978, 112
    %v1048 = vpop.permute.xlu0 %1047
    %v1049 = vsel %vm112, %v1048, 0
    %1051 = vmatpush.msra.mxu0 0.0
    %1052 = vmatpush.msra.mxu0 0.0
    %1053 = vmatpush.msra.mxu0 0.0
    %1054 = vmatpush.msra.mxu0 0.0
    %1055 = vmatpush.msra.mxu0 0.0
    %1056 = vmatpush.msra.mxu0 0.0
    %1057 = vmatpush.msra.mxu0 0.0
    %1058 = vmatpush.msra.mxu0 0.0
    %1059 = vmatpush.msra.mxu0 0.0
    %1060 = vmatpush.msra.mxu0 0.0
    %1061 = vmatpush.msra.mxu0 0.0
    %1062 = vmatpush.msra.mxu0 0.0
    %1063 = vmatpush.msra.mxu0 0.0
    %1064 = vmatpush.msra.mxu0 0.0
    %1065 = vmatpush.msra.mxu0 0.0
    %1066 = vmatpush.msra.mxu0 %v17
    %1067 = vmatmul.f32.gmra.mxu0 %v1049
    %v1068 = vpop.f32.mrf.mxu0
    %v1069 = vadd.f32 %v1044, %v1068
    %1070 = vdwg.mxu0
    %v1071 = vadd.f32 %v1069, %v19
    %vm1072 = vcmp.lt.f32.partialorder %v1071, 0.0
    %v1073 = vsel %vm1072, -1.0, 1.0
    %v1074 = vand.u32 2147483647, %v1071
    %vm1075 = vcmp.gt.f32.partialorder %v1074, 2.4142137
    %vm1076 = vcmp.gt.f32.partialorder %v1074, 0.41421357
    %v1077 = vsub.f32 %v1074, 1.0
    %v1078 = vsel %vm1076, %v1077, %v1074
    %v1079 = vsel %vm1075, -1.0, %v1078
    %v1080 = vmax.f32 %v1074, 1e-30
    %v1081 = vadd.f32 %v1074, 1.0
    %v1082 = vsel %vm1076, %v1081, 1.0
    %v1083 = vsel %vm1075, %v1080, %v1082
    %v1084 = vrcp.pop %v1083
    %v1085 = vmul.f32 %v1083, %v1084
    %v1086 = vsub.f32 1.0, %v1085
    %v1087 = vmul.f32 %v1084, %v1086
    %v1088 = vadd.f32 %v1084, %v1087
    %vm1089 = vweird.f32 %v1083
    %vm1090 = vweird.f32 %v1084
    %vm1091 = vmor %vm1089, %vm1090
    %v1092 = vsel %vm1091, %v1084, %v1088
    %v1093 = vand.u32 2147483647, %v1083
    %vm1094 = vcmp.eq.f32.partialorder %v1093, 8.507059e+37
    %v1095 = vand.u32 %v1083, 2147483648
    %v1096 = vor.u32 1.1754944e-38, %v1095
    %v1097 = vsel %vm1094, %v1096, %v1092
    %v1098 = vmul.f32 %v1079, %v1097
    %v1099 = vsel %vm1076, 0.7853982, 0.0
    %v1100 = vsel %vm1075, 1.5707964, %v1099
    %v1101 = vmul.f32 %v1098, %v1098
    %v1102 = vmul.f32 %v1101, 0.080537446
    %v1103 = vsub.f32 %v1102, 0.13877685
    %v1104 = vmul.f32 %v1103, %v1101
    %v1105 = vadd.f32 %v1104, 0.19977711
    %v1106 = vmul.f32 %v1105, %v1101
    %v1107 = vsub.f32 %v1106, 0.3333295
    %v1108 = vadd.f32 %v1100, %v1098
    %v1109 = vmul.f32 %v1098, %v1101
    %v1110 = vmul.f32 %v1109, %v1107
    %v1111 = vadd.f32 %v1108, %v1110
    %v1112 = vmul.f32 %v1073, %v1111
    %v1113 = vmul.f32 %v1071, %v1071
    %vm1114 = vcmp.lt.f32.partialorder %v1113, 0.0
    %v1115 = vsel %vm1114, -1.0, 1.0
    %v1116 = vand.u32 2147483647, %v1113
    %vm1117 = vcmp.gt.f32.partialorder %v1116, 2.4142137
    %vm1118 = vcmp.gt.f32.partialorder %v1116, 0.41421357
    %v1119 = vsub.f32 %v1116, 1.0
    %v1120 = vsel %vm1118, %v1119, %v1116
    %v1121 = vsel %vm1117, -1.0, %v1120
    %v1122 = vmax.f32 %v1116, 1e-30
    %v1123 = vadd.f32 %v1116, 1.0
    %v1124 = vsel %vm1118, %v1123, 1.0
    %v1125 = vsel %vm1117, %v1122, %v1124
    %v1126 = vrcp.pop %v1125
    %v1127 = vmul.f32 %v1125, %v1126
    %v1128 = vsub.f32 1.0, %v1127
    %v1129 = vmul.f32 %v1126, %v1128
    %v1130 = vadd.f32 %v1126, %v1129
    %vm1131 = vweird.f32 %v1125
    %vm1132 = vweird.f32 %v1126
    %vm1133 = vmor %vm1131, %vm1132
    %v1134 = vsel %vm1133, %v1126, %v1130
    %v1135 = vand.u32 2147483647, %v1125
    %vm1136 = vcmp.eq.f32.partialorder %v1135, 8.507059e+37
    %v1137 = vand.u32 %v1125, 2147483648
    %v1138 = vor.u32 1.1754944e-38, %v1137
    %v1139 = vsel %vm1136, %v1138, %v1134
    %v1140 = vmul.f32 %v1121, %v1139
    %v1141 = vsel %vm1118, 0.7853982, 0.0
    %v1142 = vsel %vm1117, 1.5707964, %v1141
    %v1143 = vmul.f32 %v1140, %v1140
    %v1144 = vmul.f32 %v1143, 0.080537446
    %v1145 = vsub.f32 %v1144, 0.13877685
    %v1146 = vmul.f32 %v1145, %v1143
    %v1147 = vadd.f32 %v1146, 0.19977711
    %v1148 = vmul.f32 %v1147, %v1143
    %v1149 = vsub.f32 %v1148, 0.3333295
    %v1150 = vadd.f32 %v1142, %v1140
    %v1151 = vmul.f32 %v1140, %v1143
    %v1152 = vmul.f32 %v1151, %v1149
    %v1153 = vadd.f32 %v1150, %v1152
    %v1154 = vmul.f32 %v1115, %v1153
    %v1156 = vsel %vm112, %v1154, 0
    %1158 = vmatpush.msra.mxu0 0.0
    %1159 = vmatpush.msra.mxu0 0.0
    %1160 = vmatpush.msra.mxu0 0.0
    %1161 = vmatpush.msra.mxu0 0.0
    %1162 = vmatpush.msra.mxu0 0.0
    %1163 = vmatpush.msra.mxu0 0.0
    %1164 = vmatpush.msra.mxu0 0.0
    %1165 = vmatpush.msra.mxu0 0.0
    %1166 = vmatpush.msra.mxu0 0.0
    %1167 = vmatpush.msra.mxu0 0.0
    %1168 = vmatpush.msra.mxu0 0.0
    %1169 = vmatpush.msra.mxu0 0.0
    %1170 = vmatpush.msra.mxu0 0.0
    %1171 = vmatpush.msra.mxu0 0.0
    %1172 = vmatpush.msra.mxu0 0.0
    %1173 = vmatpush.msra.mxu0 %v15
    %1174 = vmatmul.f32.gmra.mxu0 %v1156
    %v1175 = vpop.f32.mrf.mxu0
    %v1176 = vadd.f32 0.0, %v1175
    %1177 = vdwg.mxu0
    %v1179 = vsel %vm112, %v1112, 0
    %1181 = vmatpush.msra.mxu0 0.0
    %1182 = vmatpush.msra.mxu0 0.0
    %1183 = vmatpush.msra.mxu0 0.0
    %1184 = vmatpush.msra.mxu0 0.0
    %1185 = vmatpush.msra.mxu0 0.0
    %1186 = vmatpush.msra.mxu0 0.0
    %1187 = vmatpush.msra.mxu0 0.0
    %1188 = vmatpush.msra.mxu0 0.0
    %1189 = vmatpush.msra.mxu0 0.0
    %1190 = vmatpush.msra.mxu0 0.0
    %1191 = vmatpush.msra.mxu0 0.0
    %1192 = vmatpush.msra.mxu0 0.0
    %1193 = vmatpush.msra.mxu0 0.0
    %1194 = vmatpush.msra.mxu0 0.0
    %1195 = vmatpush.msra.mxu0 0.0
    %1196 = vmatpush.msra.mxu0 %v14
    %1197 = vmatmul.f32.gmra.mxu0 %v1179
    %v1198 = vpop.f32.mrf.mxu0
    %v1199 = vadd.f32 %v1176, %v1198
    %1200 = vdwg.mxu0
    %v1201 = vld [vmem:[#allocation2 + $0x3] sm:$0x1]
    %v1202 = vadd.f32 %v1199, %v1201
    %v1203 = vsub.f32 0.0, %v1202
    %v1204 = vmul.f32 %v1203, 1.442695
    %v1205 = vpow.pop %v1204
    %v1206 = vadd.f32 %v1205, 1.0
    %v1207 = vrcp.pop %v1206
    %v1208 = vmul.f32 %v1206, %v1207
    %v1209 = vsub.f32 1.0, %v1208
    %v1210 = vmul.f32 %v1207, %v1209
    %v1211 = vadd.f32 %v1207, %v1210
    %vm1212 = vweird.f32 %v1206
    %vm1213 = vweird.f32 %v1207
    %vm1214 = vmor %vm1212, %vm1213
    %v1215 = vsel %vm1214, %v1207, %v1211
    %v1216 = vand.u32 2147483647, %v1206
    %vm1217 = vcmp.eq.f32.partialorder %v1216, 8.507059e+37
    %v1218 = vand.u32 %v1206, 2147483648
    %v1219 = vor.u32 1.1754944e-38, %v1218
    %v1220 = vsel %vm1217, %v1219, %v1215
    %v1221 = vmul.f32 1.0, %v1220
    %v1222 = vmul.f32 %v1221, 2.0
    %v1223 = vsub.f32 %v1222, 1.0
    %v1224 = vmul.f32 %v931, %v1221
    %1226 = vrot.lane.b32.xlu0 %v1223, 112
    %v1227 = vpop.permute.xlu0 %1226
    %v1229 = vmul.f32 %v1221, %v1227
    %1231 = vrot.lane.b32.xlu0 %v1229, 120
    %v1232 = vpop.permute.xlu0 %1231
    %v1234 = vadd.f32 %v1224, %v1232
    %v1235 = vtanh.pop %v1234
    %1237 = vrot.lane.b32.xlu0 %v1235, 16
    %v1238 = vpop.permute.xlu0 %1237
    %v1240 = vmul.f32 %v1221, %v1238
    %vm1241 = vcmp.lt.f32.partialorder %v1240, 0.0
    %v1242 = vsel %vm1241, -1.0, 1.0
    %v1243 = vand.u32 2147483647, %v1240
    %vm1244 = vcmp.gt.f32.partialorder %v1243, 2.4142137
    %vm1245 = vcmp.gt.f32.partialorder %v1243, 0.41421357
    %v1246 = vsub.f32 %v1243, 1.0
    %v1247 = vsel %vm1245, %v1246, %v1243
    %v1248 = vsel %vm1244, -1.0, %v1247
    %v1249 = vmax.f32 %v1243, 1e-30
    %v1250 = vadd.f32 %v1243, 1.0
    %v1251 = vsel %vm1245, %v1250, 1.0
    %v1252 = vsel %vm1244, %v1249, %v1251
    %v1253 = vrcp.pop %v1252
    %v1254 = vmul.f32 %v1252, %v1253
    %v1255 = vsub.f32 1.0, %v1254
    %v1256 = vmul.f32 %v1253, %v1255
    %v1257 = vadd.f32 %v1253, %v1256
    %vm1258 = vweird.f32 %v1252
    %vm1259 = vweird.f32 %v1253
    %vm1260 = vmor %vm1258, %vm1259
    %v1261 = vsel %vm1260, %v1253, %v1257
    %v1262 = vand.u32 2147483647, %v1252
    %vm1263 = vcmp.eq.f32.partialorder %v1262, 8.507059e+37
    %v1264 = vand.u32 %v1252, 2147483648
    %v1265 = vor.u32 1.1754944e-38, %v1264
    %v1266 = vsel %vm1263, %v1265, %v1261
    %v1267 = vmul.f32 %v1248, %v1266
    %v1268 = vsel %vm1245, 0.7853982, 0.0
    %v1269 = vsel %vm1244, 1.5707964, %v1268
    %v1270 = vmul.f32 %v1267, %v1267
    %v1271 = vmul.f32 %v1270, 0.080537446
    %v1272 = vsub.f32 %v1271, 0.13877685
    %v1273 = vmul.f32 %v1272, %v1270
    %v1274 = vadd.f32 %v1273, 0.19977711
    %v1275 = vmul.f32 %v1274, %v1270
    %v1276 = vsub.f32 %v1275, 0.3333295
    %v1277 = vadd.f32 %v1269, %v1267
    %v1278 = vmul.f32 %v1267, %v1270
    %v1279 = vmul.f32 %v1278, %v1276
    %v1280 = vadd.f32 %v1277, %v1279
    %v1281 = vmul.f32 %v1242, %v1280
    %v1282 = vmul.f32 %v1240, %v1240
    %vm1283 = vcmp.lt.f32.partialorder %v1282, 0.0
    %v1284 = vsel %vm1283, -1.0, 1.0
    %v1285 = vand.u32 2147483647, %v1282
    %vm1286 = vcmp.gt.f32.partialorder %v1285, 2.4142137
    %vm1287 = vcmp.gt.f32.partialorder %v1285, 0.41421357
    %v1288 = vsub.f32 %v1285, 1.0
    %v1289 = vsel %vm1287, %v1288, %v1285
    %v1290 = vsel %vm1286, -1.0, %v1289
    %v1291 = vmax.f32 %v1285, 1e-30
    %v1292 = vadd.f32 %v1285, 1.0
    %v1293 = vsel %vm1287, %v1292, 1.0
    %v1294 = vsel %vm1286, %v1291, %v1293
    %v1295 = vrcp.pop %v1294
    %v1296 = vmul.f32 %v1294, %v1295
    %v1297 = vsub.f32 1.0, %v1296
    %v1298 = vmul.f32 %v1295, %v1297
    %v1299 = vadd.f32 %v1295, %v1298
    %vm1300 = vweird.f32 %v1294
    %vm1301 = vweird.f32 %v1295
    %vm1302 = vmor %vm1300, %vm1301
    %v1303 = vsel %vm1302, %v1295, %v1299
    %v1304 = vand.u32 2147483647, %v1294
    %vm1305 = vcmp.eq.f32.partialorder %v1304, 8.507059e+37
    %v1306 = vand.u32 %v1294, 2147483648
    %v1307 = vor.u32 1.1754944e-38, %v1306
    %v1308 = vsel %vm1305, %v1307, %v1303
    %v1309 = vmul.f32 %v1290, %v1308
    %v1310 = vsel %vm1287, 0.7853982, 0.0
    %v1311 = vsel %vm1286, 1.5707964, %v1310
    %v1312 = vmul.f32 %v1309, %v1309
    %v1313 = vmul.f32 %v1312, 0.080537446
    %v1314 = vsub.f32 %v1313, 0.13877685
    %v1315 = vmul.f32 %v1314, %v1312
    %v1316 = vadd.f32 %v1315, 0.19977711
    %v1317 = vmul.f32 %v1316, %v1312
    %v1318 = vsub.f32 %v1317, 0.3333295
    %v1319 = vadd.f32 %v1311, %v1309
    %v1320 = vmul.f32 %v1309, %v1312
    %v1321 = vmul.f32 %v1320, %v1318
    %v1322 = vadd.f32 %v1319, %v1321
    %v1323 = vmul.f32 %v1284, %v1322
    %1325 = vrot.lane.b32.xlu0 %v1323, 112
    %v1326 = vpop.permute.xlu0 %1325
    %v1327 = vsel %vm112, %v1326, 0
    %1329 = vmatpush.msra.mxu0 0.0
    %1330 = vmatpush.msra.mxu0 0.0
    %1331 = vmatpush.msra.mxu0 0.0
    %1332 = vmatpush.msra.mxu0 0.0
    %1333 = vmatpush.msra.mxu0 0.0
    %1334 = vmatpush.msra.mxu0 0.0
    %1335 = vmatpush.msra.mxu0 0.0
    %1336 = vmatpush.msra.mxu0 0.0
    %1337 = vmatpush.msra.mxu0 0.0
    %1338 = vmatpush.msra.mxu0 0.0
    %1339 = vmatpush.msra.mxu0 0.0
    %1340 = vmatpush.msra.mxu0 0.0
    %1341 = vmatpush.msra.mxu0 0.0
    %1342 = vmatpush.msra.mxu0 0.0
    %1343 = vmatpush.msra.mxu0 0.0
    %1344 = vmatpush.msra.mxu0 %v18
    %1345 = vmatmul.f32.gmra.mxu0 %v1327
    %v1346 = vpop.f32.mrf.mxu0
    %v1347 = vadd.f32 0.0, %v1346
    %1348 = vdwg.mxu0
    %1350 = vrot.lane.b32.xlu0 %v1281, 112
    %v1351 = vpop.permute.xlu0 %1350
    %v1352 = vsel %vm112, %v1351, 0
    %1354 = vmatpush.msra.mxu0 0.0
    %1355 = vmatpush.msra.mxu0 0.0
    %1356 = vmatpush.msra.mxu0 0.0
    %1357 = vmatpush.msra.mxu0 0.0
    %1358 = vmatpush.msra.mxu0 0.0
    %1359 = vmatpush.msra.mxu0 0.0
    %1360 = vmatpush.msra.mxu0 0.0
    %1361 = vmatpush.msra.mxu0 0.0
    %1362 = vmatpush.msra.mxu0 0.0
    %1363 = vmatpush.msra.mxu0 0.0
    %1364 = vmatpush.msra.mxu0 0.0
    %1365 = vmatpush.msra.mxu0 0.0
    %1366 = vmatpush.msra.mxu0 0.0
    %1367 = vmatpush.msra.mxu0 0.0
    %1368 = vmatpush.msra.mxu0 0.0
    %1369 = vmatpush.msra.mxu0 %v17
    %1370 = vmatmul.f32.gmra.mxu0 %v1352
    %v1371 = vpop.f32.mrf.mxu0
    %v1372 = vadd.f32 %v1347, %v1371
    %1373 = vdwg.mxu0
    %v1374 = vadd.f32 %v1372, %v19
    %vm1375 = vcmp.lt.f32.partialorder %v1374, 0.0
    %v1376 = vsel %vm1375, -1.0, 1.0
    %v1377 = vand.u32 2147483647, %v1374
    %vm1378 = vcmp.gt.f32.partialorder %v1377, 2.4142137
    %vm1379 = vcmp.gt.f32.partialorder %v1377, 0.41421357
    %v1380 = vsub.f32 %v1377, 1.0
    %v1381 = vsel %vm1379, %v1380, %v1377
    %v1382 = vsel %vm1378, -1.0, %v1381
    %v1383 = vmax.f32 %v1377, 1e-30
    %v1384 = vadd.f32 %v1377, 1.0
    %v1385 = vsel %vm1379, %v1384, 1.0
    %v1386 = vsel %vm1378, %v1383, %v1385
    %v1387 = vrcp.pop %v1386
    %v1388 = vmul.f32 %v1386, %v1387
    %v1389 = vsub.f32 1.0, %v1388
    %v1390 = vmul.f32 %v1387, %v1389
    %v1391 = vadd.f32 %v1387, %v1390
    %vm1392 = vweird.f32 %v1386
    %vm1393 = vweird.f32 %v1387
    %vm1394 = vmor %vm1392, %vm1393
    %v1395 = vsel %vm1394, %v1387, %v1391
    %v1396 = vand.u32 2147483647, %v1386
    %vm1397 = vcmp.eq.f32.partialorder %v1396, 8.507059e+37
    %v1398 = vand.u32 %v1386, 2147483648
    %v1399 = vor.u32 1.1754944e-38, %v1398
    %v1400 = vsel %vm1397, %v1399, %v1395
    %v1401 = vmul.f32 %v1382, %v1400
    %v1402 = vsel %vm1379, 0.7853982, 0.0
    %v1403 = vsel %vm1378, 1.5707964, %v1402
    %v1404 = vmul.f32 %v1401, %v1401
    %v1405 = vmul.f32 %v1404, 0.080537446
    %v1406 = vsub.f32 %v1405, 0.13877685
    %v1407 = vmul.f32 %v1406, %v1404
    %v1408 = vadd.f32 %v1407, 0.19977711
    %v1409 = vmul.f32 %v1408, %v1404
    %v1410 = vsub.f32 %v1409, 0.3333295
    %v1411 = vadd.f32 %v1403, %v1401
    %v1412 = vmul.f32 %v1401, %v1404
    %v1413 = vmul.f32 %v1412, %v1410
    %v1414 = vadd.f32 %v1411, %v1413
    %v1415 = vmul.f32 %v1376, %v1414
    %v1416 = vmul.f32 %v1374, %v1374
    %vm1417 = vcmp.lt.f32.partialorder %v1416, 0.0
    %v1418 = vsel %vm1417, -1.0, 1.0
    %v1419 = vand.u32 2147483647, %v1416
    %vm1420 = vcmp.gt.f32.partialorder %v1419, 2.4142137
    %vm1421 = vcmp.gt.f32.partialorder %v1419, 0.41421357
    %v1422 = vsub.f32 %v1419, 1.0
    %v1423 = vsel %vm1421, %v1422, %v1419
    %v1424 = vsel %vm1420, -1.0, %v1423
    %v1425 = vmax.f32 %v1419, 1e-30
    %v1426 = vadd.f32 %v1419, 1.0
    %v1427 = vsel %vm1421, %v1426, 1.0
    %v1428 = vsel %vm1420, %v1425, %v1427
    %v1429 = vrcp.pop %v1428
    %v1430 = vmul.f32 %v1428, %v1429
    %v1431 = vsub.f32 1.0, %v1430
    %v1432 = vmul.f32 %v1429, %v1431
    %v1433 = vadd.f32 %v1429, %v1432
    %vm1434 = vweird.f32 %v1428
    %vm1435 = vweird.f32 %v1429
    %vm1436 = vmor %vm1434, %vm1435
    %v1437 = vsel %vm1436, %v1429, %v1433
    %v1438 = vand.u32 2147483647, %v1428
    %vm1439 = vcmp.eq.f32.partialorder %v1438, 8.507059e+37
    %v1440 = vand.u32 %v1428, 2147483648
    %v1441 = vor.u32 1.1754944e-38, %v1440
    %v1442 = vsel %vm1439, %v1441, %v1437
    %v1443 = vmul.f32 %v1424, %v1442
    %v1444 = vsel %vm1421, 0.7853982, 0.0
    %v1445 = vsel %vm1420, 1.5707964, %v1444
    %v1446 = vmul.f32 %v1443, %v1443
    %v1447 = vmul.f32 %v1446, 0.080537446
    %v1448 = vsub.f32 %v1447, 0.13877685
    %v1449 = vmul.f32 %v1448, %v1446
    %v1450 = vadd.f32 %v1449, 0.19977711
    %v1451 = vmul.f32 %v1450, %v1446
    %v1452 = vsub.f32 %v1451, 0.3333295
    %v1453 = vadd.f32 %v1445, %v1443
    %v1454 = vmul.f32 %v1443, %v1446
    %v1455 = vmul.f32 %v1454, %v1452
    %v1456 = vadd.f32 %v1453, %v1455
    %v1457 = vmul.f32 %v1418, %v1456
    %v1459 = vsel %vm112, %v1457, 0
    %1461 = vmatpush.msra.mxu0 0.0
    %1462 = vmatpush.msra.mxu0 0.0
    %1463 = vmatpush.msra.mxu0 0.0
    %1464 = vmatpush.msra.mxu0 0.0
    %1465 = vmatpush.msra.mxu0 0.0
    %1466 = vmatpush.msra.mxu0 0.0
    %1467 = vmatpush.msra.mxu0 0.0
    %1468 = vmatpush.msra.mxu0 0.0
    %1469 = vmatpush.msra.mxu0 0.0
    %1470 = vmatpush.msra.mxu0 0.0
    %1471 = vmatpush.msra.mxu0 0.0
    %1472 = vmatpush.msra.mxu0 0.0
    %1473 = vmatpush.msra.mxu0 0.0
    %1474 = vmatpush.msra.mxu0 0.0
    %1475 = vmatpush.msra.mxu0 0.0
    %1476 = vmatpush.msra.mxu0 %v15
    %1477 = vmatmul.f32.gmra.mxu0 %v1459
    %v1478 = vpop.f32.mrf.mxu0
    %v1479 = vadd.f32 0.0, %v1478
    %1480 = vdwg.mxu0
    %v1482 = vsel %vm112, %v1415, 0
    %1484 = vmatpush.msra.mxu0 0.0
    %1485 = vmatpush.msra.mxu0 0.0
    %1486 = vmatpush.msra.mxu0 0.0
    %1487 = vmatpush.msra.mxu0 0.0
    %1488 = vmatpush.msra.mxu0 0.0
    %1489 = vmatpush.msra.mxu0 0.0
    %1490 = vmatpush.msra.mxu0 0.0
    %1491 = vmatpush.msra.mxu0 0.0
    %1492 = vmatpush.msra.mxu0 0.0
    %1493 = vmatpush.msra.mxu0 0.0
    %1494 = vmatpush.msra.mxu0 0.0
    %1495 = vmatpush.msra.mxu0 0.0
    %1496 = vmatpush.msra.mxu0 0.0
    %1497 = vmatpush.msra.mxu0 0.0
    %1498 = vmatpush.msra.mxu0 0.0
    %1499 = vmatpush.msra.mxu0 %v14
    %1500 = vmatmul.f32.gmra.mxu0 %v1482
    %v1501 = vpop.f32.mrf.mxu0
    %v1502 = vadd.f32 %v1479, %v1501
    %1503 = vdwg.mxu0
    %v1504 = vld [vmem:[#allocation2 + $0x4] sm:$0x1]
    %v1505 = vadd.f32 %v1502, %v1504
    %v1506 = vsub.f32 0.0, %v1505
    %v1507 = vmul.f32 %v1506, 1.442695
    %v1508 = vpow.pop %v1507
    %v1509 = vadd.f32 %v1508, 1.0
    %v1510 = vrcp.pop %v1509
    %v1511 = vmul.f32 %v1509, %v1510
    %v1512 = vsub.f32 1.0, %v1511
    %v1513 = vmul.f32 %v1510, %v1512
    %v1514 = vadd.f32 %v1510, %v1513
    %vm1515 = vweird.f32 %v1509
    %vm1516 = vweird.f32 %v1510
    %vm1517 = vmor %vm1515, %vm1516
    %v1518 = vsel %vm1517, %v1510, %v1514
    %v1519 = vand.u32 2147483647, %v1509
    %vm1520 = vcmp.eq.f32.partialorder %v1519, 8.507059e+37
    %v1521 = vand.u32 %v1509, 2147483648
    %v1522 = vor.u32 1.1754944e-38, %v1521
    %v1523 = vsel %vm1520, %v1522, %v1518
    %v1524 = vmul.f32 1.0, %v1523
    %v1525 = vmul.f32 %v1524, 2.0
    %v1526 = vsub.f32 %v1525, 1.0
    %v1527 = vmul.f32 %v1234, %v1524
    %1529 = vrot.lane.b32.xlu0 %v1526, 112
    %v1530 = vpop.permute.xlu0 %1529
    %v1532 = vmul.f32 %v1524, %v1530
    %1534 = vrot.lane.b32.xlu0 %v1532, 120
    %v1535 = vpop.permute.xlu0 %1534
    %v1537 = vadd.f32 %v1527, %v1535
    %v1538 = vtanh.pop %v1537
    %1540 = vrot.lane.b32.xlu0 %v1538, 16
    %v1541 = vpop.permute.xlu0 %1540
    %v1543 = vmul.f32 %v1524, %v1541
    %vm1544 = vcmp.lt.f32.partialorder %v1543, 0.0
    %v1545 = vsel %vm1544, -1.0, 1.0
    %v1546 = vand.u32 2147483647, %v1543
    %vm1547 = vcmp.gt.f32.partialorder %v1546, 2.4142137
    %vm1548 = vcmp.gt.f32.partialorder %v1546, 0.41421357
    %v1549 = vsub.f32 %v1546, 1.0
    %v1550 = vsel %vm1548, %v1549, %v1546
    %v1551 = vsel %vm1547, -1.0, %v1550
    %v1552 = vmax.f32 %v1546, 1e-30
    %v1553 = vadd.f32 %v1546, 1.0
    %v1554 = vsel %vm1548, %v1553, 1.0
    %v1555 = vsel %vm1547, %v1552, %v1554
    %v1556 = vrcp.pop %v1555
    %v1557 = vmul.f32 %v1555, %v1556
    %v1558 = vsub.f32 1.0, %v1557
    %v1559 = vmul.f32 %v1556, %v1558
    %v1560 = vadd.f32 %v1556, %v1559
    %vm1561 = vweird.f32 %v1555
    %vm1562 = vweird.f32 %v1556
    %vm1563 = vmor %vm1561, %vm1562
    %v1564 = vsel %vm1563, %v1556, %v1560
    %v1565 = vand.u32 2147483647, %v1555
    %vm1566 = vcmp.eq.f32.partialorder %v1565, 8.507059e+37
    %v1567 = vand.u32 %v1555, 2147483648
    %v1568 = vor.u32 1.1754944e-38, %v1567
    %v1569 = vsel %vm1566, %v1568, %v1564
    %v1570 = vmul.f32 %v1551, %v1569
    %v1571 = vsel %vm1548, 0.7853982, 0.0
    %v1572 = vsel %vm1547, 1.5707964, %v1571
    %v1573 = vmul.f32 %v1570, %v1570
    %v1574 = vmul.f32 %v1573, 0.080537446
    %v1575 = vsub.f32 %v1574, 0.13877685
    %v1576 = vmul.f32 %v1575, %v1573
    %v1577 = vadd.f32 %v1576, 0.19977711
    %v1578 = vmul.f32 %v1577, %v1573
    %v1579 = vsub.f32 %v1578, 0.3333295
    %v1580 = vadd.f32 %v1572, %v1570
    %v1581 = vmul.f32 %v1570, %v1573
    %v1582 = vmul.f32 %v1581, %v1579
    %v1583 = vadd.f32 %v1580, %v1582
    %v1584 = vmul.f32 %v1545, %v1583
    %v1585 = vmul.f32 %v1543, %v1543
    %vm1586 = vcmp.lt.f32.partialorder %v1585, 0.0
    %v1587 = vsel %vm1586, -1.0, 1.0
    %v1588 = vand.u32 2147483647, %v1585
    %vm1589 = vcmp.gt.f32.partialorder %v1588, 2.4142137
    %vm1590 = vcmp.gt.f32.partialorder %v1588, 0.41421357
    %v1591 = vsub.f32 %v1588, 1.0
    %v1592 = vsel %vm1590, %v1591, %v1588
    %v1593 = vsel %vm1589, -1.0, %v1592
    %v1594 = vmax.f32 %v1588, 1e-30
    %v1595 = vadd.f32 %v1588, 1.0
    %v1596 = vsel %vm1590, %v1595, 1.0
    %v1597 = vsel %vm1589, %v1594, %v1596
    %v1598 = vrcp.pop %v1597
    %v1599 = vmul.f32 %v1597, %v1598
    %v1600 = vsub.f32 1.0, %v1599
    %v1601 = vmul.f32 %v1598, %v1600
    %v1602 = vadd.f32 %v1598, %v1601
    %vm1603 = vweird.f32 %v1597
    %vm1604 = vweird.f32 %v1598
    %vm1605 = vmor %vm1603, %vm1604
    %v1606 = vsel %vm1605, %v1598, %v1602
    %v1607 = vand.u32 2147483647, %v1597
    %vm1608 = vcmp.eq.f32.partialorder %v1607, 8.507059e+37
    %v1609 = vand.u32 %v1597, 2147483648
    %v1610 = vor.u32 1.1754944e-38, %v1609
    %v1611 = vsel %vm1608, %v1610, %v1606
    %v1612 = vmul.f32 %v1593, %v1611
    %v1613 = vsel %vm1590, 0.7853982, 0.0
    %v1614 = vsel %vm1589, 1.5707964, %v1613
    %v1615 = vmul.f32 %v1612, %v1612
    %v1616 = vmul.f32 %v1615, 0.080537446
    %v1617 = vsub.f32 %v1616, 0.13877685
    %v1618 = vmul.f32 %v1617, %v1615
    %v1619 = vadd.f32 %v1618, 0.19977711
    %v1620 = vmul.f32 %v1619, %v1615
    %v1621 = vsub.f32 %v1620, 0.3333295
    %v1622 = vadd.f32 %v1614, %v1612
    %v1623 = vmul.f32 %v1612, %v1615
    %v1624 = vmul.f32 %v1623, %v1621
    %v1625 = vadd.f32 %v1622, %v1624
    %v1626 = vmul.f32 %v1587, %v1625
    %1628 = vrot.lane.b32.xlu0 %v1626, 112
    %v1629 = vpop.permute.xlu0 %1628
    %v1630 = vsel %vm112, %v1629, 0
    %1632 = vmatpush.msra.mxu0 0.0
    %1633 = vmatpush.msra.mxu0 0.0
    %1634 = vmatpush.msra.mxu0 0.0
    %1635 = vmatpush.msra.mxu0 0.0
    %1636 = vmatpush.msra.mxu0 0.0
    %1637 = vmatpush.msra.mxu0 0.0
    %1638 = vmatpush.msra.mxu0 0.0
    %1639 = vmatpush.msra.mxu0 0.0
    %1640 = vmatpush.msra.mxu0 0.0
    %1641 = vmatpush.msra.mxu0 0.0
    %1642 = vmatpush.msra.mxu0 0.0
    %1643 = vmatpush.msra.mxu0 0.0
    %1644 = vmatpush.msra.mxu0 0.0
    %1645 = vmatpush.msra.mxu0 0.0
    %1646 = vmatpush.msra.mxu0 0.0
    %1647 = vmatpush.msra.mxu0 %v18
    %1648 = vmatmul.f32.gmra.mxu0 %v1630
    %v1649 = vpop.f32.mrf.mxu0
    %v1650 = vadd.f32 0.0, %v1649
    %1651 = vdwg.mxu0
    %1653 = vrot.lane.b32.xlu0 %v1584, 112
    %v1654 = vpop.permute.xlu0 %1653
    %v1655 = vsel %vm112, %v1654, 0
    %1657 = vmatpush.msra.mxu0 0.0
    %1658 = vmatpush.msra.mxu0 0.0
    %1659 = vmatpush.msra.mxu0 0.0
    %1660 = vmatpush.msra.mxu0 0.0
    %1661 = vmatpush.msra.mxu0 0.0
    %1662 = vmatpush.msra.mxu0 0.0
    %1663 = vmatpush.msra.mxu0 0.0
    %1664 = vmatpush.msra.mxu0 0.0
    %1665 = vmatpush.msra.mxu0 0.0
    %1666 = vmatpush.msra.mxu0 0.0
    %1667 = vmatpush.msra.mxu0 0.0
    %1668 = vmatpush.msra.mxu0 0.0
    %1669 = vmatpush.msra.mxu0 0.0
    %1670 = vmatpush.msra.mxu0 0.0
    %1671 = vmatpush.msra.mxu0 0.0
    %1672 = vmatpush.msra.mxu0 %v17
    %1673 = vmatmul.f32.gmra.mxu0 %v1655
    %v1674 = vpop.f32.mrf.mxu0
    %v1675 = vadd.f32 %v1650, %v1674
    %1676 = vdwg.mxu0
    %v1677 = vadd.f32 %v1675, %v19
    %vm1678 = vcmp.lt.f32.partialorder %v1677, 0.0
    %v1679 = vsel %vm1678, -1.0, 1.0
    %v1680 = vand.u32 2147483647, %v1677
    %vm1681 = vcmp.gt.f32.partialorder %v1680, 2.4142137
    %vm1682 = vcmp.gt.f32.partialorder %v1680, 0.41421357
    %v1683 = vsub.f32 %v1680, 1.0
    %v1684 = vsel %vm1682, %v1683, %v1680
    %v1685 = vsel %vm1681, -1.0, %v1684
    %v1686 = vmax.f32 %v1680, 1e-30
    %v1687 = vadd.f32 %v1680, 1.0
    %v1688 = vsel %vm1682, %v1687, 1.0
    %v1689 = vsel %vm1681, %v1686, %v1688
    %v1690 = vrcp.pop %v1689
    %v1691 = vmul.f32 %v1689, %v1690
    %v1692 = vsub.f32 1.0, %v1691
    %v1693 = vmul.f32 %v1690, %v1692
    %v1694 = vadd.f32 %v1690, %v1693
    %vm1695 = vweird.f32 %v1689
    %vm1696 = vweird.f32 %v1690
    %vm1697 = vmor %vm1695, %vm1696
    %v1698 = vsel %vm1697, %v1690, %v1694
    %v1699 = vand.u32 2147483647, %v1689
    %vm1700 = vcmp.eq.f32.partialorder %v1699, 8.507059e+37
    %v1701 = vand.u32 %v1689, 2147483648
    %v1702 = vor.u32 1.1754944e-38, %v1701
    %v1703 = vsel %vm1700, %v1702, %v1698
    %v1704 = vmul.f32 %v1685, %v1703
    %v1705 = vsel %vm1682, 0.7853982, 0.0
    %v1706 = vsel %vm1681, 1.5707964, %v1705
    %v1707 = vmul.f32 %v1704, %v1704
    %v1708 = vmul.f32 %v1707, 0.080537446
    %v1709 = vsub.f32 %v1708, 0.13877685
    %v1710 = vmul.f32 %v1709, %v1707
    %v1711 = vadd.f32 %v1710, 0.19977711
    %v1712 = vmul.f32 %v1711, %v1707
    %v1713 = vsub.f32 %v1712, 0.3333295
    %v1714 = vadd.f32 %v1706, %v1704
    %v1715 = vmul.f32 %v1704, %v1707
    %v1716 = vmul.f32 %v1715, %v1713
    %v1717 = vadd.f32 %v1714, %v1716
    %v1718 = vmul.f32 %v1679, %v1717
    %v1719 = vmul.f32 %v1677, %v1677
    %vm1720 = vcmp.lt.f32.partialorder %v1719, 0.0
    %v1721 = vsel %vm1720, -1.0, 1.0
    %v1722 = vand.u32 2147483647, %v1719
    %vm1723 = vcmp.gt.f32.partialorder %v1722, 2.4142137
    %vm1724 = vcmp.gt.f32.partialorder %v1722, 0.41421357
    %v1725 = vsub.f32 %v1722, 1.0
    %v1726 = vsel %vm1724, %v1725, %v1722
    %v1727 = vsel %vm1723, -1.0, %v1726
    %v1728 = vmax.f32 %v1722, 1e-30
    %v1729 = vadd.f32 %v1722, 1.0
    %v1730 = vsel %vm1724, %v1729, 1.0
    %v1731 = vsel %vm1723, %v1728, %v1730
    %v1732 = vrcp.pop %v1731
    %v1733 = vmul.f32 %v1731, %v1732
    %v1734 = vsub.f32 1.0, %v1733
    %v1735 = vmul.f32 %v1732, %v1734
    %v1736 = vadd.f32 %v1732, %v1735
    %vm1737 = vweird.f32 %v1731
    %vm1738 = vweird.f32 %v1732
    %vm1739 = vmor %vm1737, %vm1738
    %v1740 = vsel %vm1739, %v1732, %v1736
    %v1741 = vand.u32 2147483647, %v1731
    %vm1742 = vcmp.eq.f32.partialorder %v1741, 8.507059e+37
    %v1743 = vand.u32 %v1731, 2147483648
    %v1744 = vor.u32 1.1754944e-38, %v1743
    %v1745 = vsel %vm1742, %v1744, %v1740
    %v1746 = vmul.f32 %v1727, %v1745
    %v1747 = vsel %vm1724, 0.7853982, 0.0
    %v1748 = vsel %vm1723, 1.5707964, %v1747
    %v1749 = vmul.f32 %v1746, %v1746
    %v1750 = vmul.f32 %v1749, 0.080537446
    %v1751 = vsub.f32 %v1750, 0.13877685
    %v1752 = vmul.f32 %v1751, %v1749
    %v1753 = vadd.f32 %v1752, 0.19977711
    %v1754 = vmul.f32 %v1753, %v1749
    %v1755 = vsub.f32 %v1754, 0.3333295
    %v1756 = vadd.f32 %v1748, %v1746
    %v1757 = vmul.f32 %v1746, %v1749
    %v1758 = vmul.f32 %v1757, %v1755
    %v1759 = vadd.f32 %v1756, %v1758
    %v1760 = vmul.f32 %v1721, %v1759
    %v1762 = vsel %vm112, %v1760, 0
    %1764 = vmatpush.msra.mxu0 0.0
    %1765 = vmatpush.msra.mxu0 0.0
    %1766 = vmatpush.msra.mxu0 0.0
    %1767 = vmatpush.msra.mxu0 0.0
    %1768 = vmatpush.msra.mxu0 0.0
    %1769 = vmatpush.msra.mxu0 0.0
    %1770 = vmatpush.msra.mxu0 0.0
    %1771 = vmatpush.msra.mxu0 0.0
    %1772 = vmatpush.msra.mxu0 0.0
    %1773 = vmatpush.msra.mxu0 0.0
    %1774 = vmatpush.msra.mxu0 0.0
    %1775 = vmatpush.msra.mxu0 0.0
    %1776 = vmatpush.msra.mxu0 0.0
    %1777 = vmatpush.msra.mxu0 0.0
    %1778 = vmatpush.msra.mxu0 0.0
    %1779 = vmatpush.msra.mxu0 %v15
    %1780 = vmatmul.f32.gmra.mxu0 %v1762
    %v1781 = vpop.f32.mrf.mxu0
    %v1782 = vadd.f32 0.0, %v1781
    %1783 = vdwg.mxu0
    %v1785 = vsel %vm112, %v1718, 0
    %1787 = vmatpush.msra.mxu0 0.0
    %1788 = vmatpush.msra.mxu0 0.0
    %1789 = vmatpush.msra.mxu0 0.0
    %1790 = vmatpush.msra.mxu0 0.0
    %1791 = vmatpush.msra.mxu0 0.0
    %1792 = vmatpush.msra.mxu0 0.0
    %1793 = vmatpush.msra.mxu0 0.0
    %1794 = vmatpush.msra.mxu0 0.0
    %1795 = vmatpush.msra.mxu0 0.0
    %1796 = vmatpush.msra.mxu0 0.0
    %1797 = vmatpush.msra.mxu0 0.0
    %1798 = vmatpush.msra.mxu0 0.0
    %1799 = vmatpush.msra.mxu0 0.0
    %1800 = vmatpush.msra.mxu0 0.0
    %1801 = vmatpush.msra.mxu0 0.0
    %1802 = vmatpush.msra.mxu0 %v14
    %1803 = vmatmul.f32.gmra.mxu0 %v1785
    %v1804 = vpop.f32.mrf.mxu0
    %v1805 = vadd.f32 %v1782, %v1804
    %1806 = vdwg.mxu0
    %v1807 = vld [vmem:[#allocation2 + $0x5] sm:$0x1]
    %v1808 = vadd.f32 %v1805, %v1807
    %v1809 = vsub.f32 0.0, %v1808
    %v1810 = vmul.f32 %v1809, 1.442695
    %v1811 = vpow.pop %v1810
    %v1812 = vadd.f32 %v1811, 1.0
    %v1813 = vrcp.pop %v1812
    %v1814 = vmul.f32 %v1812, %v1813
    %v1815 = vsub.f32 1.0, %v1814
    %v1816 = vmul.f32 %v1813, %v1815
    %v1817 = vadd.f32 %v1813, %v1816
    %vm1818 = vweird.f32 %v1812
    %vm1819 = vweird.f32 %v1813
    %vm1820 = vmor %vm1818, %vm1819
    %v1821 = vsel %vm1820, %v1813, %v1817
    %v1822 = vand.u32 2147483647, %v1812
    %vm1823 = vcmp.eq.f32.partialorder %v1822, 8.507059e+37
    %v1824 = vand.u32 %v1812, 2147483648
    %v1825 = vor.u32 1.1754944e-38, %v1824
    %v1826 = vsel %vm1823, %v1825, %v1821
    %v1827 = vmul.f32 1.0, %v1826
    %v1828 = vmul.f32 %v1827, 2.0
    %v1829 = vsub.f32 %v1828, 1.0
    %v1830 = vmul.f32 %v1537, %v1827
    %1832 = vrot.lane.b32.xlu0 %v1829, 112
    %v1833 = vpop.permute.xlu0 %1832
    %v1835 = vmul.f32 %v1827, %v1833
    %1837 = vrot.lane.b32.xlu0 %v1835, 120
    %v1838 = vpop.permute.xlu0 %1837
    %v1840 = vadd.f32 %v1830, %v1838
    %v1841 = vtanh.pop %v1840
    %1843 = vrot.lane.b32.xlu0 %v1841, 16
    %v1844 = vpop.permute.xlu0 %1843
    %v1846 = vmul.f32 %v1827, %v1844
    %vm1847 = vcmp.lt.f32.partialorder %v1846, 0.0
    %v1848 = vsel %vm1847, -1.0, 1.0
    %v1849 = vand.u32 2147483647, %v1846
    %vm1850 = vcmp.gt.f32.partialorder %v1849, 2.4142137
    %vm1851 = vcmp.gt.f32.partialorder %v1849, 0.41421357
    %v1852 = vsub.f32 %v1849, 1.0
    %v1853 = vsel %vm1851, %v1852, %v1849
    %v1854 = vsel %vm1850, -1.0, %v1853
    %v1855 = vmax.f32 %v1849, 1e-30
    %v1856 = vadd.f32 %v1849, 1.0
    %v1857 = vsel %vm1851, %v1856, 1.0
    %v1858 = vsel %vm1850, %v1855, %v1857
    %v1859 = vrcp.pop %v1858
    %v1860 = vmul.f32 %v1858, %v1859
    %v1861 = vsub.f32 1.0, %v1860
    %v1862 = vmul.f32 %v1859, %v1861
    %v1863 = vadd.f32 %v1859, %v1862
    %vm1864 = vweird.f32 %v1858
    %vm1865 = vweird.f32 %v1859
    %vm1866 = vmor %vm1864, %vm1865
    %v1867 = vsel %vm1866, %v1859, %v1863
    %v1868 = vand.u32 2147483647, %v1858
    %vm1869 = vcmp.eq.f32.partialorder %v1868, 8.507059e+37
    %v1870 = vand.u32 %v1858, 2147483648
    %v1871 = vor.u32 1.1754944e-38, %v1870
    %v1872 = vsel %vm1869, %v1871, %v1867
    %v1873 = vmul.f32 %v1854, %v1872
    %v1874 = vsel %vm1851, 0.7853982, 0.0
    %v1875 = vsel %vm1850, 1.5707964, %v1874
    %v1876 = vmul.f32 %v1873, %v1873
    %v1877 = vmul.f32 %v1876, 0.080537446
    %v1878 = vsub.f32 %v1877, 0.13877685
    %v1879 = vmul.f32 %v1878, %v1876
    %v1880 = vadd.f32 %v1879, 0.19977711
    %v1881 = vmul.f32 %v1880, %v1876
    %v1882 = vsub.f32 %v1881, 0.3333295
    %v1883 = vadd.f32 %v1875, %v1873
    %v1884 = vmul.f32 %v1873, %v1876
    %v1885 = vmul.f32 %v1884, %v1882
    %v1886 = vadd.f32 %v1883, %v1885
    %v1887 = vmul.f32 %v1848, %v1886
    %v1888 = vmul.f32 %v1846, %v1846
    %vm1889 = vcmp.lt.f32.partialorder %v1888, 0.0
    %v1890 = vsel %vm1889, -1.0, 1.0
    %v1891 = vand.u32 2147483647, %v1888
    %vm1892 = vcmp.gt.f32.partialorder %v1891, 2.4142137
    %vm1893 = vcmp.gt.f32.partialorder %v1891, 0.41421357
    %v1894 = vsub.f32 %v1891, 1.0
    %v1895 = vsel %vm1893, %v1894, %v1891
    %v1896 = vsel %vm1892, -1.0, %v1895
    %v1897 = vmax.f32 %v1891, 1e-30
    %v1898 = vadd.f32 %v1891, 1.0
    %v1899 = vsel %vm1893, %v1898, 1.0
    %v1900 = vsel %vm1892, %v1897, %v1899
    %v1901 = vrcp.pop %v1900
    %v1902 = vmul.f32 %v1900, %v1901
    %v1903 = vsub.f32 1.0, %v1902
    %v1904 = vmul.f32 %v1901, %v1903
    %v1905 = vadd.f32 %v1901, %v1904
    %vm1906 = vweird.f32 %v1900
    %vm1907 = vweird.f32 %v1901
    %vm1908 = vmor %vm1906, %vm1907
    %v1909 = vsel %vm1908, %v1901, %v1905
    %v1910 = vand.u32 2147483647, %v1900
    %vm1911 = vcmp.eq.f32.partialorder %v1910, 8.507059e+37
    %v1912 = vand.u32 %v1900, 2147483648
    %v1913 = vor.u32 1.1754944e-38, %v1912
    %v1914 = vsel %vm1911, %v1913, %v1909
    %v1915 = vmul.f32 %v1896, %v1914
    %v1916 = vsel %vm1893, 0.7853982, 0.0
    %v1917 = vsel %vm1892, 1.5707964, %v1916
    %v1918 = vmul.f32 %v1915, %v1915
    %v1919 = vmul.f32 %v1918, 0.080537446
    %v1920 = vsub.f32 %v1919, 0.13877685
    %v1921 = vmul.f32 %v1920, %v1918
    %v1922 = vadd.f32 %v1921, 0.19977711
    %v1923 = vmul.f32 %v1922, %v1918
    %v1924 = vsub.f32 %v1923, 0.3333295
    %v1925 = vadd.f32 %v1917, %v1915
    %v1926 = vmul.f32 %v1915, %v1918
    %v1927 = vmul.f32 %v1926, %v1924
    %v1928 = vadd.f32 %v1925, %v1927
    %v1929 = vmul.f32 %v1890, %v1928
    %1931 = vrot.lane.b32.xlu0 %v1929, 112
    %v1932 = vpop.permute.xlu0 %1931
    %v1933 = vsel %vm112, %v1932, 0
    %1935 = vmatpush.msra.mxu0 0.0
    %1936 = vmatpush.msra.mxu0 0.0
    %1937 = vmatpush.msra.mxu0 0.0
    %1938 = vmatpush.msra.mxu0 0.0
    %1939 = vmatpush.msra.mxu0 0.0
    %1940 = vmatpush.msra.mxu0 0.0
    %1941 = vmatpush.msra.mxu0 0.0
    %1942 = vmatpush.msra.mxu0 0.0
    %1943 = vmatpush.msra.mxu0 0.0
    %1944 = vmatpush.msra.mxu0 0.0
    %1945 = vmatpush.msra.mxu0 0.0
    %1946 = vmatpush.msra.mxu0 0.0
    %1947 = vmatpush.msra.mxu0 0.0
    %1948 = vmatpush.msra.mxu0 0.0
    %1949 = vmatpush.msra.mxu0 0.0
    %1950 = vmatpush.msra.mxu0 %v18
    %1951 = vmatmul.f32.gmra.mxu0 %v1933
    %v1952 = vpop.f32.mrf.mxu0
    %v1953 = vadd.f32 0.0, %v1952
    %1954 = vdwg.mxu0
    %1956 = vrot.lane.b32.xlu0 %v1887, 112
    %v1957 = vpop.permute.xlu0 %1956
    %v1958 = vsel %vm112, %v1957, 0
    %1960 = vmatpush.msra.mxu0 0.0
    %1961 = vmatpush.msra.mxu0 0.0
    %1962 = vmatpush.msra.mxu0 0.0
    %1963 = vmatpush.msra.mxu0 0.0
    %1964 = vmatpush.msra.mxu0 0.0
    %1965 = vmatpush.msra.mxu0 0.0
    %1966 = vmatpush.msra.mxu0 0.0
    %1967 = vmatpush.msra.mxu0 0.0
    %1968 = vmatpush.msra.mxu0 0.0
    %1969 = vmatpush.msra.mxu0 0.0
    %1970 = vmatpush.msra.mxu0 0.0
    %1971 = vmatpush.msra.mxu0 0.0
    %1972 = vmatpush.msra.mxu0 0.0
    %1973 = vmatpush.msra.mxu0 0.0
    %1974 = vmatpush.msra.mxu0 0.0
    %1975 = vmatpush.msra.mxu0 %v17
    %1976 = vmatmul.f32.gmra.mxu0 %v1958
    %v1977 = vpop.f32.mrf.mxu0
    %v1978 = vadd.f32 %v1953, %v1977
    %1979 = vdwg.mxu0
    %v1980 = vadd.f32 %v1978, %v19
    %vm1981 = vcmp.lt.f32.partialorder %v1980, 0.0
    %v1982 = vsel %vm1981, -1.0, 1.0
    %v1983 = vand.u32 2147483647, %v1980
    %vm1984 = vcmp.gt.f32.partialorder %v1983, 2.4142137
    %vm1985 = vcmp.gt.f32.partialorder %v1983, 0.41421357
    %v1986 = vsub.f32 %v1983, 1.0
    %v1987 = vsel %vm1985, %v1986, %v1983
    %v1988 = vsel %vm1984, -1.0, %v1987
    %v1989 = vmax.f32 %v1983, 1e-30
    %v1990 = vadd.f32 %v1983, 1.0
    %v1991 = vsel %vm1985, %v1990, 1.0
    %v1992 = vsel %vm1984, %v1989, %v1991
    %v1993 = vrcp.pop %v1992
    %v1994 = vmul.f32 %v1992, %v1993
    %v1995 = vsub.f32 1.0, %v1994
    %v1996 = vmul.f32 %v1993, %v1995
    %v1997 = vadd.f32 %v1993, %v1996
    %vm1998 = vweird.f32 %v1992
    %vm1999 = vweird.f32 %v1993
    %vm2000 = vmor %vm1998, %vm1999
    %v2001 = vsel %vm2000, %v1993, %v1997
    %v2002 = vand.u32 2147483647, %v1992
    %vm2003 = vcmp.eq.f32.partialorder %v2002, 8.507059e+37
    %v2004 = vand.u32 %v1992, 2147483648
    %v2005 = vor.u32 1.1754944e-38, %v2004
    %v2006 = vsel %vm2003, %v2005, %v2001
    %v2007 = vmul.f32 %v1988, %v2006
    %v2008 = vsel %vm1985, 0.7853982, 0.0
    %v2009 = vsel %vm1984, 1.5707964, %v2008
    %v2010 = vmul.f32 %v2007, %v2007
    %v2011 = vmul.f32 %v2010, 0.080537446
    %v2012 = vsub.f32 %v2011, 0.13877685
    %v2013 = vmul.f32 %v2012, %v2010
    %v2014 = vadd.f32 %v2013, 0.19977711
    %v2015 = vmul.f32 %v2014, %v2010
    %v2016 = vsub.f32 %v2015, 0.3333295
    %v2017 = vadd.f32 %v2009, %v2007
    %v2018 = vmul.f32 %v2007, %v2010
    %v2019 = vmul.f32 %v2018, %v2016
    %v2020 = vadd.f32 %v2017, %v2019
    %v2021 = vmul.f32 %v1982, %v2020
    %v2022 = vmul.f32 %v1980, %v1980
    %vm2023 = vcmp.lt.f32.partialorder %v2022, 0.0
    %v2024 = vsel %vm2023, -1.0, 1.0
    %v2025 = vand.u32 2147483647, %v2022
    %vm2026 = vcmp.gt.f32.partialorder %v2025, 2.4142137
    %vm2027 = vcmp.gt.f32.partialorder %v2025, 0.41421357
    %v2028 = vsub.f32 %v2025, 1.0
    %v2029 = vsel %vm2027, %v2028, %v2025
    %v2030 = vsel %vm2026, -1.0, %v2029
    %v2031 = vmax.f32 %v2025, 1e-30
    %v2032 = vadd.f32 %v2025, 1.0
    %v2033 = vsel %vm2027, %v2032, 1.0
    %v2034 = vsel %vm2026, %v2031, %v2033
    %v2035 = vrcp.pop %v2034
    %v2036 = vmul.f32 %v2034, %v2035
    %v2037 = vsub.f32 1.0, %v2036
    %v2038 = vmul.f32 %v2035, %v2037
    %v2039 = vadd.f32 %v2035, %v2038
    %vm2040 = vweird.f32 %v2034
    %vm2041 = vweird.f32 %v2035
    %vm2042 = vmor %vm2040, %vm2041
    %v2043 = vsel %vm2042, %v2035, %v2039
    %v2044 = vand.u32 2147483647, %v2034
    %vm2045 = vcmp.eq.f32.partialorder %v2044, 8.507059e+37
    %v2046 = vand.u32 %v2034, 2147483648
    %v2047 = vor.u32 1.1754944e-38, %v2046
    %v2048 = vsel %vm2045, %v2047, %v2043
    %v2049 = vmul.f32 %v2030, %v2048
    %v2050 = vsel %vm2027, 0.7853982, 0.0
    %v2051 = vsel %vm2026, 1.5707964, %v2050
    %v2052 = vmul.f32 %v2049, %v2049
    %v2053 = vmul.f32 %v2052, 0.080537446
    %v2054 = vsub.f32 %v2053, 0.13877685
    %v2055 = vmul.f32 %v2054, %v2052
    %v2056 = vadd.f32 %v2055, 0.19977711
    %v2057 = vmul.f32 %v2056, %v2052
    %v2058 = vsub.f32 %v2057, 0.3333295
    %v2059 = vadd.f32 %v2051, %v2049
    %v2060 = vmul.f32 %v2049, %v2052
    %v2061 = vmul.f32 %v2060, %v2058
    %v2062 = vadd.f32 %v2059, %v2061
    %v2063 = vmul.f32 %v2024, %v2062
    %v2065 = vsel %vm112, %v2063, 0
    %2067 = vmatpush.msra.mxu0 0.0
    %2068 = vmatpush.msra.mxu0 0.0
    %2069 = vmatpush.msra.mxu0 0.0
    %2070 = vmatpush.msra.mxu0 0.0
    %2071 = vmatpush.msra.mxu0 0.0
    %2072 = vmatpush.msra.mxu0 0.0
    %2073 = vmatpush.msra.mxu0 0.0
    %2074 = vmatpush.msra.mxu0 0.0
    %2075 = vmatpush.msra.mxu0 0.0
    %2076 = vmatpush.msra.mxu0 0.0
    %2077 = vmatpush.msra.mxu0 0.0
    %2078 = vmatpush.msra.mxu0 0.0
    %2079 = vmatpush.msra.mxu0 0.0
    %2080 = vmatpush.msra.mxu0 0.0
    %2081 = vmatpush.msra.mxu0 0.0
    %2082 = vmatpush.msra.mxu0 %v15
    %2083 = vmatmul.f32.gmra.mxu0 %v2065
    %v2084 = vpop.f32.mrf.mxu0
    %v2085 = vadd.f32 0.0, %v2084
    %2086 = vdwg.mxu0
    %v2088 = vsel %vm112, %v2021, 0
    %2090 = vmatpush.msra.mxu0 0.0
    %2091 = vmatpush.msra.mxu0 0.0
    %2092 = vmatpush.msra.mxu0 0.0
    %2093 = vmatpush.msra.mxu0 0.0
    %2094 = vmatpush.msra.mxu0 0.0
    %2095 = vmatpush.msra.mxu0 0.0
    %2096 = vmatpush.msra.mxu0 0.0
    %2097 = vmatpush.msra.mxu0 0.0
    %2098 = vmatpush.msra.mxu0 0.0
    %2099 = vmatpush.msra.mxu0 0.0
    %2100 = vmatpush.msra.mxu0 0.0
    %2101 = vmatpush.msra.mxu0 0.0
    %2102 = vmatpush.msra.mxu0 0.0
    %2103 = vmatpush.msra.mxu0 0.0
    %2104 = vmatpush.msra.mxu0 0.0
    %2105 = vmatpush.msra.mxu0 %v14
    %2106 = vmatmul.f32.gmra.mxu0 %v2088
    %v2107 = vpop.f32.mrf.mxu0
    %v2108 = vadd.f32 %v2085, %v2107
    %2109 = vdwg.mxu0
    %v2110 = vld [vmem:[#allocation2 + $0x6] sm:$0x1]
    %v2111 = vadd.f32 %v2108, %v2110
    %v2112 = vsub.f32 0.0, %v2111
    %v2113 = vmul.f32 %v2112, 1.442695
    %v2114 = vpow.pop %v2113
    %v2115 = vadd.f32 %v2114, 1.0
    %v2116 = vrcp.pop %v2115
    %v2117 = vmul.f32 %v2115, %v2116
    %v2118 = vsub.f32 1.0, %v2117
    %v2119 = vmul.f32 %v2116, %v2118
    %v2120 = vadd.f32 %v2116, %v2119
    %vm2121 = vweird.f32 %v2115
    %vm2122 = vweird.f32 %v2116
    %vm2123 = vmor %vm2121, %vm2122
    %v2124 = vsel %vm2123, %v2116, %v2120
    %v2125 = vand.u32 2147483647, %v2115
    %vm2126 = vcmp.eq.f32.partialorder %v2125, 8.507059e+37
    %v2127 = vand.u32 %v2115, 2147483648
    %v2128 = vor.u32 1.1754944e-38, %v2127
    %v2129 = vsel %vm2126, %v2128, %v2124
    %v2130 = vmul.f32 1.0, %v2129
    %v2131 = vmul.f32 %v2130, 2.0
    %v2132 = vsub.f32 %v2131, 1.0
    %v2133 = vmul.f32 %v1840, %v2130
    %2135 = vrot.lane.b32.xlu0 %v2132, 112
    %v2136 = vpop.permute.xlu0 %2135
    %v2138 = vmul.f32 %v2130, %v2136
    %2140 = vrot.lane.b32.xlu0 %v2138, 120
    %v2141 = vpop.permute.xlu0 %2140
    %v2143 = vadd.f32 %v2133, %v2141
    %v2144 = vtanh.pop %v2143
    %2146 = vrot.lane.b32.xlu0 %v2144, 16
    %v2147 = vpop.permute.xlu0 %2146
    %v2149 = vmul.f32 %v2130, %v2147
    %vm2150 = vcmp.lt.f32.partialorder %v2149, 0.0
    %v2151 = vsel %vm2150, -1.0, 1.0
    %v2152 = vand.u32 2147483647, %v2149
    %vm2153 = vcmp.gt.f32.partialorder %v2152, 2.4142137
    %vm2154 = vcmp.gt.f32.partialorder %v2152, 0.41421357
    %v2155 = vsub.f32 %v2152, 1.0
    %v2156 = vsel %vm2154, %v2155, %v2152
    %v2157 = vsel %vm2153, -1.0, %v2156
    %v2158 = vmax.f32 %v2152, 1e-30
    %v2159 = vadd.f32 %v2152, 1.0
    %v2160 = vsel %vm2154, %v2159, 1.0
    %v2161 = vsel %vm2153, %v2158, %v2160
    %v2162 = vrcp.pop %v2161
    %v2163 = vmul.f32 %v2161, %v2162
    %v2164 = vsub.f32 1.0, %v2163
    %v2165 = vmul.f32 %v2162, %v2164
    %v2166 = vadd.f32 %v2162, %v2165
    %vm2167 = vweird.f32 %v2161
    %vm2168 = vweird.f32 %v2162
    %vm2169 = vmor %vm2167, %vm2168
    %v2170 = vsel %vm2169, %v2162, %v2166
    %v2171 = vand.u32 2147483647, %v2161
    %vm2172 = vcmp.eq.f32.partialorder %v2171, 8.507059e+37
    %v2173 = vand.u32 %v2161, 2147483648
    %v2174 = vor.u32 1.1754944e-38, %v2173
    %v2175 = vsel %vm2172, %v2174, %v2170
    %v2176 = vmul.f32 %v2157, %v2175
    %v2177 = vsel %vm2154, 0.7853982, 0.0
    %v2178 = vsel %vm2153, 1.5707964, %v2177
    %v2179 = vmul.f32 %v2176, %v2176
    %v2180 = vmul.f32 %v2179, 0.080537446
    %v2181 = vsub.f32 %v2180, 0.13877685
    %v2182 = vmul.f32 %v2181, %v2179
    %v2183 = vadd.f32 %v2182, 0.19977711
    %v2184 = vmul.f32 %v2183, %v2179
    %v2185 = vsub.f32 %v2184, 0.3333295
    %v2186 = vadd.f32 %v2178, %v2176
    %v2187 = vmul.f32 %v2176, %v2179
    %v2188 = vmul.f32 %v2187, %v2185
    %v2189 = vadd.f32 %v2186, %v2188
    %v2190 = vmul.f32 %v2151, %v2189
    %v2191 = vmul.f32 %v2149, %v2149
    %vm2192 = vcmp.lt.f32.partialorder %v2191, 0.0
    %v2193 = vsel %vm2192, -1.0, 1.0
    %v2194 = vand.u32 2147483647, %v2191
    %vm2195 = vcmp.gt.f32.partialorder %v2194, 2.4142137
    %vm2196 = vcmp.gt.f32.partialorder %v2194, 0.41421357
    %v2197 = vsub.f32 %v2194, 1.0
    %v2198 = vsel %vm2196, %v2197, %v2194
    %v2199 = vsel %vm2195, -1.0, %v2198
    %v2200 = vmax.f32 %v2194, 1e-30
    %v2201 = vadd.f32 %v2194, 1.0
    %v2202 = vsel %vm2196, %v2201, 1.0
    %v2203 = vsel %vm2195, %v2200, %v2202
    %v2204 = vrcp.pop %v2203
    %v2205 = vmul.f32 %v2203, %v2204
    %v2206 = vsub.f32 1.0, %v2205
    %v2207 = vmul.f32 %v2204, %v2206
    %v2208 = vadd.f32 %v2204, %v2207
    %vm2209 = vweird.f32 %v2203
    %vm2210 = vweird.f32 %v2204
    %vm2211 = vmor %vm2209, %vm2210
    %v2212 = vsel %vm2211, %v2204, %v2208
    %v2213 = vand.u32 2147483647, %v2203
    %vm2214 = vcmp.eq.f32.partialorder %v2213, 8.507059e+37
    %v2215 = vand.u32 %v2203, 2147483648
    %v2216 = vor.u32 1.1754944e-38, %v2215
    %v2217 = vsel %vm2214, %v2216, %v2212
    %v2218 = vmul.f32 %v2199, %v2217
    %v2219 = vsel %vm2196, 0.7853982, 0.0
    %v2220 = vsel %vm2195, 1.5707964, %v2219
    %v2221 = vmul.f32 %v2218, %v2218
    %v2222 = vmul.f32 %v2221, 0.080537446
    %v2223 = vsub.f32 %v2222, 0.13877685
    %v2224 = vmul.f32 %v2223, %v2221
    %v2225 = vadd.f32 %v2224, 0.19977711
    %v2226 = vmul.f32 %v2225, %v2221
    %v2227 = vsub.f32 %v2226, 0.3333295
    %v2228 = vadd.f32 %v2220, %v2218
    %v2229 = vmul.f32 %v2218, %v2221
    %v2230 = vmul.f32 %v2229, %v2227
    %v2231 = vadd.f32 %v2228, %v2230
    %v2232 = vmul.f32 %v2193, %v2231
    %2234 = vrot.lane.b32.xlu0 %v2232, 112
    %v2235 = vpop.permute.xlu0 %2234
    %v2236 = vsel %vm112, %v2235, 0
    %2238 = vmatpush.msra.mxu0 0.0
    %2239 = vmatpush.msra.mxu0 0.0
    %2240 = vmatpush.msra.mxu0 0.0
    %2241 = vmatpush.msra.mxu0 0.0
    %2242 = vmatpush.msra.mxu0 0.0
    %2243 = vmatpush.msra.mxu0 0.0
    %2244 = vmatpush.msra.mxu0 0.0
    %2245 = vmatpush.msra.mxu0 0.0
    %2246 = vmatpush.msra.mxu0 0.0
    %2247 = vmatpush.msra.mxu0 0.0
    %2248 = vmatpush.msra.mxu0 0.0
    %2249 = vmatpush.msra.mxu0 0.0
    %2250 = vmatpush.msra.mxu0 0.0
    %2251 = vmatpush.msra.mxu0 0.0
    %2252 = vmatpush.msra.mxu0 0.0
    %2253 = vmatpush.msra.mxu0 %v18
    %2254 = vmatmul.f32.gmra.mxu0 %v2236
    %v2255 = vpop.f32.mrf.mxu0
    %v2256 = vadd.f32 0.0, %v2255
    %2257 = vdwg.mxu0
    %2259 = vrot.lane.b32.xlu0 %v2190, 112
    %v2260 = vpop.permute.xlu0 %2259
    %v2261 = vsel %vm112, %v2260, 0
    %2263 = vmatpush.msra.mxu0 0.0
    %2264 = vmatpush.msra.mxu0 0.0
    %2265 = vmatpush.msra.mxu0 0.0
    %2266 = vmatpush.msra.mxu0 0.0
    %2267 = vmatpush.msra.mxu0 0.0
    %2268 = vmatpush.msra.mxu0 0.0
    %2269 = vmatpush.msra.mxu0 0.0
    %2270 = vmatpush.msra.mxu0 0.0
    %2271 = vmatpush.msra.mxu0 0.0
    %2272 = vmatpush.msra.mxu0 0.0
    %2273 = vmatpush.msra.mxu0 0.0
    %2274 = vmatpush.msra.mxu0 0.0
    %2275 = vmatpush.msra.mxu0 0.0
    %2276 = vmatpush.msra.mxu0 0.0
    %2277 = vmatpush.msra.mxu0 0.0
    %2278 = vmatpush.msra.mxu0 %v17
    %2279 = vmatmul.f32.gmra.mxu0 %v2261
    %v2280 = vpop.f32.mrf.mxu0
    %v2281 = vadd.f32 %v2256, %v2280
    %2282 = vdwg.mxu0
    %v2283 = vadd.f32 %v2281, %v19
    %vm2284 = vcmp.lt.f32.partialorder %v2283, 0.0
    %v2285 = vsel %vm2284, -1.0, 1.0
    %v2286 = vand.u32 2147483647, %v2283
    %vm2287 = vcmp.gt.f32.partialorder %v2286, 2.4142137
    %vm2288 = vcmp.gt.f32.partialorder %v2286, 0.41421357
    %v2289 = vsub.f32 %v2286, 1.0
    %v2290 = vsel %vm2288, %v2289, %v2286
    %v2291 = vsel %vm2287, -1.0, %v2290
    %v2292 = vmax.f32 %v2286, 1e-30
    %v2293 = vadd.f32 %v2286, 1.0
    %v2294 = vsel %vm2288, %v2293, 1.0
    %v2295 = vsel %vm2287, %v2292, %v2294
    %v2296 = vrcp.pop %v2295
    %v2297 = vmul.f32 %v2295, %v2296
    %v2298 = vsub.f32 1.0, %v2297
    %v2299 = vmul.f32 %v2296, %v2298
    %v2300 = vadd.f32 %v2296, %v2299
    %vm2301 = vweird.f32 %v2295
    %vm2302 = vweird.f32 %v2296
    %vm2303 = vmor %vm2301, %vm2302
    %v2304 = vsel %vm2303, %v2296, %v2300
    %v2305 = vand.u32 2147483647, %v2295
    %vm2306 = vcmp.eq.f32.partialorder %v2305, 8.507059e+37
    %v2307 = vand.u32 %v2295, 2147483648
    %v2308 = vor.u32 1.1754944e-38, %v2307
    %v2309 = vsel %vm2306, %v2308, %v2304
    %v2310 = vmul.f32 %v2291, %v2309
    %v2311 = vsel %vm2288, 0.7853982, 0.0
    %v2312 = vsel %vm2287, 1.5707964, %v2311
    %v2313 = vmul.f32 %v2310, %v2310
    %v2314 = vmul.f32 %v2313, 0.080537446
    %v2315 = vsub.f32 %v2314, 0.13877685
    %v2316 = vmul.f32 %v2315, %v2313
    %v2317 = vadd.f32 %v2316, 0.19977711
    %v2318 = vmul.f32 %v2317, %v2313
    %v2319 = vsub.f32 %v2318, 0.3333295
    %v2320 = vadd.f32 %v2312, %v2310
    %v2321 = vmul.f32 %v2310, %v2313
    %v2322 = vmul.f32 %v2321, %v2319
    %v2323 = vadd.f32 %v2320, %v2322
    %v2324 = vmul.f32 %v2285, %v2323
    %v2325 = vmul.f32 %v2283, %v2283
    %vm2326 = vcmp.lt.f32.partialorder %v2325, 0.0
    %v2327 = vsel %vm2326, -1.0, 1.0
    %v2328 = vand.u32 2147483647, %v2325
    %vm2329 = vcmp.gt.f32.partialorder %v2328, 2.4142137
    %vm2330 = vcmp.gt.f32.partialorder %v2328, 0.41421357
    %v2331 = vsub.f32 %v2328, 1.0
    %v2332 = vsel %vm2330, %v2331, %v2328
    %v2333 = vsel %vm2329, -1.0, %v2332
    %v2334 = vmax.f32 %v2328, 1e-30
    %v2335 = vadd.f32 %v2328, 1.0
    %v2336 = vsel %vm2330, %v2335, 1.0
    %v2337 = vsel %vm2329, %v2334, %v2336
    %v2338 = vrcp.pop %v2337
    %v2339 = vmul.f32 %v2337, %v2338
    %v2340 = vsub.f32 1.0, %v2339
    %v2341 = vmul.f32 %v2338, %v2340
    %v2342 = vadd.f32 %v2338, %v2341
    %vm2343 = vweird.f32 %v2337
    %vm2344 = vweird.f32 %v2338
    %vm2345 = vmor %vm2343, %vm2344
    %v2346 = vsel %vm2345, %v2338, %v2342
    %v2347 = vand.u32 2147483647, %v2337
    %vm2348 = vcmp.eq.f32.partialorder %v2347, 8.507059e+37
    %v2349 = vand.u32 %v2337, 2147483648
    %v2350 = vor.u32 1.1754944e-38, %v2349
    %v2351 = vsel %vm2348, %v2350, %v2346
    %v2352 = vmul.f32 %v2333, %v2351
    %v2353 = vsel %vm2330, 0.7853982, 0.0
    %v2354 = vsel %vm2329, 1.5707964, %v2353
    %v2355 = vmul.f32 %v2352, %v2352
    %v2356 = vmul.f32 %v2355, 0.080537446
    %v2357 = vsub.f32 %v2356, 0.13877685
    %v2358 = vmul.f32 %v2357, %v2355
    %v2359 = vadd.f32 %v2358, 0.19977711
    %v2360 = vmul.f32 %v2359, %v2355
    %v2361 = vsub.f32 %v2360, 0.3333295
    %v2362 = vadd.f32 %v2354, %v2352
    %v2363 = vmul.f32 %v2352, %v2355
    %v2364 = vmul.f32 %v2363, %v2361
    %v2365 = vadd.f32 %v2362, %v2364
    %v2366 = vmul.f32 %v2327, %v2365
    %v2368 = vsel %vm112, %v2366, 0
    %2370 = vmatpush.msra.mxu0 0.0
    %2371 = vmatpush.msra.mxu0 0.0
    %2372 = vmatpush.msra.mxu0 0.0
    %2373 = vmatpush.msra.mxu0 0.0
    %2374 = vmatpush.msra.mxu0 0.0
    %2375 = vmatpush.msra.mxu0 0.0
    %2376 = vmatpush.msra.mxu0 0.0
    %2377 = vmatpush.msra.mxu0 0.0
    %2378 = vmatpush.msra.mxu0 0.0
    %2379 = vmatpush.msra.mxu0 0.0
    %2380 = vmatpush.msra.mxu0 0.0
    %2381 = vmatpush.msra.mxu0 0.0
    %2382 = vmatpush.msra.mxu0 0.0
    %2383 = vmatpush.msra.mxu0 0.0
    %2384 = vmatpush.msra.mxu0 0.0
    %2385 = vmatpush.msra.mxu0 %v15
    %2386 = vmatmul.f32.gmra.mxu0 %v2368
    %v2387 = vpop.f32.mrf.mxu0
    %v2388 = vadd.f32 0.0, %v2387
    %2389 = vdwg.mxu0
    %v2391 = vsel %vm112, %v2324, 0
    %2393 = vmatpush.msra.mxu0 0.0
    %2394 = vmatpush.msra.mxu0 0.0
    %2395 = vmatpush.msra.mxu0 0.0
    %2396 = vmatpush.msra.mxu0 0.0
    %2397 = vmatpush.msra.mxu0 0.0
    %2398 = vmatpush.msra.mxu0 0.0
    %2399 = vmatpush.msra.mxu0 0.0
    %2400 = vmatpush.msra.mxu0 0.0
    %2401 = vmatpush.msra.mxu0 0.0
    %2402 = vmatpush.msra.mxu0 0.0
    %2403 = vmatpush.msra.mxu0 0.0
    %2404 = vmatpush.msra.mxu0 0.0
    %2405 = vmatpush.msra.mxu0 0.0
    %2406 = vmatpush.msra.mxu0 0.0
    %2407 = vmatpush.msra.mxu0 0.0
    %2408 = vmatpush.msra.mxu0 %v14
    %2409 = vmatmul.f32.gmra.mxu0 %v2391
    %v2410 = vpop.f32.mrf.mxu0
    %v2411 = vadd.f32 %v2388, %v2410
    %2412 = vdwg.mxu0
    %v2413 = vld [vmem:[#allocation2 + $0x7] sm:$0x1]
    %v2414 = vadd.f32 %v2411, %v2413
    %v2415 = vsub.f32 0.0, %v2414
    %v2416 = vmul.f32 %v2415, 1.442695
    %v2417 = vpow.pop %v2416
    %v2418 = vadd.f32 %v2417, 1.0
    %v2419 = vrcp.pop %v2418
    %v2420 = vmul.f32 %v2418, %v2419
    %v2421 = vsub.f32 1.0, %v2420
    %v2422 = vmul.f32 %v2419, %v2421
    %v2423 = vadd.f32 %v2419, %v2422
    %vm2424 = vweird.f32 %v2418
    %vm2425 = vweird.f32 %v2419
    %vm2426 = vmor %vm2424, %vm2425
    %v2427 = vsel %vm2426, %v2419, %v2423
    %v2428 = vand.u32 2147483647, %v2418
    %vm2429 = vcmp.eq.f32.partialorder %v2428, 8.507059e+37
    %v2430 = vand.u32 %v2418, 2147483648
    %v2431 = vor.u32 1.1754944e-38, %v2430
    %v2432 = vsel %vm2429, %v2431, %v2427
    %v2433 = vmul.f32 1.0, %v2432
    %v2434 = vmul.f32 %v2433, 2.0
    %v2435 = vsub.f32 %v2434, 1.0
    %v2436 = vmul.f32 %v2143, %v2433
    %2438 = vrot.lane.b32.xlu0 %v2435, 112
    %v2439 = vpop.permute.xlu0 %2438
    %v2441 = vmul.f32 %v2433, %v2439
    %2443 = vrot.lane.b32.xlu0 %v2441, 120
    %v2444 = vpop.permute.xlu0 %2443
    %v2446 = vadd.f32 %v2436, %v2444
    %v2447 = vtanh.pop %v2446
    %2449 = vrot.lane.b32.xlu0 %v2447, 16
    %v2450 = vpop.permute.xlu0 %2449
    %v2452 = vmul.f32 %v2433, %v2450
    %vm2453 = vcmp.lt.f32.partialorder %v2452, 0.0
    %v2454 = vsel %vm2453, -1.0, 1.0
    %v2455 = vand.u32 2147483647, %v2452
    %vm2456 = vcmp.gt.f32.partialorder %v2455, 2.4142137
    %vm2457 = vcmp.gt.f32.partialorder %v2455, 0.41421357
    %v2458 = vsub.f32 %v2455, 1.0
    %v2459 = vsel %vm2457, %v2458, %v2455
    %v2460 = vsel %vm2456, -1.0, %v2459
    %v2461 = vmax.f32 %v2455, 1e-30
    %v2462 = vadd.f32 %v2455, 1.0
    %v2463 = vsel %vm2457, %v2462, 1.0
    %v2464 = vsel %vm2456, %v2461, %v2463
    %v2465 = vrcp.pop %v2464
    %v2466 = vmul.f32 %v2464, %v2465
    %v2467 = vsub.f32 1.0, %v2466
    %v2468 = vmul.f32 %v2465, %v2467
    %v2469 = vadd.f32 %v2465, %v2468
    %vm2470 = vweird.f32 %v2464
    %vm2471 = vweird.f32 %v2465
    %vm2472 = vmor %vm2470, %vm2471
    %v2473 = vsel %vm2472, %v2465, %v2469
    %v2474 = vand.u32 2147483647, %v2464
    %vm2475 = vcmp.eq.f32.partialorder %v2474, 8.507059e+37
    %v2476 = vand.u32 %v2464, 2147483648
    %v2477 = vor.u32 1.1754944e-38, %v2476
    %v2478 = vsel %vm2475, %v2477, %v2473
    %v2479 = vmul.f32 %v2460, %v2478
    %v2480 = vsel %vm2457, 0.7853982, 0.0
    %v2481 = vsel %vm2456, 1.5707964, %v2480
    %v2482 = vmul.f32 %v2479, %v2479
    %v2483 = vmul.f32 %v2482, 0.080537446
    %v2484 = vsub.f32 %v2483, 0.13877685
    %v2485 = vmul.f32 %v2484, %v2482
    %v2486 = vadd.f32 %v2485, 0.19977711
    %v2487 = vmul.f32 %v2486, %v2482
    %v2488 = vsub.f32 %v2487, 0.3333295
    %v2489 = vadd.f32 %v2481, %v2479
    %v2490 = vmul.f32 %v2479, %v2482
    %v2491 = vmul.f32 %v2490, %v2488
    %v2492 = vadd.f32 %v2489, %v2491
    %v2493 = vmul.f32 %v2454, %v2492
    %v2494 = vmul.f32 %v2452, %v2452
    %vm2495 = vcmp.lt.f32.partialorder %v2494, 0.0
    %v2496 = vsel %vm2495, -1.0, 1.0
    %v2497 = vand.u32 2147483647, %v2494
    %vm2498 = vcmp.gt.f32.partialorder %v2497, 2.4142137
    %vm2499 = vcmp.gt.f32.partialorder %v2497, 0.41421357
    %v2500 = vsub.f32 %v2497, 1.0
    %v2501 = vsel %vm2499, %v2500, %v2497
    %v2502 = vsel %vm2498, -1.0, %v2501
    %v2503 = vmax.f32 %v2497, 1e-30
    %v2504 = vadd.f32 %v2497, 1.0
    %v2505 = vsel %vm2499, %v2504, 1.0
    %v2506 = vsel %vm2498, %v2503, %v2505
    %v2507 = vrcp.pop %v2506
    %v2508 = vmul.f32 %v2506, %v2507
    %v2509 = vsub.f32 1.0, %v2508
    %v2510 = vmul.f32 %v2507, %v2509
    %v2511 = vadd.f32 %v2507, %v2510
    %vm2512 = vweird.f32 %v2506
    %vm2513 = vweird.f32 %v2507
    %vm2514 = vmor %vm2512, %vm2513
    %v2515 = vsel %vm2514, %v2507, %v2511
    %v2516 = vand.u32 2147483647, %v2506
    %vm2517 = vcmp.eq.f32.partialorder %v2516, 8.507059e+37
    %v2518 = vand.u32 %v2506, 2147483648
    %v2519 = vor.u32 1.1754944e-38, %v2518
    %v2520 = vsel %vm2517, %v2519, %v2515
    %v2521 = vmul.f32 %v2502, %v2520
    %v2522 = vsel %vm2499, 0.7853982, 0.0
    %v2523 = vsel %vm2498, 1.5707964, %v2522
    %v2524 = vmul.f32 %v2521, %v2521
    %v2525 = vmul.f32 %v2524, 0.080537446
    %v2526 = vsub.f32 %v2525, 0.13877685
    %v2527 = vmul.f32 %v2526, %v2524
    %v2528 = vadd.f32 %v2527, 0.19977711
    %v2529 = vmul.f32 %v2528, %v2524
    %v2530 = vsub.f32 %v2529, 0.3333295
    %v2531 = vadd.f32 %v2523, %v2521
    %v2532 = vmul.f32 %v2521, %v2524
    %v2533 = vmul.f32 %v2532, %v2530
    %v2534 = vadd.f32 %v2531, %v2533
    %v2535 = vmul.f32 %v2496, %v2534
    %2537 = vrot.lane.b32.xlu0 %v2535, 112
    %v2538 = vpop.permute.xlu0 %2537
    %v2539 = vsel %vm112, %v2538, 0
    %2541 = vmatpush.msra.mxu0 0.0
    %2542 = vmatpush.msra.mxu0 0.0
    %2543 = vmatpush.msra.mxu0 0.0
    %2544 = vmatpush.msra.mxu0 0.0
    %2545 = vmatpush.msra.mxu0 0.0
    %2546 = vmatpush.msra.mxu0 0.0
    %2547 = vmatpush.msra.mxu0 0.0
    %2548 = vmatpush.msra.mxu0 0.0
    %2549 = vmatpush.msra.mxu0 0.0
    %2550 = vmatpush.msra.mxu0 0.0
    %2551 = vmatpush.msra.mxu0 0.0
    %2552 = vmatpush.msra.mxu0 0.0
    %2553 = vmatpush.msra.mxu0 0.0
    %2554 = vmatpush.msra.mxu0 0.0
    %2555 = vmatpush.msra.mxu0 0.0
    %2556 = vmatpush.msra.mxu0 %v18
    %2557 = vmatmul.f32.gmra.mxu0 %v2539
    %v2558 = vpop.f32.mrf.mxu0
    %v2559 = vadd.f32 0.0, %v2558
    %2560 = vdwg.mxu0
    %2562 = vrot.lane.b32.xlu0 %v2493, 112
    %v2563 = vpop.permute.xlu0 %2562
    %v2564 = vsel %vm112, %v2563, 0
    %2566 = vmatpush.msra.mxu0 0.0
    %2567 = vmatpush.msra.mxu0 0.0
    %2568 = vmatpush.msra.mxu0 0.0
    %2569 = vmatpush.msra.mxu0 0.0
    %2570 = vmatpush.msra.mxu0 0.0
    %2571 = vmatpush.msra.mxu0 0.0
    %2572 = vmatpush.msra.mxu0 0.0
    %2573 = vmatpush.msra.mxu0 0.0
    %2574 = vmatpush.msra.mxu0 0.0
    %2575 = vmatpush.msra.mxu0 0.0
    %2576 = vmatpush.msra.mxu0 0.0
    %2577 = vmatpush.msra.mxu0 0.0
    %2578 = vmatpush.msra.mxu0 0.0
    %2579 = vmatpush.msra.mxu0 0.0
    %2580 = vmatpush.msra.mxu0 0.0
    %2581 = vmatpush.msra.mxu0 %v17
    %2582 = vmatmul.f32.gmra.mxu0 %v2564
    %v2583 = vpop.f32.mrf.mxu0
    %v2584 = vadd.f32 %v2559, %v2583
    %2585 = vdwg.mxu0
    %v2586 = vadd.f32 %v2584, %v19
    %vm2587 = vcmp.lt.f32.partialorder %v2586, 0.0
    %v2588 = vsel %vm2587, -1.0, 1.0
    %v2589 = vand.u32 2147483647, %v2586
    %vm2590 = vcmp.gt.f32.partialorder %v2589, 2.4142137
    %vm2591 = vcmp.gt.f32.partialorder %v2589, 0.41421357
    %v2592 = vsub.f32 %v2589, 1.0
    %v2593 = vsel %vm2591, %v2592, %v2589
    %v2594 = vsel %vm2590, -1.0, %v2593
    %v2595 = vmax.f32 %v2589, 1e-30
    %v2596 = vadd.f32 %v2589, 1.0
    %v2597 = vsel %vm2591, %v2596, 1.0
    %v2598 = vsel %vm2590, %v2595, %v2597
    %v2599 = vrcp.pop %v2598
    %v2600 = vmul.f32 %v2598, %v2599
    %v2601 = vsub.f32 1.0, %v2600
    %v2602 = vmul.f32 %v2599, %v2601
    %v2603 = vadd.f32 %v2599, %v2602
    %vm2604 = vweird.f32 %v2598
    %vm2605 = vweird.f32 %v2599
    %vm2606 = vmor %vm2604, %vm2605
    %v2607 = vsel %vm2606, %v2599, %v2603
    %v2608 = vand.u32 2147483647, %v2598
    %vm2609 = vcmp.eq.f32.partialorder %v2608, 8.507059e+37
    %v2610 = vand.u32 %v2598, 2147483648
    %v2611 = vor.u32 1.1754944e-38, %v2610
    %v2612 = vsel %vm2609, %v2611, %v2607
    %v2613 = vmul.f32 %v2594, %v2612
    %v2614 = vsel %vm2591, 0.7853982, 0.0
    %v2615 = vsel %vm2590, 1.5707964, %v2614
    %v2616 = vmul.f32 %v2613, %v2613
    %v2617 = vmul.f32 %v2616, 0.080537446
    %v2618 = vsub.f32 %v2617, 0.13877685
    %v2619 = vmul.f32 %v2618, %v2616
    %v2620 = vadd.f32 %v2619, 0.19977711
    %v2621 = vmul.f32 %v2620, %v2616
    %v2622 = vsub.f32 %v2621, 0.3333295
    %v2623 = vadd.f32 %v2615, %v2613
    %v2624 = vmul.f32 %v2613, %v2616
    %v2625 = vmul.f32 %v2624, %v2622
    %v2626 = vadd.f32 %v2623, %v2625
    %v2627 = vmul.f32 %v2588, %v2626
    %v2628 = vmul.f32 %v2586, %v2586
    %vm2629 = vcmp.lt.f32.partialorder %v2628, 0.0
    %v2630 = vsel %vm2629, -1.0, 1.0
    %v2631 = vand.u32 2147483647, %v2628
    %vm2632 = vcmp.gt.f32.partialorder %v2631, 2.4142137
    %vm2633 = vcmp.gt.f32.partialorder %v2631, 0.41421357
    %v2634 = vsub.f32 %v2631, 1.0
    %v2635 = vsel %vm2633, %v2634, %v2631
    %v2636 = vsel %vm2632, -1.0, %v2635
    %v2637 = vmax.f32 %v2631, 1e-30
    %v2638 = vadd.f32 %v2631, 1.0
    %v2639 = vsel %vm2633, %v2638, 1.0
    %v2640 = vsel %vm2632, %v2637, %v2639
    %v2641 = vrcp.pop %v2640
    %v2642 = vmul.f32 %v2640, %v2641
    %v2643 = vsub.f32 1.0, %v2642
    %v2644 = vmul.f32 %v2641, %v2643
    %v2645 = vadd.f32 %v2641, %v2644
    %vm2646 = vweird.f32 %v2640
    %vm2647 = vweird.f32 %v2641
    %vm2648 = vmor %vm2646, %vm2647
    %v2649 = vsel %vm2648, %v2641, %v2645
    %v2650 = vand.u32 2147483647, %v2640
    %vm2651 = vcmp.eq.f32.partialorder %v2650, 8.507059e+37
    %v2652 = vand.u32 %v2640, 2147483648
    %v2653 = vor.u32 1.1754944e-38, %v2652
    %v2654 = vsel %vm2651, %v2653, %v2649
    %v2655 = vmul.f32 %v2636, %v2654
    %v2656 = vsel %vm2633, 0.7853982, 0.0
    %v2657 = vsel %vm2632, 1.5707964, %v2656
    %v2658 = vmul.f32 %v2655, %v2655
    %v2659 = vmul.f32 %v2658, 0.080537446
    %v2660 = vsub.f32 %v2659, 0.13877685
    %v2661 = vmul.f32 %v2660, %v2658
    %v2662 = vadd.f32 %v2661, 0.19977711
    %v2663 = vmul.f32 %v2662, %v2658
    %v2664 = vsub.f32 %v2663, 0.3333295
    %v2665 = vadd.f32 %v2657, %v2655
    %v2666 = vmul.f32 %v2655, %v2658
    %v2667 = vmul.f32 %v2666, %v2664
    %v2668 = vadd.f32 %v2665, %v2667
    %v2669 = vmul.f32 %v2630, %v2668
    %v2671 = vsel %vm112, %v2669, 0
    %2673 = vmatpush.msra.mxu0 0.0
    %2674 = vmatpush.msra.mxu0 0.0
    %2675 = vmatpush.msra.mxu0 0.0
    %2676 = vmatpush.msra.mxu0 0.0
    %2677 = vmatpush.msra.mxu0 0.0
    %2678 = vmatpush.msra.mxu0 0.0
    %2679 = vmatpush.msra.mxu0 0.0
    %2680 = vmatpush.msra.mxu0 0.0
    %2681 = vmatpush.msra.mxu0 0.0
    %2682 = vmatpush.msra.mxu0 0.0
    %2683 = vmatpush.msra.mxu0 0.0
    %2684 = vmatpush.msra.mxu0 0.0
    %2685 = vmatpush.msra.mxu0 0.0
    %2686 = vmatpush.msra.mxu0 0.0
    %2687 = vmatpush.msra.mxu0 0.0
    %2688 = vmatpush.msra.mxu0 %v21
    %2689 = vmatmul.f32.gmra.mxu0 %v2671
    %v2690 = vpop.f32.mrf.mxu0
    %v2691 = vadd.f32 0.0, %v2690
    %2692 = vdwg.mxu0
    %v2694 = vsel %vm112, %v2627, 0
    %2696 = vmatpush.msra.mxu0 0.0
    %2697 = vmatpush.msra.mxu0 0.0
    %2698 = vmatpush.msra.mxu0 0.0
    %2699 = vmatpush.msra.mxu0 0.0
    %2700 = vmatpush.msra.mxu0 0.0
    %2701 = vmatpush.msra.mxu0 0.0
    %2702 = vmatpush.msra.mxu0 0.0
    %2703 = vmatpush.msra.mxu0 0.0
    %2704 = vmatpush.msra.mxu0 0.0
    %2705 = vmatpush.msra.mxu0 0.0
    %2706 = vmatpush.msra.mxu0 0.0
    %2707 = vmatpush.msra.mxu0 0.0
    %2708 = vmatpush.msra.mxu0 0.0
    %2709 = vmatpush.msra.mxu0 0.0
    %2710 = vmatpush.msra.mxu0 0.0
    %2711 = vmatpush.msra.mxu0 %v20
    %2712 = vmatmul.f32.gmra.mxu0 %v2694
    %v2713 = vpop.f32.mrf.mxu0
    %v2714 = vadd.f32 %v2691, %v2713
    %2715 = vdwg.mxu0
    %v2716 = vadd.f32 %v2714, %v22
    %v2717 = vsub.f32 0.0, %v2716
    %v2718 = vmul.f32 %v2717, 1.442695
    %v2719 = vpow.pop %v2718
    %v2720 = vadd.f32 %v2719, 1.0
    %v2721 = vrcp.pop %v2720
    %v2722 = vmul.f32 %v2720, %v2721
    %v2723 = vsub.f32 1.0, %v2722
    %v2724 = vmul.f32 %v2721, %v2723
    %v2725 = vadd.f32 %v2721, %v2724
    %vm2726 = vweird.f32 %v2720
    %vm2727 = vweird.f32 %v2721
    %vm2728 = vmor %vm2726, %vm2727
    %v2729 = vsel %vm2728, %v2721, %v2725
    %v2730 = vand.u32 2147483647, %v2720
    %vm2731 = vcmp.eq.f32.partialorder %v2730, 8.507059e+37
    %v2732 = vand.u32 %v2720, 2147483648
    %v2733 = vor.u32 1.1754944e-38, %v2732
    %v2734 = vsel %vm2731, %v2733, %v2729
    %v2735 = vmul.f32 1.0, %v2734
    %v2736 = vmul.f32 %v2735, 2.0
    %v2737 = vsub.f32 %v2736, 1.0
    %v2738 = vmul.f32 %v2446, %v2735
    %2740 = vrot.lane.b32.xlu0 %v2737, 112
    %v2741 = vpop.permute.xlu0 %2740
    %v2743 = vmul.f32 %v2735, %v2741
    %2745 = vrot.lane.b32.xlu0 %v2743, 120
    %v2746 = vpop.permute.xlu0 %2745
    %v2748 = vadd.f32 %v2738, %v2746
    %v2749 = vtanh.pop %v2748
    %2751 = vrot.lane.b32.xlu0 %v2749, 16
    %v2752 = vpop.permute.xlu0 %2751
    %v2754 = vmul.f32 %v2735, %v2752
    %vm2755 = vcmp.lt.f32.partialorder %v2754, 0.0
    %v2756 = vsel %vm2755, -1.0, 1.0
    %v2757 = vand.u32 2147483647, %v2754
    %vm2758 = vcmp.gt.f32.partialorder %v2757, 2.4142137
    %vm2759 = vcmp.gt.f32.partialorder %v2757, 0.41421357
    %v2760 = vsub.f32 %v2757, 1.0
    %v2761 = vsel %vm2759, %v2760, %v2757
    %v2762 = vsel %vm2758, -1.0, %v2761
    %v2763 = vmax.f32 %v2757, 1e-30
    %v2764 = vadd.f32 %v2757, 1.0
    %v2765 = vsel %vm2759, %v2764, 1.0
    %v2766 = vsel %vm2758, %v2763, %v2765
    %v2767 = vrcp.pop %v2766
    %v2768 = vmul.f32 %v2766, %v2767
    %v2769 = vsub.f32 1.0, %v2768
    %v2770 = vmul.f32 %v2767, %v2769
    %v2771 = vadd.f32 %v2767, %v2770
    %vm2772 = vweird.f32 %v2766
    %vm2773 = vweird.f32 %v2767
    %vm2774 = vmor %vm2772, %vm2773
    %v2775 = vsel %vm2774, %v2767, %v2771
    %v2776 = vand.u32 2147483647, %v2766
    %vm2777 = vcmp.eq.f32.partialorder %v2776, 8.507059e+37
    %v2778 = vand.u32 %v2766, 2147483648
    %v2779 = vor.u32 1.1754944e-38, %v2778
    %v2780 = vsel %vm2777, %v2779, %v2775
    %v2781 = vmul.f32 %v2762, %v2780
    %v2782 = vsel %vm2759, 0.7853982, 0.0
    %v2783 = vsel %vm2758, 1.5707964, %v2782
    %v2784 = vmul.f32 %v2781, %v2781
    %v2785 = vmul.f32 %v2784, 0.080537446
    %v2786 = vsub.f32 %v2785, 0.13877685
    %v2787 = vmul.f32 %v2786, %v2784
    %v2788 = vadd.f32 %v2787, 0.19977711
    %v2789 = vmul.f32 %v2788, %v2784
    %v2790 = vsub.f32 %v2789, 0.3333295
    %v2791 = vadd.f32 %v2783, %v2781
    %v2792 = vmul.f32 %v2781, %v2784
    %v2793 = vmul.f32 %v2792, %v2790
    %v2794 = vadd.f32 %v2791, %v2793
    %v2795 = vmul.f32 %v2756, %v2794
    %v2796 = vmul.f32 %v2754, %v2754
    %vm2797 = vcmp.lt.f32.partialorder %v2796, 0.0
    %v2798 = vsel %vm2797, -1.0, 1.0
    %v2799 = vand.u32 2147483647, %v2796
    %vm2800 = vcmp.gt.f32.partialorder %v2799, 2.4142137
    %vm2801 = vcmp.gt.f32.partialorder %v2799, 0.41421357
    %v2802 = vsub.f32 %v2799, 1.0
    %v2803 = vsel %vm2801, %v2802, %v2799
    %v2804 = vsel %vm2800, -1.0, %v2803
    %v2805 = vmax.f32 %v2799, 1e-30
    %v2806 = vadd.f32 %v2799, 1.0
    %v2807 = vsel %vm2801, %v2806, 1.0
    %v2808 = vsel %vm2800, %v2805, %v2807
    %v2809 = vrcp.pop %v2808
    %v2810 = vmul.f32 %v2808, %v2809
    %v2811 = vsub.f32 1.0, %v2810
    %v2812 = vmul.f32 %v2809, %v2811
    %v2813 = vadd.f32 %v2809, %v2812
    %vm2814 = vweird.f32 %v2808
    %vm2815 = vweird.f32 %v2809
    %vm2816 = vmor %vm2814, %vm2815
    %v2817 = vsel %vm2816, %v2809, %v2813
    %v2818 = vand.u32 2147483647, %v2808
    %vm2819 = vcmp.eq.f32.partialorder %v2818, 8.507059e+37
    %v2820 = vand.u32 %v2808, 2147483648
    %v2821 = vor.u32 1.1754944e-38, %v2820
    %v2822 = vsel %vm2819, %v2821, %v2817
    %v2823 = vmul.f32 %v2804, %v2822
    %v2824 = vsel %vm2801, 0.7853982, 0.0
    %v2825 = vsel %vm2800, 1.5707964, %v2824
    %v2826 = vmul.f32 %v2823, %v2823
    %v2827 = vmul.f32 %v2826, 0.080537446
    %v2828 = vsub.f32 %v2827, 0.13877685
    %v2829 = vmul.f32 %v2828, %v2826
    %v2830 = vadd.f32 %v2829, 0.19977711
    %v2831 = vmul.f32 %v2830, %v2826
    %v2832 = vsub.f32 %v2831, 0.3333295
    %v2833 = vadd.f32 %v2825, %v2823
    %v2834 = vmul.f32 %v2823, %v2826
    %v2835 = vmul.f32 %v2834, %v2832
    %v2836 = vadd.f32 %v2833, %v2835
    %v2837 = vmul.f32 %v2798, %v2836
    %2839 = vrot.lane.b32.xlu0 %v2837, 112
    %v2840 = vpop.permute.xlu0 %2839
    %v2841 = vsel %vm112, %v2840, 0
    %2843 = vmatpush.msra.mxu0 0.0
    %2844 = vmatpush.msra.mxu0 0.0
    %2845 = vmatpush.msra.mxu0 0.0
    %2846 = vmatpush.msra.mxu0 0.0
    %2847 = vmatpush.msra.mxu0 0.0
    %2848 = vmatpush.msra.mxu0 0.0
    %2849 = vmatpush.msra.mxu0 0.0
    %2850 = vmatpush.msra.mxu0 0.0
    %2851 = vmatpush.msra.mxu0 0.0
    %2852 = vmatpush.msra.mxu0 0.0
    %2853 = vmatpush.msra.mxu0 0.0
    %2854 = vmatpush.msra.mxu0 0.0
    %2855 = vmatpush.msra.mxu0 0.0
    %2856 = vmatpush.msra.mxu0 0.0
    %2857 = vmatpush.msra.mxu0 0.0
    %2858 = vmatpush.msra.mxu0 %v24
    %2859 = vmatmul.f32.gmra.mxu0 %v2841
    %v2860 = vpop.f32.mrf.mxu0
    %v2861 = vadd.f32 0.0, %v2860
    %2862 = vdwg.mxu0
    %2864 = vrot.lane.b32.xlu0 %v2795, 112
    %v2865 = vpop.permute.xlu0 %2864
    %v2866 = vsel %vm112, %v2865, 0
    %2868 = vmatpush.msra.mxu0 0.0
    %2869 = vmatpush.msra.mxu0 0.0
    %2870 = vmatpush.msra.mxu0 0.0
    %2871 = vmatpush.msra.mxu0 0.0
    %2872 = vmatpush.msra.mxu0 0.0
    %2873 = vmatpush.msra.mxu0 0.0
    %2874 = vmatpush.msra.mxu0 0.0
    %2875 = vmatpush.msra.mxu0 0.0
    %2876 = vmatpush.msra.mxu0 0.0
    %2877 = vmatpush.msra.mxu0 0.0
    %2878 = vmatpush.msra.mxu0 0.0
    %2879 = vmatpush.msra.mxu0 0.0
    %2880 = vmatpush.msra.mxu0 0.0
    %2881 = vmatpush.msra.mxu0 0.0
    %2882 = vmatpush.msra.mxu0 0.0
    %2883 = vmatpush.msra.mxu0 %v23
    %2884 = vmatmul.f32.gmra.mxu0 %v2866
    %v2885 = vpop.f32.mrf.mxu0
    %v2886 = vadd.f32 %v2861, %v2885
    %2887 = vdwg.mxu0
    %v2888 = vadd.f32 %v2886, %v25
    %vm2889 = vcmp.lt.f32.partialorder %v2888, 0.0
    %v2890 = vsel %vm2889, -1.0, 1.0
    %v2891 = vand.u32 2147483647, %v2888
    %vm2892 = vcmp.gt.f32.partialorder %v2891, 2.4142137
    %vm2893 = vcmp.gt.f32.partialorder %v2891, 0.41421357
    %v2894 = vsub.f32 %v2891, 1.0
    %v2895 = vsel %vm2893, %v2894, %v2891
    %v2896 = vsel %vm2892, -1.0, %v2895
    %v2897 = vmax.f32 %v2891, 1e-30
    %v2898 = vadd.f32 %v2891, 1.0
    %v2899 = vsel %vm2893, %v2898, 1.0
    %v2900 = vsel %vm2892, %v2897, %v2899
    %v2901 = vrcp.pop %v2900
    %v2902 = vmul.f32 %v2900, %v2901
    %v2903 = vsub.f32 1.0, %v2902
    %v2904 = vmul.f32 %v2901, %v2903
    %v2905 = vadd.f32 %v2901, %v2904
    %vm2906 = vweird.f32 %v2900
    %vm2907 = vweird.f32 %v2901
    %vm2908 = vmor %vm2906, %vm2907
    %v2909 = vsel %vm2908, %v2901, %v2905
    %v2910 = vand.u32 2147483647, %v2900
    %vm2911 = vcmp.eq.f32.partialorder %v2910, 8.507059e+37
    %v2912 = vand.u32 %v2900, 2147483648
    %v2913 = vor.u32 1.1754944e-38, %v2912
    %v2914 = vsel %vm2911, %v2913, %v2909
    %v2915 = vmul.f32 %v2896, %v2914
    %v2916 = vsel %vm2893, 0.7853982, 0.0
    %v2917 = vsel %vm2892, 1.5707964, %v2916
    %v2918 = vmul.f32 %v2915, %v2915
    %v2919 = vmul.f32 %v2918, 0.080537446
    %v2920 = vsub.f32 %v2919, 0.13877685
    %v2921 = vmul.f32 %v2920, %v2918
    %v2922 = vadd.f32 %v2921, 0.19977711
    %v2923 = vmul.f32 %v2922, %v2918
    %v2924 = vsub.f32 %v2923, 0.3333295
    %v2925 = vadd.f32 %v2917, %v2915
    %v2926 = vmul.f32 %v2915, %v2918
    %v2927 = vmul.f32 %v2926, %v2924
    %v2928 = vadd.f32 %v2925, %v2927
    %v2929 = vmul.f32 %v2890, %v2928
    %v2930 = vmul.f32 %v2888, %v2888
    %vm2931 = vcmp.lt.f32.partialorder %v2930, 0.0
    %v2932 = vsel %vm2931, -1.0, 1.0
    %v2933 = vand.u32 2147483647, %v2930
    %vm2934 = vcmp.gt.f32.partialorder %v2933, 2.4142137
    %vm2935 = vcmp.gt.f32.partialorder %v2933, 0.41421357
    %v2936 = vsub.f32 %v2933, 1.0
    %v2937 = vsel %vm2935, %v2936, %v2933
    %v2938 = vsel %vm2934, -1.0, %v2937
    %v2939 = vmax.f32 %v2933, 1e-30
    %v2940 = vadd.f32 %v2933, 1.0
    %v2941 = vsel %vm2935, %v2940, 1.0
    %v2942 = vsel %vm2934, %v2939, %v2941
    %v2943 = vrcp.pop %v2942
    %v2944 = vmul.f32 %v2942, %v2943
    %v2945 = vsub.f32 1.0, %v2944
    %v2946 = vmul.f32 %v2943, %v2945
    %v2947 = vadd.f32 %v2943, %v2946
    %vm2948 = vweird.f32 %v2942
    %vm2949 = vweird.f32 %v2943
    %vm2950 = vmor %vm2948, %vm2949
    %v2951 = vsel %vm2950, %v2943, %v2947
    %v2952 = vand.u32 2147483647, %v2942
    %vm2953 = vcmp.eq.f32.partialorder %v2952, 8.507059e+37
    %v2954 = vand.u32 %v2942, 2147483648
    %v2955 = vor.u32 1.1754944e-38, %v2954
    %v2956 = vsel %vm2953, %v2955, %v2951
    %v2957 = vmul.f32 %v2938, %v2956
    %v2958 = vsel %vm2935, 0.7853982, 0.0
    %v2959 = vsel %vm2934, 1.5707964, %v2958
    %v2960 = vmul.f32 %v2957, %v2957
    %v2961 = vmul.f32 %v2960, 0.080537446
    %v2962 = vsub.f32 %v2961, 0.13877685
    %v2963 = vmul.f32 %v2962, %v2960
    %v2964 = vadd.f32 %v2963, 0.19977711
    %v2965 = vmul.f32 %v2964, %v2960
    %v2966 = vsub.f32 %v2965, 0.3333295
    %v2967 = vadd.f32 %v2959, %v2957
    %v2968 = vmul.f32 %v2957, %v2960
    %v2969 = vmul.f32 %v2968, %v2966
    %v2970 = vadd.f32 %v2967, %v2969
    %v2971 = vmul.f32 %v2932, %v2970
    %v2973 = vsel %vm112, %v2971, 0
    %2975 = vmatpush.msra.mxu0 0.0
    %2976 = vmatpush.msra.mxu0 0.0
    %2977 = vmatpush.msra.mxu0 0.0
    %2978 = vmatpush.msra.mxu0 0.0
    %2979 = vmatpush.msra.mxu0 0.0
    %2980 = vmatpush.msra.mxu0 0.0
    %2981 = vmatpush.msra.mxu0 0.0
    %2982 = vmatpush.msra.mxu0 0.0
    %2983 = vmatpush.msra.mxu0 0.0
    %2984 = vmatpush.msra.mxu0 0.0
    %2985 = vmatpush.msra.mxu0 0.0
    %2986 = vmatpush.msra.mxu0 0.0
    %2987 = vmatpush.msra.mxu0 0.0
    %2988 = vmatpush.msra.mxu0 0.0
    %2989 = vmatpush.msra.mxu0 0.0
    %2990 = vmatpush.msra.mxu0 %v21
    %2991 = vmatmul.f32.gmra.mxu0 %v2973
    %v2992 = vpop.f32.mrf.mxu0
    %v2993 = vadd.f32 0.0, %v2992
    %2994 = vdwg.mxu0
    %v2996 = vsel %vm112, %v2929, 0
    %2998 = vmatpush.msra.mxu0 0.0
    %2999 = vmatpush.msra.mxu0 0.0
    %3000 = vmatpush.msra.mxu0 0.0
    %3001 = vmatpush.msra.mxu0 0.0
    %3002 = vmatpush.msra.mxu0 0.0
    %3003 = vmatpush.msra.mxu0 0.0
    %3004 = vmatpush.msra.mxu0 0.0
    %3005 = vmatpush.msra.mxu0 0.0
    %3006 = vmatpush.msra.mxu0 0.0
    %3007 = vmatpush.msra.mxu0 0.0
    %3008 = vmatpush.msra.mxu0 0.0
    %3009 = vmatpush.msra.mxu0 0.0
    %3010 = vmatpush.msra.mxu0 0.0
    %3011 = vmatpush.msra.mxu0 0.0
    %3012 = vmatpush.msra.mxu0 0.0
    %3013 = vmatpush.msra.mxu0 %v20
    %3014 = vmatmul.f32.gmra.mxu0 %v2996
    %v3015 = vpop.f32.mrf.mxu0
    %v3016 = vadd.f32 %v2993, %v3015
    %3017 = vdwg.mxu0
    %v3018 = vadd.f32 %v3016, %v22
    %v3019 = vsub.f32 0.0, %v3018
    %v3020 = vmul.f32 %v3019, 1.442695
    %v3021 = vpow.pop %v3020
    %v3022 = vadd.f32 %v3021, 1.0
    %v3023 = vrcp.pop %v3022
    %v3024 = vmul.f32 %v3022, %v3023
    %v3025 = vsub.f32 1.0, %v3024
    %v3026 = vmul.f32 %v3023, %v3025
    %v3027 = vadd.f32 %v3023, %v3026
    %vm3028 = vweird.f32 %v3022
    %vm3029 = vweird.f32 %v3023
    %vm3030 = vmor %vm3028, %vm3029
    %v3031 = vsel %vm3030, %v3023, %v3027
    %v3032 = vand.u32 2147483647, %v3022
    %vm3033 = vcmp.eq.f32.partialorder %v3032, 8.507059e+37
    %v3034 = vand.u32 %v3022, 2147483648
    %v3035 = vor.u32 1.1754944e-38, %v3034
    %v3036 = vsel %vm3033, %v3035, %v3031
    %v3037 = vmul.f32 1.0, %v3036
    %v3038 = vmul.f32 %v3037, 2.0
    %v3039 = vsub.f32 %v3038, 1.0
    %v3040 = vmul.f32 %v2748, %v3037
    %3042 = vrot.lane.b32.xlu0 %v3039, 112
    %v3043 = vpop.permute.xlu0 %3042
    %v3045 = vmul.f32 %v3037, %v3043
    %3047 = vrot.lane.b32.xlu0 %v3045, 120
    %v3048 = vpop.permute.xlu0 %3047
    %v3050 = vadd.f32 %v3040, %v3048
    %v3051 = vtanh.pop %v3050
    %3053 = vrot.lane.b32.xlu0 %v3051, 16
    %v3054 = vpop.permute.xlu0 %3053
    %v3056 = vmul.f32 %v3037, %v3054
    %vm3057 = vcmp.lt.f32.partialorder %v3056, 0.0
    %v3058 = vsel %vm3057, -1.0, 1.0
    %v3059 = vand.u32 2147483647, %v3056
    %vm3060 = vcmp.gt.f32.partialorder %v3059, 2.4142137
    %vm3061 = vcmp.gt.f32.partialorder %v3059, 0.41421357
    %v3062 = vsub.f32 %v3059, 1.0
    %v3063 = vsel %vm3061, %v3062, %v3059
    %v3064 = vsel %vm3060, -1.0, %v3063
    %v3065 = vmax.f32 %v3059, 1e-30
    %v3066 = vadd.f32 %v3059, 1.0
    %v3067 = vsel %vm3061, %v3066, 1.0
    %v3068 = vsel %vm3060, %v3065, %v3067
    %v3069 = vrcp.pop %v3068
    %v3070 = vmul.f32 %v3068, %v3069
    %v3071 = vsub.f32 1.0, %v3070
    %v3072 = vmul.f32 %v3069, %v3071
    %v3073 = vadd.f32 %v3069, %v3072
    %vm3074 = vweird.f32 %v3068
    %vm3075 = vweird.f32 %v3069
    %vm3076 = vmor %vm3074, %vm3075
    %v3077 = vsel %vm3076, %v3069, %v3073
    %v3078 = vand.u32 2147483647, %v3068
    %vm3079 = vcmp.eq.f32.partialorder %v3078, 8.507059e+37
    %v3080 = vand.u32 %v3068, 2147483648
    %v3081 = vor.u32 1.1754944e-38, %v3080
    %v3082 = vsel %vm3079, %v3081, %v3077
    %v3083 = vmul.f32 %v3064, %v3082
    %v3084 = vsel %vm3061, 0.7853982, 0.0
    %v3085 = vsel %vm3060, 1.5707964, %v3084
    %v3086 = vmul.f32 %v3083, %v3083
    %v3087 = vmul.f32 %v3086, 0.080537446
    %v3088 = vsub.f32 %v3087, 0.13877685
    %v3089 = vmul.f32 %v3088, %v3086
    %v3090 = vadd.f32 %v3089, 0.19977711
    %v3091 = vmul.f32 %v3090, %v3086
    %v3092 = vsub.f32 %v3091, 0.3333295
    %v3093 = vadd.f32 %v3085, %v3083
    %v3094 = vmul.f32 %v3083, %v3086
    %v3095 = vmul.f32 %v3094, %v3092
    %v3096 = vadd.f32 %v3093, %v3095
    %v3097 = vmul.f32 %v3058, %v3096
    %v3098 = vmul.f32 %v3056, %v3056
    %vm3099 = vcmp.lt.f32.partialorder %v3098, 0.0
    %v3100 = vsel %vm3099, -1.0, 1.0
    %v3101 = vand.u32 2147483647, %v3098
    %vm3102 = vcmp.gt.f32.partialorder %v3101, 2.4142137
    %vm3103 = vcmp.gt.f32.partialorder %v3101, 0.41421357
    %v3104 = vsub.f32 %v3101, 1.0
    %v3105 = vsel %vm3103, %v3104, %v3101
    %v3106 = vsel %vm3102, -1.0, %v3105
    %v3107 = vmax.f32 %v3101, 1e-30
    %v3108 = vadd.f32 %v3101, 1.0
    %v3109 = vsel %vm3103, %v3108, 1.0
    %v3110 = vsel %vm3102, %v3107, %v3109
    %v3111 = vrcp.pop %v3110
    %v3112 = vmul.f32 %v3110, %v3111
    %v3113 = vsub.f32 1.0, %v3112
    %v3114 = vmul.f32 %v3111, %v3113
    %v3115 = vadd.f32 %v3111, %v3114
    %vm3116 = vweird.f32 %v3110
    %vm3117 = vweird.f32 %v3111
    %vm3118 = vmor %vm3116, %vm3117
    %v3119 = vsel %vm3118, %v3111, %v3115
    %v3120 = vand.u32 2147483647, %v3110
    %vm3121 = vcmp.eq.f32.partialorder %v3120, 8.507059e+37
    %v3122 = vand.u32 %v3110, 2147483648
    %v3123 = vor.u32 1.1754944e-38, %v3122
    %v3124 = vsel %vm3121, %v3123, %v3119
    %v3125 = vmul.f32 %v3106, %v3124
    %v3126 = vsel %vm3103, 0.7853982, 0.0
    %v3127 = vsel %vm3102, 1.5707964, %v3126
    %v3128 = vmul.f32 %v3125, %v3125
    %v3129 = vmul.f32 %v3128, 0.080537446
    %v3130 = vsub.f32 %v3129, 0.13877685
    %v3131 = vmul.f32 %v3130, %v3128
    %v3132 = vadd.f32 %v3131, 0.19977711
    %v3133 = vmul.f32 %v3132, %v3128
    %v3134 = vsub.f32 %v3133, 0.3333295
    %v3135 = vadd.f32 %v3127, %v3125
    %v3136 = vmul.f32 %v3125, %v3128
    %v3137 = vmul.f32 %v3136, %v3134
    %v3138 = vadd.f32 %v3135, %v3137
    %v3139 = vmul.f32 %v3100, %v3138
    %3141 = vrot.lane.b32.xlu0 %v3139, 112
    %v3142 = vpop.permute.xlu0 %3141
    %v3143 = vsel %vm112, %v3142, 0
    %3145 = vmatpush.msra.mxu0 0.0
    %3146 = vmatpush.msra.mxu0 0.0
    %3147 = vmatpush.msra.mxu0 0.0
    %3148 = vmatpush.msra.mxu0 0.0
    %3149 = vmatpush.msra.mxu0 0.0
    %3150 = vmatpush.msra.mxu0 0.0
    %3151 = vmatpush.msra.mxu0 0.0
    %3152 = vmatpush.msra.mxu0 0.0
    %3153 = vmatpush.msra.mxu0 0.0
    %3154 = vmatpush.msra.mxu0 0.0
    %3155 = vmatpush.msra.mxu0 0.0
    %3156 = vmatpush.msra.mxu0 0.0
    %3157 = vmatpush.msra.mxu0 0.0
    %3158 = vmatpush.msra.mxu0 0.0
    %3159 = vmatpush.msra.mxu0 0.0
    %3160 = vmatpush.msra.mxu0 %v24
    %3161 = vmatmul.f32.gmra.mxu0 %v3143
    %v3162 = vpop.f32.mrf.mxu0
    %v3163 = vadd.f32 0.0, %v3162
    %3164 = vdwg.mxu0
    %3166 = vrot.lane.b32.xlu0 %v3097, 112
    %v3167 = vpop.permute.xlu0 %3166
    %v3168 = vsel %vm112, %v3167, 0
    %3170 = vmatpush.msra.mxu0 0.0
    %3171 = vmatpush.msra.mxu0 0.0
    %3172 = vmatpush.msra.mxu0 0.0
    %3173 = vmatpush.msra.mxu0 0.0
    %3174 = vmatpush.msra.mxu0 0.0
    %3175 = vmatpush.msra.mxu0 0.0
    %3176 = vmatpush.msra.mxu0 0.0
    %3177 = vmatpush.msra.mxu0 0.0
    %3178 = vmatpush.msra.mxu0 0.0
    %3179 = vmatpush.msra.mxu0 0.0
    %3180 = vmatpush.msra.mxu0 0.0
    %3181 = vmatpush.msra.mxu0 0.0
    %3182 = vmatpush.msra.mxu0 0.0
    %3183 = vmatpush.msra.mxu0 0.0
    %3184 = vmatpush.msra.mxu0 0.0
    %3185 = vmatpush.msra.mxu0 %v23
    %3186 = vmatmul.f32.gmra.mxu0 %v3168
    %v3187 = vpop.f32.mrf.mxu0
    %v3188 = vadd.f32 %v3163, %v3187
    %3189 = vdwg.mxu0
    %v3190 = vadd.f32 %v3188, %v25
    %vm3191 = vcmp.lt.f32.partialorder %v3190, 0.0
    %v3192 = vsel %vm3191, -1.0, 1.0
    %v3193 = vand.u32 2147483647, %v3190
    %vm3194 = vcmp.gt.f32.partialorder %v3193, 2.4142137
    %vm3195 = vcmp.gt.f32.partialorder %v3193, 0.41421357
    %v3196 = vsub.f32 %v3193, 1.0
    %v3197 = vsel %vm3195, %v3196, %v3193
    %v3198 = vsel %vm3194, -1.0, %v3197
    %v3199 = vmax.f32 %v3193, 1e-30
    %v3200 = vadd.f32 %v3193, 1.0
    %v3201 = vsel %vm3195, %v3200, 1.0
    %v3202 = vsel %vm3194, %v3199, %v3201
    %v3203 = vrcp.pop %v3202
    %v3204 = vmul.f32 %v3202, %v3203
    %v3205 = vsub.f32 1.0, %v3204
    %v3206 = vmul.f32 %v3203, %v3205
    %v3207 = vadd.f32 %v3203, %v3206
    %vm3208 = vweird.f32 %v3202
    %vm3209 = vweird.f32 %v3203
    %vm3210 = vmor %vm3208, %vm3209
    %v3211 = vsel %vm3210, %v3203, %v3207
    %v3212 = vand.u32 2147483647, %v3202
    %vm3213 = vcmp.eq.f32.partialorder %v3212, 8.507059e+37
    %v3214 = vand.u32 %v3202, 2147483648
    %v3215 = vor.u32 1.1754944e-38, %v3214
    %v3216 = vsel %vm3213, %v3215, %v3211
    %v3217 = vmul.f32 %v3198, %v3216
    %v3218 = vsel %vm3195, 0.7853982, 0.0
    %v3219 = vsel %vm3194, 1.5707964, %v3218
    %v3220 = vmul.f32 %v3217, %v3217
    %v3221 = vmul.f32 %v3220, 0.080537446
    %v3222 = vsub.f32 %v3221, 0.13877685
    %v3223 = vmul.f32 %v3222, %v3220
    %v3224 = vadd.f32 %v3223, 0.19977711
    %v3225 = vmul.f32 %v3224, %v3220
    %v3226 = vsub.f32 %v3225, 0.3333295
    %v3227 = vadd.f32 %v3219, %v3217
    %v3228 = vmul.f32 %v3217, %v3220
    %v3229 = vmul.f32 %v3228, %v3226
    %v3230 = vadd.f32 %v3227, %v3229
    %v3231 = vmul.f32 %v3192, %v3230
    %v3232 = vmul.f32 %v3190, %v3190
    %vm3233 = vcmp.lt.f32.partialorder %v3232, 0.0
    %v3234 = vsel %vm3233, -1.0, 1.0
    %v3235 = vand.u32 2147483647, %v3232
    %vm3236 = vcmp.gt.f32.partialorder %v3235, 2.4142137
    %vm3237 = vcmp.gt.f32.partialorder %v3235, 0.41421357
    %v3238 = vsub.f32 %v3235, 1.0
    %v3239 = vsel %vm3237, %v3238, %v3235
    %v3240 = vsel %vm3236, -1.0, %v3239
    %v3241 = vmax.f32 %v3235, 1e-30
    %v3242 = vadd.f32 %v3235, 1.0
    %v3243 = vsel %vm3237, %v3242, 1.0
    %v3244 = vsel %vm3236, %v3241, %v3243
    %v3245 = vrcp.pop %v3244
    %v3246 = vmul.f32 %v3244, %v3245
    %v3247 = vsub.f32 1.0, %v3246
    %v3248 = vmul.f32 %v3245, %v3247
    %v3249 = vadd.f32 %v3245, %v3248
    %vm3250 = vweird.f32 %v3244
    %vm3251 = vweird.f32 %v3245
    %vm3252 = vmor %vm3250, %vm3251
    %v3253 = vsel %vm3252, %v3245, %v3249
    %v3254 = vand.u32 2147483647, %v3244
    %vm3255 = vcmp.eq.f32.partialorder %v3254, 8.507059e+37
    %v3256 = vand.u32 %v3244, 2147483648
    %v3257 = vor.u32 1.1754944e-38, %v3256
    %v3258 = vsel %vm3255, %v3257, %v3253
    %v3259 = vmul.f32 %v3240, %v3258
    %v3260 = vsel %vm3237, 0.7853982, 0.0
    %v3261 = vsel %vm3236, 1.5707964, %v3260
    %v3262 = vmul.f32 %v3259, %v3259
    %v3263 = vmul.f32 %v3262, 0.080537446
    %v3264 = vsub.f32 %v3263, 0.13877685
    %v3265 = vmul.f32 %v3264, %v3262
    %v3266 = vadd.f32 %v3265, 0.19977711
    %v3267 = vmul.f32 %v3266, %v3262
    %v3268 = vsub.f32 %v3267, 0.3333295
    %v3269 = vadd.f32 %v3261, %v3259
    %v3270 = vmul.f32 %v3259, %v3262
    %v3271 = vmul.f32 %v3270, %v3268
    %v3272 = vadd.f32 %v3269, %v3271
    %v3273 = vmul.f32 %v3234, %v3272
    %v3275 = vsel %vm112, %v3273, 0
    %3277 = vmatpush.msra.mxu0 0.0
    %3278 = vmatpush.msra.mxu0 0.0
    %3279 = vmatpush.msra.mxu0 0.0
    %3280 = vmatpush.msra.mxu0 0.0
    %3281 = vmatpush.msra.mxu0 0.0
    %3282 = vmatpush.msra.mxu0 0.0
    %3283 = vmatpush.msra.mxu0 0.0
    %3284 = vmatpush.msra.mxu0 0.0
    %3285 = vmatpush.msra.mxu0 0.0
    %3286 = vmatpush.msra.mxu0 0.0
    %3287 = vmatpush.msra.mxu0 0.0
    %3288 = vmatpush.msra.mxu0 0.0
    %3289 = vmatpush.msra.mxu0 0.0
    %3290 = vmatpush.msra.mxu0 0.0
    %3291 = vmatpush.msra.mxu0 0.0
    %3292 = vmatpush.msra.mxu0 %v21
    %3293 = vmatmul.f32.gmra.mxu0 %v3275
    %v3294 = vpop.f32.mrf.mxu0
    %v3295 = vadd.f32 0.0, %v3294
    %3296 = vdwg.mxu0
    %v3298 = vsel %vm112, %v3231, 0
    %3300 = vmatpush.msra.mxu0 0.0
    %3301 = vmatpush.msra.mxu0 0.0
    %3302 = vmatpush.msra.mxu0 0.0
    %3303 = vmatpush.msra.mxu0 0.0
    %3304 = vmatpush.msra.mxu0 0.0
    %3305 = vmatpush.msra.mxu0 0.0
    %3306 = vmatpush.msra.mxu0 0.0
    %3307 = vmatpush.msra.mxu0 0.0
    %3308 = vmatpush.msra.mxu0 0.0
    %3309 = vmatpush.msra.mxu0 0.0
    %3310 = vmatpush.msra.mxu0 0.0
    %3311 = vmatpush.msra.mxu0 0.0
    %3312 = vmatpush.msra.mxu0 0.0
    %3313 = vmatpush.msra.mxu0 0.0
    %3314 = vmatpush.msra.mxu0 0.0
    %3315 = vmatpush.msra.mxu0 %v20
    %3316 = vmatmul.f32.gmra.mxu0 %v3298
    %v3317 = vpop.f32.mrf.mxu0
    %v3318 = vadd.f32 %v3295, %v3317
    %3319 = vdwg.mxu0
    %v3320 = vadd.f32 %v3318, %v22
    %v3321 = vsub.f32 0.0, %v3320
    %v3322 = vmul.f32 %v3321, 1.442695
    %v3323 = vpow.pop %v3322
    %v3324 = vadd.f32 %v3323, 1.0
    %v3325 = vrcp.pop %v3324
    %v3326 = vmul.f32 %v3324, %v3325
    %v3327 = vsub.f32 1.0, %v3326
    %v3328 = vmul.f32 %v3325, %v3327
    %v3329 = vadd.f32 %v3325, %v3328
    %vm3330 = vweird.f32 %v3324
    %vm3331 = vweird.f32 %v3325
    %vm3332 = vmor %vm3330, %vm3331
    %v3333 = vsel %vm3332, %v3325, %v3329
    %v3334 = vand.u32 2147483647, %v3324
    %vm3335 = vcmp.eq.f32.partialorder %v3334, 8.507059e+37
    %v3336 = vand.u32 %v3324, 2147483648
    %v3337 = vor.u32 1.1754944e-38, %v3336
    %v3338 = vsel %vm3335, %v3337, %v3333
    %v3339 = vmul.f32 1.0, %v3338
    %v3340 = vmul.f32 %v3339, 2.0
    %v3341 = vsub.f32 %v3340, 1.0
    %v3342 = vmul.f32 %v3050, %v3339
    %3344 = vrot.lane.b32.xlu0 %v3341, 112
    %v3345 = vpop.permute.xlu0 %3344
    %v3347 = vmul.f32 %v3339, %v3345
    %3349 = vrot.lane.b32.xlu0 %v3347, 120
    %v3350 = vpop.permute.xlu0 %3349
    %v3352 = vadd.f32 %v3342, %v3350
    %v3353 = vtanh.pop %v3352
    %3355 = vrot.lane.b32.xlu0 %v3353, 16
    %v3356 = vpop.permute.xlu0 %3355
    %v3358 = vmul.f32 %v3339, %v3356
    %vm3359 = vcmp.lt.f32.partialorder %v3358, 0.0
    %v3360 = vsel %vm3359, -1.0, 1.0
    %v3361 = vand.u32 2147483647, %v3358
    %vm3362 = vcmp.gt.f32.partialorder %v3361, 2.4142137
    %vm3363 = vcmp.gt.f32.partialorder %v3361, 0.41421357
    %v3364 = vsub.f32 %v3361, 1.0
    %v3365 = vsel %vm3363, %v3364, %v3361
    %v3366 = vsel %vm3362, -1.0, %v3365
    %v3367 = vmax.f32 %v3361, 1e-30
    %v3368 = vadd.f32 %v3361, 1.0
    %v3369 = vsel %vm3363, %v3368, 1.0
    %v3370 = vsel %vm3362, %v3367, %v3369
    %v3371 = vrcp.pop %v3370
    %v3372 = vmul.f32 %v3370, %v3371
    %v3373 = vsub.f32 1.0, %v3372
    %v3374 = vmul.f32 %v3371, %v3373
    %v3375 = vadd.f32 %v3371, %v3374
    %vm3376 = vweird.f32 %v3370
    %vm3377 = vweird.f32 %v3371
    %vm3378 = vmor %vm3376, %vm3377
    %v3379 = vsel %vm3378, %v3371, %v3375
    %v3380 = vand.u32 2147483647, %v3370
    %vm3381 = vcmp.eq.f32.partialorder %v3380, 8.507059e+37
    %v3382 = vand.u32 %v3370, 2147483648
    %v3383 = vor.u32 1.1754944e-38, %v3382
    %v3384 = vsel %vm3381, %v3383, %v3379
    %v3385 = vmul.f32 %v3366, %v3384
    %v3386 = vsel %vm3363, 0.7853982, 0.0
    %v3387 = vsel %vm3362, 1.5707964, %v3386
    %v3388 = vmul.f32 %v3385, %v3385
    %v3389 = vmul.f32 %v3388, 0.080537446
    %v3390 = vsub.f32 %v3389, 0.13877685
    %v3391 = vmul.f32 %v3390, %v3388
    %v3392 = vadd.f32 %v3391, 0.19977711
    %v3393 = vmul.f32 %v3392, %v3388
    %v3394 = vsub.f32 %v3393, 0.3333295
    %v3395 = vadd.f32 %v3387, %v3385
    %v3396 = vmul.f32 %v3385, %v3388
    %v3397 = vmul.f32 %v3396, %v3394
    %v3398 = vadd.f32 %v3395, %v3397
    %v3399 = vmul.f32 %v3360, %v3398
    %v3400 = vmul.f32 %v3358, %v3358
    %vm3401 = vcmp.lt.f32.partialorder %v3400, 0.0
    %v3402 = vsel %vm3401, -1.0, 1.0
    %v3403 = vand.u32 2147483647, %v3400
    %vm3404 = vcmp.gt.f32.partialorder %v3403, 2.4142137
    %vm3405 = vcmp.gt.f32.partialorder %v3403, 0.41421357
    %v3406 = vsub.f32 %v3403, 1.0
    %v3407 = vsel %vm3405, %v3406, %v3403
    %v3408 = vsel %vm3404, -1.0, %v3407
    %v3409 = vmax.f32 %v3403, 1e-30
    %v3410 = vadd.f32 %v3403, 1.0
    %v3411 = vsel %vm3405, %v3410, 1.0
    %v3412 = vsel %vm3404, %v3409, %v3411
    %v3413 = vrcp.pop %v3412
    %v3414 = vmul.f32 %v3412, %v3413
    %v3415 = vsub.f32 1.0, %v3414
    %v3416 = vmul.f32 %v3413, %v3415
    %v3417 = vadd.f32 %v3413, %v3416
    %vm3418 = vweird.f32 %v3412
    %vm3419 = vweird.f32 %v3413
    %vm3420 = vmor %vm3418, %vm3419
    %v3421 = vsel %vm3420, %v3413, %v3417
    %v3422 = vand.u32 2147483647, %v3412
    %vm3423 = vcmp.eq.f32.partialorder %v3422, 8.507059e+37
    %v3424 = vand.u32 %v3412, 2147483648
    %v3425 = vor.u32 1.1754944e-38, %v3424
    %v3426 = vsel %vm3423, %v3425, %v3421
    %v3427 = vmul.f32 %v3408, %v3426
    %v3428 = vsel %vm3405, 0.7853982, 0.0
    %v3429 = vsel %vm3404, 1.5707964, %v3428
    %v3430 = vmul.f32 %v3427, %v3427
    %v3431 = vmul.f32 %v3430, 0.080537446
    %v3432 = vsub.f32 %v3431, 0.13877685
    %v3433 = vmul.f32 %v3432, %v3430
    %v3434 = vadd.f32 %v3433, 0.19977711
    %v3435 = vmul.f32 %v3434, %v3430
    %v3436 = vsub.f32 %v3435, 0.3333295
    %v3437 = vadd.f32 %v3429, %v3427
    %v3438 = vmul.f32 %v3427, %v3430
    %v3439 = vmul.f32 %v3438, %v3436
    %v3440 = vadd.f32 %v3437, %v3439
    %v3441 = vmul.f32 %v3402, %v3440
    %3443 = vrot.lane.b32.xlu0 %v3441, 112
    %v3444 = vpop.permute.xlu0 %3443
    %v3445 = vsel %vm112, %v3444, 0
    %3447 = vmatpush.msra.mxu0 0.0
    %3448 = vmatpush.msra.mxu0 0.0
    %3449 = vmatpush.msra.mxu0 0.0
    %3450 = vmatpush.msra.mxu0 0.0
    %3451 = vmatpush.msra.mxu0 0.0
    %3452 = vmatpush.msra.mxu0 0.0
    %3453 = vmatpush.msra.mxu0 0.0
    %3454 = vmatpush.msra.mxu0 0.0
    %3455 = vmatpush.msra.mxu0 0.0
    %3456 = vmatpush.msra.mxu0 0.0
    %3457 = vmatpush.msra.mxu0 0.0
    %3458 = vmatpush.msra.mxu0 0.0
    %3459 = vmatpush.msra.mxu0 0.0
    %3460 = vmatpush.msra.mxu0 0.0
    %3461 = vmatpush.msra.mxu0 0.0
    %3462 = vmatpush.msra.mxu0 %v24
    %3463 = vmatmul.f32.gmra.mxu0 %v3445
    %v3464 = vpop.f32.mrf.mxu0
    %v3465 = vadd.f32 0.0, %v3464
    %3466 = vdwg.mxu0
    %3468 = vrot.lane.b32.xlu0 %v3399, 112
    %v3469 = vpop.permute.xlu0 %3468
    %v3470 = vsel %vm112, %v3469, 0
    %3472 = vmatpush.msra.mxu0 0.0
    %3473 = vmatpush.msra.mxu0 0.0
    %3474 = vmatpush.msra.mxu0 0.0
    %3475 = vmatpush.msra.mxu0 0.0
    %3476 = vmatpush.msra.mxu0 0.0
    %3477 = vmatpush.msra.mxu0 0.0
    %3478 = vmatpush.msra.mxu0 0.0
    %3479 = vmatpush.msra.mxu0 0.0
    %3480 = vmatpush.msra.mxu0 0.0
    %3481 = vmatpush.msra.mxu0 0.0
    %3482 = vmatpush.msra.mxu0 0.0
    %3483 = vmatpush.msra.mxu0 0.0
    %3484 = vmatpush.msra.mxu0 0.0
    %3485 = vmatpush.msra.mxu0 0.0
    %3486 = vmatpush.msra.mxu0 0.0
    %3487 = vmatpush.msra.mxu0 %v23
    %3488 = vmatmul.f32.gmra.mxu0 %v3470
    %v3489 = vpop.f32.mrf.mxu0
    %v3490 = vadd.f32 %v3465, %v3489
    %3491 = vdwg.mxu0
    %v3492 = vadd.f32 %v3490, %v25
    %vm3493 = vcmp.lt.f32.partialorder %v3492, 0.0
    %v3494 = vsel %vm3493, -1.0, 1.0
    %v3495 = vand.u32 2147483647, %v3492
    %vm3496 = vcmp.gt.f32.partialorder %v3495, 2.4142137
    %vm3497 = vcmp.gt.f32.partialorder %v3495, 0.41421357
    %v3498 = vsub.f32 %v3495, 1.0
    %v3499 = vsel %vm3497, %v3498, %v3495
    %v3500 = vsel %vm3496, -1.0, %v3499
    %v3501 = vmax.f32 %v3495, 1e-30
    %v3502 = vadd.f32 %v3495, 1.0
    %v3503 = vsel %vm3497, %v3502, 1.0
    %v3504 = vsel %vm3496, %v3501, %v3503
    %v3505 = vrcp.pop %v3504
    %v3506 = vmul.f32 %v3504, %v3505
    %v3507 = vsub.f32 1.0, %v3506
    %v3508 = vmul.f32 %v3505, %v3507
    %v3509 = vadd.f32 %v3505, %v3508
    %vm3510 = vweird.f32 %v3504
    %vm3511 = vweird.f32 %v3505
    %vm3512 = vmor %vm3510, %vm3511
    %v3513 = vsel %vm3512, %v3505, %v3509
    %v3514 = vand.u32 2147483647, %v3504
    %vm3515 = vcmp.eq.f32.partialorder %v3514, 8.507059e+37
    %v3516 = vand.u32 %v3504, 2147483648
    %v3517 = vor.u32 1.1754944e-38, %v3516
    %v3518 = vsel %vm3515, %v3517, %v3513
    %v3519 = vmul.f32 %v3500, %v3518
    %v3520 = vsel %vm3497, 0.7853982, 0.0
    %v3521 = vsel %vm3496, 1.5707964, %v3520
    %v3522 = vmul.f32 %v3519, %v3519
    %v3523 = vmul.f32 %v3522, 0.080537446
    %v3524 = vsub.f32 %v3523, 0.13877685
    %v3525 = vmul.f32 %v3524, %v3522
    %v3526 = vadd.f32 %v3525, 0.19977711
    %v3527 = vmul.f32 %v3526, %v3522
    %v3528 = vsub.f32 %v3527, 0.3333295
    %v3529 = vadd.f32 %v3521, %v3519
    %v3530 = vmul.f32 %v3519, %v3522
    %v3531 = vmul.f32 %v3530, %v3528
    %v3532 = vadd.f32 %v3529, %v3531
    %v3533 = vmul.f32 %v3494, %v3532
    %v3534 = vmul.f32 %v3492, %v3492
    %vm3535 = vcmp.lt.f32.partialorder %v3534, 0.0
    %v3536 = vsel %vm3535, -1.0, 1.0
    %v3537 = vand.u32 2147483647, %v3534
    %vm3538 = vcmp.gt.f32.partialorder %v3537, 2.4142137
    %vm3539 = vcmp.gt.f32.partialorder %v3537, 0.41421357
    %v3540 = vsub.f32 %v3537, 1.0
    %v3541 = vsel %vm3539, %v3540, %v3537
    %v3542 = vsel %vm3538, -1.0, %v3541
    %v3543 = vmax.f32 %v3537, 1e-30
    %v3544 = vadd.f32 %v3537, 1.0
    %v3545 = vsel %vm3539, %v3544, 1.0
    %v3546 = vsel %vm3538, %v3543, %v3545
    %v3547 = vrcp.pop %v3546
    %v3548 = vmul.f32 %v3546, %v3547
    %v3549 = vsub.f32 1.0, %v3548
    %v3550 = vmul.f32 %v3547, %v3549
    %v3551 = vadd.f32 %v3547, %v3550
    %vm3552 = vweird.f32 %v3546
    %vm3553 = vweird.f32 %v3547
    %vm3554 = vmor %vm3552, %vm3553
    %v3555 = vsel %vm3554, %v3547, %v3551
    %v3556 = vand.u32 2147483647, %v3546
    %vm3557 = vcmp.eq.f32.partialorder %v3556, 8.507059e+37
    %v3558 = vand.u32 %v3546, 2147483648
    %v3559 = vor.u32 1.1754944e-38, %v3558
    %v3560 = vsel %vm3557, %v3559, %v3555
    %v3561 = vmul.f32 %v3542, %v3560
    %v3562 = vsel %vm3539, 0.7853982, 0.0
    %v3563 = vsel %vm3538, 1.5707964, %v3562
    %v3564 = vmul.f32 %v3561, %v3561
    %v3565 = vmul.f32 %v3564, 0.080537446
    %v3566 = vsub.f32 %v3565, 0.13877685
    %v3567 = vmul.f32 %v3566, %v3564
    %v3568 = vadd.f32 %v3567, 0.19977711
    %v3569 = vmul.f32 %v3568, %v3564
    %v3570 = vsub.f32 %v3569, 0.3333295
    %v3571 = vadd.f32 %v3563, %v3561
    %v3572 = vmul.f32 %v3561, %v3564
    %v3573 = vmul.f32 %v3572, %v3570
    %v3574 = vadd.f32 %v3571, %v3573
    %v3575 = vmul.f32 %v3536, %v3574
    %v3577 = vsel %vm112, %v3575, 0
    %3579 = vmatpush.msra.mxu0 0.0
    %3580 = vmatpush.msra.mxu0 0.0
    %3581 = vmatpush.msra.mxu0 0.0
    %3582 = vmatpush.msra.mxu0 0.0
    %3583 = vmatpush.msra.mxu0 0.0
    %3584 = vmatpush.msra.mxu0 0.0
    %3585 = vmatpush.msra.mxu0 0.0
    %3586 = vmatpush.msra.mxu0 0.0
    %3587 = vmatpush.msra.mxu0 0.0
    %3588 = vmatpush.msra.mxu0 0.0
    %3589 = vmatpush.msra.mxu0 0.0
    %3590 = vmatpush.msra.mxu0 0.0
    %3591 = vmatpush.msra.mxu0 0.0
    %3592 = vmatpush.msra.mxu0 0.0
    %3593 = vmatpush.msra.mxu0 0.0
    %3594 = vmatpush.msra.mxu0 %v21
    %3595 = vmatmul.f32.gmra.mxu0 %v3577
    %v3596 = vpop.f32.mrf.mxu0
    %v3597 = vadd.f32 0.0, %v3596
    %3598 = vdwg.mxu0
    %v3600 = vsel %vm112, %v3533, 0
    %3602 = vmatpush.msra.mxu0 0.0
    %3603 = vmatpush.msra.mxu0 0.0
    %3604 = vmatpush.msra.mxu0 0.0
    %3605 = vmatpush.msra.mxu0 0.0
    %3606 = vmatpush.msra.mxu0 0.0
    %3607 = vmatpush.msra.mxu0 0.0
    %3608 = vmatpush.msra.mxu0 0.0
    %3609 = vmatpush.msra.mxu0 0.0
    %3610 = vmatpush.msra.mxu0 0.0
    %3611 = vmatpush.msra.mxu0 0.0
    %3612 = vmatpush.msra.mxu0 0.0
    %3613 = vmatpush.msra.mxu0 0.0
    %3614 = vmatpush.msra.mxu0 0.0
    %3615 = vmatpush.msra.mxu0 0.0
    %3616 = vmatpush.msra.mxu0 0.0
    %3617 = vmatpush.msra.mxu0 %v20
    %3618 = vmatmul.f32.gmra.mxu0 %v3600
    %v3619 = vpop.f32.mrf.mxu0
    %v3620 = vadd.f32 %v3597, %v3619
    %3621 = vdwg.mxu0
    %v3622 = vadd.f32 %v3620, %v22
    %v3623 = vsub.f32 0.0, %v3622
    %v3624 = vmul.f32 %v3623, 1.442695
    %v3625 = vpow.pop %v3624
    %v3626 = vadd.f32 %v3625, 1.0
    %v3627 = vrcp.pop %v3626
    %v3628 = vmul.f32 %v3626, %v3627
    %v3629 = vsub.f32 1.0, %v3628
    %v3630 = vmul.f32 %v3627, %v3629
    %v3631 = vadd.f32 %v3627, %v3630
    %vm3632 = vweird.f32 %v3626
    %vm3633 = vweird.f32 %v3627
    %vm3634 = vmor %vm3632, %vm3633
    %v3635 = vsel %vm3634, %v3627, %v3631
    %v3636 = vand.u32 2147483647, %v3626
    %vm3637 = vcmp.eq.f32.partialorder %v3636, 8.507059e+37
    %v3638 = vand.u32 %v3626, 2147483648
    %v3639 = vor.u32 1.1754944e-38, %v3638
    %v3640 = vsel %vm3637, %v3639, %v3635
    %v3641 = vmul.f32 1.0, %v3640
    %v3642 = vmul.f32 %v3641, 2.0
    %v3643 = vsub.f32 %v3642, 1.0
    %v3644 = vmul.f32 %v3352, %v3641
    %3646 = vrot.lane.b32.xlu0 %v3643, 112
    %v3647 = vpop.permute.xlu0 %3646
    %v3649 = vmul.f32 %v3641, %v3647
    %3651 = vrot.lane.b32.xlu0 %v3649, 120
    %v3652 = vpop.permute.xlu0 %3651
    %v3654 = vadd.f32 %v3644, %v3652
    %v3655 = vtanh.pop %v3654
    %3657 = vrot.lane.b32.xlu0 %v3655, 16
    %v3658 = vpop.permute.xlu0 %3657
    %v3660 = vmul.f32 %v3641, %v3658
    %vm3661 = vcmp.lt.f32.partialorder %v3660, 0.0
    %v3662 = vsel %vm3661, -1.0, 1.0
    %v3663 = vand.u32 2147483647, %v3660
    %vm3664 = vcmp.gt.f32.partialorder %v3663, 2.4142137
    %vm3665 = vcmp.gt.f32.partialorder %v3663, 0.41421357
    %v3666 = vsub.f32 %v3663, 1.0
    %v3667 = vsel %vm3665, %v3666, %v3663
    %v3668 = vsel %vm3664, -1.0, %v3667
    %v3669 = vmax.f32 %v3663, 1e-30
    %v3670 = vadd.f32 %v3663, 1.0
    %v3671 = vsel %vm3665, %v3670, 1.0
    %v3672 = vsel %vm3664, %v3669, %v3671
    %v3673 = vrcp.pop %v3672
    %v3674 = vmul.f32 %v3672, %v3673
    %v3675 = vsub.f32 1.0, %v3674
    %v3676 = vmul.f32 %v3673, %v3675
    %v3677 = vadd.f32 %v3673, %v3676
    %vm3678 = vweird.f32 %v3672
    %vm3679 = vweird.f32 %v3673
    %vm3680 = vmor %vm3678, %vm3679
    %v3681 = vsel %vm3680, %v3673, %v3677
    %v3682 = vand.u32 2147483647, %v3672
    %vm3683 = vcmp.eq.f32.partialorder %v3682, 8.507059e+37
    %v3684 = vand.u32 %v3672, 2147483648
    %v3685 = vor.u32 1.1754944e-38, %v3684
    %v3686 = vsel %vm3683, %v3685, %v3681
    %v3687 = vmul.f32 %v3668, %v3686
    %v3688 = vsel %vm3665, 0.7853982, 0.0
    %v3689 = vsel %vm3664, 1.5707964, %v3688
    %v3690 = vmul.f32 %v3687, %v3687
    %v3691 = vmul.f32 %v3690, 0.080537446
    %v3692 = vsub.f32 %v3691, 0.13877685
    %v3693 = vmul.f32 %v3692, %v3690
    %v3694 = vadd.f32 %v3693, 0.19977711
    %v3695 = vmul.f32 %v3694, %v3690
    %v3696 = vsub.f32 %v3695, 0.3333295
    %v3697 = vadd.f32 %v3689, %v3687
    %v3698 = vmul.f32 %v3687, %v3690
    %v3699 = vmul.f32 %v3698, %v3696
    %v3700 = vadd.f32 %v3697, %v3699
    %v3701 = vmul.f32 %v3662, %v3700
    %v3702 = vmul.f32 %v3660, %v3660
    %vm3703 = vcmp.lt.f32.partialorder %v3702, 0.0
    %v3704 = vsel %vm3703, -1.0, 1.0
    %v3705 = vand.u32 2147483647, %v3702
    %vm3706 = vcmp.gt.f32.partialorder %v3705, 2.4142137
    %vm3707 = vcmp.gt.f32.partialorder %v3705, 0.41421357
    %v3708 = vsub.f32 %v3705, 1.0
    %v3709 = vsel %vm3707, %v3708, %v3705
    %v3710 = vsel %vm3706, -1.0, %v3709
    %v3711 = vmax.f32 %v3705, 1e-30
    %v3712 = vadd.f32 %v3705, 1.0
    %v3713 = vsel %vm3707, %v3712, 1.0
    %v3714 = vsel %vm3706, %v3711, %v3713
    %v3715 = vrcp.pop %v3714
    %v3716 = vmul.f32 %v3714, %v3715
    %v3717 = vsub.f32 1.0, %v3716
    %v3718 = vmul.f32 %v3715, %v3717
    %v3719 = vadd.f32 %v3715, %v3718
    %vm3720 = vweird.f32 %v3714
    %vm3721 = vweird.f32 %v3715
    %vm3722 = vmor %vm3720, %vm3721
    %v3723 = vsel %vm3722, %v3715, %v3719
    %v3724 = vand.u32 2147483647, %v3714
    %vm3725 = vcmp.eq.f32.partialorder %v3724, 8.507059e+37
    %v3726 = vand.u32 %v3714, 2147483648
    %v3727 = vor.u32 1.1754944e-38, %v3726
    %v3728 = vsel %vm3725, %v3727, %v3723
    %v3729 = vmul.f32 %v3710, %v3728
    %v3730 = vsel %vm3707, 0.7853982, 0.0
    %v3731 = vsel %vm3706, 1.5707964, %v3730
    %v3732 = vmul.f32 %v3729, %v3729
    %v3733 = vmul.f32 %v3732, 0.080537446
    %v3734 = vsub.f32 %v3733, 0.13877685
    %v3735 = vmul.f32 %v3734, %v3732
    %v3736 = vadd.f32 %v3735, 0.19977711
    %v3737 = vmul.f32 %v3736, %v3732
    %v3738 = vsub.f32 %v3737, 0.3333295
    %v3739 = vadd.f32 %v3731, %v3729
    %v3740 = vmul.f32 %v3729, %v3732
    %v3741 = vmul.f32 %v3740, %v3738
    %v3742 = vadd.f32 %v3739, %v3741
    %v3743 = vmul.f32 %v3704, %v3742
    %3745 = vrot.lane.b32.xlu0 %v3743, 112
    %v3746 = vpop.permute.xlu0 %3745
    %v3747 = vsel %vm112, %v3746, 0
    %3749 = vmatpush.msra.mxu0 0.0
    %3750 = vmatpush.msra.mxu0 0.0
    %3751 = vmatpush.msra.mxu0 0.0
    %3752 = vmatpush.msra.mxu0 0.0
    %3753 = vmatpush.msra.mxu0 0.0
    %3754 = vmatpush.msra.mxu0 0.0
    %3755 = vmatpush.msra.mxu0 0.0
    %3756 = vmatpush.msra.mxu0 0.0
    %3757 = vmatpush.msra.mxu0 0.0
    %3758 = vmatpush.msra.mxu0 0.0
    %3759 = vmatpush.msra.mxu0 0.0
    %3760 = vmatpush.msra.mxu0 0.0
    %3761 = vmatpush.msra.mxu0 0.0
    %3762 = vmatpush.msra.mxu0 0.0
    %3763 = vmatpush.msra.mxu0 0.0
    %3764 = vmatpush.msra.mxu0 %v24
    %3765 = vmatmul.f32.gmra.mxu0 %v3747
    %v3766 = vpop.f32.mrf.mxu0
    %v3767 = vadd.f32 0.0, %v3766
    %3768 = vdwg.mxu0
    %3770 = vrot.lane.b32.xlu0 %v3701, 112
    %v3771 = vpop.permute.xlu0 %3770
    %v3772 = vsel %vm112, %v3771, 0
    %3774 = vmatpush.msra.mxu0 0.0
    %3775 = vmatpush.msra.mxu0 0.0
    %3776 = vmatpush.msra.mxu0 0.0
    %3777 = vmatpush.msra.mxu0 0.0
    %3778 = vmatpush.msra.mxu0 0.0
    %3779 = vmatpush.msra.mxu0 0.0
    %3780 = vmatpush.msra.mxu0 0.0
    %3781 = vmatpush.msra.mxu0 0.0
    %3782 = vmatpush.msra.mxu0 0.0
    %3783 = vmatpush.msra.mxu0 0.0
    %3784 = vmatpush.msra.mxu0 0.0
    %3785 = vmatpush.msra.mxu0 0.0
    %3786 = vmatpush.msra.mxu0 0.0
    %3787 = vmatpush.msra.mxu0 0.0
    %3788 = vmatpush.msra.mxu0 0.0
    %3789 = vmatpush.msra.mxu0 %v23
    %3790 = vmatmul.f32.gmra.mxu0 %v3772
    %v3791 = vpop.f32.mrf.mxu0
    %v3792 = vadd.f32 %v3767, %v3791
    %3793 = vdwg.mxu0
    %v3794 = vadd.f32 %v3792, %v25
    %vm3795 = vcmp.lt.f32.partialorder %v3794, 0.0
    %v3796 = vsel %vm3795, -1.0, 1.0
    %v3797 = vand.u32 2147483647, %v3794
    %vm3798 = vcmp.gt.f32.partialorder %v3797, 2.4142137
    %vm3799 = vcmp.gt.f32.partialorder %v3797, 0.41421357
    %v3800 = vsub.f32 %v3797, 1.0
    %v3801 = vsel %vm3799, %v3800, %v3797
    %v3802 = vsel %vm3798, -1.0, %v3801
    %v3803 = vmax.f32 %v3797, 1e-30
    %v3804 = vadd.f32 %v3797, 1.0
    %v3805 = vsel %vm3799, %v3804, 1.0
    %v3806 = vsel %vm3798, %v3803, %v3805
    %v3807 = vrcp.pop %v3806
    %v3808 = vmul.f32 %v3806, %v3807
    %v3809 = vsub.f32 1.0, %v3808
    %v3810 = vmul.f32 %v3807, %v3809
    %v3811 = vadd.f32 %v3807, %v3810
    %vm3812 = vweird.f32 %v3806
    %vm3813 = vweird.f32 %v3807
    %vm3814 = vmor %vm3812, %vm3813
    %v3815 = vsel %vm3814, %v3807, %v3811
    %v3816 = vand.u32 2147483647, %v3806
    %vm3817 = vcmp.eq.f32.partialorder %v3816, 8.507059e+37
    %v3818 = vand.u32 %v3806, 2147483648
    %v3819 = vor.u32 1.1754944e-38, %v3818
    %v3820 = vsel %vm3817, %v3819, %v3815
    %v3821 = vmul.f32 %v3802, %v3820
    %v3822 = vsel %vm3799, 0.7853982, 0.0
    %v3823 = vsel %vm3798, 1.5707964, %v3822
    %v3824 = vmul.f32 %v3821, %v3821
    %v3825 = vmul.f32 %v3824, 0.080537446
    %v3826 = vsub.f32 %v3825, 0.13877685
    %v3827 = vmul.f32 %v3826, %v3824
    %v3828 = vadd.f32 %v3827, 0.19977711
    %v3829 = vmul.f32 %v3828, %v3824
    %v3830 = vsub.f32 %v3829, 0.3333295
    %v3831 = vadd.f32 %v3823, %v3821
    %v3832 = vmul.f32 %v3821, %v3824
    %v3833 = vmul.f32 %v3832, %v3830
    %v3834 = vadd.f32 %v3831, %v3833
    %v3835 = vmul.f32 %v3796, %v3834
    %v3836 = vmul.f32 %v3794, %v3794
    %vm3837 = vcmp.lt.f32.partialorder %v3836, 0.0
    %v3838 = vsel %vm3837, -1.0, 1.0
    %v3839 = vand.u32 2147483647, %v3836
    %vm3840 = vcmp.gt.f32.partialorder %v3839, 2.4142137
    %vm3841 = vcmp.gt.f32.partialorder %v3839, 0.41421357
    %v3842 = vsub.f32 %v3839, 1.0
    %v3843 = vsel %vm3841, %v3842, %v3839
    %v3844 = vsel %vm3840, -1.0, %v3843
    %v3845 = vmax.f32 %v3839, 1e-30
    %v3846 = vadd.f32 %v3839, 1.0
    %v3847 = vsel %vm3841, %v3846, 1.0
    %v3848 = vsel %vm3840, %v3845, %v3847
    %v3849 = vrcp.pop %v3848
    %v3850 = vmul.f32 %v3848, %v3849
    %v3851 = vsub.f32 1.0, %v3850
    %v3852 = vmul.f32 %v3849, %v3851
    %v3853 = vadd.f32 %v3849, %v3852
    %vm3854 = vweird.f32 %v3848
    %vm3855 = vweird.f32 %v3849
    %vm3856 = vmor %vm3854, %vm3855
    %v3857 = vsel %vm3856, %v3849, %v3853
    %v3858 = vand.u32 2147483647, %v3848
    %vm3859 = vcmp.eq.f32.partialorder %v3858, 8.507059e+37
    %v3860 = vand.u32 %v3848, 2147483648
    %v3861 = vor.u32 1.1754944e-38, %v3860
    %v3862 = vsel %vm3859, %v3861, %v3857
    %v3863 = vmul.f32 %v3844, %v3862
    %v3864 = vsel %vm3841, 0.7853982, 0.0
    %v3865 = vsel %vm3840, 1.5707964, %v3864
    %v3866 = vmul.f32 %v3863, %v3863
    %v3867 = vmul.f32 %v3866, 0.080537446
    %v3868 = vsub.f32 %v3867, 0.13877685
    %v3869 = vmul.f32 %v3868, %v3866
    %v3870 = vadd.f32 %v3869, 0.19977711
    %v3871 = vmul.f32 %v3870, %v3866
    %v3872 = vsub.f32 %v3871, 0.3333295
    %v3873 = vadd.f32 %v3865, %v3863
    %v3874 = vmul.f32 %v3863, %v3866
    %v3875 = vmul.f32 %v3874, %v3872
    %v3876 = vadd.f32 %v3873, %v3875
    %v3877 = vmul.f32 %v3838, %v3876
    %v3879 = vsel %vm112, %v3877, 0
    %3881 = vmatpush.msra.mxu0 0.0
    %3882 = vmatpush.msra.mxu0 0.0
    %3883 = vmatpush.msra.mxu0 0.0
    %3884 = vmatpush.msra.mxu0 0.0
    %3885 = vmatpush.msra.mxu0 0.0
    %3886 = vmatpush.msra.mxu0 0.0
    %3887 = vmatpush.msra.mxu0 0.0
    %3888 = vmatpush.msra.mxu0 0.0
    %3889 = vmatpush.msra.mxu0 0.0
    %3890 = vmatpush.msra.mxu0 0.0
    %3891 = vmatpush.msra.mxu0 0.0
    %3892 = vmatpush.msra.mxu0 0.0
    %3893 = vmatpush.msra.mxu0 0.0
    %3894 = vmatpush.msra.mxu0 0.0
    %3895 = vmatpush.msra.mxu0 0.0
    %3896 = vmatpush.msra.mxu0 %v21
    %3897 = vmatmul.f32.gmra.mxu0 %v3879
    %v3898 = vpop.f32.mrf.mxu0
    %v3899 = vadd.f32 0.0, %v3898
    %3900 = vdwg.mxu0
    %v3902 = vsel %vm112, %v3835, 0
    %3904 = vmatpush.msra.mxu0 0.0
    %3905 = vmatpush.msra.mxu0 0.0
    %3906 = vmatpush.msra.mxu0 0.0
    %3907 = vmatpush.msra.mxu0 0.0
    %3908 = vmatpush.msra.mxu0 0.0
    %3909 = vmatpush.msra.mxu0 0.0
    %3910 = vmatpush.msra.mxu0 0.0
    %3911 = vmatpush.msra.mxu0 0.0
    %3912 = vmatpush.msra.mxu0 0.0
    %3913 = vmatpush.msra.mxu0 0.0
    %3914 = vmatpush.msra.mxu0 0.0
    %3915 = vmatpush.msra.mxu0 0.0
    %3916 = vmatpush.msra.mxu0 0.0
    %3917 = vmatpush.msra.mxu0 0.0
    %3918 = vmatpush.msra.mxu0 0.0
    %3919 = vmatpush.msra.mxu0 %v20
    %3920 = vmatmul.f32.gmra.mxu0 %v3902
    %v3921 = vpop.f32.mrf.mxu0
    %v3922 = vadd.f32 %v3899, %v3921
    %3923 = vdwg.mxu0
    %v3924 = vadd.f32 %v3922, %v22
    %v3925 = vsub.f32 0.0, %v3924
    %v3926 = vmul.f32 %v3925, 1.442695
    %v3927 = vpow.pop %v3926
    %v3928 = vadd.f32 %v3927, 1.0
    %v3929 = vrcp.pop %v3928
    %v3930 = vmul.f32 %v3928, %v3929
    %v3931 = vsub.f32 1.0, %v3930
    %v3932 = vmul.f32 %v3929, %v3931
    %v3933 = vadd.f32 %v3929, %v3932
    %vm3934 = vweird.f32 %v3928
    %vm3935 = vweird.f32 %v3929
    %vm3936 = vmor %vm3934, %vm3935
    %v3937 = vsel %vm3936, %v3929, %v3933
    %v3938 = vand.u32 2147483647, %v3928
    %vm3939 = vcmp.eq.f32.partialorder %v3938, 8.507059e+37
    %v3940 = vand.u32 %v3928, 2147483648
    %v3941 = vor.u32 1.1754944e-38, %v3940
    %v3942 = vsel %vm3939, %v3941, %v3937
    %v3943 = vmul.f32 1.0, %v3942
    %v3944 = vmul.f32 %v3943, 2.0
    %v3945 = vsub.f32 %v3944, 1.0
    %v3946 = vmul.f32 %v3654, %v3943
    %3948 = vrot.lane.b32.xlu0 %v3945, 112
    %v3949 = vpop.permute.xlu0 %3948
    %v3951 = vmul.f32 %v3943, %v3949
    %3953 = vrot.lane.b32.xlu0 %v3951, 120
    %v3954 = vpop.permute.xlu0 %3953
    %v3956 = vadd.f32 %v3946, %v3954
    %v3957 = vtanh.pop %v3956
    %3959 = vrot.lane.b32.xlu0 %v3957, 16
    %v3960 = vpop.permute.xlu0 %3959
    %v3962 = vmul.f32 %v3943, %v3960
    %vm3963 = vcmp.lt.f32.partialorder %v3962, 0.0
    %v3964 = vsel %vm3963, -1.0, 1.0
    %v3965 = vand.u32 2147483647, %v3962
    %vm3966 = vcmp.gt.f32.partialorder %v3965, 2.4142137
    %vm3967 = vcmp.gt.f32.partialorder %v3965, 0.41421357
    %v3968 = vsub.f32 %v3965, 1.0
    %v3969 = vsel %vm3967, %v3968, %v3965
    %v3970 = vsel %vm3966, -1.0, %v3969
    %v3971 = vmax.f32 %v3965, 1e-30
    %v3972 = vadd.f32 %v3965, 1.0
    %v3973 = vsel %vm3967, %v3972, 1.0
    %v3974 = vsel %vm3966, %v3971, %v3973
    %v3975 = vrcp.pop %v3974
    %v3976 = vmul.f32 %v3974, %v3975
    %v3977 = vsub.f32 1.0, %v3976
    %v3978 = vmul.f32 %v3975, %v3977
    %v3979 = vadd.f32 %v3975, %v3978
    %vm3980 = vweird.f32 %v3974
    %vm3981 = vweird.f32 %v3975
    %vm3982 = vmor %vm3980, %vm3981
    %v3983 = vsel %vm3982, %v3975, %v3979
    %v3984 = vand.u32 2147483647, %v3974
    %vm3985 = vcmp.eq.f32.partialorder %v3984, 8.507059e+37
    %v3986 = vand.u32 %v3974, 2147483648
    %v3987 = vor.u32 1.1754944e-38, %v3986
    %v3988 = vsel %vm3985, %v3987, %v3983
    %v3989 = vmul.f32 %v3970, %v3988
    %v3990 = vsel %vm3967, 0.7853982, 0.0
    %v3991 = vsel %vm3966, 1.5707964, %v3990
    %v3992 = vmul.f32 %v3989, %v3989
    %v3993 = vmul.f32 %v3992, 0.080537446
    %v3994 = vsub.f32 %v3993, 0.13877685
    %v3995 = vmul.f32 %v3994, %v3992
    %v3996 = vadd.f32 %v3995, 0.19977711
    %v3997 = vmul.f32 %v3996, %v3992
    %v3998 = vsub.f32 %v3997, 0.3333295
    %v3999 = vadd.f32 %v3991, %v3989
    %v4000 = vmul.f32 %v3989, %v3992
    %v4001 = vmul.f32 %v4000, %v3998
    %v4002 = vadd.f32 %v3999, %v4001
    %v4003 = vmul.f32 %v3964, %v4002
    %v4004 = vmul.f32 %v3962, %v3962
    %vm4005 = vcmp.lt.f32.partialorder %v4004, 0.0
    %v4006 = vsel %vm4005, -1.0, 1.0
    %v4007 = vand.u32 2147483647, %v4004
    %vm4008 = vcmp.gt.f32.partialorder %v4007, 2.4142137
    %vm4009 = vcmp.gt.f32.partialorder %v4007, 0.41421357
    %v4010 = vsub.f32 %v4007, 1.0
    %v4011 = vsel %vm4009, %v4010, %v4007
    %v4012 = vsel %vm4008, -1.0, %v4011
    %v4013 = vmax.f32 %v4007, 1e-30
    %v4014 = vadd.f32 %v4007, 1.0
    %v4015 = vsel %vm4009, %v4014, 1.0
    %v4016 = vsel %vm4008, %v4013, %v4015
    %v4017 = vrcp.pop %v4016
    %v4018 = vmul.f32 %v4016, %v4017
    %v4019 = vsub.f32 1.0, %v4018
    %v4020 = vmul.f32 %v4017, %v4019
    %v4021 = vadd.f32 %v4017, %v4020
    %vm4022 = vweird.f32 %v4016
    %vm4023 = vweird.f32 %v4017
    %vm4024 = vmor %vm4022, %vm4023
    %v4025 = vsel %vm4024, %v4017, %v4021
    %v4026 = vand.u32 2147483647, %v4016
    %vm4027 = vcmp.eq.f32.partialorder %v4026, 8.507059e+37
    %v4028 = vand.u32 %v4016, 2147483648
    %v4029 = vor.u32 1.1754944e-38, %v4028
    %v4030 = vsel %vm4027, %v4029, %v4025
    %v4031 = vmul.f32 %v4012, %v4030
    %v4032 = vsel %vm4009, 0.7853982, 0.0
    %v4033 = vsel %vm4008, 1.5707964, %v4032
    %v4034 = vmul.f32 %v4031, %v4031
    %v4035 = vmul.f32 %v4034, 0.080537446
    %v4036 = vsub.f32 %v4035, 0.13877685
    %v4037 = vmul.f32 %v4036, %v4034
    %v4038 = vadd.f32 %v4037, 0.19977711
    %v4039 = vmul.f32 %v4038, %v4034
    %v4040 = vsub.f32 %v4039, 0.3333295
    %v4041 = vadd.f32 %v4033, %v4031
    %v4042 = vmul.f32 %v4031, %v4034
    %v4043 = vmul.f32 %v4042, %v4040
    %v4044 = vadd.f32 %v4041, %v4043
    %v4045 = vmul.f32 %v4006, %v4044
    %4047 = vrot.lane.b32.xlu0 %v4045, 112
    %v4048 = vpop.permute.xlu0 %4047
    %v4049 = vsel %vm112, %v4048, 0
    %4051 = vmatpush.msra.mxu0 0.0
    %4052 = vmatpush.msra.mxu0 0.0
    %4053 = vmatpush.msra.mxu0 0.0
    %4054 = vmatpush.msra.mxu0 0.0
    %4055 = vmatpush.msra.mxu0 0.0
    %4056 = vmatpush.msra.mxu0 0.0
    %4057 = vmatpush.msra.mxu0 0.0
    %4058 = vmatpush.msra.mxu0 0.0
    %4059 = vmatpush.msra.mxu0 0.0
    %4060 = vmatpush.msra.mxu0 0.0
    %4061 = vmatpush.msra.mxu0 0.0
    %4062 = vmatpush.msra.mxu0 0.0
    %4063 = vmatpush.msra.mxu0 0.0
    %4064 = vmatpush.msra.mxu0 0.0
    %4065 = vmatpush.msra.mxu0 0.0
    %4066 = vmatpush.msra.mxu0 %v24
    %4067 = vmatmul.f32.gmra.mxu0 %v4049
    %v4068 = vpop.f32.mrf.mxu0
    %v4069 = vadd.f32 0.0, %v4068
    %4070 = vdwg.mxu0
    %4072 = vrot.lane.b32.xlu0 %v4003, 112
    %v4073 = vpop.permute.xlu0 %4072
    %v4074 = vsel %vm112, %v4073, 0
    %4076 = vmatpush.msra.mxu0 0.0
    %4077 = vmatpush.msra.mxu0 0.0
    %4078 = vmatpush.msra.mxu0 0.0
    %4079 = vmatpush.msra.mxu0 0.0
    %4080 = vmatpush.msra.mxu0 0.0
    %4081 = vmatpush.msra.mxu0 0.0
    %4082 = vmatpush.msra.mxu0 0.0
    %4083 = vmatpush.msra.mxu0 0.0
    %4084 = vmatpush.msra.mxu0 0.0
    %4085 = vmatpush.msra.mxu0 0.0
    %4086 = vmatpush.msra.mxu0 0.0
    %4087 = vmatpush.msra.mxu0 0.0
    %4088 = vmatpush.msra.mxu0 0.0
    %4089 = vmatpush.msra.mxu0 0.0
    %4090 = vmatpush.msra.mxu0 0.0
    %4091 = vmatpush.msra.mxu0 %v23
    %4092 = vmatmul.f32.gmra.mxu0 %v4074
    %v4093 = vpop.f32.mrf.mxu0
    %v4094 = vadd.f32 %v4069, %v4093
    %4095 = vdwg.mxu0
    %v4096 = vadd.f32 %v4094, %v25
    %vm4097 = vcmp.lt.f32.partialorder %v4096, 0.0
    %v4098 = vsel %vm4097, -1.0, 1.0
    %v4099 = vand.u32 2147483647, %v4096
    %vm4100 = vcmp.gt.f32.partialorder %v4099, 2.4142137
    %vm4101 = vcmp.gt.f32.partialorder %v4099, 0.41421357
    %v4102 = vsub.f32 %v4099, 1.0
    %v4103 = vsel %vm4101, %v4102, %v4099
    %v4104 = vsel %vm4100, -1.0, %v4103
    %v4105 = vmax.f32 %v4099, 1e-30
    %v4106 = vadd.f32 %v4099, 1.0
    %v4107 = vsel %vm4101, %v4106, 1.0
    %v4108 = vsel %vm4100, %v4105, %v4107
    %v4109 = vrcp.pop %v4108
    %v4110 = vmul.f32 %v4108, %v4109
    %v4111 = vsub.f32 1.0, %v4110
    %v4112 = vmul.f32 %v4109, %v4111
    %v4113 = vadd.f32 %v4109, %v4112
    %vm4114 = vweird.f32 %v4108
    %vm4115 = vweird.f32 %v4109
    %vm4116 = vmor %vm4114, %vm4115
    %v4117 = vsel %vm4116, %v4109, %v4113
    %v4118 = vand.u32 2147483647, %v4108
    %vm4119 = vcmp.eq.f32.partialorder %v4118, 8.507059e+37
    %v4120 = vand.u32 %v4108, 2147483648
    %v4121 = vor.u32 1.1754944e-38, %v4120
    %v4122 = vsel %vm4119, %v4121, %v4117
    %v4123 = vmul.f32 %v4104, %v4122
    %v4124 = vsel %vm4101, 0.7853982, 0.0
    %v4125 = vsel %vm4100, 1.5707964, %v4124
    %v4126 = vmul.f32 %v4123, %v4123
    %v4127 = vmul.f32 %v4126, 0.080537446
    %v4128 = vsub.f32 %v4127, 0.13877685
    %v4129 = vmul.f32 %v4128, %v4126
    %v4130 = vadd.f32 %v4129, 0.19977711
    %v4131 = vmul.f32 %v4130, %v4126
    %v4132 = vsub.f32 %v4131, 0.3333295
    %v4133 = vadd.f32 %v4125, %v4123
    %v4134 = vmul.f32 %v4123, %v4126
    %v4135 = vmul.f32 %v4134, %v4132
    %v4136 = vadd.f32 %v4133, %v4135
    %v4137 = vmul.f32 %v4098, %v4136
    %v4138 = vmul.f32 %v4096, %v4096
    %vm4139 = vcmp.lt.f32.partialorder %v4138, 0.0
    %v4140 = vsel %vm4139, -1.0, 1.0
    %v4141 = vand.u32 2147483647, %v4138
    %vm4142 = vcmp.gt.f32.partialorder %v4141, 2.4142137
    %vm4143 = vcmp.gt.f32.partialorder %v4141, 0.41421357
    %v4144 = vsub.f32 %v4141, 1.0
    %v4145 = vsel %vm4143, %v4144, %v4141
    %v4146 = vsel %vm4142, -1.0, %v4145
    %v4147 = vmax.f32 %v4141, 1e-30
    %v4148 = vadd.f32 %v4141, 1.0
    %v4149 = vsel %vm4143, %v4148, 1.0
    %v4150 = vsel %vm4142, %v4147, %v4149
    %v4151 = vrcp.pop %v4150
    %v4152 = vmul.f32 %v4150, %v4151
    %v4153 = vsub.f32 1.0, %v4152
    %v4154 = vmul.f32 %v4151, %v4153
    %v4155 = vadd.f32 %v4151, %v4154
    %vm4156 = vweird.f32 %v4150
    %vm4157 = vweird.f32 %v4151
    %vm4158 = vmor %vm4156, %vm4157
    %v4159 = vsel %vm4158, %v4151, %v4155
    %v4160 = vand.u32 2147483647, %v4150
    %vm4161 = vcmp.eq.f32.partialorder %v4160, 8.507059e+37
    %v4162 = vand.u32 %v4150, 2147483648
    %v4163 = vor.u32 1.1754944e-38, %v4162
    %v4164 = vsel %vm4161, %v4163, %v4159
    %v4165 = vmul.f32 %v4146, %v4164
    %v4166 = vsel %vm4143, 0.7853982, 0.0
    %v4167 = vsel %vm4142, 1.5707964, %v4166
    %v4168 = vmul.f32 %v4165, %v4165
    %v4169 = vmul.f32 %v4168, 0.080537446
    %v4170 = vsub.f32 %v4169, 0.13877685
    %v4171 = vmul.f32 %v4170, %v4168
    %v4172 = vadd.f32 %v4171, 0.19977711
    %v4173 = vmul.f32 %v4172, %v4168
    %v4174 = vsub.f32 %v4173, 0.3333295
    %v4175 = vadd.f32 %v4167, %v4165
    %v4176 = vmul.f32 %v4165, %v4168
    %v4177 = vmul.f32 %v4176, %v4174
    %v4178 = vadd.f32 %v4175, %v4177
    %v4179 = vmul.f32 %v4140, %v4178
    %v4181 = vsel %vm112, %v4179, 0
    %4183 = vmatpush.msra.mxu0 0.0
    %4184 = vmatpush.msra.mxu0 0.0
    %4185 = vmatpush.msra.mxu0 0.0
    %4186 = vmatpush.msra.mxu0 0.0
    %4187 = vmatpush.msra.mxu0 0.0
    %4188 = vmatpush.msra.mxu0 0.0
    %4189 = vmatpush.msra.mxu0 0.0
    %4190 = vmatpush.msra.mxu0 0.0
    %4191 = vmatpush.msra.mxu0 0.0
    %4192 = vmatpush.msra.mxu0 0.0
    %4193 = vmatpush.msra.mxu0 0.0
    %4194 = vmatpush.msra.mxu0 0.0
    %4195 = vmatpush.msra.mxu0 0.0
    %4196 = vmatpush.msra.mxu0 0.0
    %4197 = vmatpush.msra.mxu0 0.0
    %4198 = vmatpush.msra.mxu0 %v21
    %4199 = vmatmul.f32.gmra.mxu0 %v4181
    %v4200 = vpop.f32.mrf.mxu0
    %v4201 = vadd.f32 0.0, %v4200
    %4202 = vdwg.mxu0
    %v4204 = vsel %vm112, %v4137, 0
    %4206 = vmatpush.msra.mxu0 0.0
    %4207 = vmatpush.msra.mxu0 0.0
    %4208 = vmatpush.msra.mxu0 0.0
    %4209 = vmatpush.msra.mxu0 0.0
    %4210 = vmatpush.msra.mxu0 0.0
    %4211 = vmatpush.msra.mxu0 0.0
    %4212 = vmatpush.msra.mxu0 0.0
    %4213 = vmatpush.msra.mxu0 0.0
    %4214 = vmatpush.msra.mxu0 0.0
    %4215 = vmatpush.msra.mxu0 0.0
    %4216 = vmatpush.msra.mxu0 0.0
    %4217 = vmatpush.msra.mxu0 0.0
    %4218 = vmatpush.msra.mxu0 0.0
    %4219 = vmatpush.msra.mxu0 0.0
    %4220 = vmatpush.msra.mxu0 0.0
    %4221 = vmatpush.msra.mxu0 %v20
    %4222 = vmatmul.f32.gmra.mxu0 %v4204
    %v4223 = vpop.f32.mrf.mxu0
    %v4224 = vadd.f32 %v4201, %v4223
    %4225 = vdwg.mxu0
    %v4226 = vadd.f32 %v4224, %v22
    %v4227 = vsub.f32 0.0, %v4226
    %v4228 = vmul.f32 %v4227, 1.442695
    %v4229 = vpow.pop %v4228
    %v4230 = vadd.f32 %v4229, 1.0
    %v4231 = vrcp.pop %v4230
    %v4232 = vmul.f32 %v4230, %v4231
    %v4233 = vsub.f32 1.0, %v4232
    %v4234 = vmul.f32 %v4231, %v4233
    %v4235 = vadd.f32 %v4231, %v4234
    %vm4236 = vweird.f32 %v4230
    %vm4237 = vweird.f32 %v4231
    %vm4238 = vmor %vm4236, %vm4237
    %v4239 = vsel %vm4238, %v4231, %v4235
    %v4240 = vand.u32 2147483647, %v4230
    %vm4241 = vcmp.eq.f32.partialorder %v4240, 8.507059e+37
    %v4242 = vand.u32 %v4230, 2147483648
    %v4243 = vor.u32 1.1754944e-38, %v4242
    %v4244 = vsel %vm4241, %v4243, %v4239
    %v4245 = vmul.f32 1.0, %v4244
    %v4246 = vmul.f32 %v4245, 2.0
    %v4247 = vsub.f32 %v4246, 1.0
    %v4248 = vmul.f32 %v3956, %v4245
    %4250 = vrot.lane.b32.xlu0 %v4247, 112
    %v4251 = vpop.permute.xlu0 %4250
    %v4253 = vmul.f32 %v4245, %v4251
    %4255 = vrot.lane.b32.xlu0 %v4253, 120
    %v4256 = vpop.permute.xlu0 %4255
    %v4258 = vadd.f32 %v4248, %v4256
    %v4259 = vtanh.pop %v4258
    %4261 = vrot.lane.b32.xlu0 %v4259, 16
    %v4262 = vpop.permute.xlu0 %4261
    %v4264 = vmul.f32 %v4245, %v4262
    %vm4265 = vcmp.lt.f32.partialorder %v4264, 0.0
    %v4266 = vsel %vm4265, -1.0, 1.0
    %v4267 = vand.u32 2147483647, %v4264
    %vm4268 = vcmp.gt.f32.partialorder %v4267, 2.4142137
    %vm4269 = vcmp.gt.f32.partialorder %v4267, 0.41421357
    %v4270 = vsub.f32 %v4267, 1.0
    %v4271 = vsel %vm4269, %v4270, %v4267
    %v4272 = vsel %vm4268, -1.0, %v4271
    %v4273 = vmax.f32 %v4267, 1e-30
    %v4274 = vadd.f32 %v4267, 1.0
    %v4275 = vsel %vm4269, %v4274, 1.0
    %v4276 = vsel %vm4268, %v4273, %v4275
    %v4277 = vrcp.pop %v4276
    %v4278 = vmul.f32 %v4276, %v4277
    %v4279 = vsub.f32 1.0, %v4278
    %v4280 = vmul.f32 %v4277, %v4279
    %v4281 = vadd.f32 %v4277, %v4280
    %vm4282 = vweird.f32 %v4276
    %vm4283 = vweird.f32 %v4277
    %vm4284 = vmor %vm4282, %vm4283
    %v4285 = vsel %vm4284, %v4277, %v4281
    %v4286 = vand.u32 2147483647, %v4276
    %vm4287 = vcmp.eq.f32.partialorder %v4286, 8.507059e+37
    %v4288 = vand.u32 %v4276, 2147483648
    %v4289 = vor.u32 1.1754944e-38, %v4288
    %v4290 = vsel %vm4287, %v4289, %v4285
    %v4291 = vmul.f32 %v4272, %v4290
    %v4292 = vsel %vm4269, 0.7853982, 0.0
    %v4293 = vsel %vm4268, 1.5707964, %v4292
    %v4294 = vmul.f32 %v4291, %v4291
    %v4295 = vmul.f32 %v4294, 0.080537446
    %v4296 = vsub.f32 %v4295, 0.13877685
    %v4297 = vmul.f32 %v4296, %v4294
    %v4298 = vadd.f32 %v4297, 0.19977711
    %v4299 = vmul.f32 %v4298, %v4294
    %v4300 = vsub.f32 %v4299, 0.3333295
    %v4301 = vadd.f32 %v4293, %v4291
    %v4302 = vmul.f32 %v4291, %v4294
    %v4303 = vmul.f32 %v4302, %v4300
    %v4304 = vadd.f32 %v4301, %v4303
    %v4305 = vmul.f32 %v4266, %v4304
    %v4306 = vmul.f32 %v4264, %v4264
    %vm4307 = vcmp.lt.f32.partialorder %v4306, 0.0
    %v4308 = vsel %vm4307, -1.0, 1.0
    %v4309 = vand.u32 2147483647, %v4306
    %vm4310 = vcmp.gt.f32.partialorder %v4309, 2.4142137
    %vm4311 = vcmp.gt.f32.partialorder %v4309, 0.41421357
    %v4312 = vsub.f32 %v4309, 1.0
    %v4313 = vsel %vm4311, %v4312, %v4309
    %v4314 = vsel %vm4310, -1.0, %v4313
    %v4315 = vmax.f32 %v4309, 1e-30
    %v4316 = vadd.f32 %v4309, 1.0
    %v4317 = vsel %vm4311, %v4316, 1.0
    %v4318 = vsel %vm4310, %v4315, %v4317
    %v4319 = vrcp.pop %v4318
    %v4320 = vmul.f32 %v4318, %v4319
    %v4321 = vsub.f32 1.0, %v4320
    %v4322 = vmul.f32 %v4319, %v4321
    %v4323 = vadd.f32 %v4319, %v4322
    %vm4324 = vweird.f32 %v4318
    %vm4325 = vweird.f32 %v4319
    %vm4326 = vmor %vm4324, %vm4325
    %v4327 = vsel %vm4326, %v4319, %v4323
    %v4328 = vand.u32 2147483647, %v4318
    %vm4329 = vcmp.eq.f32.partialorder %v4328, 8.507059e+37
    %v4330 = vand.u32 %v4318, 2147483648
    %v4331 = vor.u32 1.1754944e-38, %v4330
    %v4332 = vsel %vm4329, %v4331, %v4327
    %v4333 = vmul.f32 %v4314, %v4332
    %v4334 = vsel %vm4311, 0.7853982, 0.0
    %v4335 = vsel %vm4310, 1.5707964, %v4334
    %v4336 = vmul.f32 %v4333, %v4333
    %v4337 = vmul.f32 %v4336, 0.080537446
    %v4338 = vsub.f32 %v4337, 0.13877685
    %v4339 = vmul.f32 %v4338, %v4336
    %v4340 = vadd.f32 %v4339, 0.19977711
    %v4341 = vmul.f32 %v4340, %v4336
    %v4342 = vsub.f32 %v4341, 0.3333295
    %v4343 = vadd.f32 %v4335, %v4333
    %v4344 = vmul.f32 %v4333, %v4336
    %v4345 = vmul.f32 %v4344, %v4342
    %v4346 = vadd.f32 %v4343, %v4345
    %v4347 = vmul.f32 %v4308, %v4346
    %4349 = vrot.lane.b32.xlu0 %v4347, 112
    %v4350 = vpop.permute.xlu0 %4349
    %v4351 = vsel %vm112, %v4350, 0
    %4353 = vmatpush.msra.mxu0 0.0
    %4354 = vmatpush.msra.mxu0 0.0
    %4355 = vmatpush.msra.mxu0 0.0
    %4356 = vmatpush.msra.mxu0 0.0
    %4357 = vmatpush.msra.mxu0 0.0
    %4358 = vmatpush.msra.mxu0 0.0
    %4359 = vmatpush.msra.mxu0 0.0
    %4360 = vmatpush.msra.mxu0 0.0
    %4361 = vmatpush.msra.mxu0 0.0
    %4362 = vmatpush.msra.mxu0 0.0
    %4363 = vmatpush.msra.mxu0 0.0
    %4364 = vmatpush.msra.mxu0 0.0
    %4365 = vmatpush.msra.mxu0 0.0
    %4366 = vmatpush.msra.mxu0 0.0
    %4367 = vmatpush.msra.mxu0 0.0
    %4368 = vmatpush.msra.mxu0 %v24
    %4369 = vmatmul.f32.gmra.mxu0 %v4351
    %v4370 = vpop.f32.mrf.mxu0
    %v4371 = vadd.f32 0.0, %v4370
    %4372 = vdwg.mxu0
    %4374 = vrot.lane.b32.xlu0 %v4305, 112
    %v4375 = vpop.permute.xlu0 %4374
    %v4376 = vsel %vm112, %v4375, 0
    %4378 = vmatpush.msra.mxu0 0.0
    %4379 = vmatpush.msra.mxu0 0.0
    %4380 = vmatpush.msra.mxu0 0.0
    %4381 = vmatpush.msra.mxu0 0.0
    %4382 = vmatpush.msra.mxu0 0.0
    %4383 = vmatpush.msra.mxu0 0.0
    %4384 = vmatpush.msra.mxu0 0.0
    %4385 = vmatpush.msra.mxu0 0.0
    %4386 = vmatpush.msra.mxu0 0.0
    %4387 = vmatpush.msra.mxu0 0.0
    %4388 = vmatpush.msra.mxu0 0.0
    %4389 = vmatpush.msra.mxu0 0.0
    %4390 = vmatpush.msra.mxu0 0.0
    %4391 = vmatpush.msra.mxu0 0.0
    %4392 = vmatpush.msra.mxu0 0.0
    %4393 = vmatpush.msra.mxu0 %v23
    %4394 = vmatmul.f32.gmra.mxu0 %v4376
    %v4395 = vpop.f32.mrf.mxu0
    %v4396 = vadd.f32 %v4371, %v4395
    %4397 = vdwg.mxu0
    %v4398 = vadd.f32 %v4396, %v25
    %vm4399 = vcmp.lt.f32.partialorder %v4398, 0.0
    %v4400 = vsel %vm4399, -1.0, 1.0
    %v4401 = vand.u32 2147483647, %v4398
    %vm4402 = vcmp.gt.f32.partialorder %v4401, 2.4142137
    %vm4403 = vcmp.gt.f32.partialorder %v4401, 0.41421357
    %v4404 = vsub.f32 %v4401, 1.0
    %v4405 = vsel %vm4403, %v4404, %v4401
    %v4406 = vsel %vm4402, -1.0, %v4405
    %v4407 = vmax.f32 %v4401, 1e-30
    %v4408 = vadd.f32 %v4401, 1.0
    %v4409 = vsel %vm4403, %v4408, 1.0
    %v4410 = vsel %vm4402, %v4407, %v4409
    %v4411 = vrcp.pop %v4410
    %v4412 = vmul.f32 %v4410, %v4411
    %v4413 = vsub.f32 1.0, %v4412
    %v4414 = vmul.f32 %v4411, %v4413
    %v4415 = vadd.f32 %v4411, %v4414
    %vm4416 = vweird.f32 %v4410
    %vm4417 = vweird.f32 %v4411
    %vm4418 = vmor %vm4416, %vm4417
    %v4419 = vsel %vm4418, %v4411, %v4415
    %v4420 = vand.u32 2147483647, %v4410
    %vm4421 = vcmp.eq.f32.partialorder %v4420, 8.507059e+37
    %v4422 = vand.u32 %v4410, 2147483648
    %v4423 = vor.u32 1.1754944e-38, %v4422
    %v4424 = vsel %vm4421, %v4423, %v4419
    %v4425 = vmul.f32 %v4406, %v4424
    %v4426 = vsel %vm4403, 0.7853982, 0.0
    %v4427 = vsel %vm4402, 1.5707964, %v4426
    %v4428 = vmul.f32 %v4425, %v4425
    %v4429 = vmul.f32 %v4428, 0.080537446
    %v4430 = vsub.f32 %v4429, 0.13877685
    %v4431 = vmul.f32 %v4430, %v4428
    %v4432 = vadd.f32 %v4431, 0.19977711
    %v4433 = vmul.f32 %v4432, %v4428
    %v4434 = vsub.f32 %v4433, 0.3333295
    %v4435 = vadd.f32 %v4427, %v4425
    %v4436 = vmul.f32 %v4425, %v4428
    %v4437 = vmul.f32 %v4436, %v4434
    %v4438 = vadd.f32 %v4435, %v4437
    %v4439 = vmul.f32 %v4400, %v4438
    %v4440 = vmul.f32 %v4398, %v4398
    %vm4441 = vcmp.lt.f32.partialorder %v4440, 0.0
    %v4442 = vsel %vm4441, -1.0, 1.0
    %v4443 = vand.u32 2147483647, %v4440
    %vm4444 = vcmp.gt.f32.partialorder %v4443, 2.4142137
    %vm4445 = vcmp.gt.f32.partialorder %v4443, 0.41421357
    %v4446 = vsub.f32 %v4443, 1.0
    %v4447 = vsel %vm4445, %v4446, %v4443
    %v4448 = vsel %vm4444, -1.0, %v4447
    %v4449 = vmax.f32 %v4443, 1e-30
    %v4450 = vadd.f32 %v4443, 1.0
    %v4451 = vsel %vm4445, %v4450, 1.0
    %v4452 = vsel %vm4444, %v4449, %v4451
    %v4453 = vrcp.pop %v4452
    %v4454 = vmul.f32 %v4452, %v4453
    %v4455 = vsub.f32 1.0, %v4454
    %v4456 = vmul.f32 %v4453, %v4455
    %v4457 = vadd.f32 %v4453, %v4456
    %vm4458 = vweird.f32 %v4452
    %vm4459 = vweird.f32 %v4453
    %vm4460 = vmor %vm4458, %vm4459
    %v4461 = vsel %vm4460, %v4453, %v4457
    %v4462 = vand.u32 2147483647, %v4452
    %vm4463 = vcmp.eq.f32.partialorder %v4462, 8.507059e+37
    %v4464 = vand.u32 %v4452, 2147483648
    %v4465 = vor.u32 1.1754944e-38, %v4464
    %v4466 = vsel %vm4463, %v4465, %v4461
    %v4467 = vmul.f32 %v4448, %v4466
    %v4468 = vsel %vm4445, 0.7853982, 0.0
    %v4469 = vsel %vm4444, 1.5707964, %v4468
    %v4470 = vmul.f32 %v4467, %v4467
    %v4471 = vmul.f32 %v4470, 0.080537446
    %v4472 = vsub.f32 %v4471, 0.13877685
    %v4473 = vmul.f32 %v4472, %v4470
    %v4474 = vadd.f32 %v4473, 0.19977711
    %v4475 = vmul.f32 %v4474, %v4470
    %v4476 = vsub.f32 %v4475, 0.3333295
    %v4477 = vadd.f32 %v4469, %v4467
    %v4478 = vmul.f32 %v4467, %v4470
    %v4479 = vmul.f32 %v4478, %v4476
    %v4480 = vadd.f32 %v4477, %v4479
    %v4481 = vmul.f32 %v4442, %v4480
    %v4483 = vsel %vm112, %v4481, 0
    %4485 = vmatpush.msra.mxu0 0.0
    %4486 = vmatpush.msra.mxu0 0.0
    %4487 = vmatpush.msra.mxu0 0.0
    %4488 = vmatpush.msra.mxu0 0.0
    %4489 = vmatpush.msra.mxu0 0.0
    %4490 = vmatpush.msra.mxu0 0.0
    %4491 = vmatpush.msra.mxu0 0.0
    %4492 = vmatpush.msra.mxu0 0.0
    %4493 = vmatpush.msra.mxu0 0.0
    %4494 = vmatpush.msra.mxu0 0.0
    %4495 = vmatpush.msra.mxu0 0.0
    %4496 = vmatpush.msra.mxu0 0.0
    %4497 = vmatpush.msra.mxu0 0.0
    %4498 = vmatpush.msra.mxu0 0.0
    %4499 = vmatpush.msra.mxu0 0.0
    %4500 = vmatpush.msra.mxu0 %v21
    %4501 = vmatmul.f32.gmra.mxu0 %v4483
    %v4502 = vpop.f32.mrf.mxu0
    %v4503 = vadd.f32 0.0, %v4502
    %4504 = vdwg.mxu0
    %v4506 = vsel %vm112, %v4439, 0
    %4508 = vmatpush.msra.mxu0 0.0
    %4509 = vmatpush.msra.mxu0 0.0
    %4510 = vmatpush.msra.mxu0 0.0
    %4511 = vmatpush.msra.mxu0 0.0
    %4512 = vmatpush.msra.mxu0 0.0
    %4513 = vmatpush.msra.mxu0 0.0
    %4514 = vmatpush.msra.mxu0 0.0
    %4515 = vmatpush.msra.mxu0 0.0
    %4516 = vmatpush.msra.mxu0 0.0
    %4517 = vmatpush.msra.mxu0 0.0
    %4518 = vmatpush.msra.mxu0 0.0
    %4519 = vmatpush.msra.mxu0 0.0
    %4520 = vmatpush.msra.mxu0 0.0
    %4521 = vmatpush.msra.mxu0 0.0
    %4522 = vmatpush.msra.mxu0 0.0
    %4523 = vmatpush.msra.mxu0 %v20
    %4524 = vmatmul.f32.gmra.mxu0 %v4506
    %v4525 = vpop.f32.mrf.mxu0
    %v4526 = vadd.f32 %v4503, %v4525
    %4527 = vdwg.mxu0
    %v4528 = vadd.f32 %v4526, %v22
    %v4529 = vsub.f32 0.0, %v4528
    %v4530 = vmul.f32 %v4529, 1.442695
    %v4531 = vpow.pop %v4530
    %v4532 = vadd.f32 %v4531, 1.0
    %v4533 = vrcp.pop %v4532
    %v4534 = vmul.f32 %v4532, %v4533
    %v4535 = vsub.f32 1.0, %v4534
    %v4536 = vmul.f32 %v4533, %v4535
    %v4537 = vadd.f32 %v4533, %v4536
    %vm4538 = vweird.f32 %v4532
    %vm4539 = vweird.f32 %v4533
    %vm4540 = vmor %vm4538, %vm4539
    %v4541 = vsel %vm4540, %v4533, %v4537
    %v4542 = vand.u32 2147483647, %v4532
    %vm4543 = vcmp.eq.f32.partialorder %v4542, 8.507059e+37
    %v4544 = vand.u32 %v4532, 2147483648
    %v4545 = vor.u32 1.1754944e-38, %v4544
    %v4546 = vsel %vm4543, %v4545, %v4541
    %v4547 = vmul.f32 1.0, %v4546
    %v4548 = vmul.f32 %v4547, 2.0
    %v4549 = vsub.f32 %v4548, 1.0
    %v4550 = vmul.f32 %v4258, %v4547
    %4552 = vrot.lane.b32.xlu0 %v4549, 112
    %v4553 = vpop.permute.xlu0 %4552
    %v4555 = vmul.f32 %v4547, %v4553
    %4557 = vrot.lane.b32.xlu0 %v4555, 120
    %v4558 = vpop.permute.xlu0 %4557
    %v4560 = vadd.f32 %v4550, %v4558
    %v4561 = vtanh.pop %v4560
    %4563 = vrot.lane.b32.xlu0 %v4561, 16
    %v4564 = vpop.permute.xlu0 %4563
    %v4566 = vmul.f32 %v4547, %v4564
    %vm4567 = vcmp.lt.f32.partialorder %v4566, 0.0
    %v4568 = vsel %vm4567, -1.0, 1.0
    %v4569 = vand.u32 2147483647, %v4566
    %vm4570 = vcmp.gt.f32.partialorder %v4569, 2.4142137
    %vm4571 = vcmp.gt.f32.partialorder %v4569, 0.41421357
    %v4572 = vsub.f32 %v4569, 1.0
    %v4573 = vsel %vm4571, %v4572, %v4569
    %v4574 = vsel %vm4570, -1.0, %v4573
    %v4575 = vmax.f32 %v4569, 1e-30
    %v4576 = vadd.f32 %v4569, 1.0
    %v4577 = vsel %vm4571, %v4576, 1.0
    %v4578 = vsel %vm4570, %v4575, %v4577
    %v4579 = vrcp.pop %v4578
    %v4580 = vmul.f32 %v4578, %v4579
    %v4581 = vsub.f32 1.0, %v4580
    %v4582 = vmul.f32 %v4579, %v4581
    %v4583 = vadd.f32 %v4579, %v4582
    %vm4584 = vweird.f32 %v4578
    %vm4585 = vweird.f32 %v4579
    %vm4586 = vmor %vm4584, %vm4585
    %v4587 = vsel %vm4586, %v4579, %v4583
    %v4588 = vand.u32 2147483647, %v4578
    %vm4589 = vcmp.eq.f32.partialorder %v4588, 8.507059e+37
    %v4590 = vand.u32 %v4578, 2147483648
    %v4591 = vor.u32 1.1754944e-38, %v4590
    %v4592 = vsel %vm4589, %v4591, %v4587
    %v4593 = vmul.f32 %v4574, %v4592
    %v4594 = vsel %vm4571, 0.7853982, 0.0
    %v4595 = vsel %vm4570, 1.5707964, %v4594
    %v4596 = vmul.f32 %v4593, %v4593
    %v4597 = vmul.f32 %v4596, 0.080537446
    %v4598 = vsub.f32 %v4597, 0.13877685
    %v4599 = vmul.f32 %v4598, %v4596
    %v4600 = vadd.f32 %v4599, 0.19977711
    %v4601 = vmul.f32 %v4600, %v4596
    %v4602 = vsub.f32 %v4601, 0.3333295
    %v4603 = vadd.f32 %v4595, %v4593
    %v4604 = vmul.f32 %v4593, %v4596
    %v4605 = vmul.f32 %v4604, %v4602
    %v4606 = vadd.f32 %v4603, %v4605
    %v4607 = vmul.f32 %v4568, %v4606
    %v4608 = vmul.f32 %v4566, %v4566
    %vm4609 = vcmp.lt.f32.partialorder %v4608, 0.0
    %v4610 = vsel %vm4609, -1.0, 1.0
    %v4611 = vand.u32 2147483647, %v4608
    %vm4612 = vcmp.gt.f32.partialorder %v4611, 2.4142137
    %vm4613 = vcmp.gt.f32.partialorder %v4611, 0.41421357
    %v4614 = vsub.f32 %v4611, 1.0
    %v4615 = vsel %vm4613, %v4614, %v4611
    %v4616 = vsel %vm4612, -1.0, %v4615
    %v4617 = vmax.f32 %v4611, 1e-30
    %v4618 = vadd.f32 %v4611, 1.0
    %v4619 = vsel %vm4613, %v4618, 1.0
    %v4620 = vsel %vm4612, %v4617, %v4619
    %v4621 = vrcp.pop %v4620
    %v4622 = vmul.f32 %v4620, %v4621
    %v4623 = vsub.f32 1.0, %v4622
    %v4624 = vmul.f32 %v4621, %v4623
    %v4625 = vadd.f32 %v4621, %v4624
    %vm4626 = vweird.f32 %v4620
    %vm4627 = vweird.f32 %v4621
    %vm4628 = vmor %vm4626, %vm4627
    %v4629 = vsel %vm4628, %v4621, %v4625
    %v4630 = vand.u32 2147483647, %v4620
    %vm4631 = vcmp.eq.f32.partialorder %v4630, 8.507059e+37
    %v4632 = vand.u32 %v4620, 2147483648
    %v4633 = vor.u32 1.1754944e-38, %v4632
    %v4634 = vsel %vm4631, %v4633, %v4629
    %v4635 = vmul.f32 %v4616, %v4634
    %v4636 = vsel %vm4613, 0.7853982, 0.0
    %v4637 = vsel %vm4612, 1.5707964, %v4636
    %v4638 = vmul.f32 %v4635, %v4635
    %v4639 = vmul.f32 %v4638, 0.080537446
    %v4640 = vsub.f32 %v4639, 0.13877685
    %v4641 = vmul.f32 %v4640, %v4638
    %v4642 = vadd.f32 %v4641, 0.19977711
    %v4643 = vmul.f32 %v4642, %v4638
    %v4644 = vsub.f32 %v4643, 0.3333295
    %v4645 = vadd.f32 %v4637, %v4635
    %v4646 = vmul.f32 %v4635, %v4638
    %v4647 = vmul.f32 %v4646, %v4644
    %v4648 = vadd.f32 %v4645, %v4647
    %v4649 = vmul.f32 %v4610, %v4648
    %4651 = vrot.lane.b32.xlu0 %v4649, 112
    %v4652 = vpop.permute.xlu0 %4651
    %v4653 = vsel %vm112, %v4652, 0
    %4655 = vmatpush.msra.mxu0 0.0
    %4656 = vmatpush.msra.mxu0 0.0
    %4657 = vmatpush.msra.mxu0 0.0
    %4658 = vmatpush.msra.mxu0 0.0
    %4659 = vmatpush.msra.mxu0 0.0
    %4660 = vmatpush.msra.mxu0 0.0
    %4661 = vmatpush.msra.mxu0 0.0
    %4662 = vmatpush.msra.mxu0 0.0
    %4663 = vmatpush.msra.mxu0 0.0
    %4664 = vmatpush.msra.mxu0 0.0
    %4665 = vmatpush.msra.mxu0 0.0
    %4666 = vmatpush.msra.mxu0 0.0
    %4667 = vmatpush.msra.mxu0 0.0
    %4668 = vmatpush.msra.mxu0 0.0
    %4669 = vmatpush.msra.mxu0 0.0
    %4670 = vmatpush.msra.mxu0 %v24
    %4671 = vmatmul.f32.gmra.mxu0 %v4653
    %v4672 = vpop.f32.mrf.mxu0
    %v4673 = vadd.f32 0.0, %v4672
    %4674 = vdwg.mxu0
    %4676 = vrot.lane.b32.xlu0 %v4607, 112
    %v4677 = vpop.permute.xlu0 %4676
    %v4678 = vsel %vm112, %v4677, 0
    %4680 = vmatpush.msra.mxu0 0.0
    %4681 = vmatpush.msra.mxu0 0.0
    %4682 = vmatpush.msra.mxu0 0.0
    %4683 = vmatpush.msra.mxu0 0.0
    %4684 = vmatpush.msra.mxu0 0.0
    %4685 = vmatpush.msra.mxu0 0.0
    %4686 = vmatpush.msra.mxu0 0.0
    %4687 = vmatpush.msra.mxu0 0.0
    %4688 = vmatpush.msra.mxu0 0.0
    %4689 = vmatpush.msra.mxu0 0.0
    %4690 = vmatpush.msra.mxu0 0.0
    %4691 = vmatpush.msra.mxu0 0.0
    %4692 = vmatpush.msra.mxu0 0.0
    %4693 = vmatpush.msra.mxu0 0.0
    %4694 = vmatpush.msra.mxu0 0.0
    %4695 = vmatpush.msra.mxu0 %v23
    %4696 = vmatmul.f32.gmra.mxu0 %v4678
    %v4697 = vpop.f32.mrf.mxu0
    %v4698 = vadd.f32 %v4673, %v4697
    %4699 = vdwg.mxu0
    %v4700 = vadd.f32 %v4698, %v25
    %vm4701 = vcmp.lt.f32.partialorder %v4700, 0.0
    %v4702 = vsel %vm4701, -1.0, 1.0
    %v4703 = vand.u32 2147483647, %v4700
    %vm4704 = vcmp.gt.f32.partialorder %v4703, 2.4142137
    %vm4705 = vcmp.gt.f32.partialorder %v4703, 0.41421357
    %v4706 = vsub.f32 %v4703, 1.0
    %v4707 = vsel %vm4705, %v4706, %v4703
    %v4708 = vsel %vm4704, -1.0, %v4707
    %v4709 = vmax.f32 %v4703, 1e-30
    %v4710 = vadd.f32 %v4703, 1.0
    %v4711 = vsel %vm4705, %v4710, 1.0
    %v4712 = vsel %vm4704, %v4709, %v4711
    %v4713 = vrcp.pop %v4712
    %v4714 = vmul.f32 %v4712, %v4713
    %v4715 = vsub.f32 1.0, %v4714
    %v4716 = vmul.f32 %v4713, %v4715
    %v4717 = vadd.f32 %v4713, %v4716
    %vm4718 = vweird.f32 %v4712
    %vm4719 = vweird.f32 %v4713
    %vm4720 = vmor %vm4718, %vm4719
    %v4721 = vsel %vm4720, %v4713, %v4717
    %v4722 = vand.u32 2147483647, %v4712
    %vm4723 = vcmp.eq.f32.partialorder %v4722, 8.507059e+37
    %v4724 = vand.u32 %v4712, 2147483648
    %v4725 = vor.u32 1.1754944e-38, %v4724
    %v4726 = vsel %vm4723, %v4725, %v4721
    %v4727 = vmul.f32 %v4708, %v4726
    %v4728 = vsel %vm4705, 0.7853982, 0.0
    %v4729 = vsel %vm4704, 1.5707964, %v4728
    %v4730 = vmul.f32 %v4727, %v4727
    %v4731 = vmul.f32 %v4730, 0.080537446
    %v4732 = vsub.f32 %v4731, 0.13877685
    %v4733 = vmul.f32 %v4732, %v4730
    %v4734 = vadd.f32 %v4733, 0.19977711
    %v4735 = vmul.f32 %v4734, %v4730
    %v4736 = vsub.f32 %v4735, 0.3333295
    %v4737 = vadd.f32 %v4729, %v4727
    %v4738 = vmul.f32 %v4727, %v4730
    %v4739 = vmul.f32 %v4738, %v4736
    %v4740 = vadd.f32 %v4737, %v4739
    %v4741 = vmul.f32 %v4702, %v4740
    %v4742 = vmul.f32 %v4700, %v4700
    %vm4743 = vcmp.lt.f32.partialorder %v4742, 0.0
    %v4744 = vsel %vm4743, -1.0, 1.0
    %v4745 = vand.u32 2147483647, %v4742
    %vm4746 = vcmp.gt.f32.partialorder %v4745, 2.4142137
    %vm4747 = vcmp.gt.f32.partialorder %v4745, 0.41421357
    %v4748 = vsub.f32 %v4745, 1.0
    %v4749 = vsel %vm4747, %v4748, %v4745
    %v4750 = vsel %vm4746, -1.0, %v4749
    %v4751 = vmax.f32 %v4745, 1e-30
    %v4752 = vadd.f32 %v4745, 1.0
    %v4753 = vsel %vm4747, %v4752, 1.0
    %v4754 = vsel %vm4746, %v4751, %v4753
    %v4755 = vrcp.pop %v4754
    %v4756 = vmul.f32 %v4754, %v4755
    %v4757 = vsub.f32 1.0, %v4756
    %v4758 = vmul.f32 %v4755, %v4757
    %v4759 = vadd.f32 %v4755, %v4758
    %vm4760 = vweird.f32 %v4754
    %vm4761 = vweird.f32 %v4755
    %vm4762 = vmor %vm4760, %vm4761
    %v4763 = vsel %vm4762, %v4755, %v4759
    %v4764 = vand.u32 2147483647, %v4754
    %vm4765 = vcmp.eq.f32.partialorder %v4764, 8.507059e+37
    %v4766 = vand.u32 %v4754, 2147483648
    %v4767 = vor.u32 1.1754944e-38, %v4766
    %v4768 = vsel %vm4765, %v4767, %v4763
    %v4769 = vmul.f32 %v4750, %v4768
    %v4770 = vsel %vm4747, 0.7853982, 0.0
    %v4771 = vsel %vm4746, 1.5707964, %v4770
    %v4772 = vmul.f32 %v4769, %v4769
    %v4773 = vmul.f32 %v4772, 0.080537446
    %v4774 = vsub.f32 %v4773, 0.13877685
    %v4775 = vmul.f32 %v4774, %v4772
    %v4776 = vadd.f32 %v4775, 0.19977711
    %v4777 = vmul.f32 %v4776, %v4772
    %v4778 = vsub.f32 %v4777, 0.3333295
    %v4779 = vadd.f32 %v4771, %v4769
    %v4780 = vmul.f32 %v4769, %v4772
    %v4781 = vmul.f32 %v4780, %v4778
    %v4782 = vadd.f32 %v4779, %v4781
    %v4783 = vmul.f32 %v4744, %v4782
    %v4785 = vsel %vm112, %v4783, 0
    %4787 = vmatpush.msra.mxu0 0.0
    %4788 = vmatpush.msra.mxu0 0.0
    %4789 = vmatpush.msra.mxu0 0.0
    %4790 = vmatpush.msra.mxu0 0.0
    %4791 = vmatpush.msra.mxu0 0.0
    %4792 = vmatpush.msra.mxu0 0.0
    %4793 = vmatpush.msra.mxu0 0.0
    %4794 = vmatpush.msra.mxu0 0.0
    %4795 = vmatpush.msra.mxu0 0.0
    %4796 = vmatpush.msra.mxu0 0.0
    %4797 = vmatpush.msra.mxu0 0.0
    %4798 = vmatpush.msra.mxu0 0.0
    %4799 = vmatpush.msra.mxu0 0.0
    %4800 = vmatpush.msra.mxu0 0.0
    %4801 = vmatpush.msra.mxu0 0.0
    %4802 = vmatpush.msra.mxu0 %v21
    %4803 = vmatmul.f32.gmra.mxu0 %v4785
    %v4804 = vpop.f32.mrf.mxu0
    %v4805 = vadd.f32 0.0, %v4804
    %4806 = vdwg.mxu0
    %v4808 = vsel %vm112, %v4741, 0
    %4810 = vmatpush.msra.mxu0 0.0
    %4811 = vmatpush.msra.mxu0 0.0
    %4812 = vmatpush.msra.mxu0 0.0
    %4813 = vmatpush.msra.mxu0 0.0
    %4814 = vmatpush.msra.mxu0 0.0
    %4815 = vmatpush.msra.mxu0 0.0
    %4816 = vmatpush.msra.mxu0 0.0
    %4817 = vmatpush.msra.mxu0 0.0
    %4818 = vmatpush.msra.mxu0 0.0
    %4819 = vmatpush.msra.mxu0 0.0
    %4820 = vmatpush.msra.mxu0 0.0
    %4821 = vmatpush.msra.mxu0 0.0
    %4822 = vmatpush.msra.mxu0 0.0
    %4823 = vmatpush.msra.mxu0 0.0
    %4824 = vmatpush.msra.mxu0 0.0
    %4825 = vmatpush.msra.mxu0 %v20
    %4826 = vmatmul.f32.gmra.mxu0 %v4808
    %v4827 = vpop.f32.mrf.mxu0
    %v4828 = vadd.f32 %v4805, %v4827
    %4829 = vdwg.mxu0
    %v4830 = vadd.f32 %v4828, %v22
    %v4831 = vsub.f32 0.0, %v4830
    %v4832 = vmul.f32 %v4831, 1.442695
    %v4833 = vpow.pop %v4832
    %v4834 = vadd.f32 %v4833, 1.0
    %v4835 = vrcp.pop %v4834
    %v4836 = vmul.f32 %v4834, %v4835
    %v4837 = vsub.f32 1.0, %v4836
    %v4838 = vmul.f32 %v4835, %v4837
    %v4839 = vadd.f32 %v4835, %v4838
    %vm4840 = vweird.f32 %v4834
    %vm4841 = vweird.f32 %v4835
    %vm4842 = vmor %vm4840, %vm4841
    %v4843 = vsel %vm4842, %v4835, %v4839
    %v4844 = vand.u32 2147483647, %v4834
    %vm4845 = vcmp.eq.f32.partialorder %v4844, 8.507059e+37
    %v4846 = vand.u32 %v4834, 2147483648
    %v4847 = vor.u32 1.1754944e-38, %v4846
    %v4848 = vsel %vm4845, %v4847, %v4843
    %v4849 = vmul.f32 1.0, %v4848
    %v4850 = vmul.f32 %v4849, 2.0
    %v4851 = vsub.f32 %v4850, 1.0
    %v4852 = vmul.f32 %v4560, %v4849
    %4854 = vrot.lane.b32.xlu0 %v4851, 112
    %v4855 = vpop.permute.xlu0 %4854
    %v4857 = vmul.f32 %v4849, %v4855
    %4859 = vrot.lane.b32.xlu0 %v4857, 120
    %v4860 = vpop.permute.xlu0 %4859
    %v4862 = vadd.f32 %v4852, %v4860
    %v4863 = vtanh.pop %v4862
    %4865 = vrot.lane.b32.xlu0 %v4863, 16
    %v4866 = vpop.permute.xlu0 %4865
    %v4868 = vmul.f32 %v4849, %v4866
    %vm4869 = vcmp.lt.f32.partialorder %v4868, 0.0
    %v4870 = vsel %vm4869, -1.0, 1.0
    %v4871 = vand.u32 2147483647, %v4868
    %vm4872 = vcmp.gt.f32.partialorder %v4871, 2.4142137
    %vm4873 = vcmp.gt.f32.partialorder %v4871, 0.41421357
    %v4874 = vsub.f32 %v4871, 1.0
    %v4875 = vsel %vm4873, %v4874, %v4871
    %v4876 = vsel %vm4872, -1.0, %v4875
    %v4877 = vmax.f32 %v4871, 1e-30
    %v4878 = vadd.f32 %v4871, 1.0
    %v4879 = vsel %vm4873, %v4878, 1.0
    %v4880 = vsel %vm4872, %v4877, %v4879
    %v4881 = vrcp.pop %v4880
    %v4882 = vmul.f32 %v4880, %v4881
    %v4883 = vsub.f32 1.0, %v4882
    %v4884 = vmul.f32 %v4881, %v4883
    %v4885 = vadd.f32 %v4881, %v4884
    %vm4886 = vweird.f32 %v4880
    %vm4887 = vweird.f32 %v4881
    %vm4888 = vmor %vm4886, %vm4887
    %v4889 = vsel %vm4888, %v4881, %v4885
    %v4890 = vand.u32 2147483647, %v4880
    %vm4891 = vcmp.eq.f32.partialorder %v4890, 8.507059e+37
    %v4892 = vand.u32 %v4880, 2147483648
    %v4893 = vor.u32 1.1754944e-38, %v4892
    %v4894 = vsel %vm4891, %v4893, %v4889
    %v4895 = vmul.f32 %v4876, %v4894
    %v4896 = vsel %vm4873, 0.7853982, 0.0
    %v4897 = vsel %vm4872, 1.5707964, %v4896
    %v4898 = vmul.f32 %v4895, %v4895
    %v4899 = vmul.f32 %v4898, 0.080537446
    %v4900 = vsub.f32 %v4899, 0.13877685
    %v4901 = vmul.f32 %v4900, %v4898
    %v4902 = vadd.f32 %v4901, 0.19977711
    %v4903 = vmul.f32 %v4902, %v4898
    %v4904 = vsub.f32 %v4903, 0.3333295
    %v4905 = vadd.f32 %v4897, %v4895
    %v4906 = vmul.f32 %v4895, %v4898
    %v4907 = vmul.f32 %v4906, %v4904
    %v4908 = vadd.f32 %v4905, %v4907
    %v4909 = vmul.f32 %v4870, %v4908
    %v4910 = vmul.f32 %v4868, %v4868
    %vm4911 = vcmp.lt.f32.partialorder %v4910, 0.0
    %v4912 = vsel %vm4911, -1.0, 1.0
    %v4913 = vand.u32 2147483647, %v4910
    %vm4914 = vcmp.gt.f32.partialorder %v4913, 2.4142137
    %vm4915 = vcmp.gt.f32.partialorder %v4913, 0.41421357
    %v4916 = vsub.f32 %v4913, 1.0
    %v4917 = vsel %vm4915, %v4916, %v4913
    %v4918 = vsel %vm4914, -1.0, %v4917
    %v4919 = vmax.f32 %v4913, 1e-30
    %v4920 = vadd.f32 %v4913, 1.0
    %v4921 = vsel %vm4915, %v4920, 1.0
    %v4922 = vsel %vm4914, %v4919, %v4921
    %v4923 = vrcp.pop %v4922
    %v4924 = vmul.f32 %v4922, %v4923
    %v4925 = vsub.f32 1.0, %v4924
    %v4926 = vmul.f32 %v4923, %v4925
    %v4927 = vadd.f32 %v4923, %v4926
    %vm4928 = vweird.f32 %v4922
    %vm4929 = vweird.f32 %v4923
    %vm4930 = vmor %vm4928, %vm4929
    %v4931 = vsel %vm4930, %v4923, %v4927
    %v4932 = vand.u32 2147483647, %v4922
    %vm4933 = vcmp.eq.f32.partialorder %v4932, 8.507059e+37
    %v4934 = vand.u32 %v4922, 2147483648
    %v4935 = vor.u32 1.1754944e-38, %v4934
    %v4936 = vsel %vm4933, %v4935, %v4931
    %v4937 = vmul.f32 %v4918, %v4936
    %v4938 = vsel %vm4915, 0.7853982, 0.0
    %v4939 = vsel %vm4914, 1.5707964, %v4938
    %v4940 = vmul.f32 %v4937, %v4937
    %v4941 = vmul.f32 %v4940, 0.080537446
    %v4942 = vsub.f32 %v4941, 0.13877685
    %v4943 = vmul.f32 %v4942, %v4940
    %v4944 = vadd.f32 %v4943, 0.19977711
    %v4945 = vmul.f32 %v4944, %v4940
    %v4946 = vsub.f32 %v4945, 0.3333295
    %v4947 = vadd.f32 %v4939, %v4937
    %v4948 = vmul.f32 %v4937, %v4940
    %v4949 = vmul.f32 %v4948, %v4946
    %v4950 = vadd.f32 %v4947, %v4949
    %v4951 = vmul.f32 %v4912, %v4950
    %4953 = vrot.lane.b32.xlu0 %v4951, 112
    %v4954 = vpop.permute.xlu0 %4953
    %v4955 = vsel %vm112, %v4954, 0
    %4957 = vmatpush.msra.mxu0 0.0
    %4958 = vmatpush.msra.mxu0 0.0
    %4959 = vmatpush.msra.mxu0 0.0
    %4960 = vmatpush.msra.mxu0 0.0
    %4961 = vmatpush.msra.mxu0 0.0
    %4962 = vmatpush.msra.mxu0 0.0
    %4963 = vmatpush.msra.mxu0 0.0
    %4964 = vmatpush.msra.mxu0 0.0
    %4965 = vmatpush.msra.mxu0 0.0
    %4966 = vmatpush.msra.mxu0 0.0
    %4967 = vmatpush.msra.mxu0 0.0
    %4968 = vmatpush.msra.mxu0 0.0
    %4969 = vmatpush.msra.mxu0 0.0
    %4970 = vmatpush.msra.mxu0 0.0
    %4971 = vmatpush.msra.mxu0 0.0
    %4972 = vmatpush.msra.mxu0 %v24
    %4973 = vmatmul.f32.gmra.mxu0 %v4955
    %v4974 = vpop.f32.mrf.mxu0
    %v4975 = vadd.f32 0.0, %v4974
    %4976 = vdwg.mxu0
    %4978 = vrot.lane.b32.xlu0 %v4909, 112
    %v4979 = vpop.permute.xlu0 %4978
    %v4980 = vsel %vm112, %v4979, 0
    %4982 = vmatpush.msra.mxu0 0.0
    %4983 = vmatpush.msra.mxu0 0.0
    %4984 = vmatpush.msra.mxu0 0.0
    %4985 = vmatpush.msra.mxu0 0.0
    %4986 = vmatpush.msra.mxu0 0.0
    %4987 = vmatpush.msra.mxu0 0.0
    %4988 = vmatpush.msra.mxu0 0.0
    %4989 = vmatpush.msra.mxu0 0.0
    %4990 = vmatpush.msra.mxu0 0.0
    %4991 = vmatpush.msra.mxu0 0.0
    %4992 = vmatpush.msra.mxu0 0.0
    %4993 = vmatpush.msra.mxu0 0.0
    %4994 = vmatpush.msra.mxu0 0.0
    %4995 = vmatpush.msra.mxu0 0.0
    %4996 = vmatpush.msra.mxu0 0.0
    %4997 = vmatpush.msra.mxu0 %v23
    %4998 = vmatmul.f32.gmra.mxu0 %v4980
    %v4999 = vpop.f32.mrf.mxu0
    %v5000 = vadd.f32 %v4975, %v4999
    %5001 = vdwg.mxu0
    %v5002 = vadd.f32 %v5000, %v25
    %5004 = vrot.lane.b32.xlu0 %v2888, 120
    %v5005 = vpop.permute.xlu0 %5004
    %5008 = vrot.lane.b32.xlu0 %v3190, 121
    %v5009 = vpop.permute.xlu0 %5008
    %5012 = vrot.lane.b32.xlu0 %v3492, 122
    %v5013 = vpop.permute.xlu0 %5012
    %5016 = vrot.lane.b32.xlu0 %v3794, 123
    %v5017 = vpop.permute.xlu0 %5016
    %5020 = vrot.lane.b32.xlu0 %v4096, 124
    %v5021 = vpop.permute.xlu0 %5020
    %5024 = vrot.lane.b32.xlu0 %v4398, 125
    %v5025 = vpop.permute.xlu0 %5024
    %5028 = vrot.lane.b32.xlu0 %v4700, 126
    %v5029 = vpop.permute.xlu0 %5028
    %5032 = vrot.lane.b32.xlu0 %v5002, 127
    %v5033 = vpop.permute.xlu0 %5032
    %vm5035 = vcmask 7168
    %v5036 = vsel %vm5035, %v5005, %v5009
    %vm5037 = vcmask 15360
    %v5038 = vsel %vm5037, %v5036, %v5013
    %vm5039 = vcmask 23552
    %v5040 = vsel %vm5039, %v5038, %v5017
    %vm5041 = vcmask 31744
    %v5042 = vsel %vm5041, %v5040, %v5021
    %vm5043 = vcmask 39936
    %v5044 = vsel %vm5043, %v5042, %v5025
    %vm5045 = vcmask 48128
    %v5046 = vsel %vm5045, %v5044, %v5029
    %vm5047 = vcmask 56320
    %v5048 = vsel %vm5047, %v5046, %v5033
    %vm5049 = vcmask 57344
    %5050 = vst.msk [vmem:[#allocation3] sm:$0x1] %vm5049, %v5048
    // Predicated region
    $region10: #{autoencoded_vqlstm_forward.1} parent=1 // pred_check
      _
    $region11: #{autoencoded_vqlstm_forward.1} parent=1 // pred_check_branch
      %5052 = sbr.rel (0) target = $region13
    $region12: #{autoencoded_vqlstm_forward.1} parent=1 // pred_region
      %5054 = vsyncadd [#allocation4], 0
      %s5056 = sshll.u32 [#allocation3], 4
      %s5057 = int_to_ptr.vmem [resolvable:$true] %s5056
      %s5058 = sshll.u32 %s2, 4
      %s5059 = int_to_ptr.hbm [resolvable:$true] %s5058
      %5061 = dma.vmem_to_hbm [thread:$0]  %s5057, 16, %s5059, [#allocation4]
    $region13: #{autoencoded_vqlstm_forward.1} parent=1 // pred_fallthru
      _
    // Predicated region
    $region14: #{autoencoded_vqlstm_forward.1} parent=1 // pred_check
      _
    $region15: #{autoencoded_vqlstm_forward.1} parent=1 // pred_check_branch
      %5063 = sbr.rel (0) target = $region17
    $region16: #{autoencoded_vqlstm_forward.1} parent=1 // pred_region
      %5065 = dma.done [#allocation4], 16
    $region17: #{autoencoded_vqlstm_forward.1} parent=1 // pred_fallthru
      _
    %5066 = vsyncpa [#allocation4], 1

</llo_original>
